<compile_context>
chip_gen: v7x
topology: tpu7x:2x2x1
jax: 0.10.0
libtpu: 0.0.40
codegen_flags: <defaults>
</compile_context>

<pallas_src>
import math
from functools import partial

import numpy as np

import jax
import jax.numpy as jnp
from jax import lax
from jax.experimental import pallas as pl
from jax.experimental.pallas import tpu as pltpu

# ---------------- configuration (small, consistent with the module) ----------
DIM = 32                    # C
NUM_HEADS = 4
HEAD_DIM = DIM // NUM_HEADS
WINDOW_SIZE = 2
MLP_RATIO = 4.0
HIDDEN = int(DIM * MLP_RATIO)
VOXEL_RES = 4               # voxel grid resolution (coords in [0, VOXEL_RES))
WCAP = WINDOW_SIZE ** 3     # max tokens per window (coords are unique voxels)
SCALE = HEAD_DIM ** -0.5
LN_EPS = 1e-5
BIAS_LANES = NUM_HEADS * WCAP   # packed bias width (lane-dense, = 32)


def _round_up(a, b):
    return ((a + b - 1) // b) * b


def _tpu_config():
    """(num TensorCores, max windows per grid step, scoped-VMEM limit bytes)."""
    try:
        kind = jax.devices()[0].device_kind.lower()
    except Exception:
        kind = ""
    is_v7 = ("v7" in kind) or ("7x" in kind)
    num_tc = 2 if is_v7 else 1                 # v5e / v6e: single TC -> no forced split
    max_win_block = 128 if is_v7 else 256      # v7x: smaller cap for its 64 MiB VMEM
    vmem_limit = (40 if is_v7 else 64) * 1024 * 1024
    return num_tc, max_win_block, vmem_limit


# ---------------- in-kernel helpers ------------------------------------------
def _erf(x):
    """Abramowitz & Stegun 7.1.26 erf approximation (max abs err ~1.5e-7)."""
    a1, a2, a3, a4, a5 = 0.254829592, -0.284496736, 1.421413741, -1.453152027, 1.061405429
    p = 0.3275911
    sgn = jnp.where(x >= 0.0, 1.0, -1.0)
    ax = jnp.abs(x)
    t = 1.0 / (1.0 + p * ax)
    poly = ((((a5 * t + a4) * t + a3) * t + a2) * t + a1) * t
    return sgn * (1.0 - poly * jnp.exp(-ax * ax))


def _layernorm(x, g, b):
    mu = jnp.mean(x, axis=-1, keepdims=True)
    var = jnp.mean((x - mu) ** 2, axis=-1, keepdims=True)
    return (x - mu) * lax.rsqrt(var + LN_EPS) * g + b


# ---------------- fused kernel: LN1+QKV+MHA+proj+res + LN2+FFN+res -----------
def _fused_block_kernel(x_ref, bias_ref, g1_ref, b1_ref, wqkv_ref, bqkv_ref,
                        wp_ref, bp_ref, g2_ref, b2_ref, w1_ref, bf1_ref,
                        w2_ref, bf2_ref, o_ref, attn_sc):
    x = x_ref[...]                               # (rows, C) f32, window-major rows
    rows, C = x.shape
    WB = rows // WCAP

    # ---- LN1 + QKV projection (bf16 MXU inputs, f32 accumulation) ----
    xn = _layernorm(x, g1_ref[...], b1_ref[...])
    qkv = jnp.dot(xn.astype(jnp.bfloat16), wqkv_ref[...],
                  preferred_element_type=jnp.float32) + bqkv_ref[...]
    q = qkv[:, :C].reshape(WB, WCAP, C)          # heads contiguous on the lane axis
    k = qkv[:, C:2 * C].reshape(WB, WCAP, C)
    v = qkv[:, 2 * C:].reshape(WB, WCAP, C)

    bias = bias_ref[...]                         # (rows, H*Wc) packed bias + key mask

    # Per-head MHA; each head's output is written straight into a lane slice of
    # the VMEM scratch so only one head's tiny tensors are live at a time.
    for h in range(NUM_HEADS):                   # static unroll; heads = lane slices
        sl = slice(h * HEAD_DIM, (h + 1) * HEAD_DIM)
        bias_h = bias[:, h * WCAP:(h + 1) * WCAP].reshape(WB, WCAP, WCAP)
        s = jnp.einsum("bqd,bkd->bqk", q[..., sl], k[..., sl],
                       preferred_element_type=jnp.float32) * SCALE + bias_h
        m = jnp.max(s, axis=-1, keepdims=True)
        e = jnp.exp(s - m)
        p = e * pl.reciprocal(jnp.sum(e, axis=-1, keepdims=True), approx=True)
        oh = jnp.einsum("bqk,bkd->bqd", p, v[..., sl],
                        preferred_element_type=jnp.float32)
        attn_sc[:, sl] = oh.reshape(rows, HEAD_DIM)

    proj = jnp.dot(attn_sc[...].astype(jnp.bfloat16), wp_ref[...],
                   preferred_element_type=jnp.float32) + bp_ref[...]
    x2 = x + proj                                # first residual

    # ---- LN2 + FFN + residual (row-wise, commutes with scatter-back) ----
    xn2 = _layernorm(x2, g2_ref[...], b2_ref[...])
    hdn = jnp.dot(xn2.astype(jnp.bfloat16), w1_ref[...],
                  preferred_element_type=jnp.float32) + bf1_ref[...]
    hdn = 0.5 * hdn * (1.0 + _erf(hdn * (1.0 / math.sqrt(2.0))))   # exact (erf) GELU
    y = jnp.dot(hdn.astype(jnp.bfloat16), w2_ref[...],
                preferred_element_type=jnp.float32) + bf2_ref[...]
    o_ref[...] = x2 + y


def fused_transformer(xw, bias_w, g1, be1, wqkv, bqkv, wp, bp,
                      g2, be2, w1, bf1, w2, bf2, *, w_block, vmem_limit):
    R, C = xw.shape                              # R = NW_pad * WCAP
    NW_pad = R // WCAP
    rows = w_block * WCAP

    flops = R * (2 * C * 3 * C + 4 * WCAP * C + 2 * C * C + 4 * C * HIDDEN)
    transcendentals = R * (WCAP + HIDDEN)
    weight_bytes = 2 * (C * 3 * C + C * C + 2 * C * HIDDEN)
    bytes_accessed = R * C * 4 * 2 + R * BIAS_LANES * 4 + weight_bytes

    return pl.pallas_call(
        _fused_block_kernel,
        out_shape=jax.ShapeDtypeStruct((R, C), jnp.float32),
        grid_spec=pltpu.PrefetchScalarGridSpec(
            num_scalar_prefetch=0,
            grid=(NW_pad // w_block,),
            in_specs=[
                pl.BlockSpec((rows, C), lambda i: (i, 0)),
                pl.BlockSpec((rows, BIAS_LANES), lambda i: (i, 0)),
                pl.BlockSpec((1, C), lambda i: (0, 0)),
                pl.BlockSpec((1, C), lambda i: (0, 0)),
                pl.BlockSpec((C, 3 * C), lambda i: (0, 0)),
                pl.BlockSpec((1, 3 * C), lambda i: (0, 0)),
                pl.BlockSpec((C, C), lambda i: (0, 0)),
                pl.BlockSpec((1, C), lambda i: (0, 0)),
                pl.BlockSpec((1, C), lambda i: (0, 0)),
                pl.BlockSpec((1, C), lambda i: (0, 0)),
                pl.BlockSpec((C, HIDDEN), lambda i: (0, 0)),
                pl.BlockSpec((1, HIDDEN), lambda i: (0, 0)),
                pl.BlockSpec((HIDDEN, C), lambda i: (0, 0)),
                pl.BlockSpec((1, C), lambda i: (0, 0)),
            ],
            out_specs=pl.BlockSpec((rows, C), lambda i: (i, 0)),
            scratch_shapes=[pltpu.VMEM((rows, C), jnp.float32)],
        ),
        compiler_params=pltpu.CompilerParams(
            dimension_semantics=("parallel",),
            vmem_limit_bytes=int(vmem_limit)),
        cost_estimate=pl.CostEstimate(
            flops=int(flops), transcendentals=int(transcendentals),
            bytes_accessed=int(bytes_accessed)),
    )(xw, bias_w, g1, be1, wqkv, bqkv, wp, bp, g2, be2, w1, bf1, w2, bf2)


# ---------------- host-side glue ---------------------------------------------
def build_window_partition(coords_np, window_size, wcap):
    """Vectorized window bucketing (coord // window_size); pad each to wcap."""
    coords_np = np.asarray(coords_np)
    N = coords_np.shape[0]
    win = (coords_np // window_size).astype(np.int64)
    base = int(win.max()) + 1 if N > 0 else 1
    key = (win[:, 0] * base + win[:, 1]) * base + win[:, 2]
    uniq, inv = np.unique(key, return_inverse=True)
    NW = uniq.shape[0]
    order = np.argsort(inv, kind="stable")             # tokens grouped by window
    counts = np.bincount(inv, minlength=NW)
    assert counts.max(initial=0) <= wcap
    starts = np.zeros(NW, np.int64)
    starts[1:] = np.cumsum(counts)[:-1]
    slot_sorted = np.arange(N) - np.repeat(starts, counts)
    win_sorted = inv[order]
    tok_sorted = order
    gather_idx = np.zeros((NW, wcap), np.int32)
    valid = np.zeros((NW, wcap), bool)
    gather_idx[win_sorted, slot_sorted] = tok_sorted
    valid[win_sorted, slot_sorted] = True
    flat_pos = np.zeros((N,), np.int32)
    flat_pos[tok_sorted] = (win_sorted * wcap + slot_sorted).astype(np.int32)
    return gather_idx, valid, flat_pos


def compute_window_bias(coords, gather_idx, valid, rel_table):
    """Packed relative-position bias + (-1e9) key-padding mask.

    Layout matches the kernel's window-gathered rows: (NW*Wc_q, H*Wc_k) f32,
    lane-dense (32 wide), so each grid block is one contiguous DMA and the
    in-kernel per-head reshape is sublane-aligned."""
    cw = coords[gather_idx]                                        # (NW, Wc, 3)
    rel = cw[:, :, None, :] - cw[:, None, :, :] + (WINDOW_SIZE - 1)
    D = 2 * WINDOW_SIZE - 1
    ridx = rel[..., 0] * (D * D) + rel[..., 1] * D + rel[..., 2]
    ridx = jnp.clip(ridx, 0, D ** 3 - 1)                           # padded slots only
    bias = rel_table[ridx]                                         # (NW, Wq, Wk, H)
    mask = jnp.where(valid[:, None, :, None], 0.0, -1e9)           # mask padded keys
    bias = (bias + mask).astype(jnp.float32)
    bias = jnp.transpose(bias, (0, 1, 3, 2))                       # (NW, Wq, H, Wk)
    return bias.reshape(-1, NUM_HEADS * WCAP)                      # (NW*Wq, 32)


@partial(jax.jit, static_argnames=("w_block", "vmem_limit"))
def _device_forward(x, coords, gi, valid, flat_pos, params, *, w_block, vmem_limit):
    N, C = x.shape
    # Single gather of the raw tokens into windows (padded slots duplicate token 0;
    # their outputs are dropped by the final flat_pos gather).
    xw = x[gi].reshape(-1, C)                                      # (NW_pad*Wc, C)
    bias_w = compute_window_bias(coords, gi, valid, params["rel_pos_bias"])

    # single fused kernel (attention + FFN) over window-ordered rows
    out_w = fused_transformer(
        xw, bias_w,
        params["g1"], params["be1"],
        params["w_qkv"].astype(jnp.bfloat16), params["b_qkv"],
        params["w_proj"].astype(jnp.bfloat16), params["b_proj"],
        params["g2"], params["be2"],
        params["w_ff1"].astype(jnp.bfloat16), params["b_ff1"],
        params["w_ff2"].astype(jnp.bfloat16), params["b_ff2"],
        w_block=w_block, vmem_limit=vmem_limit)

    # scatter back to token order once, at the very end
    return out_w[flat_pos]                                         # (N, C)


def transformer_block(x, coords, params):
    coords_np = np.asarray(coords)
    gather_idx, valid, flat_pos = build_window_partition(coords_np, WINDOW_SIZE, WCAP)
    NW = gather_idx.shape[0]

    num_tc, max_win_block, vmem_limit = _tpu_config()
    grid_w = -(-NW // max_win_block)                # step count from the block cap
    if num_tc > 1 and NW >= num_tc:                 # v7x: >= one block per TensorCore
        grid_w = max(grid_w, num_tc)
    grid_w = max(grid_w, 1)
    NW_pad = _round_up(NW, grid_w)
    w_block = NW_pad // grid_w
    if NW_pad > NW:
        pad = NW_pad - NW
        gather_idx = np.concatenate(
            [gather_idx, np.zeros((pad, WCAP), np.int32)], axis=0)
        valid = np.concatenate([valid, np.zeros((pad, WCAP), bool)], axis=0)

    return _device_forward(x, coords,
                           jnp.asarray(gather_idx), jnp.asarray(valid),
                           jnp.asarray(flat_pos), params,
                           w_block=w_block, vmem_limit=vmem_limit)


# ---------------- plain-JAX reference (intended semantics, same precision) ----
def reference_block(x, coords, params, gather_idx, valid, flat_pos):
    from jax.scipy.special import erf

    def ln(a, g, b):
        mu = jnp.mean(a, -1, keepdims=True)
        var = jnp.mean((a - mu) ** 2, -1, keepdims=True)
        return (a - mu) * lax.rsqrt(var + LN_EPS) * g + b

    def mm(a, w, b):   # same bf16-input / f32-accumulate convention as the kernel
        return jnp.dot(a.astype(jnp.bfloat16), w.astype(jnp.bfloat16),
                       preferred_element_type=jnp.float32) + b

    N, C = x.shape
    NW = gather_idx.shape[0]
    xn = ln(x, params["g1"], params["be1"])
    qkv = mm(xn, params["w_qkv"], params["b_qkv"])
    q = qkv[:, :C].reshape(N, NUM_HEADS, HEAD_DIM)
    k = qkv[:, C:2 * C].reshape(N, NUM_HEADS, HEAD_DIM)
    v = qkv[:, 2 * C:].reshape(N, NUM_HEADS, HEAD_DIM)
    qw = jnp.transpose(q[gather_idx], (0, 2, 1, 3))
    kw = jnp.transpose(k[gather_idx], (0, 2, 1, 3))
    vw = jnp.transpose(v[gather_idx], (0, 2, 1, 3))
    packed = compute_window_bias(coords, gather_idx, valid, params["rel_pos_bias"])
    bias = jnp.transpose(packed.reshape(NW, WCAP, NUM_HEADS, WCAP), (0, 2, 1, 3))
    s = jnp.einsum("whqd,whkd->whqk", qw, kw) * SCALE + bias
    a = jax.nn.softmax(s, axis=-1)
    ow = jnp.einsum("whqk,whkd->whqd", a, vw)
    ow = jnp.transpose(ow, (0, 2, 1, 3)).reshape(-1, C)
    proj = mm(ow, params["w_proj"], params["b_proj"])
    x2 = x + proj[flat_pos]
    h = mm(ln(x2, params["g2"], params["be2"]), params["w_ff1"], params["b_ff1"])
    h = 0.5 * h * (1.0 + erf(h / math.sqrt(2.0)))
    y = mm(h, params["w_ff2"], params["b_ff2"])
    return x2 + y


# ---------------- parameter init (deterministic, synthetic) -------------------
def init_params(key):
    ks = jax.random.split(key, 9)
    s = 0.05
    return dict(
        g1=jnp.ones((1, DIM), jnp.float32),
        be1=jnp.zeros((1, DIM), jnp.float32),
        w_qkv=jax.random.normal(ks[0], (DIM, 3 * DIM), jnp.float32) * s,
        b_qkv=jax.random.normal(ks[1], (1, 3 * DIM), jnp.float32) * s,
        w_proj=jax.random.normal(ks[2], (DIM, DIM), jnp.float32) * s,
        b_proj=jax.random.normal(ks[3], (1, DIM), jnp.float32) * s,
        # PyTorch inits this to zeros; use small random values so the gather
        # path is actually exercised.
        rel_pos_bias=jax.random.normal(
            ks[4], ((2 * WINDOW_SIZE - 1) ** 3, NUM_HEADS), jnp.float32) * 0.1,
        g2=jnp.ones((1, DIM), jnp.float32),
        be2=jnp.zeros((1, DIM), jnp.float32),
        w_ff1=jax.random.normal(ks[5], (DIM, HIDDEN), jnp.float32) * s,
        b_ff1=jax.random.normal(ks[6], (1, HIDDEN), jnp.float32) * s,
        w_ff2=jax.random.normal(ks[7], (HIDDEN, DIM), jnp.float32) * s,
        b_ff2=jax.random.normal(ks[8], (1, DIM), jnp.float32) * s,
    )


# ---------------- main ---------------------------------------------------------
if __name__ == "__main__":
    N = 40  # number of sparse voxel tokens
    key = jax.random.PRNGKey(0)
    kc, kx, kp = jax.random.split(key, 3)

    # unique voxel coordinates in a VOXEL_RES^3 grid (<= WCAP tokens per window)
    perm = jax.random.permutation(kc, VOXEL_RES ** 3)[:N]
    coords = jnp.stack([perm // (VOXEL_RES ** 2),
                        (perm // VOXEL_RES) % VOXEL_RES,
                        perm % VOXEL_RES], axis=-1).astype(jnp.int32)
    x = jax.random.normal(kx, (N, DIM), dtype=jnp.float32)
    params = init_params(kp)

    out = jax.block_until_ready(transformer_block(x, coords, params))

    # sanity check against a plain-JAX reference of the intended semantics
    gather_idx, valid, flat_pos = build_window_partition(
        np.asarray(coords), WINDOW_SIZE, WCAP)
    ref = reference_block(x, coords, params,
                          jnp.asarray(gather_idx), jnp.asarray(valid),
                          jnp.asarray(flat_pos))
    assert out.shape == (N, DIM)
    assert bool(jnp.all(jnp.isfinite(out)))
    np.testing.assert_allclose(np.asarray(out), np.asarray(ref),
                               rtol=1e-2, atol=2e-3)
    print("KERNEL_OK")
</pallas_src>

<mosaic_0001>
module attributes {stable_mosaic.version = 11 : i64} {
  func.func @_fused_block_kernel(%arg0: i32, %arg1: memref<64x32xf32, #tpu.memory_space<vmem>>, %arg2: memref<64x32xf32, #tpu.memory_space<vmem>>, %arg3: memref<1x32xf32, #tpu.memory_space<vmem>>, %arg4: memref<1x32xf32, #tpu.memory_space<vmem>>, %arg5: memref<32x96xbf16, #tpu.memory_space<vmem>>, %arg6: memref<1x96xf32, #tpu.memory_space<vmem>>, %arg7: memref<32x32xbf16, #tpu.memory_space<vmem>>, %arg8: memref<1x32xf32, #tpu.memory_space<vmem>>, %arg9: memref<1x32xf32, #tpu.memory_space<vmem>>, %arg10: memref<1x32xf32, #tpu.memory_space<vmem>>, %arg11: memref<32x128xbf16, #tpu.memory_space<vmem>>, %arg12: memref<1x128xf32, #tpu.memory_space<vmem>>, %arg13: memref<128x32xbf16, #tpu.memory_space<vmem>>, %arg14: memref<1x32xf32, #tpu.memory_space<vmem>>, %arg15: memref<64x32xf32, #tpu.memory_space<vmem>>, %arg16: memref<64x32xf32, #tpu.memory_space<vmem>>) attributes {dimension_semantics = [#tpu.dimension_semantics<parallel>], iteration_bounds = array<i64: 1>, scalar_prefetch = 0 : i64, scratch_operands = 1 : i64, tpu.core_type = #tpu.core_type<tc>, window_params = [{transform_indices = @transform_0, window_bounds = array<i64: 64, 32>}, {transform_indices = @transform_1, window_bounds = array<i64: 64, 32>}, {pipeline_mode = #tpu.pipeline_mode<synchronous>, transform_indices = @transform_2, window_bounds = array<i64: 1, 32>}, {pipeline_mode = #tpu.pipeline_mode<synchronous>, transform_indices = @transform_3, window_bounds = array<i64: 1, 32>}, {pipeline_mode = #tpu.pipeline_mode<synchronous>, transform_indices = @transform_4, window_bounds = array<i64: 32, 96>}, {pipeline_mode = #tpu.pipeline_mode<synchronous>, transform_indices = @transform_5, window_bounds = array<i64: 1, 96>}, {pipeline_mode = #tpu.pipeline_mode<synchronous>, transform_indices = @transform_6, window_bounds = array<i64: 32, 32>}, {pipeline_mode = #tpu.pipeline_mode<synchronous>, transform_indices = @transform_7, window_bounds = array<i64: 1, 32>}, {pipeline_mode = #tpu.pipeline_mode<synchronous>, transform_indices = @transform_8, window_bounds = array<i64: 1, 32>}, {pipeline_mode = #tpu.pipeline_mode<synchronous>, transform_indices = @transform_9, window_bounds = array<i64: 1, 32>}, {pipeline_mode = #tpu.pipeline_mode<synchronous>, transform_indices = @transform_10, window_bounds = array<i64: 32, 128>}, {pipeline_mode = #tpu.pipeline_mode<synchronous>, transform_indices = @transform_11, window_bounds = array<i64: 1, 128>}, {pipeline_mode = #tpu.pipeline_mode<synchronous>, transform_indices = @transform_12, window_bounds = array<i64: 128, 32>}, {pipeline_mode = #tpu.pipeline_mode<synchronous>, transform_indices = @transform_13, window_bounds = array<i64: 1, 32>}, {transform_indices = @transform_14, window_bounds = array<i64: 64, 32>}]} {
    %c0 = arith.constant 0 : index
    %c0_0 = arith.constant 0 : index
    %0 = vector.load %arg1[%c0, %c0_0] : memref<64x32xf32, #tpu.memory_space<vmem>>, vector<64x32xf32>
    %c0_1 = arith.constant 0 : index
    %c0_2 = arith.constant 0 : index
    %1 = vector.load %arg3[%c0_1, %c0_2] : memref<1x32xf32, #tpu.memory_space<vmem>>, vector<1x32xf32>
    %c0_3 = arith.constant 0 : index
    %c0_4 = arith.constant 0 : index
    %2 = vector.load %arg4[%c0_3, %c0_4] : memref<1x32xf32, #tpu.memory_space<vmem>>, vector<1x32xf32>
    %cst = arith.constant dense<0.000000e+00> : vector<64xf32>
    %3 = vector.multi_reduction <add>, %0, %cst [1] : vector<64x32xf32> to vector<64xf32>
    %4 = vector.shape_cast %3 : vector<64xf32> to vector<64x1xf32>
    %cst_5 = arith.constant 3.200000e+01 : f32
    %5 = vector.broadcast %cst_5 : f32 to vector<64x1xf32>
    %6 = arith.divf %4, %5 : vector<64x1xf32>
    %7 = vector.broadcast %6 : vector<64x1xf32> to vector<64x32xf32>
    %8 = arith.subf %0, %7 : vector<64x32xf32>
    %9 = arith.mulf %8, %8 : vector<64x32xf32>
    %cst_6 = arith.constant dense<0.000000e+00> : vector<64xf32>
    %10 = vector.multi_reduction <add>, %9, %cst_6 [1] : vector<64x32xf32> to vector<64xf32>
    %11 = vector.shape_cast %10 : vector<64xf32> to vector<64x1xf32>
    %cst_7 = arith.constant 3.200000e+01 : f32
    %12 = vector.broadcast %cst_7 : f32 to vector<64x1xf32>
    %13 = arith.divf %11, %12 : vector<64x1xf32>
    %14 = vector.broadcast %6 : vector<64x1xf32> to vector<64x32xf32>
    %15 = arith.subf %0, %14 : vector<64x32xf32>
    %cst_8 = arith.constant 9.99999974E-6 : f32
    %16 = vector.broadcast %cst_8 : f32 to vector<64x1xf32>
    %17 = arith.addf %13, %16 : vector<64x1xf32>
    %18 = math.rsqrt %17 : vector<64x1xf32>
    %19 = vector.broadcast %18 : vector<64x1xf32> to vector<64x32xf32>
    %20 = arith.mulf %15, %19 : vector<64x32xf32>
    %21 = vector.broadcast %1 : vector<1x32xf32> to vector<64x32xf32>
    %22 = arith.mulf %20, %21 : vector<64x32xf32>
    %23 = vector.broadcast %2 : vector<1x32xf32> to vector<64x32xf32>
    %24 = arith.addf %22, %23 : vector<64x32xf32>
    %25 = arith.truncf %24 : vector<64x32xf32> to vector<64x32xbf16>
    %c0_9 = arith.constant 0 : index
    %c0_10 = arith.constant 0 : index
    %26 = vector.load %arg5[%c0_9, %c0_10] : memref<32x96xbf16, #tpu.memory_space<vmem>>, vector<32x96xbf16>
    %cst_11 = arith.constant dense<0.000000e+00> : vector<64x96xf32>
    %27 = tpu.matmul %25, %26, %cst_11 {dimension_numbers = #tpu.dot_dimension_numbers<[1], [0], [0], [1], [0, 0, 1, 1], [], []>} : vector<64x32xbf16>, vector<32x96xbf16>, vector<64x96xf32> -> vector<64x96xf32>
    %c0_12 = arith.constant 0 : index
    %c0_13 = arith.constant 0 : index
    %28 = vector.load %arg6[%c0_12, %c0_13] : memref<1x96xf32, #tpu.memory_space<vmem>>, vector<1x96xf32>
    %29 = vector.broadcast %28 : vector<1x96xf32> to vector<64x96xf32>
    %30 = arith.addf %27, %29 : vector<64x96xf32>
    %31 = vector.extract_strided_slice %30 {offsets = [0, 0], sizes = [64, 32], strides = [1, 1]} : vector<64x96xf32> to vector<64x32xf32>
    %32 = vector.shape_cast %31 : vector<64x32xf32> to vector<8x8x32xf32>
    %33 = vector.extract_strided_slice %30 {offsets = [0, 32], sizes = [64, 32], strides = [1, 1]} : vector<64x96xf32> to vector<64x32xf32>
    %34 = vector.shape_cast %33 : vector<64x32xf32> to vector<8x8x32xf32>
    %35 = vector.extract_strided_slice %30 {offsets = [0, 64], sizes = [64, 32], strides = [1, 1]} : vector<64x96xf32> to vector<64x32xf32>
    %36 = vector.shape_cast %35 : vector<64x32xf32> to vector<8x8x32xf32>
    %c0_14 = arith.constant 0 : index
    %c0_15 = arith.constant 0 : index
    %37 = vector.load %arg2[%c0_14, %c0_15] : memref<64x32xf32, #tpu.memory_space<vmem>>, vector<64x32xf32>
    %38 = vector.extract_strided_slice %37 {offsets = [0, 0], sizes = [64, 8], strides = [1, 1]} : vector<64x32xf32> to vector<64x8xf32>
    %39 = vector.shape_cast %38 : vector<64x8xf32> to vector<8x8x8xf32>
    %40 = vector.extract_strided_slice %32 {offsets = [0, 0, 0], sizes = [8, 8, 8], strides = [1, 1, 1]} : vector<8x8x32xf32> to vector<8x8x8xf32>
    %41 = vector.extract_strided_slice %34 {offsets = [0, 0, 0], sizes = [8, 8, 8], strides = [1, 1, 1]} : vector<8x8x32xf32> to vector<8x8x8xf32>
    "tpu.trace_start"() <{level = 10 : i32, message = "bqd,bkd->bqk"}> : () -> ()
    %cst_16 = arith.constant dense<0.000000e+00> : vector<8x8x8xf32>
    %42 = tpu.matmul %40, %41, %cst_16 {dimension_numbers = #tpu.dot_dimension_numbers<[2], [2], [1], [1], [0, 0, 0, 1, 1, 1], [0], [0]>} : vector<8x8x8xf32>, vector<8x8x8xf32>, vector<8x8x8xf32> -> vector<8x8x8xf32>
    "tpu.trace_stop"() : () -> ()
    %cst_17 = arith.constant 0.353553385 : f32
    %43 = vector.broadcast %cst_17 : f32 to vector<8x8x8xf32>
    %44 = arith.mulf %42, %43 : vector<8x8x8xf32>
    %45 = arith.addf %44, %39 : vector<8x8x8xf32>
    %cst_18 = arith.constant dense<0xFF800000> : vector<8x8xf32>
    %46 = vector.multi_reduction <maximumf>, %45, %cst_18 [2] : vector<8x8x8xf32> to vector<8x8xf32>
    %47 = vector.shape_cast %46 : vector<8x8xf32> to vector<8x8x1xf32>
    %48 = vector.broadcast %47 : vector<8x8x1xf32> to vector<8x8x8xf32>
    %49 = arith.subf %45, %48 : vector<8x8x8xf32>
    %50 = math.exp %49 : vector<8x8x8xf32>
    %cst_19 = arith.constant dense<0.000000e+00> : vector<8x8xf32>
    %51 = vector.multi_reduction <add>, %50, %cst_19 [2] : vector<8x8x8xf32> to vector<8x8xf32>
    %52 = vector.shape_cast %51 : vector<8x8xf32> to vector<8x8x1xf32>
    %53 = tpu.reciprocal %52 {approx = true} : vector<8x8x1xf32> -> vector<8x8x1xf32>
    %54 = vector.broadcast %53 : vector<8x8x1xf32> to vector<8x8x8xf32>
    %55 = arith.mulf %50, %54 : vector<8x8x8xf32>
    %56 = vector.extract_strided_slice %36 {offsets = [0, 0, 0], sizes = [8, 8, 8], strides = [1, 1, 1]} : vector<8x8x32xf32> to vector<8x8x8xf32>
    "tpu.trace_start"() <{level = 10 : i32, message = "bqk,bkd->bqd"}> : () -> ()
    %cst_20 = arith.constant dense<0.000000e+00> : vector<8x8x8xf32>
    %57 = tpu.matmul %55, %56, %cst_20 {dimension_numbers = #tpu.dot_dimension_numbers<[2], [1], [1], [2], [0, 0, 0, 1, 1, 2], [0], [0]>} : vector<8x8x8xf32>, vector<8x8x8xf32>, vector<8x8x8xf32> -> vector<8x8x8xf32>
    "tpu.trace_stop"() : () -> ()
    %58 = vector.shape_cast %57 : vector<8x8x8xf32> to vector<64x8xf32>
    %c0_21 = arith.constant 0 : index
    %c0_22 = arith.constant 0 : index
    %59 = vector.load %arg16[%c0_21, %c0_22] : memref<64x32xf32, #tpu.memory_space<vmem>>, vector<64x8xf32>
    tpu.vector_store %arg16[%c0_21, %c0_22], %58 {strides = array<i32>} : memref<64x32xf32, #tpu.memory_space<vmem>>, vector<64x8xf32>,
    %60 = vector.extract_strided_slice %37 {offsets = [0, 8], sizes = [64, 8], strides = [1, 1]} : vector<64x32xf32> to vector<64x8xf32>
    %61 = vector.shape_cast %60 : vector<64x8xf32> to vector<8x8x8xf32>
    %62 = vector.extract_strided_slice %32 {offsets = [0, 0, 8], sizes = [8, 8, 8], strides = [1, 1, 1]} : vector<8x8x32xf32> to vector<8x8x8xf32>
    %63 = vector.extract_strided_slice %34 {offsets = [0, 0, 8], sizes = [8, 8, 8], strides = [1, 1, 1]} : vector<8x8x32xf32> to vector<8x8x8xf32>
    "tpu.trace_start"() <{level = 10 : i32, message = "bqd,bkd->bqk"}> : () -> ()
    %cst_23 = arith.constant dense<0.000000e+00> : vector<8x8x8xf32>
    %64 = tpu.matmul %62, %63, %cst_23 {dimension_numbers = #tpu.dot_dimension_numbers<[2], [2], [1], [1], [0, 0, 0, 1, 1, 1], [0], [0]>} : vector<8x8x8xf32>, vector<8x8x8xf32>, vector<8x8x8xf32> -> vector<8x8x8xf32>
    "tpu.trace_stop"() : () -> ()
    %cst_24 = arith.constant 0.353553385 : f32
    %65 = vector.broadcast %cst_24 : f32 to vector<8x8x8xf32>
    %66 = arith.mulf %64, %65 : vector<8x8x8xf32>
    %67 = arith.addf %66, %61 : vector<8x8x8xf32>
    %cst_25 = arith.constant dense<0xFF800000> : vector<8x8xf32>
    %68 = vector.multi_reduction <maximumf>, %67, %cst_25 [2] : vector<8x8x8xf32> to vector<8x8xf32>
    %69 = vector.shape_cast %68 : vector<8x8xf32> to vector<8x8x1xf32>
    %70 = vector.broadcast %69 : vector<8x8x1xf32> to vector<8x8x8xf32>
    %71 = arith.subf %67, %70 : vector<8x8x8xf32>
    %72 = math.exp %71 : vector<8x8x8xf32>
    %cst_26 = arith.constant dense<0.000000e+00> : vector<8x8xf32>
    %73 = vector.multi_reduction <add>, %72, %cst_26 [2] : vector<8x8x8xf32> to vector<8x8xf32>
    %74 = vector.shape_cast %73 : vector<8x8xf32> to vector<8x8x1xf32>
    %75 = tpu.reciprocal %74 {approx = true} : vector<8x8x1xf32> -> vector<8x8x1xf32>
    %76 = vector.broadcast %75 : vector<8x8x1xf32> to vector<8x8x8xf32>
    %77 = arith.mulf %72, %76 : vector<8x8x8xf32>
    %78 = vector.extract_strided_slice %36 {offsets = [0, 0, 8], sizes = [8, 8, 8], strides = [1, 1, 1]} : vector<8x8x32xf32> to vector<8x8x8xf32>
    "tpu.trace_start"() <{level = 10 : i32, message = "bqk,bkd->bqd"}> : () -> ()
    %cst_27 = arith.constant dense<0.000000e+00> : vector<8x8x8xf32>
    %79 = tpu.matmul %77, %78, %cst_27 {dimension_numbers = #tpu.dot_dimension_numbers<[2], [1], [1], [2], [0, 0, 0, 1, 1, 2], [0], [0]>} : vector<8x8x8xf32>, vector<8x8x8xf32>, vector<8x8x8xf32> -> vector<8x8x8xf32>
    "tpu.trace_stop"() : () -> ()
    %80 = vector.shape_cast %79 : vector<8x8x8xf32> to vector<64x8xf32>
    %c0_28 = arith.constant 0 : index
    %c8 = arith.constant 8 : index
    %81 = vector.load %arg16[%c0_28, %c8] : memref<64x32xf32, #tpu.memory_space<vmem>>, vector<64x8xf32>
    tpu.vector_store %arg16[%c0_28, %c8], %80 {strides = array<i32>} : memref<64x32xf32, #tpu.memory_space<vmem>>, vector<64x8xf32>,
    %82 = vector.extract_strided_slice %37 {offsets = [0, 16], sizes = [64, 8], strides = [1, 1]} : vector<64x32xf32> to vector<64x8xf32>
    %83 = vector.shape_cast %82 : vector<64x8xf32> to vector<8x8x8xf32>
    %84 = vector.extract_strided_slice %32 {offsets = [0, 0, 16], sizes = [8, 8, 8], strides = [1, 1, 1]} : vector<8x8x32xf32> to vector<8x8x8xf32>
    %85 = vector.extract_strided_slice %34 {offsets = [0, 0, 16], sizes = [8, 8, 8], strides = [1, 1, 1]} : vector<8x8x32xf32> to vector<8x8x8xf32>
    "tpu.trace_start"() <{level = 10 : i32, message = "bqd,bkd->bqk"}> : () -> ()
    %cst_29 = arith.constant dense<0.000000e+00> : vector<8x8x8xf32>
    %86 = tpu.matmul %84, %85, %cst_29 {dimension_numbers = #tpu.dot_dimension_numbers<[2], [2], [1], [1], [0, 0, 0, 1, 1, 1], [0], [0]>} : vector<8x8x8xf32>, vector<8x8x8xf32>, vector<8x8x8xf32> -> vector<8x8x8xf32>
    "tpu.trace_stop"() : () -> ()
    %cst_30 = arith.constant 0.353553385 : f32
    %87 = vector.broadcast %cst_30 : f32 to vector<8x8x8xf32>
    %88 = arith.mulf %86, %87 : vector<8x8x8xf32>
    %89 = arith.addf %88, %83 : vector<8x8x8xf32>
    %cst_31 = arith.constant dense<0xFF800000> : vector<8x8xf32>
    %90 = vector.multi_reduction <maximumf>, %89, %cst_31 [2] : vector<8x8x8xf32> to vector<8x8xf32>
    %91 = vector.shape_cast %90 : vector<8x8xf32> to vector<8x8x1xf32>
    %92 = vector.broadcast %91 : vector<8x8x1xf32> to vector<8x8x8xf32>
    %93 = arith.subf %89, %92 : vector<8x8x8xf32>
    %94 = math.exp %93 : vector<8x8x8xf32>
    %cst_32 = arith.constant dense<0.000000e+00> : vector<8x8xf32>
    %95 = vector.multi_reduction <add>, %94, %cst_32 [2] : vector<8x8x8xf32> to vector<8x8xf32>
    %96 = vector.shape_cast %95 : vector<8x8xf32> to vector<8x8x1xf32>
    %97 = tpu.reciprocal %96 {approx = true} : vector<8x8x1xf32> -> vector<8x8x1xf32>
    %98 = vector.broadcast %97 : vector<8x8x1xf32> to vector<8x8x8xf32>
    %99 = arith.mulf %94, %98 : vector<8x8x8xf32>
    %100 = vector.extract_strided_slice %36 {offsets = [0, 0, 16], sizes = [8, 8, 8], strides = [1, 1, 1]} : vector<8x8x32xf32> to vector<8x8x8xf32>
    "tpu.trace_start"() <{level = 10 : i32, message = "bqk,bkd->bqd"}> : () -> ()
    %cst_33 = arith.constant dense<0.000000e+00> : vector<8x8x8xf32>
    %101 = tpu.matmul %99, %100, %cst_33 {dimension_numbers = #tpu.dot_dimension_numbers<[2], [1], [1], [2], [0, 0, 0, 1, 1, 2], [0], [0]>} : vector<8x8x8xf32>, vector<8x8x8xf32>, vector<8x8x8xf32> -> vector<8x8x8xf32>
    "tpu.trace_stop"() : () -> ()
    %102 = vector.shape_cast %101 : vector<8x8x8xf32> to vector<64x8xf32>
    %c0_34 = arith.constant 0 : index
    %c16 = arith.constant 16 : index
    %103 = vector.load %arg16[%c0_34, %c16] : memref<64x32xf32, #tpu.memory_space<vmem>>, vector<64x8xf32>
    tpu.vector_store %arg16[%c0_34, %c16], %102 {strides = array<i32>} : memref<64x32xf32, #tpu.memory_space<vmem>>, vector<64x8xf32>,
    %104 = vector.extract_strided_slice %37 {offsets = [0, 24], sizes = [64, 8], strides = [1, 1]} : vector<64x32xf32> to vector<64x8xf32>
    %105 = vector.shape_cast %104 : vector<64x8xf32> to vector<8x8x8xf32>
    %106 = vector.extract_strided_slice %32 {offsets = [0, 0, 24], sizes = [8, 8, 8], strides = [1, 1, 1]} : vector<8x8x32xf32> to vector<8x8x8xf32>
    %107 = vector.extract_strided_slice %34 {offsets = [0, 0, 24], sizes = [8, 8, 8], strides = [1, 1, 1]} : vector<8x8x32xf32> to vector<8x8x8xf32>
    "tpu.trace_start"() <{level = 10 : i32, message = "bqd,bkd->bqk"}> : () -> ()
    %cst_35 = arith.constant dense<0.000000e+00> : vector<8x8x8xf32>
    %108 = tpu.matmul %106, %107, %cst_35 {dimension_numbers = #tpu.dot_dimension_numbers<[2], [2], [1], [1], [0, 0, 0, 1, 1, 1], [0], [0]>} : vector<8x8x8xf32>, vector<8x8x8xf32>, vector<8x8x8xf32> -> vector<8x8x8xf32>
    "tpu.trace_stop"() : () -> ()
    %cst_36 = arith.constant 0.353553385 : f32
    %109 = vector.broadcast %cst_36 : f32 to vector<8x8x8xf32>
    %110 = arith.mulf %108, %109 : vector<8x8x8xf32>
    %111 = arith.addf %110, %105 : vector<8x8x8xf32>
    %cst_37 = arith.constant dense<0xFF800000> : vector<8x8xf32>
    %112 = vector.multi_reduction <maximumf>, %111, %cst_37 [2] : vector<8x8x8xf32> to vector<8x8xf32>
    %113 = vector.shape_cast %112 : vector<8x8xf32> to vector<8x8x1xf32>
    %114 = vector.broadcast %113 : vector<8x8x1xf32> to vector<8x8x8xf32>
    %115 = arith.subf %111, %114 : vector<8x8x8xf32>
    %116 = math.exp %115 : vector<8x8x8xf32>
    %cst_38 = arith.constant dense<0.000000e+00> : vector<8x8xf32>
    %117 = vector.multi_reduction <add>, %116, %cst_38 [2] : vector<8x8x8xf32> to vector<8x8xf32>
    %118 = vector.shape_cast %117 : vector<8x8xf32> to vector<8x8x1xf32>
    %119 = tpu.reciprocal %118 {approx = true} : vector<8x8x1xf32> -> vector<8x8x1xf32>
    %120 = vector.broadcast %119 : vector<8x8x1xf32> to vector<8x8x8xf32>
    %121 = arith.mulf %116, %120 : vector<8x8x8xf32>
    %122 = vector.extract_strided_slice %36 {offsets = [0, 0, 24], sizes = [8, 8, 8], strides = [1, 1, 1]} : vector<8x8x32xf32> to vector<8x8x8xf32>
    "tpu.trace_start"() <{level = 10 : i32, message = "bqk,bkd->bqd"}> : () -> ()
    %cst_39 = arith.constant dense<0.000000e+00> : vector<8x8x8xf32>
    %123 = tpu.matmul %121, %122, %cst_39 {dimension_numbers = #tpu.dot_dimension_numbers<[2], [1], [1], [2], [0, 0, 0, 1, 1, 2], [0], [0]>} : vector<8x8x8xf32>, vector<8x8x8xf32>, vector<8x8x8xf32> -> vector<8x8x8xf32>
    "tpu.trace_stop"() : () -> ()
    %124 = vector.shape_cast %123 : vector<8x8x8xf32> to vector<64x8xf32>
    %c0_40 = arith.constant 0 : index
    %c24 = arith.constant 24 : index
    %125 = vector.load %arg16[%c0_40, %c24] : memref<64x32xf32, #tpu.memory_space<vmem>>, vector<64x8xf32>
    tpu.vector_store %arg16[%c0_40, %c24], %124 {strides = array<i32>} : memref<64x32xf32, #tpu.memory_space<vmem>>, vector<64x8xf32>,
    %c0_41 = arith.constant 0 : index
    %c0_42 = arith.constant 0 : index
    %126 = vector.load %arg16[%c0_41, %c0_42] : memref<64x32xf32, #tpu.memory_space<vmem>>, vector<64x32xf32>
    %127 = arith.truncf %126 : vector<64x32xf32> to vector<64x32xbf16>
    %c0_43 = arith.constant 0 : index
    %c0_44 = arith.constant 0 : index
    %128 = vector.load %arg7[%c0_43, %c0_44] : memref<32x32xbf16, #tpu.memory_space<vmem>>, vector<32x32xbf16>
    %cst_45 = arith.constant dense<0.000000e+00> : vector<64x32xf32>
    %129 = tpu.matmul %127, %128, %cst_45 {dimension_numbers = #tpu.dot_dimension_numbers<[1], [0], [0], [1], [0, 0, 1, 1], [], []>} : vector<64x32xbf16>, vector<32x32xbf16>, vector<64x32xf32> -> vector<64x32xf32>
    %c0_46 = arith.constant 0 : index
    %c0_47 = arith.constant 0 : index
    %130 = vector.load %arg8[%c0_46, %c0_47] : memref<1x32xf32, #tpu.memory_space<vmem>>, vector<1x32xf32>
    %131 = vector.broadcast %130 : vector<1x32xf32> to vector<64x32xf32>
    %132 = arith.addf %129, %131 : vector<64x32xf32>
    %133 = arith.addf %0, %132 : vector<64x32xf32>
    %c0_48 = arith.constant 0 : index
    %c0_49 = arith.constant 0 : index
    %134 = vector.load %arg9[%c0_48, %c0_49] : memref<1x32xf32, #tpu.memory_space<vmem>>, vector<1x32xf32>
    %c0_50 = arith.constant 0 : index
    %c0_51 = arith.constant 0 : index
    %135 = vector.load %arg10[%c0_50, %c0_51] : memref<1x32xf32, #tpu.memory_space<vmem>>, vector<1x32xf32>
    %cst_52 = arith.constant dense<0.000000e+00> : vector<64xf32>
    %136 = vector.multi_reduction <add>, %133, %cst_52 [1] : vector<64x32xf32> to vector<64xf32>
    %137 = vector.shape_cast %136 : vector<64xf32> to vector<64x1xf32>
    %cst_53 = arith.constant 3.200000e+01 : f32
    %138 = vector.broadcast %cst_53 : f32 to vector<64x1xf32>
    %139 = arith.divf %137, %138 : vector<64x1xf32>
    %140 = vector.broadcast %139 : vector<64x1xf32> to vector<64x32xf32>
    %141 = arith.subf %133, %140 : vector<64x32xf32>
    %142 = arith.mulf %141, %141 : vector<64x32xf32>
    %cst_54 = arith.constant dense<0.000000e+00> : vector<64xf32>
    %143 = vector.multi_reduction <add>, %142, %cst_54 [1] : vector<64x32xf32> to vector<64xf32>
    %144 = vector.shape_cast %143 : vector<64xf32> to vector<64x1xf32>
    %cst_55 = arith.constant 3.200000e+01 : f32
    %145 = vector.broadcast %cst_55 : f32 to vector<64x1xf32>
    %146 = arith.divf %144, %145 : vector<64x1xf32>
    %147 = vector.broadcast %139 : vector<64x1xf32> to vector<64x32xf32>
    %148 = arith.subf %133, %147 : vector<64x32xf32>
    %cst_56 = arith.constant 9.99999974E-6 : f32
    %149 = vector.broadcast %cst_56 : f32 to vector<64x1xf32>
    %150 = arith.addf %146, %149 : vector<64x1xf32>
    %151 = math.rsqrt %150 : vector<64x1xf32>
    %152 = vector.broadcast %151 : vector<64x1xf32> to vector<64x32xf32>
    %153 = arith.mulf %148, %152 : vector<64x32xf32>
    %154 = vector.broadcast %134 : vector<1x32xf32> to vector<64x32xf32>
    %155 = arith.mulf %153, %154 : vector<64x32xf32>
    %156 = vector.broadcast %135 : vector<1x32xf32> to vector<64x32xf32>
    %157 = arith.addf %155, %156 : vector<64x32xf32>
    %158 = arith.truncf %157 : vector<64x32xf32> to vector<64x32xbf16>
    %c0_57 = arith.constant 0 : index
    %c0_58 = arith.constant 0 : index
    %159 = vector.load %arg11[%c0_57, %c0_58] : memref<32x128xbf16, #tpu.memory_space<vmem>>, vector<32x128xbf16>
    %cst_59 = arith.constant dense<0.000000e+00> : vector<64x128xf32>
    %160 = tpu.matmul %158, %159, %cst_59 {dimension_numbers = #tpu.dot_dimension_numbers<[1], [0], [0], [1], [0, 0, 1, 1], [], []>} : vector<64x32xbf16>, vector<32x128xbf16>, vector<64x128xf32> -> vector<64x128xf32>
    %c0_60 = arith.constant 0 : index
    %c0_61 = arith.constant 0 : index
    %161 = vector.load %arg12[%c0_60, %c0_61] : memref<1x128xf32, #tpu.memory_space<vmem>>, vector<1x128xf32>
    %162 = vector.broadcast %161 : vector<1x128xf32> to vector<64x128xf32>
    %163 = arith.addf %160, %162 : vector<64x128xf32>
    %cst_62 = arith.constant 5.000000e-01 : f32
    %164 = vector.broadcast %cst_62 : f32 to vector<64x128xf32>
    %165 = arith.mulf %164, %163 : vector<64x128xf32>
    %cst_63 = arith.constant 0.707106769 : f32
    %166 = vector.broadcast %cst_63 : f32 to vector<64x128xf32>
    %167 = arith.mulf %163, %166 : vector<64x128xf32>
    %cst_64 = arith.constant 0.000000e+00 : f32
    %168 = vector.broadcast %cst_64 : f32 to vector<64x128xf32>
    %169 = arith.cmpf oge, %167, %168 : vector<64x128xf32>
    %cst_65 = arith.constant 1.000000e+00 : f32
    %cst_66 = arith.constant -1.000000e+00 : f32
    %170 = vector.broadcast %cst_65 : f32 to vector<64x128xf32>
    %171 = vector.broadcast %cst_66 : f32 to vector<64x128xf32>
    %172 = arith.select %169, %170, %171 : vector<64x128xi1>, vector<64x128xf32>
    %173 = math.absf %167 : vector<64x128xf32>
    %cst_67 = arith.constant 0.327591091 : f32
    %174 = vector.broadcast %cst_67 : f32 to vector<64x128xf32>
    %175 = arith.mulf %174, %173 : vector<64x128xf32>
    %cst_68 = arith.constant 1.000000e+00 : f32
    %176 = vector.broadcast %cst_68 : f32 to vector<64x128xf32>
    %177 = arith.addf %176, %175 : vector<64x128xf32>
    %cst_69 = arith.constant 1.000000e+00 : f32
    %178 = vector.broadcast %cst_69 : f32 to vector<64x128xf32>
    %179 = arith.divf %178, %177 : vector<64x128xf32>
    %cst_70 = arith.constant 1.06140542 : f32
    %180 = vector.broadcast %cst_70 : f32 to vector<64x128xf32>
    %181 = arith.mulf %180, %179 : vector<64x128xf32>
    %cst_71 = arith.constant -1.45315206 : f32
    %182 = vector.broadcast %cst_71 : f32 to vector<64x128xf32>
    %183 = arith.addf %181, %182 : vector<64x128xf32>
    %184 = arith.mulf %183, %179 : vector<64x128xf32>
    %cst_72 = arith.constant 1.42141378 : f32
    %185 = vector.broadcast %cst_72 : f32 to vector<64x128xf32>
    %186 = arith.addf %184, %185 : vector<64x128xf32>
    %187 = arith.mulf %186, %179 : vector<64x128xf32>
    %cst_73 = arith.constant -0.284496725 : f32
    %188 = vector.broadcast %cst_73 : f32 to vector<64x128xf32>
    %189 = arith.addf %187, %188 : vector<64x128xf32>
    %190 = arith.mulf %189, %179 : vector<64x128xf32>
    %cst_74 = arith.constant 0.254829586 : f32
    %191 = vector.broadcast %cst_74 : f32 to vector<64x128xf32>
    %192 = arith.addf %190, %191 : vector<64x128xf32>
    %193 = arith.mulf %192, %179 : vector<64x128xf32>
    %cst_75 = arith.constant 0.000000e+00 : f32
    %194 = vector.broadcast %cst_75 : f32 to vector<64x128xf32>
    %195 = arith.subf %194, %173 : vector<64x128xf32>
    %196 = arith.mulf %195, %173 : vector<64x128xf32>
    %197 = math.exp %196 : vector<64x128xf32>
    %198 = arith.mulf %193, %197 : vector<64x128xf32>
    %cst_76 = arith.constant 1.000000e+00 : f32
    %199 = vector.broadcast %cst_76 : f32 to vector<64x128xf32>
    %200 = arith.subf %199, %198 : vector<64x128xf32>
    %201 = arith.mulf %172, %200 : vector<64x128xf32>
    %cst_77 = arith.constant 1.000000e+00 : f32
    %202 = vector.broadcast %cst_77 : f32 to vector<64x128xf32>
    %203 = arith.addf %202, %201 : vector<64x128xf32>
    %204 = arith.mulf %165, %203 : vector<64x128xf32>
    %205 = arith.truncf %204 : vector<64x128xf32> to vector<64x128xbf16>
    %c0_78 = arith.constant 0 : index
    %c0_79 = arith.constant 0 : index
    %206 = vector.load %arg13[%c0_78, %c0_79] : memref<128x32xbf16, #tpu.memory_space<vmem>>, vector<128x32xbf16>
    %cst_80 = arith.constant dense<0.000000e+00> : vector<64x32xf32>
    %207 = tpu.matmul %205, %206, %cst_80 {dimension_numbers = #tpu.dot_dimension_numbers<[1], [0], [0], [1], [0, 0, 1, 1], [], []>} : vector<64x128xbf16>, vector<128x32xbf16>, vector<64x32xf32> -> vector<64x32xf32>
    %c0_81 = arith.constant 0 : index
    %c0_82 = arith.constant 0 : index
    %208 = vector.load %arg14[%c0_81, %c0_82] : memref<1x32xf32, #tpu.memory_space<vmem>>, vector<1x32xf32>
    %209 = vector.broadcast %208 : vector<1x32xf32> to vector<64x32xf32>
    %210 = arith.addf %207, %209 : vector<64x32xf32>
    %211 = arith.addf %133, %210 : vector<64x32xf32>
    %c0_83 = arith.constant 0 : index
    %c0_84 = arith.constant 0 : index
    %212 = vector.load %arg15[%c0_83, %c0_84] : memref<64x32xf32, #tpu.memory_space<vmem>>, vector<64x32xf32>
    tpu.vector_store %arg15[%c0_83, %c0_84], %211 {strides = array<i32>} : memref<64x32xf32, #tpu.memory_space<vmem>>, vector<64x32xf32>,
    return
  }
  func.func @transform_0(%arg0: i32) -> (i32, i32) {
    %c0_i32 = arith.constant 0 : i32
    %c0_i32_0 = arith.constant 0 : i32
    return %arg0, %c0_i32 : i32, i32
  }
  func.func @transform_1(%arg0: i32) -> (i32, i32) {
    %c0_i32 = arith.constant 0 : i32
    %c0_i32_0 = arith.constant 0 : i32
    return %arg0, %c0_i32 : i32, i32
  }
  func.func @transform_2(%arg0: i32) -> (i32, i32) {
    %c0_i32 = arith.constant 0 : i32
    %c0_i32_0 = arith.constant 0 : i32
    %c0_i32_1 = arith.constant 0 : i32
    return %c0_i32, %c0_i32_0 : i32, i32
  }
  func.func @transform_3(%arg0: i32) -> (i32, i32) {
    %c0_i32 = arith.constant 0 : i32
    %c0_i32_0 = arith.constant 0 : i32
    %c0_i32_1 = arith.constant 0 : i32
    return %c0_i32, %c0_i32_0 : i32, i32
  }
  func.func @transform_4(%arg0: i32) -> (i32, i32) {
    %c0_i32 = arith.constant 0 : i32
    %c0_i32_0 = arith.constant 0 : i32
    %c0_i32_1 = arith.constant 0 : i32
    return %c0_i32, %c0_i32_0 : i32, i32
  }
  func.func @transform_5(%arg0: i32) -> (i32, i32) {
    %c0_i32 = arith.constant 0 : i32
    %c0_i32_0 = arith.constant 0 : i32
    %c0_i32_1 = arith.constant 0 : i32
    return %c0_i32, %c0_i32_0 : i32, i32
  }
  func.func @transform_6(%arg0: i32) -> (i32, i32) {
    %c0_i32 = arith.constant 0 : i32
    %c0_i32_0 = arith.constant 0 : i32
    %c0_i32_1 = arith.constant 0 : i32
    return %c0_i32, %c0_i32_0 : i32, i32
  }
  func.func @transform_7(%arg0: i32) -> (i32, i32) {
    %c0_i32 = arith.constant 0 : i32
    %c0_i32_0 = arith.constant 0 : i32
    %c0_i32_1 = arith.constant 0 : i32
    return %c0_i32, %c0_i32_0 : i32, i32
  }
  func.func @transform_8(%arg0: i32) -> (i32, i32) {
    %c0_i32 = arith.constant 0 : i32
    %c0_i32_0 = arith.constant 0 : i32
    %c0_i32_1 = arith.constant 0 : i32
    return %c0_i32, %c0_i32_0 : i32, i32
  }
  func.func @transform_9(%arg0: i32) -> (i32, i32) {
    %c0_i32 = arith.constant 0 : i32
    %c0_i32_0 = arith.constant 0 : i32
    %c0_i32_1 = arith.constant 0 : i32
    return %c0_i32, %c0_i32_0 : i32, i32
  }
  func.func @transform_10(%arg0: i32) -> (i32, i32) {
    %c0_i32 = arith.constant 0 : i32
    %c0_i32_0 = arith.constant 0 : i32
    %c0_i32_1 = arith.constant 0 : i32
    return %c0_i32, %c0_i32_0 : i32, i32
  }
  func.func @transform_11(%arg0: i32) -> (i32, i32) {
    %c0_i32 = arith.constant 0 : i32
    %c0_i32_0 = arith.constant 0 : i32
    %c0_i32_1 = arith.constant 0 : i32
    return %c0_i32, %c0_i32_0 : i32, i32
  }
  func.func @transform_12(%arg0: i32) -> (i32, i32) {
    %c0_i32 = arith.constant 0 : i32
    %c0_i32_0 = arith.constant 0 : i32
    %c0_i32_1 = arith.constant 0 : i32
    return %c0_i32, %c0_i32_0 : i32, i32
  }
  func.func @transform_13(%arg0: i32) -> (i32, i32) {
    %c0_i32 = arith.constant 0 : i32
    %c0_i32_0 = arith.constant 0 : i32
    %c0_i32_1 = arith.constant 0 : i32
    return %c0_i32, %c0_i32_0 : i32, i32
  }
  func.func @transform_14(%arg0: i32) -> (i32, i32) {
    %c0_i32 = arith.constant 0 : i32
    %c0_i32_0 = arith.constant 0 : i32
    return %arg0, %c0_i32 : i32, i32
  }
}

</mosaic_0001>

<llo_original>
// kernel: _device_forward.1
$region0: #{_device_forward.1}
  #allocation0 [shape = 'u32[]', space=smem, size = 0x4, offset = 0x4, fixed_abs, tag = 'smem constant byte address 0x4 - core index']
  #allocation1 [shape = 'u32[144,128]{1,0:T(1,128)}', space=vmem, size = 0x12000, scoped, tag = 'internal scratch']
  #allocation2 [shape = 'f32[64,32]{1,0:T(8,128)}', space=vmem, size = 0x8000, scoped, tag = 'scratch operand']
  %s0 = inlined_call_operand.hbm [shape: f32[64,32], index: 0, kind: input, shape index: {}]
  %s1 = inlined_call_operand.hbm [shape: f32[64,32], index: 1, kind: input, shape index: {}]
  %s2 = inlined_call_operand.hbm [shape: f32[1,32], index: 2, kind: input, shape index: {}]
  %s3 = inlined_call_operand.hbm [shape: f32[1,32], index: 3, kind: input, shape index: {}]
  %s4 = inlined_call_operand.hbm [shape: bf16[32,96], index: 4, kind: input, shape index: {}]
  %s5 = inlined_call_operand.hbm [shape: f32[1,96], index: 5, kind: input, shape index: {}]
  %s6 = inlined_call_operand.hbm [shape: bf16[32,32], index: 6, kind: input, shape index: {}]
  %s7 = inlined_call_operand.hbm [shape: f32[1,32], index: 7, kind: input, shape index: {}]
  %s8 = inlined_call_operand.hbm [shape: f32[1,32], index: 8, kind: input, shape index: {}]
  %s9 = inlined_call_operand.hbm [shape: f32[1,32], index: 9, kind: input, shape index: {}]
  %s10 = inlined_call_operand.hbm [shape: bf16[32,128], index: 10, kind: input, shape index: {}]
  %s11 = inlined_call_operand.hbm [shape: f32[1,128], index: 11, kind: input, shape index: {}]
  %s12 = inlined_call_operand.hbm [shape: bf16[128,32], index: 12, kind: input, shape index: {}]
  %s13 = inlined_call_operand.hbm [shape: f32[1,32], index: 13, kind: input, shape index: {}]
  %s14 = inlined_call_operand.hbm [shape: f32[64,32], index: 14, kind: output, shape index: {}]
  %s15 = sld [smem:[#allocation0]]
  $region122: #{_device_forward.1} parent=0
    _
  %s17 = ssub.s32 1, %s15
  %s18 = scalar_select 0, %s17, %s15
  $region1: #{_device_forward.1} parent=0
    #allocation3 [shape = 'u8[32768]{0}', space=vmem, size = 0x8000, scoped, tag = 'input window, operand 0, single buffered']
    #allocation4 [shape = 's32[1]{0}', space=sflag, size = 0x4, scoped, tag = 'scoped memory for _device_forward.1']
    #allocation5 [shape = 's32[1]{0}', space=sflag, size = 0x4, scoped, tag = 'scoped memory for _device_forward.1']
    #allocation6 [shape = 'u8[32768]{0}', space=vmem, size = 0x8000, scoped, tag = 'input window, operand 1, single buffered']
    #allocation7 [shape = 's32[1]{0}', space=sflag, size = 0x4, scoped, tag = 'scoped memory for _device_forward.1']
    #allocation8 [shape = 'u8[512]{0}', space=vmem, size = 0x400, scoped, tag = 'input window, operand 2, single buffered']
    #allocation9 [shape = 'u8[512]{0}', space=vmem, size = 0x400, scoped, tag = 'input window, operand 3, single buffered']
    #allocation10 [shape = 's32[1]{0}', space=sflag, size = 0x4, scoped, tag = 'scoped memory for _device_forward.1']
    #allocation11 [shape = 'u8[8192]{0}', space=vmem, size = 0x2000, scoped, tag = 'input window, operand 4, single buffered']
    #allocation12 [shape = 'u8[512]{0}', space=vmem, size = 0x400, scoped, tag = 'input window, operand 5, single buffered']
    #allocation13 [shape = 's32[1]{0}', space=sflag, size = 0x4, scoped, tag = 'scoped memory for _device_forward.1']
    #allocation14 [shape = 'u8[8192]{0}', space=vmem, size = 0x2000, scoped, tag = 'input window, operand 6, single buffered']
    #allocation15 [shape = 'u8[512]{0}', space=vmem, size = 0x400, scoped, tag = 'input window, operand 7, single buffered']
    #allocation16 [shape = 's32[1]{0}', space=sflag, size = 0x4, scoped, tag = 'scoped memory for _device_forward.1']
    #allocation17 [shape = 'u8[512]{0}', space=vmem, size = 0x400, scoped, tag = 'input window, operand 8, single buffered']
    #allocation18 [shape = 'u8[512]{0}', space=vmem, size = 0x400, scoped, tag = 'input window, operand 9, single buffered']
    #allocation19 [shape = 's32[1]{0}', space=sflag, size = 0x4, scoped, tag = 'scoped memory for _device_forward.1']
    #allocation20 [shape = 'u8[8192]{0}', space=vmem, size = 0x2000, scoped, tag = 'input window, operand 10, single buffered']
    #allocation21 [shape = 'u8[512]{0}', space=vmem, size = 0x400, scoped, tag = 'input window, operand 11, single buffered']
    #allocation22 [shape = 's32[1]{0}', space=sflag, size = 0x4, scoped, tag = 'scoped memory for _device_forward.1']
    #allocation23 [shape = 'u8[32768]{0}', space=vmem, size = 0x8000, scoped, tag = 'input window, operand 12, single buffered']
    #allocation24 [shape = 'u8[512]{0}', space=vmem, size = 0x400, scoped, tag = 'input window, operand 13, single buffered']
    #allocation25 [shape = 's32[1]{0}', space=sflag, size = 0x4, scoped, tag = 'scoped memory for _device_forward.1']
    #allocation26 [shape = 'u8[32768]{0}', space=vmem, size = 0x8000, scoped, tag = 'output window, operand 0, single buffered']
    %19 = vsyncpa [#allocation4], 0
    %20 = vsyncpa [#allocation7], 0
    %21 = vsyncpa [#allocation10], 0
    %22 = vsyncpa [#allocation13], 0
    %23 = vsyncpa [#allocation16], 0
    %24 = vsyncpa [#allocation19], 0
    %25 = vsyncpa [#allocation22], 0
    %26 = vsyncpa [#allocation25], 0
    %27 = vsyncpa [#allocation5], 0
    // Predicated region
    $region2: #{_device_forward.1} parent=1 // pred_check
      _
    $region3: #{_device_forward.1} parent=1 // pred_check_branch
      %29 = sbr.rel (0) target = $region5
    $region4: #{_device_forward.1} parent=1 // pred_region
      %s31 = ssub.s32 1024, 1024
      %32 = vsyncadd [#allocation4], %s31
      %s33 = sshll.u32 [#allocation3], 4
      %s34 = int_to_ptr.vmem [resolvable:$true] %s33
      %39 = dma.hbm_to_vmem [thread:$0]  %s0, 1024, %s34, [#allocation4], 128, 128, 8
    $region5: #{_device_forward.1} parent=1 // pred_fallthru
      _
    // Predicated region
    $region6: #{_device_forward.1} parent=1 // pred_check
      _
    $region7: #{_device_forward.1} parent=1 // pred_check_branch
      %41 = sbr.rel (0) target = $region9
    $region8: #{_device_forward.1} parent=1 // pred_region
      %s43 = ssub.s32 1024, 1024
      %44 = vsyncadd [#allocation7], %s43
      %s45 = sshll.u32 [#allocation6], 4
      %s46 = int_to_ptr.vmem [resolvable:$true] %s45
      %51 = dma.hbm_to_vmem [thread:$0]  %s1, 1024, %s46, [#allocation7], 128, 128, 8
    $region9: #{_device_forward.1} parent=1 // pred_fallthru
      _
    // Predicated region
    $region10: #{_device_forward.1} parent=1 // pred_check
      _
    $region11: #{_device_forward.1} parent=1 // pred_check_branch
      %53 = sbr.rel (0) target = $region13
    $region12: #{_device_forward.1} parent=1 // pred_region
      %s55 = ssub.s32 16, 16
      %56 = vsyncadd [#allocation7], %s55
      %s58 = sshll.u32 [#allocation8], 4
      %s59 = int_to_ptr.vmem [resolvable:$true] %s58
      %61 = dma.hbm_to_vmem [thread:$0]  %s2, 16, %s59, [#allocation7]
    $region13: #{_device_forward.1} parent=1 // pred_fallthru
      _
    // Predicated region
    $region14: #{_device_forward.1} parent=1 // pred_check
      _
    $region15: #{_device_forward.1} parent=1 // pred_check_branch
      %63 = sbr.rel (0) target = $region17
    $region16: #{_device_forward.1} parent=1 // pred_region
      %s65 = ssub.s32 16, 16
      %66 = vsyncadd [#allocation10], %s65
      %s68 = sshll.u32 [#allocation9], 4
      %s69 = int_to_ptr.vmem [resolvable:$true] %s68
      %71 = dma.hbm_to_vmem [thread:$0]  %s3, 16, %s69, [#allocation10]
    $region17: #{_device_forward.1} parent=1 // pred_fallthru
      _
    // Predicated region
    $region18: #{_device_forward.1} parent=1 // pred_check
      _
    $region19: #{_device_forward.1} parent=1 // pred_check_branch
      %73 = sbr.rel (0) target = $region21
    $region20: #{_device_forward.1} parent=1 // pred_region
      %s75 = ssub.s32 256, 256
      %76 = vsyncadd [#allocation10], %s75
      %s77 = sshll.u32 [#allocation11], 4
      %s78 = int_to_ptr.vmem [resolvable:$true] %s77
      %83 = dma.hbm_to_vmem [thread:$0]  %s4, 256, %s78, [#allocation10], 64, 64, 4
    $region21: #{_device_forward.1} parent=1 // pred_fallthru
      _
    // Predicated region
    $region22: #{_device_forward.1} parent=1 // pred_check
      _
    $region23: #{_device_forward.1} parent=1 // pred_check_branch
      %85 = sbr.rel (0) target = $region25
    $region24: #{_device_forward.1} parent=1 // pred_region
      %s87 = ssub.s32 16, 16
      %88 = vsyncadd [#allocation13], %s87
      %s90 = sshll.u32 [#allocation12], 4
      %s91 = int_to_ptr.vmem [resolvable:$true] %s90
      %93 = dma.hbm_to_vmem [thread:$0]  %s5, 16, %s91, [#allocation13]
    $region25: #{_device_forward.1} parent=1 // pred_fallthru
      _
    // Predicated region
    $region26: #{_device_forward.1} parent=1 // pred_check
      _
    $region27: #{_device_forward.1} parent=1 // pred_check_branch
      %95 = sbr.rel (0) target = $region29
    $region28: #{_device_forward.1} parent=1 // pred_region
      %s97 = ssub.s32 256, 256
      %98 = vsyncadd [#allocation13], %s97
      %s99 = sshll.u32 [#allocation14], 4
      %s100 = int_to_ptr.vmem [resolvable:$true] %s99
      %105 = dma.hbm_to_vmem [thread:$0]  %s6, 256, %s100, [#allocation13], 64, 64, 4
    $region29: #{_device_forward.1} parent=1 // pred_fallthru
      _
    // Predicated region
    $region30: #{_device_forward.1} parent=1 // pred_check
      _
    $region31: #{_device_forward.1} parent=1 // pred_check_branch
      %107 = sbr.rel (0) target = $region33
    $region32: #{_device_forward.1} parent=1 // pred_region
      %s109 = ssub.s32 16, 16
      %110 = vsyncadd [#allocation16], %s109
      %s112 = sshll.u32 [#allocation15], 4
      %s113 = int_to_ptr.vmem [resolvable:$true] %s112
      %115 = dma.hbm_to_vmem [thread:$0]  %s7, 16, %s113, [#allocation16]
    $region33: #{_device_forward.1} parent=1 // pred_fallthru
      _
    // Predicated region
    $region34: #{_device_forward.1} parent=1 // pred_check
      _
    $region35: #{_device_forward.1} parent=1 // pred_check_branch
      %117 = sbr.rel (0) target = $region37
    $region36: #{_device_forward.1} parent=1 // pred_region
      %s119 = ssub.s32 16, 16
      %120 = vsyncadd [#allocation16], %s119
      %s122 = sshll.u32 [#allocation17], 4
      %s123 = int_to_ptr.vmem [resolvable:$true] %s122
      %125 = dma.hbm_to_vmem [thread:$0]  %s8, 16, %s123, [#allocation16]
    $region37: #{_device_forward.1} parent=1 // pred_fallthru
      _
    // Predicated region
    $region38: #{_device_forward.1} parent=1 // pred_check
      _
    $region39: #{_device_forward.1} parent=1 // pred_check_branch
      %127 = sbr.rel (0) target = $region41
    $region40: #{_device_forward.1} parent=1 // pred_region
      %s129 = ssub.s32 16, 16
      %130 = vsyncadd [#allocation19], %s129
      %s132 = sshll.u32 [#allocation18], 4
      %s133 = int_to_ptr.vmem [resolvable:$true] %s132
      %135 = dma.hbm_to_vmem [thread:$0]  %s9, 16, %s133, [#allocation19]
    $region41: #{_device_forward.1} parent=1 // pred_fallthru
      _
    // Predicated region
    $region42: #{_device_forward.1} parent=1 // pred_check
      _
    $region43: #{_device_forward.1} parent=1 // pred_check_branch
      %137 = sbr.rel (0) target = $region45
    $region44: #{_device_forward.1} parent=1 // pred_region
      %s139 = ssub.s32 256, 256
      %140 = vsyncadd [#allocation19], %s139
      %s141 = sshll.u32 [#allocation20], 4
      %s142 = int_to_ptr.vmem [resolvable:$true] %s141
      %147 = dma.hbm_to_vmem [thread:$0]  %s10, 256, %s142, [#allocation19], 64, 64, 4
    $region45: #{_device_forward.1} parent=1 // pred_fallthru
      _
    // Predicated region
    $region46: #{_device_forward.1} parent=1 // pred_check
      _
    $region47: #{_device_forward.1} parent=1 // pred_check_branch
      %149 = sbr.rel (0) target = $region49
    $region48: #{_device_forward.1} parent=1 // pred_region
      %s151 = ssub.s32 16, 16
      %152 = vsyncadd [#allocation22], %s151
      %s154 = sshll.u32 [#allocation21], 4
      %s155 = int_to_ptr.vmem [resolvable:$true] %s154
      %157 = dma.hbm_to_vmem [thread:$0]  %s11, 16, %s155, [#allocation22]
    $region49: #{_device_forward.1} parent=1 // pred_fallthru
      _
    // Predicated region
    $region50: #{_device_forward.1} parent=1 // pred_check
      _
    $region51: #{_device_forward.1} parent=1 // pred_check_branch
      %159 = sbr.rel (0) target = $region53
    $region52: #{_device_forward.1} parent=1 // pred_region
      %s161 = ssub.s32 1024, 1024
      %162 = vsyncadd [#allocation22], %s161
      %s163 = sshll.u32 [#allocation23], 4
      %s164 = int_to_ptr.vmem [resolvable:$true] %s163
      %169 = dma.hbm_to_vmem [thread:$0]  %s12, 1024, %s164, [#allocation22], 64, 64, 4
    $region53: #{_device_forward.1} parent=1 // pred_fallthru
      _
    // Predicated region
    $region54: #{_device_forward.1} parent=1 // pred_check
      _
    $region55: #{_device_forward.1} parent=1 // pred_check_branch
      %171 = sbr.rel (0) target = $region57
    $region56: #{_device_forward.1} parent=1 // pred_region
      %s173 = ssub.s32 16, 16
      %174 = vsyncadd [#allocation25], %s173
      %s176 = sshll.u32 [#allocation24], 4
      %s177 = int_to_ptr.vmem [resolvable:$true] %s176
      %179 = dma.hbm_to_vmem [thread:$0]  %s13, 16, %s177, [#allocation25]
    $region57: #{_device_forward.1} parent=1 // pred_fallthru
      _
    // Predicated region
    $region58: #{_device_forward.1} parent=1 // pred_check
      _
    $region59: #{_device_forward.1} parent=1 // pred_check_branch
      %181 = sbr.rel (0) target = $region61
    $region60: #{_device_forward.1} parent=1 // pred_region
      %182 = dma.done [#allocation4], 1024
    $region61: #{_device_forward.1} parent=1 // pred_fallthru
      _
    // Predicated region
    $region62: #{_device_forward.1} parent=1 // pred_check
      _
    $region63: #{_device_forward.1} parent=1 // pred_check_branch
      %184 = sbr.rel (0) target = $region65
    $region64: #{_device_forward.1} parent=1 // pred_region
      %185 = dma.done [#allocation7], 1024
    $region65: #{_device_forward.1} parent=1 // pred_fallthru
      _
    // Predicated region
    $region66: #{_device_forward.1} parent=1 // pred_check
      _
    $region67: #{_device_forward.1} parent=1 // pred_check_branch
      %187 = sbr.rel (0) target = $region69
    $region68: #{_device_forward.1} parent=1 // pred_region
      %188 = dma.done [#allocation7], 16
    $region69: #{_device_forward.1} parent=1 // pred_fallthru
      _
    // Predicated region
    $region70: #{_device_forward.1} parent=1 // pred_check
      _
    $region71: #{_device_forward.1} parent=1 // pred_check_branch
      %190 = sbr.rel (0) target = $region73
    $region72: #{_device_forward.1} parent=1 // pred_region
      %191 = dma.done [#allocation10], 16
    $region73: #{_device_forward.1} parent=1 // pred_fallthru
      _
    // Predicated region
    $region74: #{_device_forward.1} parent=1 // pred_check
      _
    $region75: #{_device_forward.1} parent=1 // pred_check_branch
      %193 = sbr.rel (0) target = $region77
    $region76: #{_device_forward.1} parent=1 // pred_region
      %194 = dma.done [#allocation10], 256
    $region77: #{_device_forward.1} parent=1 // pred_fallthru
      _
    // Predicated region
    $region78: #{_device_forward.1} parent=1 // pred_check
      _
    $region79: #{_device_forward.1} parent=1 // pred_check_branch
      %196 = sbr.rel (0) target = $region81
    $region80: #{_device_forward.1} parent=1 // pred_region
      %197 = dma.done [#allocation13], 16
    $region81: #{_device_forward.1} parent=1 // pred_fallthru
      _
    // Predicated region
    $region82: #{_device_forward.1} parent=1 // pred_check
      _
    $region83: #{_device_forward.1} parent=1 // pred_check_branch
      %199 = sbr.rel (0) target = $region85
    $region84: #{_device_forward.1} parent=1 // pred_region
      %200 = dma.done [#allocation13], 256
    $region85: #{_device_forward.1} parent=1 // pred_fallthru
      _
    // Predicated region
    $region86: #{_device_forward.1} parent=1 // pred_check
      _
    $region87: #{_device_forward.1} parent=1 // pred_check_branch
      %202 = sbr.rel (0) target = $region89
    $region88: #{_device_forward.1} parent=1 // pred_region
      %203 = dma.done [#allocation16], 16
    $region89: #{_device_forward.1} parent=1 // pred_fallthru
      _
    // Predicated region
    $region90: #{_device_forward.1} parent=1 // pred_check
      _
    $region91: #{_device_forward.1} parent=1 // pred_check_branch
      %205 = sbr.rel (0) target = $region93
    $region92: #{_device_forward.1} parent=1 // pred_region
      %206 = dma.done [#allocation16], 16
    $region93: #{_device_forward.1} parent=1 // pred_fallthru
      _
    // Predicated region
    $region94: #{_device_forward.1} parent=1 // pred_check
      _
    $region95: #{_device_forward.1} parent=1 // pred_check_branch
      %208 = sbr.rel (0) target = $region97
    $region96: #{_device_forward.1} parent=1 // pred_region
      %209 = dma.done [#allocation19], 16
    $region97: #{_device_forward.1} parent=1 // pred_fallthru
      _
    // Predicated region
    $region98: #{_device_forward.1} parent=1 // pred_check
      _
    $region99: #{_device_forward.1} parent=1 // pred_check_branch
      %211 = sbr.rel (0) target = $region101
    $region100: #{_device_forward.1} parent=1 // pred_region
      %212 = dma.done [#allocation19], 256
    $region101: #{_device_forward.1} parent=1 // pred_fallthru
      _
    // Predicated region
    $region102: #{_device_forward.1} parent=1 // pred_check
      _
    $region103: #{_device_forward.1} parent=1 // pred_check_branch
      %214 = sbr.rel (0) target = $region105
    $region104: #{_device_forward.1} parent=1 // pred_region
      %215 = dma.done [#allocation22], 16
    $region105: #{_device_forward.1} parent=1 // pred_fallthru
      _
    // Predicated region
    $region106: #{_device_forward.1} parent=1 // pred_check
      _
    $region107: #{_device_forward.1} parent=1 // pred_check_branch
      %217 = sbr.rel (0) target = $region109
    $region108: #{_device_forward.1} parent=1 // pred_region
      %218 = dma.done [#allocation22], 1024
    $region109: #{_device_forward.1} parent=1 // pred_fallthru
      _
    // Predicated region
    $region110: #{_device_forward.1} parent=1 // pred_check
      _
    $region111: #{_device_forward.1} parent=1 // pred_check_branch
      %220 = sbr.rel (0) target = $region113
    $region112: #{_device_forward.1} parent=1 // pred_region
      %221 = dma.done [#allocation25], 16
    $region113: #{_device_forward.1} parent=1 // pred_fallthru
      _
    %v223 = vld [vmem:[#allocation3] sm:$0xff]
    %v224 = vld [vmem:[#allocation3 + $0x8] sm:$0xff]
    %v225 = vld [vmem:[#allocation3 + $0x10] sm:$0xff]
    %v226 = vld [vmem:[#allocation3 + $0x18] sm:$0xff]
    %v227 = vld [vmem:[#allocation3 + $0x20] sm:$0xff]
    %v228 = vld [vmem:[#allocation3 + $0x28] sm:$0xff]
    %v229 = vld [vmem:[#allocation3 + $0x30] sm:$0xff]
    %v230 = vld [vmem:[#allocation3 + $0x38] sm:$0xff]
    %v231 = vld [vmem:[#allocation8] sm:$0x1]
    %v232 = vld [vmem:[#allocation9] sm:$0x1]
    %vm233 = vcmask 261120
    %v234 = vsel %vm233, %v223, 0.0
    %235 = vadd.xlane.f32.xlu0 %v234
    %v236 = vpop.xlane.xlu0 %235
    %v237 = vsel %vm233, %v224, 0.0
    %238 = vadd.xlane.f32.xlu0 %v237
    %v239 = vpop.xlane.xlu0 %238
    %v240 = vsel %vm233, %v225, 0.0
    %241 = vadd.xlane.f32.xlu0 %v240
    %v242 = vpop.xlane.xlu0 %241
    %v243 = vsel %vm233, %v226, 0.0
    %244 = vadd.xlane.f32.xlu0 %v243
    %v245 = vpop.xlane.xlu0 %244
    %v246 = vsel %vm233, %v227, 0.0
    %247 = vadd.xlane.f32.xlu0 %v246
    %v248 = vpop.xlane.xlu0 %247
    %v249 = vsel %vm233, %v228, 0.0
    %250 = vadd.xlane.f32.xlu0 %v249
    %v251 = vpop.xlane.xlu0 %250
    %v252 = vsel %vm233, %v229, 0.0
    %253 = vadd.xlane.f32.xlu0 %v252
    %v254 = vpop.xlane.xlu0 %253
    %v255 = vsel %vm233, %v230, 0.0
    %256 = vadd.xlane.f32.xlu0 %v255
    %v257 = vpop.xlane.xlu0 %256
    %v258 = vrcp.pop 32.0
    %v259 = vmul.f32 %v236, %v258
    %v260 = vmul.f32 %v239, %v258
    %v261 = vmul.f32 %v242, %v258
    %v262 = vmul.f32 %v245, %v258
    %v263 = vmul.f32 %v248, %v258
    %v264 = vmul.f32 %v251, %v258
    %v265 = vmul.f32 %v254, %v258
    %v266 = vmul.f32 %v257, %v258
    %v267 = vsub.f32 %v223, %v259
    %v268 = vsub.f32 %v224, %v260
    %v269 = vsub.f32 %v225, %v261
    %v270 = vsub.f32 %v226, %v262
    %v271 = vsub.f32 %v227, %v263
    %v272 = vsub.f32 %v228, %v264
    %v273 = vsub.f32 %v229, %v265
    %v274 = vsub.f32 %v230, %v266
    %v275 = vmul.f32 %v267, %v267
    %v276 = vmul.f32 %v268, %v268
    %v277 = vmul.f32 %v269, %v269
    %v278 = vmul.f32 %v270, %v270
    %v279 = vmul.f32 %v271, %v271
    %v280 = vmul.f32 %v272, %v272
    %v281 = vmul.f32 %v273, %v273
    %v282 = vmul.f32 %v274, %v274
    %v283 = vsel %vm233, %v275, 0.0
    %284 = vadd.xlane.f32.xlu0 %v283
    %v285 = vpop.xlane.xlu0 %284
    %v286 = vsel %vm233, %v276, 0.0
    %287 = vadd.xlane.f32.xlu0 %v286
    %v288 = vpop.xlane.xlu0 %287
    %v289 = vsel %vm233, %v277, 0.0
    %290 = vadd.xlane.f32.xlu0 %v289
    %v291 = vpop.xlane.xlu0 %290
    %v292 = vsel %vm233, %v278, 0.0
    %293 = vadd.xlane.f32.xlu0 %v292
    %v294 = vpop.xlane.xlu0 %293
    %v295 = vsel %vm233, %v279, 0.0
    %296 = vadd.xlane.f32.xlu0 %v295
    %v297 = vpop.xlane.xlu0 %296
    %v298 = vsel %vm233, %v280, 0.0
    %299 = vadd.xlane.f32.xlu0 %v298
    %v300 = vpop.xlane.xlu0 %299
    %v301 = vsel %vm233, %v281, 0.0
    %302 = vadd.xlane.f32.xlu0 %v301
    %v303 = vpop.xlane.xlu0 %302
    %v304 = vsel %vm233, %v282, 0.0
    %305 = vadd.xlane.f32.xlu0 %v304
    %v306 = vpop.xlane.xlu0 %305
    %v307 = vmul.f32 %v285, %v258
    %v308 = vmul.f32 %v288, %v258
    %v309 = vmul.f32 %v291, %v258
    %v310 = vmul.f32 %v294, %v258
    %v311 = vmul.f32 %v297, %v258
    %v312 = vmul.f32 %v300, %v258
    %v313 = vmul.f32 %v303, %v258
    %v314 = vmul.f32 %v306, %v258
    %v315 = vadd.f32 %v307, 1e-05
    %v316 = vadd.f32 %v308, 1e-05
    %v317 = vadd.f32 %v309, 1e-05
    %v318 = vadd.f32 %v310, 1e-05
    %v319 = vadd.f32 %v311, 1e-05
    %v320 = vadd.f32 %v312, 1e-05
    %v321 = vadd.f32 %v313, 1e-05
    %v322 = vadd.f32 %v314, 1e-05
    %v323 = vrsqrt.pop %v315
    %v324 = vrsqrt.pop %v316
    %v325 = vrsqrt.pop %v317
    %v326 = vrsqrt.pop %v318
    %v327 = vrsqrt.pop %v319
    %v328 = vrsqrt.pop %v320
    %v329 = vrsqrt.pop %v321
    %v330 = vrsqrt.pop %v322
    %v331 = vmul.f32 %v267, %v323
    %v332 = vmul.f32 %v268, %v324
    %v333 = vmul.f32 %v269, %v325
    %v334 = vmul.f32 %v270, %v326
    %v335 = vmul.f32 %v271, %v327
    %v336 = vmul.f32 %v272, %v328
    %v337 = vmul.f32 %v273, %v329
    %v338 = vmul.f32 %v274, %v330
    %v340 = vlaneseq
    %v341 = vshrl.u32 %v340, 7
    %v342 = vsub.s32 0, %v341
    %v343 = vrot.slane %v231, %v342
    %v345 = vmul.f32 %v331, %v343
    %v346 = vmul.f32 %v332, %v343
    %v347 = vmul.f32 %v333, %v343
    %v348 = vmul.f32 %v334, %v343
    %v349 = vmul.f32 %v335, %v343
    %v350 = vmul.f32 %v336, %v343
    %v351 = vmul.f32 %v337, %v343
    %v352 = vmul.f32 %v338, %v343
    %v354 = vlaneseq
    %v355 = vshrl.u32 %v354, 7
    %v356 = vsub.s32 0, %v355
    %v357 = vrot.slane %v232, %v356
    %v359 = vadd.f32 %v345, %v357
    %v360 = vadd.f32 %v346, %v357
    %v361 = vadd.f32 %v347, %v357
    %v362 = vadd.f32 %v348, %v357
    %v363 = vadd.f32 %v349, %v357
    %v364 = vadd.f32 %v350, %v357
    %v365 = vadd.f32 %v351, %v357
    %v366 = vadd.f32 %v352, %v357
    %v367 = vpack.c.bf16 %v360, %v359
    %v368 = vpack.c.bf16 %v362, %v361
    %v369 = vpack.c.bf16 %v364, %v363
    %v370 = vpack.c.bf16 %v366, %v365
    %v371 = vld [vmem:[#allocation11] sm:$0xf]
    %v372 = vld [vmem:[#allocation11 + $0x4] sm:$0xf]
    %v373 = vld [vmem:[#allocation11 + $0x8] sm:$0xf]
    %v374 = vld [vmem:[#allocation11 + $0xc] sm:$0xf]
    %v375 = vld [vmem:[#allocation12] sm:$0x1]
    %v377 = vlaneseq
    %v378 = vshrl.u32 %v377, 7
    %v379 = vsub.s32 0, %v378
    %v380 = vrot.slane %v375, %v379
    %v386 = vunpack.c.l.b16 %v371
    %v387 = vunpack.c.l.b16 %v372
    %v388 = vunpack.c.l.b16 %v373
    %v389 = vunpack.c.l.b16 %v374
    %v390 = vpack.c.b16 %v387, %v386
    %v391 = vpack.c.b16 %v389, %v388
    %v395 = vsel %vm233, %v367, 0
    %v398 = vsel %vm233, %v368, 0
    %v401 = vsel %vm233, %v369, 0
    %v404 = vsel %vm233, %v370, 0
    %406 = vmatprep.subr.bf16.mxu0 0
    %407 = vmatpush1.bf16.msra.mxu0 %v390
    %408 = vmatprep.subr.bf16.mxu0 0
    %409 = vmatpush1.bf16.msra.mxu0 %v391
    %410 = vmatprep.subr.bf16.mxu0 0
    %411 = vmatpush1.bf16.msra.mxu0 0
    %412 = vmatprep.subr.bf16.mxu0 0
    %413 = vmatpush1.bf16.msra.mxu0 0
    %414 = vmatprep.subr.bf16.mxu0 0
    %415 = vmatpush1.bf16.msra.mxu0 0
    %416 = vmatprep.subr.bf16.mxu0 0
    %417 = vmatpush1.bf16.msra.mxu0 0
    %418 = vmatprep.subr.bf16.mxu0 0
    %419 = vmatpush1.bf16.msra.mxu0 0
    %420 = vmatprep.subr.bf16.mxu0 0
    %421 = vmatpush1.bf16.msra.mxu0 0
    %422 = vmatprep.subr.bf16.mxu0 0
    %423 = vmatpush1.bf16.msra.mxu0 0
    %424 = vmatprep.subr.bf16.mxu0 0
    %425 = vmatpush1.bf16.msra.mxu0 0
    %426 = vmatprep.subr.bf16.mxu0 0
    %427 = vmatpush1.bf16.msra.mxu0 0
    %428 = vmatprep.subr.bf16.mxu0 0
    %429 = vmatpush1.bf16.msra.mxu0 0
    %430 = vmatprep.subr.bf16.mxu0 0
    %431 = vmatpush1.bf16.msra.mxu0 0
    %432 = vmatprep.subr.bf16.mxu0 0
    %433 = vmatpush1.bf16.msra.mxu0 0
    %434 = vmatprep.subr.bf16.mxu0 0
    %435 = vmatpush1.bf16.msra.mxu0 0
    %436 = vmatprep.subr.bf16.mxu0 0
    %437 = vmatpush1.bf16.msra.mxu0 0
    %438 = vmatprep.mubr.bf16.mxu0 0
    %439 = vmatmul.mubr.bf16.gmra.mrb[0].mxu0 %v395
    %v440 = vpop.f32.mrb[0].mxu0
    %v441 = vadd.f32 %v380, %v440
    %v442 = vpop.f32.mrb[0].mxu0
    %v443 = vpop.f32.mrb[0].mxu0
    %v444 = vadd.f32 %v380, %v443
    %v445 = vpop.f32.mrb[0].mxu0
    %446 = vmatprep.mubr.bf16.mxu0 0
    %447 = vmatmul.mubr.bf16.gmra.mrb[0].mxu0 %v398
    %v448 = vpop.f32.mrb[0].mxu0
    %v449 = vadd.f32 %v380, %v448
    %v450 = vpop.f32.mrb[0].mxu0
    %v451 = vpop.f32.mrb[0].mxu0
    %v452 = vadd.f32 %v380, %v451
    %v453 = vpop.f32.mrb[0].mxu0
    %454 = vmatprep.mubr.bf16.mxu0 0
    %455 = vmatmul.mubr.bf16.gmra.mrb[0].mxu0 %v401
    %v456 = vpop.f32.mrb[0].mxu0
    %v457 = vadd.f32 %v380, %v456
    %v458 = vpop.f32.mrb[0].mxu0
    %v459 = vpop.f32.mrb[0].mxu0
    %v460 = vadd.f32 %v380, %v459
    %v461 = vpop.f32.mrb[0].mxu0
    %462 = vmatprep.mubr.bf16.mxu0 0
    %463 = vmatmul.mubr.bf16.gmra.mrb[0].mxu0 %v404
    %v464 = vpop.f32.mrb[0].mxu0
    %v465 = vadd.f32 %v380, %v464
    %v466 = vpop.f32.mrb[0].mxu0
    %v467 = vpop.f32.mrb[0].mxu0
    %v468 = vadd.f32 %v380, %v467
    %v469 = vpop.f32.mrb[0].mxu0
    %470 = vdwg.mxu0
    %v471 = vld [vmem:[#allocation6] sm:$0xff]
    %v472 = vld [vmem:[#allocation6 + $0x8] sm:$0xff]
    %v473 = vld [vmem:[#allocation6 + $0x10] sm:$0xff]
    %v474 = vld [vmem:[#allocation6 + $0x18] sm:$0xff]
    %v475 = vld [vmem:[#allocation6 + $0x20] sm:$0xff]
    %v476 = vld [vmem:[#allocation6 + $0x28] sm:$0xff]
    %v477 = vld [vmem:[#allocation6 + $0x30] sm:$0xff]
    %v478 = vld [vmem:[#allocation6 + $0x38] sm:$0xff]
    %480 = vrot.lane.b32.xlu0 %v441, 96
    %v481 = vpop.permute.xlu0 %480
    %vm482 = vcmask 64512
    %v483 = vsel %vm482, %v441, 0
    %v485 = vsel %vm482, %v481, 0
    %487 = vmatprep.subr.mxu0 0.0
    %488 = vmatpush1.xpose.msra.mxu0 %v485
    %489 = vmatprep.subr.mxu0 0.0
    %490 = vmatpush1.xpose.msra.mxu0 0.0
    %491 = vmatprep.subr.mxu0 0.0
    %492 = vmatpush1.xpose.msra.mxu0 0.0
    %493 = vmatprep.subr.mxu0 0.0
    %494 = vmatpush1.xpose.msra.mxu0 0.0
    %495 = vmatprep.subr.mxu0 0.0
    %496 = vmatpush1.xpose.msra.mxu0 0.0
    %497 = vmatprep.subr.mxu0 0.0
    %498 = vmatpush1.xpose.msra.mxu0 0.0
    %499 = vmatprep.subr.mxu0 0.0
    %500 = vmatpush1.xpose.msra.mxu0 0.0
    %501 = vmatprep.subr.mxu0 0.0
    %502 = vmatpush1.xpose.msra.mxu0 0.0
    %503 = vmatprep.subr.mxu0 0.0
    %504 = vmatpush1.xpose.msra.mxu0 0.0
    %505 = vmatprep.subr.mxu0 0.0
    %506 = vmatpush1.xpose.msra.mxu0 0.0
    %507 = vmatprep.subr.mxu0 0.0
    %508 = vmatpush1.xpose.msra.mxu0 0.0
    %509 = vmatprep.subr.mxu0 0.0
    %510 = vmatpush1.xpose.msra.mxu0 0.0
    %511 = vmatprep.subr.mxu0 0.0
    %512 = vmatpush1.xpose.msra.mxu0 0.0
    %513 = vmatprep.subr.mxu0 0.0
    %514 = vmatpush1.xpose.msra.mxu0 0.0
    %515 = vmatprep.subr.mxu0 0.0
    %516 = vmatpush1.xpose.msra.mxu0 0.0
    %517 = vmatprep.subr.mxu0 0.0
    %518 = vmatpush1.xpose.msra.mxu0 0.0
    %519 = vmatprep.subr.mxu0 0.0
    %520 = vmatpush1.xpose.msra.mxu0 0.0
    %521 = vmatprep.subr.mxu0 0.0
    %522 = vmatpush1.xpose.msra.mxu0 0.0
    %523 = vmatprep.subr.mxu0 0.0
    %524 = vmatpush1.xpose.msra.mxu0 0.0
    %525 = vmatprep.subr.mxu0 0.0
    %526 = vmatpush1.xpose.msra.mxu0 0.0
    %527 = vmatprep.subr.mxu0 0.0
    %528 = vmatpush1.xpose.msra.mxu0 0.0
    %529 = vmatprep.subr.mxu0 0.0
    %530 = vmatpush1.xpose.msra.mxu0 0.0
    %531 = vmatprep.subr.mxu0 0.0
    %532 = vmatpush1.xpose.msra.mxu0 0.0
    %533 = vmatprep.subr.mxu0 0.0
    %534 = vmatpush1.xpose.msra.mxu0 0.0
    %535 = vmatprep.subr.mxu0 0.0
    %536 = vmatpush1.xpose.msra.mxu0 0.0
    %537 = vmatprep.subr.mxu0 0.0
    %538 = vmatpush1.xpose.msra.mxu0 0.0
    %539 = vmatprep.subr.mxu0 0.0
    %540 = vmatpush1.xpose.msra.mxu0 0.0
    %541 = vmatprep.subr.mxu0 0.0
    %542 = vmatpush1.xpose.msra.mxu0 0.0
    %543 = vmatprep.subr.mxu0 0.0
    %544 = vmatpush1.xpose.msra.mxu0 0.0
    %545 = vmatprep.subr.mxu0 0.0
    %546 = vmatpush1.xpose.msra.mxu0 0.0
    %547 = vmatprep.subr.mxu0 0.0
    %548 = vmatpush1.xpose.msra.mxu0 0.0
    %549 = vmatprep.subr.mxu0 0.0
    %550 = vmatpush1.xpose.msra.mxu0 0.0
    %551 = vmatprep.mubr.f32.mxu0 0.0
    %552 = vmatmul.mubr.f32.gmra.mrb[0].mxu0 %v483
    %v553 = vpop.f32.mrb[0].mxu0
    %v554 = vadd.f32 0.0, %v553
    %v555 = vpop.f32.mrb[0].mxu0
    %556 = vdwg.mxu0
    %558 = vrot.lane.b32.xlu0 %v444, 96
    %v559 = vpop.permute.xlu0 %558
    %v560 = vsel %vm482, %v444, 0
    %v562 = vsel %vm482, %v559, 0
    %564 = vmatprep.subr.mxu0 0.0
    %565 = vmatpush1.xpose.msra.mxu0 %v562
    %566 = vmatprep.subr.mxu0 0.0
    %567 = vmatpush1.xpose.msra.mxu0 0.0
    %568 = vmatprep.subr.mxu0 0.0
    %569 = vmatpush1.xpose.msra.mxu0 0.0
    %570 = vmatprep.subr.mxu0 0.0
    %571 = vmatpush1.xpose.msra.mxu0 0.0
    %572 = vmatprep.subr.mxu0 0.0
    %573 = vmatpush1.xpose.msra.mxu0 0.0
    %574 = vmatprep.subr.mxu0 0.0
    %575 = vmatpush1.xpose.msra.mxu0 0.0
    %576 = vmatprep.subr.mxu0 0.0
    %577 = vmatpush1.xpose.msra.mxu0 0.0
    %578 = vmatprep.subr.mxu0 0.0
    %579 = vmatpush1.xpose.msra.mxu0 0.0
    %580 = vmatprep.subr.mxu0 0.0
    %581 = vmatpush1.xpose.msra.mxu0 0.0
    %582 = vmatprep.subr.mxu0 0.0
    %583 = vmatpush1.xpose.msra.mxu0 0.0
    %584 = vmatprep.subr.mxu0 0.0
    %585 = vmatpush1.xpose.msra.mxu0 0.0
    %586 = vmatprep.subr.mxu0 0.0
    %587 = vmatpush1.xpose.msra.mxu0 0.0
    %588 = vmatprep.subr.mxu0 0.0
    %589 = vmatpush1.xpose.msra.mxu0 0.0
    %590 = vmatprep.subr.mxu0 0.0
    %591 = vmatpush1.xpose.msra.mxu0 0.0
    %592 = vmatprep.subr.mxu0 0.0
    %593 = vmatpush1.xpose.msra.mxu0 0.0
    %594 = vmatprep.subr.mxu0 0.0
    %595 = vmatpush1.xpose.msra.mxu0 0.0
    %596 = vmatprep.subr.mxu0 0.0
    %597 = vmatpush1.xpose.msra.mxu0 0.0
    %598 = vmatprep.subr.mxu0 0.0
    %599 = vmatpush1.xpose.msra.mxu0 0.0
    %600 = vmatprep.subr.mxu0 0.0
    %601 = vmatpush1.xpose.msra.mxu0 0.0
    %602 = vmatprep.subr.mxu0 0.0
    %603 = vmatpush1.xpose.msra.mxu0 0.0
    %604 = vmatprep.subr.mxu0 0.0
    %605 = vmatpush1.xpose.msra.mxu0 0.0
    %606 = vmatprep.subr.mxu0 0.0
    %607 = vmatpush1.xpose.msra.mxu0 0.0
    %608 = vmatprep.subr.mxu0 0.0
    %609 = vmatpush1.xpose.msra.mxu0 0.0
    %610 = vmatprep.subr.mxu0 0.0
    %611 = vmatpush1.xpose.msra.mxu0 0.0
    %612 = vmatprep.subr.mxu0 0.0
    %613 = vmatpush1.xpose.msra.mxu0 0.0
    %614 = vmatprep.subr.mxu0 0.0
    %615 = vmatpush1.xpose.msra.mxu0 0.0
    %616 = vmatprep.subr.mxu0 0.0
    %617 = vmatpush1.xpose.msra.mxu0 0.0
    %618 = vmatprep.subr.mxu0 0.0
    %619 = vmatpush1.xpose.msra.mxu0 0.0
    %620 = vmatprep.subr.mxu0 0.0
    %621 = vmatpush1.xpose.msra.mxu0 0.0
    %622 = vmatprep.subr.mxu0 0.0
    %623 = vmatpush1.xpose.msra.mxu0 0.0
    %624 = vmatprep.subr.mxu0 0.0
    %625 = vmatpush1.xpose.msra.mxu0 0.0
    %626 = vmatprep.subr.mxu0 0.0
    %627 = vmatpush1.xpose.msra.mxu0 0.0
    %628 = vmatprep.mubr.f32.mxu0 0.0
    %629 = vmatmul.mubr.f32.gmra.mrb[0].mxu0 %v560
    %v630 = vpop.f32.mrb[0].mxu0
    %v631 = vadd.f32 0.0, %v630
    %v632 = vpop.f32.mrb[0].mxu0
    %633 = vdwg.mxu0
    %635 = vrot.lane.b32.xlu0 %v449, 96
    %v636 = vpop.permute.xlu0 %635
    %v637 = vsel %vm482, %v449, 0
    %v639 = vsel %vm482, %v636, 0
    %641 = vmatprep.subr.mxu0 0.0
    %642 = vmatpush1.xpose.msra.mxu0 %v639
    %643 = vmatprep.subr.mxu0 0.0
    %644 = vmatpush1.xpose.msra.mxu0 0.0
    %645 = vmatprep.subr.mxu0 0.0
    %646 = vmatpush1.xpose.msra.mxu0 0.0
    %647 = vmatprep.subr.mxu0 0.0
    %648 = vmatpush1.xpose.msra.mxu0 0.0
    %649 = vmatprep.subr.mxu0 0.0
    %650 = vmatpush1.xpose.msra.mxu0 0.0
    %651 = vmatprep.subr.mxu0 0.0
    %652 = vmatpush1.xpose.msra.mxu0 0.0
    %653 = vmatprep.subr.mxu0 0.0
    %654 = vmatpush1.xpose.msra.mxu0 0.0
    %655 = vmatprep.subr.mxu0 0.0
    %656 = vmatpush1.xpose.msra.mxu0 0.0
    %657 = vmatprep.subr.mxu0 0.0
    %658 = vmatpush1.xpose.msra.mxu0 0.0
    %659 = vmatprep.subr.mxu0 0.0
    %660 = vmatpush1.xpose.msra.mxu0 0.0
    %661 = vmatprep.subr.mxu0 0.0
    %662 = vmatpush1.xpose.msra.mxu0 0.0
    %663 = vmatprep.subr.mxu0 0.0
    %664 = vmatpush1.xpose.msra.mxu0 0.0
    %665 = vmatprep.subr.mxu0 0.0
    %666 = vmatpush1.xpose.msra.mxu0 0.0
    %667 = vmatprep.subr.mxu0 0.0
    %668 = vmatpush1.xpose.msra.mxu0 0.0
    %669 = vmatprep.subr.mxu0 0.0
    %670 = vmatpush1.xpose.msra.mxu0 0.0
    %671 = vmatprep.subr.mxu0 0.0
    %672 = vmatpush1.xpose.msra.mxu0 0.0
    %673 = vmatprep.subr.mxu0 0.0
    %674 = vmatpush1.xpose.msra.mxu0 0.0
    %675 = vmatprep.subr.mxu0 0.0
    %676 = vmatpush1.xpose.msra.mxu0 0.0
    %677 = vmatprep.subr.mxu0 0.0
    %678 = vmatpush1.xpose.msra.mxu0 0.0
    %679 = vmatprep.subr.mxu0 0.0
    %680 = vmatpush1.xpose.msra.mxu0 0.0
    %681 = vmatprep.subr.mxu0 0.0
    %682 = vmatpush1.xpose.msra.mxu0 0.0
    %683 = vmatprep.subr.mxu0 0.0
    %684 = vmatpush1.xpose.msra.mxu0 0.0
    %685 = vmatprep.subr.mxu0 0.0
    %686 = vmatpush1.xpose.msra.mxu0 0.0
    %687 = vmatprep.subr.mxu0 0.0
    %688 = vmatpush1.xpose.msra.mxu0 0.0
    %689 = vmatprep.subr.mxu0 0.0
    %690 = vmatpush1.xpose.msra.mxu0 0.0
    %691 = vmatprep.subr.mxu0 0.0
    %692 = vmatpush1.xpose.msra.mxu0 0.0
    %693 = vmatprep.subr.mxu0 0.0
    %694 = vmatpush1.xpose.msra.mxu0 0.0
    %695 = vmatprep.subr.mxu0 0.0
    %696 = vmatpush1.xpose.msra.mxu0 0.0
    %697 = vmatprep.subr.mxu0 0.0
    %698 = vmatpush1.xpose.msra.mxu0 0.0
    %699 = vmatprep.subr.mxu0 0.0
    %700 = vmatpush1.xpose.msra.mxu0 0.0
    %701 = vmatprep.subr.mxu0 0.0
    %702 = vmatpush1.xpose.msra.mxu0 0.0
    %703 = vmatprep.subr.mxu0 0.0
    %704 = vmatpush1.xpose.msra.mxu0 0.0
    %705 = vmatprep.mubr.f32.mxu0 0.0
    %706 = vmatmul.mubr.f32.gmra.mrb[0].mxu0 %v637
    %v707 = vpop.f32.mrb[0].mxu0
    %v708 = vadd.f32 0.0, %v707
    %v709 = vpop.f32.mrb[0].mxu0
    %710 = vdwg.mxu0
    %712 = vrot.lane.b32.xlu0 %v452, 96
    %v713 = vpop.permute.xlu0 %712
    %v714 = vsel %vm482, %v452, 0
    %v716 = vsel %vm482, %v713, 0
    %718 = vmatprep.subr.mxu0 0.0
    %719 = vmatpush1.xpose.msra.mxu0 %v716
    %720 = vmatprep.subr.mxu0 0.0
    %721 = vmatpush1.xpose.msra.mxu0 0.0
    %722 = vmatprep.subr.mxu0 0.0
    %723 = vmatpush1.xpose.msra.mxu0 0.0
    %724 = vmatprep.subr.mxu0 0.0
    %725 = vmatpush1.xpose.msra.mxu0 0.0
    %726 = vmatprep.subr.mxu0 0.0
    %727 = vmatpush1.xpose.msra.mxu0 0.0
    %728 = vmatprep.subr.mxu0 0.0
    %729 = vmatpush1.xpose.msra.mxu0 0.0
    %730 = vmatprep.subr.mxu0 0.0
    %731 = vmatpush1.xpose.msra.mxu0 0.0
    %732 = vmatprep.subr.mxu0 0.0
    %733 = vmatpush1.xpose.msra.mxu0 0.0
    %734 = vmatprep.subr.mxu0 0.0
    %735 = vmatpush1.xpose.msra.mxu0 0.0
    %736 = vmatprep.subr.mxu0 0.0
    %737 = vmatpush1.xpose.msra.mxu0 0.0
    %738 = vmatprep.subr.mxu0 0.0
    %739 = vmatpush1.xpose.msra.mxu0 0.0
    %740 = vmatprep.subr.mxu0 0.0
    %741 = vmatpush1.xpose.msra.mxu0 0.0
    %742 = vmatprep.subr.mxu0 0.0
    %743 = vmatpush1.xpose.msra.mxu0 0.0
    %744 = vmatprep.subr.mxu0 0.0
    %745 = vmatpush1.xpose.msra.mxu0 0.0
    %746 = vmatprep.subr.mxu0 0.0
    %747 = vmatpush1.xpose.msra.mxu0 0.0
    %748 = vmatprep.subr.mxu0 0.0
    %749 = vmatpush1.xpose.msra.mxu0 0.0
    %750 = vmatprep.subr.mxu0 0.0
    %751 = vmatpush1.xpose.msra.mxu0 0.0
    %752 = vmatprep.subr.mxu0 0.0
    %753 = vmatpush1.xpose.msra.mxu0 0.0
    %754 = vmatprep.subr.mxu0 0.0
    %755 = vmatpush1.xpose.msra.mxu0 0.0
    %756 = vmatprep.subr.mxu0 0.0
    %757 = vmatpush1.xpose.msra.mxu0 0.0
    %758 = vmatprep.subr.mxu0 0.0
    %759 = vmatpush1.xpose.msra.mxu0 0.0
    %760 = vmatprep.subr.mxu0 0.0
    %761 = vmatpush1.xpose.msra.mxu0 0.0
    %762 = vmatprep.subr.mxu0 0.0
    %763 = vmatpush1.xpose.msra.mxu0 0.0
    %764 = vmatprep.subr.mxu0 0.0
    %765 = vmatpush1.xpose.msra.mxu0 0.0
    %766 = vmatprep.subr.mxu0 0.0
    %767 = vmatpush1.xpose.msra.mxu0 0.0
    %768 = vmatprep.subr.mxu0 0.0
    %769 = vmatpush1.xpose.msra.mxu0 0.0
    %770 = vmatprep.subr.mxu0 0.0
    %771 = vmatpush1.xpose.msra.mxu0 0.0
    %772 = vmatprep.subr.mxu0 0.0
    %773 = vmatpush1.xpose.msra.mxu0 0.0
    %774 = vmatprep.subr.mxu0 0.0
    %775 = vmatpush1.xpose.msra.mxu0 0.0
    %776 = vmatprep.subr.mxu0 0.0
    %777 = vmatpush1.xpose.msra.mxu0 0.0
    %778 = vmatprep.subr.mxu0 0.0
    %779 = vmatpush1.xpose.msra.mxu0 0.0
    %780 = vmatprep.subr.mxu0 0.0
    %781 = vmatpush1.xpose.msra.mxu0 0.0
    %782 = vmatprep.mubr.f32.mxu0 0.0
    %783 = vmatmul.mubr.f32.gmra.mrb[0].mxu0 %v714
    %v784 = vpop.f32.mrb[0].mxu0
    %v785 = vadd.f32 0.0, %v784
    %v786 = vpop.f32.mrb[0].mxu0
    %787 = vdwg.mxu0
    %789 = vrot.lane.b32.xlu0 %v457, 96
    %v790 = vpop.permute.xlu0 %789
    %v791 = vsel %vm482, %v457, 0
    %v793 = vsel %vm482, %v790, 0
    %795 = vmatprep.subr.mxu0 0.0
    %796 = vmatpush1.xpose.msra.mxu0 %v793
    %797 = vmatprep.subr.mxu0 0.0
    %798 = vmatpush1.xpose.msra.mxu0 0.0
    %799 = vmatprep.subr.mxu0 0.0
    %800 = vmatpush1.xpose.msra.mxu0 0.0
    %801 = vmatprep.subr.mxu0 0.0
    %802 = vmatpush1.xpose.msra.mxu0 0.0
    %803 = vmatprep.subr.mxu0 0.0
    %804 = vmatpush1.xpose.msra.mxu0 0.0
    %805 = vmatprep.subr.mxu0 0.0
    %806 = vmatpush1.xpose.msra.mxu0 0.0
    %807 = vmatprep.subr.mxu0 0.0
    %808 = vmatpush1.xpose.msra.mxu0 0.0
    %809 = vmatprep.subr.mxu0 0.0
    %810 = vmatpush1.xpose.msra.mxu0 0.0
    %811 = vmatprep.subr.mxu0 0.0
    %812 = vmatpush1.xpose.msra.mxu0 0.0
    %813 = vmatprep.subr.mxu0 0.0
    %814 = vmatpush1.xpose.msra.mxu0 0.0
    %815 = vmatprep.subr.mxu0 0.0
    %816 = vmatpush1.xpose.msra.mxu0 0.0
    %817 = vmatprep.subr.mxu0 0.0
    %818 = vmatpush1.xpose.msra.mxu0 0.0
    %819 = vmatprep.subr.mxu0 0.0
    %820 = vmatpush1.xpose.msra.mxu0 0.0
    %821 = vmatprep.subr.mxu0 0.0
    %822 = vmatpush1.xpose.msra.mxu0 0.0
    %823 = vmatprep.subr.mxu0 0.0
    %824 = vmatpush1.xpose.msra.mxu0 0.0
    %825 = vmatprep.subr.mxu0 0.0
    %826 = vmatpush1.xpose.msra.mxu0 0.0
    %827 = vmatprep.subr.mxu0 0.0
    %828 = vmatpush1.xpose.msra.mxu0 0.0
    %829 = vmatprep.subr.mxu0 0.0
    %830 = vmatpush1.xpose.msra.mxu0 0.0
    %831 = vmatprep.subr.mxu0 0.0
    %832 = vmatpush1.xpose.msra.mxu0 0.0
    %833 = vmatprep.subr.mxu0 0.0
    %834 = vmatpush1.xpose.msra.mxu0 0.0
    %835 = vmatprep.subr.mxu0 0.0
    %836 = vmatpush1.xpose.msra.mxu0 0.0
    %837 = vmatprep.subr.mxu0 0.0
    %838 = vmatpush1.xpose.msra.mxu0 0.0
    %839 = vmatprep.subr.mxu0 0.0
    %840 = vmatpush1.xpose.msra.mxu0 0.0
    %841 = vmatprep.subr.mxu0 0.0
    %842 = vmatpush1.xpose.msra.mxu0 0.0
    %843 = vmatprep.subr.mxu0 0.0
    %844 = vmatpush1.xpose.msra.mxu0 0.0
    %845 = vmatprep.subr.mxu0 0.0
    %846 = vmatpush1.xpose.msra.mxu0 0.0
    %847 = vmatprep.subr.mxu0 0.0
    %848 = vmatpush1.xpose.msra.mxu0 0.0
    %849 = vmatprep.subr.mxu0 0.0
    %850 = vmatpush1.xpose.msra.mxu0 0.0
    %851 = vmatprep.subr.mxu0 0.0
    %852 = vmatpush1.xpose.msra.mxu0 0.0
    %853 = vmatprep.subr.mxu0 0.0
    %854 = vmatpush1.xpose.msra.mxu0 0.0
    %855 = vmatprep.subr.mxu0 0.0
    %856 = vmatpush1.xpose.msra.mxu0 0.0
    %857 = vmatprep.subr.mxu0 0.0
    %858 = vmatpush1.xpose.msra.mxu0 0.0
    %859 = vmatprep.mubr.f32.mxu0 0.0
    %860 = vmatmul.mubr.f32.gmra.mrb[0].mxu0 %v791
    %v861 = vpop.f32.mrb[0].mxu0
    %v862 = vadd.f32 0.0, %v861
    %v863 = vpop.f32.mrb[0].mxu0
    %864 = vdwg.mxu0
    %866 = vrot.lane.b32.xlu0 %v460, 96
    %v867 = vpop.permute.xlu0 %866
    %v868 = vsel %vm482, %v460, 0
    %v870 = vsel %vm482, %v867, 0
    %872 = vmatprep.subr.mxu0 0.0
    %873 = vmatpush1.xpose.msra.mxu0 %v870
    %874 = vmatprep.subr.mxu0 0.0
    %875 = vmatpush1.xpose.msra.mxu0 0.0
    %876 = vmatprep.subr.mxu0 0.0
    %877 = vmatpush1.xpose.msra.mxu0 0.0
    %878 = vmatprep.subr.mxu0 0.0
    %879 = vmatpush1.xpose.msra.mxu0 0.0
    %880 = vmatprep.subr.mxu0 0.0
    %881 = vmatpush1.xpose.msra.mxu0 0.0
    %882 = vmatprep.subr.mxu0 0.0
    %883 = vmatpush1.xpose.msra.mxu0 0.0
    %884 = vmatprep.subr.mxu0 0.0
    %885 = vmatpush1.xpose.msra.mxu0 0.0
    %886 = vmatprep.subr.mxu0 0.0
    %887 = vmatpush1.xpose.msra.mxu0 0.0
    %888 = vmatprep.subr.mxu0 0.0
    %889 = vmatpush1.xpose.msra.mxu0 0.0
    %890 = vmatprep.subr.mxu0 0.0
    %891 = vmatpush1.xpose.msra.mxu0 0.0
    %892 = vmatprep.subr.mxu0 0.0
    %893 = vmatpush1.xpose.msra.mxu0 0.0
    %894 = vmatprep.subr.mxu0 0.0
    %895 = vmatpush1.xpose.msra.mxu0 0.0
    %896 = vmatprep.subr.mxu0 0.0
    %897 = vmatpush1.xpose.msra.mxu0 0.0
    %898 = vmatprep.subr.mxu0 0.0
    %899 = vmatpush1.xpose.msra.mxu0 0.0
    %900 = vmatprep.subr.mxu0 0.0
    %901 = vmatpush1.xpose.msra.mxu0 0.0
    %902 = vmatprep.subr.mxu0 0.0
    %903 = vmatpush1.xpose.msra.mxu0 0.0
    %904 = vmatprep.subr.mxu0 0.0
    %905 = vmatpush1.xpose.msra.mxu0 0.0
    %906 = vmatprep.subr.mxu0 0.0
    %907 = vmatpush1.xpose.msra.mxu0 0.0
    %908 = vmatprep.subr.mxu0 0.0
    %909 = vmatpush1.xpose.msra.mxu0 0.0
    %910 = vmatprep.subr.mxu0 0.0
    %911 = vmatpush1.xpose.msra.mxu0 0.0
    %912 = vmatprep.subr.mxu0 0.0
    %913 = vmatpush1.xpose.msra.mxu0 0.0
    %914 = vmatprep.subr.mxu0 0.0
    %915 = vmatpush1.xpose.msra.mxu0 0.0
    %916 = vmatprep.subr.mxu0 0.0
    %917 = vmatpush1.xpose.msra.mxu0 0.0
    %918 = vmatprep.subr.mxu0 0.0
    %919 = vmatpush1.xpose.msra.mxu0 0.0
    %920 = vmatprep.subr.mxu0 0.0
    %921 = vmatpush1.xpose.msra.mxu0 0.0
    %922 = vmatprep.subr.mxu0 0.0
    %923 = vmatpush1.xpose.msra.mxu0 0.0
    %924 = vmatprep.subr.mxu0 0.0
    %925 = vmatpush1.xpose.msra.mxu0 0.0
    %926 = vmatprep.subr.mxu0 0.0
    %927 = vmatpush1.xpose.msra.mxu0 0.0
    %928 = vmatprep.subr.mxu0 0.0
    %929 = vmatpush1.xpose.msra.mxu0 0.0
    %930 = vmatprep.subr.mxu0 0.0
    %931 = vmatpush1.xpose.msra.mxu0 0.0
    %932 = vmatprep.subr.mxu0 0.0
    %933 = vmatpush1.xpose.msra.mxu0 0.0
    %934 = vmatprep.subr.mxu0 0.0
    %935 = vmatpush1.xpose.msra.mxu0 0.0
    %936 = vmatprep.mubr.f32.mxu0 0.0
    %937 = vmatmul.mubr.f32.gmra.mrb[0].mxu0 %v868
    %v938 = vpop.f32.mrb[0].mxu0
    %v939 = vadd.f32 0.0, %v938
    %v940 = vpop.f32.mrb[0].mxu0
    %941 = vdwg.mxu0
    %943 = vrot.lane.b32.xlu0 %v465, 96
    %v944 = vpop.permute.xlu0 %943
    %v945 = vsel %vm482, %v465, 0
    %v947 = vsel %vm482, %v944, 0
    %949 = vmatprep.subr.mxu0 0.0
    %950 = vmatpush1.xpose.msra.mxu0 %v947
    %951 = vmatprep.subr.mxu0 0.0
    %952 = vmatpush1.xpose.msra.mxu0 0.0
    %953 = vmatprep.subr.mxu0 0.0
    %954 = vmatpush1.xpose.msra.mxu0 0.0
    %955 = vmatprep.subr.mxu0 0.0
    %956 = vmatpush1.xpose.msra.mxu0 0.0
    %957 = vmatprep.subr.mxu0 0.0
    %958 = vmatpush1.xpose.msra.mxu0 0.0
    %959 = vmatprep.subr.mxu0 0.0
    %960 = vmatpush1.xpose.msra.mxu0 0.0
    %961 = vmatprep.subr.mxu0 0.0
    %962 = vmatpush1.xpose.msra.mxu0 0.0
    %963 = vmatprep.subr.mxu0 0.0
    %964 = vmatpush1.xpose.msra.mxu0 0.0
    %965 = vmatprep.subr.mxu0 0.0
    %966 = vmatpush1.xpose.msra.mxu0 0.0
    %967 = vmatprep.subr.mxu0 0.0
    %968 = vmatpush1.xpose.msra.mxu0 0.0
    %969 = vmatprep.subr.mxu0 0.0
    %970 = vmatpush1.xpose.msra.mxu0 0.0
    %971 = vmatprep.subr.mxu0 0.0
    %972 = vmatpush1.xpose.msra.mxu0 0.0
    %973 = vmatprep.subr.mxu0 0.0
    %974 = vmatpush1.xpose.msra.mxu0 0.0
    %975 = vmatprep.subr.mxu0 0.0
    %976 = vmatpush1.xpose.msra.mxu0 0.0
    %977 = vmatprep.subr.mxu0 0.0
    %978 = vmatpush1.xpose.msra.mxu0 0.0
    %979 = vmatprep.subr.mxu0 0.0
    %980 = vmatpush1.xpose.msra.mxu0 0.0
    %981 = vmatprep.subr.mxu0 0.0
    %982 = vmatpush1.xpose.msra.mxu0 0.0
    %983 = vmatprep.subr.mxu0 0.0
    %984 = vmatpush1.xpose.msra.mxu0 0.0
    %985 = vmatprep.subr.mxu0 0.0
    %986 = vmatpush1.xpose.msra.mxu0 0.0
    %987 = vmatprep.subr.mxu0 0.0
    %988 = vmatpush1.xpose.msra.mxu0 0.0
    %989 = vmatprep.subr.mxu0 0.0
    %990 = vmatpush1.xpose.msra.mxu0 0.0
    %991 = vmatprep.subr.mxu0 0.0
    %992 = vmatpush1.xpose.msra.mxu0 0.0
    %993 = vmatprep.subr.mxu0 0.0
    %994 = vmatpush1.xpose.msra.mxu0 0.0
    %995 = vmatprep.subr.mxu0 0.0
    %996 = vmatpush1.xpose.msra.mxu0 0.0
    %997 = vmatprep.subr.mxu0 0.0
    %998 = vmatpush1.xpose.msra.mxu0 0.0
    %999 = vmatprep.subr.mxu0 0.0
    %1000 = vmatpush1.xpose.msra.mxu0 0.0
    %1001 = vmatprep.subr.mxu0 0.0
    %1002 = vmatpush1.xpose.msra.mxu0 0.0
    %1003 = vmatprep.subr.mxu0 0.0
    %1004 = vmatpush1.xpose.msra.mxu0 0.0
    %1005 = vmatprep.subr.mxu0 0.0
    %1006 = vmatpush1.xpose.msra.mxu0 0.0
    %1007 = vmatprep.subr.mxu0 0.0
    %1008 = vmatpush1.xpose.msra.mxu0 0.0
    %1009 = vmatprep.subr.mxu0 0.0
    %1010 = vmatpush1.xpose.msra.mxu0 0.0
    %1011 = vmatprep.subr.mxu0 0.0
    %1012 = vmatpush1.xpose.msra.mxu0 0.0
    %1013 = vmatprep.mubr.f32.mxu0 0.0
    %1014 = vmatmul.mubr.f32.gmra.mrb[0].mxu0 %v945
    %v1015 = vpop.f32.mrb[0].mxu0
    %v1016 = vadd.f32 0.0, %v1015
    %v1017 = vpop.f32.mrb[0].mxu0
    %1018 = vdwg.mxu0
    %1020 = vrot.lane.b32.xlu0 %v468, 96
    %v1021 = vpop.permute.xlu0 %1020
    %v1022 = vsel %vm482, %v468, 0
    %v1024 = vsel %vm482, %v1021, 0
    %1026 = vmatprep.subr.mxu0 0.0
    %1027 = vmatpush1.xpose.msra.mxu0 %v1024
    %1028 = vmatprep.subr.mxu0 0.0
    %1029 = vmatpush1.xpose.msra.mxu0 0.0
    %1030 = vmatprep.subr.mxu0 0.0
    %1031 = vmatpush1.xpose.msra.mxu0 0.0
    %1032 = vmatprep.subr.mxu0 0.0
    %1033 = vmatpush1.xpose.msra.mxu0 0.0
    %1034 = vmatprep.subr.mxu0 0.0
    %1035 = vmatpush1.xpose.msra.mxu0 0.0
    %1036 = vmatprep.subr.mxu0 0.0
    %1037 = vmatpush1.xpose.msra.mxu0 0.0
    %1038 = vmatprep.subr.mxu0 0.0
    %1039 = vmatpush1.xpose.msra.mxu0 0.0
    %1040 = vmatprep.subr.mxu0 0.0
    %1041 = vmatpush1.xpose.msra.mxu0 0.0
    %1042 = vmatprep.subr.mxu0 0.0
    %1043 = vmatpush1.xpose.msra.mxu0 0.0
    %1044 = vmatprep.subr.mxu0 0.0
    %1045 = vmatpush1.xpose.msra.mxu0 0.0
    %1046 = vmatprep.subr.mxu0 0.0
    %1047 = vmatpush1.xpose.msra.mxu0 0.0
    %1048 = vmatprep.subr.mxu0 0.0
    %1049 = vmatpush1.xpose.msra.mxu0 0.0
    %1050 = vmatprep.subr.mxu0 0.0
    %1051 = vmatpush1.xpose.msra.mxu0 0.0
    %1052 = vmatprep.subr.mxu0 0.0
    %1053 = vmatpush1.xpose.msra.mxu0 0.0
    %1054 = vmatprep.subr.mxu0 0.0
    %1055 = vmatpush1.xpose.msra.mxu0 0.0
    %1056 = vmatprep.subr.mxu0 0.0
    %1057 = vmatpush1.xpose.msra.mxu0 0.0
    %1058 = vmatprep.subr.mxu0 0.0
    %1059 = vmatpush1.xpose.msra.mxu0 0.0
    %1060 = vmatprep.subr.mxu0 0.0
    %1061 = vmatpush1.xpose.msra.mxu0 0.0
    %1062 = vmatprep.subr.mxu0 0.0
    %1063 = vmatpush1.xpose.msra.mxu0 0.0
    %1064 = vmatprep.subr.mxu0 0.0
    %1065 = vmatpush1.xpose.msra.mxu0 0.0
    %1066 = vmatprep.subr.mxu0 0.0
    %1067 = vmatpush1.xpose.msra.mxu0 0.0
    %1068 = vmatprep.subr.mxu0 0.0
    %1069 = vmatpush1.xpose.msra.mxu0 0.0
    %1070 = vmatprep.subr.mxu0 0.0
    %1071 = vmatpush1.xpose.msra.mxu0 0.0
    %1072 = vmatprep.subr.mxu0 0.0
    %1073 = vmatpush1.xpose.msra.mxu0 0.0
    %1074 = vmatprep.subr.mxu0 0.0
    %1075 = vmatpush1.xpose.msra.mxu0 0.0
    %1076 = vmatprep.subr.mxu0 0.0
    %1077 = vmatpush1.xpose.msra.mxu0 0.0
    %1078 = vmatprep.subr.mxu0 0.0
    %1079 = vmatpush1.xpose.msra.mxu0 0.0
    %1080 = vmatprep.subr.mxu0 0.0
    %1081 = vmatpush1.xpose.msra.mxu0 0.0
    %1082 = vmatprep.subr.mxu0 0.0
    %1083 = vmatpush1.xpose.msra.mxu0 0.0
    %1084 = vmatprep.subr.mxu0 0.0
    %1085 = vmatpush1.xpose.msra.mxu0 0.0
    %1086 = vmatprep.subr.mxu0 0.0
    %1087 = vmatpush1.xpose.msra.mxu0 0.0
    %1088 = vmatprep.subr.mxu0 0.0
    %1089 = vmatpush1.xpose.msra.mxu0 0.0
    %1090 = vmatprep.mubr.f32.mxu0 0.0
    %1091 = vmatmul.mubr.f32.gmra.mrb[0].mxu0 %v1022
    %v1092 = vpop.f32.mrb[0].mxu0
    %v1093 = vadd.f32 0.0, %v1092
    %v1094 = vpop.f32.mrb[0].mxu0
    %1095 = vdwg.mxu0
    %v1096 = vmul.f32 %v554, 0.35355338
    %v1097 = vmul.f32 %v631, 0.35355338
    %v1098 = vmul.f32 %v708, 0.35355338
    %v1099 = vmul.f32 %v785, 0.35355338
    %v1100 = vmul.f32 %v862, 0.35355338
    %v1101 = vmul.f32 %v939, 0.35355338
    %v1102 = vmul.f32 %v1016, 0.35355338
    %v1103 = vmul.f32 %v1093, 0.35355338
    %v1104 = vadd.f32 %v1096, %v471
    %v1105 = vadd.f32 %v1097, %v472
    %v1106 = vadd.f32 %v1098, %v473
    %v1107 = vadd.f32 %v1099, %v474
    %v1108 = vadd.f32 %v1100, %v475
    %v1109 = vadd.f32 %v1101, %v476
    %v1110 = vadd.f32 %v1102, %v477
    %v1111 = vadd.f32 %v1103, %v478
    %v1112 = vsel %vm482, %v1104, -inf
    %1113 = vmax.xlane.f32.xlu0 %v1112
    %v1114 = vpop.xlane.xlu0 %1113
    %v1115 = vsel %vm482, %v1105, -inf
    %1116 = vmax.xlane.f32.xlu0 %v1115
    %v1117 = vpop.xlane.xlu0 %1116
    %v1118 = vsel %vm482, %v1106, -inf
    %1119 = vmax.xlane.f32.xlu0 %v1118
    %v1120 = vpop.xlane.xlu0 %1119
    %v1121 = vsel %vm482, %v1107, -inf
    %1122 = vmax.xlane.f32.xlu0 %v1121
    %v1123 = vpop.xlane.xlu0 %1122
    %v1124 = vsel %vm482, %v1108, -inf
    %1125 = vmax.xlane.f32.xlu0 %v1124
    %v1126 = vpop.xlane.xlu0 %1125
    %v1127 = vsel %vm482, %v1109, -inf
    %1128 = vmax.xlane.f32.xlu0 %v1127
    %v1129 = vpop.xlane.xlu0 %1128
    %v1130 = vsel %vm482, %v1110, -inf
    %1131 = vmax.xlane.f32.xlu0 %v1130
    %v1132 = vpop.xlane.xlu0 %1131
    %v1133 = vsel %vm482, %v1111, -inf
    %1134 = vmax.xlane.f32.xlu0 %v1133
    %v1135 = vpop.xlane.xlu0 %1134
    %v1136 = vsub.f32 %v1104, %v1114
    %v1137 = vsub.f32 %v1105, %v1117
    %v1138 = vsub.f32 %v1106, %v1120
    %v1139 = vsub.f32 %v1107, %v1123
    %v1140 = vsub.f32 %v1108, %v1126
    %v1141 = vsub.f32 %v1109, %v1129
    %v1142 = vsub.f32 %v1110, %v1132
    %v1143 = vsub.f32 %v1111, %v1135
    %v1144 = vmul.f32 %v1136, 1.442695
    %v1145 = vpow.pop %v1144
    %v1146 = vmul.f32 %v1137, 1.442695
    %v1147 = vpow.pop %v1146
    %v1148 = vmul.f32 %v1138, 1.442695
    %v1149 = vpow.pop %v1148
    %v1150 = vmul.f32 %v1139, 1.442695
    %v1151 = vpow.pop %v1150
    %v1152 = vmul.f32 %v1140, 1.442695
    %v1153 = vpow.pop %v1152
    %v1154 = vmul.f32 %v1141, 1.442695
    %v1155 = vpow.pop %v1154
    %v1156 = vmul.f32 %v1142, 1.442695
    %v1157 = vpow.pop %v1156
    %v1158 = vmul.f32 %v1143, 1.442695
    %v1159 = vpow.pop %v1158
    %v1160 = vsel %vm482, %v1145, 0.0
    %1161 = vadd.xlane.f32.xlu0 %v1160
    %v1162 = vpop.xlane.xlu0 %1161
    %v1163 = vsel %vm482, %v1147, 0.0
    %1164 = vadd.xlane.f32.xlu0 %v1163
    %v1165 = vpop.xlane.xlu0 %1164
    %v1166 = vsel %vm482, %v1149, 0.0
    %1167 = vadd.xlane.f32.xlu0 %v1166
    %v1168 = vpop.xlane.xlu0 %1167
    %v1169 = vsel %vm482, %v1151, 0.0
    %1170 = vadd.xlane.f32.xlu0 %v1169
    %v1171 = vpop.xlane.xlu0 %1170
    %v1172 = vsel %vm482, %v1153, 0.0
    %1173 = vadd.xlane.f32.xlu0 %v1172
    %v1174 = vpop.xlane.xlu0 %1173
    %v1175 = vsel %vm482, %v1155, 0.0
    %1176 = vadd.xlane.f32.xlu0 %v1175
    %v1177 = vpop.xlane.xlu0 %1176
    %v1178 = vsel %vm482, %v1157, 0.0
    %1179 = vadd.xlane.f32.xlu0 %v1178
    %v1180 = vpop.xlane.xlu0 %1179
    %v1181 = vsel %vm482, %v1159, 0.0
    %1182 = vadd.xlane.f32.xlu0 %v1181
    %v1183 = vpop.xlane.xlu0 %1182
    %v1184 = vrcp.pop %v1162
    %v1185 = vrcp.pop %v1165
    %v1186 = vrcp.pop %v1168
    %v1187 = vrcp.pop %v1171
    %v1188 = vrcp.pop %v1174
    %v1189 = vrcp.pop %v1177
    %v1190 = vrcp.pop %v1180
    %v1191 = vrcp.pop %v1183
    %v1192 = vmul.f32 %v1145, %v1184
    %v1193 = vmul.f32 %v1147, %v1185
    %v1194 = vmul.f32 %v1149, %v1186
    %v1195 = vmul.f32 %v1151, %v1187
    %v1196 = vmul.f32 %v1153, %v1188
    %v1197 = vmul.f32 %v1155, %v1189
    %v1198 = vmul.f32 %v1157, %v1190
    %v1199 = vmul.f32 %v1159, %v1191
    %1200 = vrot.lane.b32.xlu0 %v441, 64
    %v1201 = vpop.permute.xlu0 %1200
    %v1204 = vsel %vm482, %v1192, 0
    %1206 = vmatprep.subr.mxu0 0.0
    %1207 = vmatpush1.msra.mxu0 %v1201
    %1208 = vmatprep.subr.mxu0 0.0
    %1209 = vmatpush1.msra.mxu0 0.0
    %1210 = vmatprep.subr.mxu0 0.0
    %1211 = vmatpush1.msra.mxu0 0.0
    %1212 = vmatprep.subr.mxu0 0.0
    %1213 = vmatpush1.msra.mxu0 0.0
    %1214 = vmatprep.subr.mxu0 0.0
    %1215 = vmatpush1.msra.mxu0 0.0
    %1216 = vmatprep.subr.mxu0 0.0
    %1217 = vmatpush1.msra.mxu0 0.0
    %1218 = vmatprep.subr.mxu0 0.0
    %1219 = vmatpush1.msra.mxu0 0.0
    %1220 = vmatprep.subr.mxu0 0.0
    %1221 = vmatpush1.msra.mxu0 0.0
    %1222 = vmatprep.subr.mxu0 0.0
    %1223 = vmatpush1.msra.mxu0 0.0
    %1224 = vmatprep.subr.mxu0 0.0
    %1225 = vmatpush1.msra.mxu0 0.0
    %1226 = vmatprep.subr.mxu0 0.0
    %1227 = vmatpush1.msra.mxu0 0.0
    %1228 = vmatprep.subr.mxu0 0.0
    %1229 = vmatpush1.msra.mxu0 0.0
    %1230 = vmatprep.subr.mxu0 0.0
    %1231 = vmatpush1.msra.mxu0 0.0
    %1232 = vmatprep.subr.mxu0 0.0
    %1233 = vmatpush1.msra.mxu0 0.0
    %1234 = vmatprep.subr.mxu0 0.0
    %1235 = vmatpush1.msra.mxu0 0.0
    %1236 = vmatprep.subr.mxu0 0.0
    %1237 = vmatpush1.msra.mxu0 0.0
    %1238 = vmatprep.subr.mxu0 0.0
    %1239 = vmatpush1.msra.mxu0 0.0
    %1240 = vmatprep.subr.mxu0 0.0
    %1241 = vmatpush1.msra.mxu0 0.0
    %1242 = vmatprep.subr.mxu0 0.0
    %1243 = vmatpush1.msra.mxu0 0.0
    %1244 = vmatprep.subr.mxu0 0.0
    %1245 = vmatpush1.msra.mxu0 0.0
    %1246 = vmatprep.subr.mxu0 0.0
    %1247 = vmatpush1.msra.mxu0 0.0
    %1248 = vmatprep.subr.mxu0 0.0
    %1249 = vmatpush1.msra.mxu0 0.0
    %1250 = vmatprep.subr.mxu0 0.0
    %1251 = vmatpush1.msra.mxu0 0.0
    %1252 = vmatprep.subr.mxu0 0.0
    %1253 = vmatpush1.msra.mxu0 0.0
    %1254 = vmatprep.subr.mxu0 0.0
    %1255 = vmatpush1.msra.mxu0 0.0
    %1256 = vmatprep.subr.mxu0 0.0
    %1257 = vmatpush1.msra.mxu0 0.0
    %1258 = vmatprep.subr.mxu0 0.0
    %1259 = vmatpush1.msra.mxu0 0.0
    %1260 = vmatprep.subr.mxu0 0.0
    %1261 = vmatpush1.msra.mxu0 0.0
    %1262 = vmatprep.subr.mxu0 0.0
    %1263 = vmatpush1.msra.mxu0 0.0
    %1264 = vmatprep.subr.mxu0 0.0
    %1265 = vmatpush1.msra.mxu0 0.0
    %1266 = vmatprep.subr.mxu0 0.0
    %1267 = vmatpush1.msra.mxu0 0.0
    %1268 = vmatprep.subr.mxu0 0.0
    %1269 = vmatpush1.msra.mxu0 0.0
    %1270 = vmatprep.mubr.f32.mxu0 0.0
    %1271 = vmatmul.mubr.f32.gmra.mrb[0].mxu0 %v1204
    %v1272 = vpop.f32.mrb[0].mxu0
    %v1273 = vadd.f32 0.0, %v1272
    %v1274 = vpop.f32.mrb[0].mxu0
    %1275 = vdwg.mxu0
    %1276 = vrot.lane.b32.xlu0 %v444, 64
    %v1277 = vpop.permute.xlu0 %1276
    %v1280 = vsel %vm482, %v1193, 0
    %1282 = vmatprep.subr.mxu0 0.0
    %1283 = vmatpush1.msra.mxu0 %v1277
    %1284 = vmatprep.subr.mxu0 0.0
    %1285 = vmatpush1.msra.mxu0 0.0
    %1286 = vmatprep.subr.mxu0 0.0
    %1287 = vmatpush1.msra.mxu0 0.0
    %1288 = vmatprep.subr.mxu0 0.0
    %1289 = vmatpush1.msra.mxu0 0.0
    %1290 = vmatprep.subr.mxu0 0.0
    %1291 = vmatpush1.msra.mxu0 0.0
    %1292 = vmatprep.subr.mxu0 0.0
    %1293 = vmatpush1.msra.mxu0 0.0
    %1294 = vmatprep.subr.mxu0 0.0
    %1295 = vmatpush1.msra.mxu0 0.0
    %1296 = vmatprep.subr.mxu0 0.0
    %1297 = vmatpush1.msra.mxu0 0.0
    %1298 = vmatprep.subr.mxu0 0.0
    %1299 = vmatpush1.msra.mxu0 0.0
    %1300 = vmatprep.subr.mxu0 0.0
    %1301 = vmatpush1.msra.mxu0 0.0
    %1302 = vmatprep.subr.mxu0 0.0
    %1303 = vmatpush1.msra.mxu0 0.0
    %1304 = vmatprep.subr.mxu0 0.0
    %1305 = vmatpush1.msra.mxu0 0.0
    %1306 = vmatprep.subr.mxu0 0.0
    %1307 = vmatpush1.msra.mxu0 0.0
    %1308 = vmatprep.subr.mxu0 0.0
    %1309 = vmatpush1.msra.mxu0 0.0
    %1310 = vmatprep.subr.mxu0 0.0
    %1311 = vmatpush1.msra.mxu0 0.0
    %1312 = vmatprep.subr.mxu0 0.0
    %1313 = vmatpush1.msra.mxu0 0.0
    %1314 = vmatprep.subr.mxu0 0.0
    %1315 = vmatpush1.msra.mxu0 0.0
    %1316 = vmatprep.subr.mxu0 0.0
    %1317 = vmatpush1.msra.mxu0 0.0
    %1318 = vmatprep.subr.mxu0 0.0
    %1319 = vmatpush1.msra.mxu0 0.0
    %1320 = vmatprep.subr.mxu0 0.0
    %1321 = vmatpush1.msra.mxu0 0.0
    %1322 = vmatprep.subr.mxu0 0.0
    %1323 = vmatpush1.msra.mxu0 0.0
    %1324 = vmatprep.subr.mxu0 0.0
    %1325 = vmatpush1.msra.mxu0 0.0
    %1326 = vmatprep.subr.mxu0 0.0
    %1327 = vmatpush1.msra.mxu0 0.0
    %1328 = vmatprep.subr.mxu0 0.0
    %1329 = vmatpush1.msra.mxu0 0.0
    %1330 = vmatprep.subr.mxu0 0.0
    %1331 = vmatpush1.msra.mxu0 0.0
    %1332 = vmatprep.subr.mxu0 0.0
    %1333 = vmatpush1.msra.mxu0 0.0
    %1334 = vmatprep.subr.mxu0 0.0
    %1335 = vmatpush1.msra.mxu0 0.0
    %1336 = vmatprep.subr.mxu0 0.0
    %1337 = vmatpush1.msra.mxu0 0.0
    %1338 = vmatprep.subr.mxu0 0.0
    %1339 = vmatpush1.msra.mxu0 0.0
    %1340 = vmatprep.subr.mxu0 0.0
    %1341 = vmatpush1.msra.mxu0 0.0
    %1342 = vmatprep.subr.mxu0 0.0
    %1343 = vmatpush1.msra.mxu0 0.0
    %1344 = vmatprep.subr.mxu0 0.0
    %1345 = vmatpush1.msra.mxu0 0.0
    %1346 = vmatprep.mubr.f32.mxu0 0.0
    %1347 = vmatmul.mubr.f32.gmra.mrb[0].mxu0 %v1280
    %v1348 = vpop.f32.mrb[0].mxu0
    %v1349 = vadd.f32 0.0, %v1348
    %v1350 = vpop.f32.mrb[0].mxu0
    %1351 = vdwg.mxu0
    %1352 = vrot.lane.b32.xlu0 %v449, 64
    %v1353 = vpop.permute.xlu0 %1352
    %v1356 = vsel %vm482, %v1194, 0
    %1358 = vmatprep.subr.mxu0 0.0
    %1359 = vmatpush1.msra.mxu0 %v1353
    %1360 = vmatprep.subr.mxu0 0.0
    %1361 = vmatpush1.msra.mxu0 0.0
    %1362 = vmatprep.subr.mxu0 0.0
    %1363 = vmatpush1.msra.mxu0 0.0
    %1364 = vmatprep.subr.mxu0 0.0
    %1365 = vmatpush1.msra.mxu0 0.0
    %1366 = vmatprep.subr.mxu0 0.0
    %1367 = vmatpush1.msra.mxu0 0.0
    %1368 = vmatprep.subr.mxu0 0.0
    %1369 = vmatpush1.msra.mxu0 0.0
    %1370 = vmatprep.subr.mxu0 0.0
    %1371 = vmatpush1.msra.mxu0 0.0
    %1372 = vmatprep.subr.mxu0 0.0
    %1373 = vmatpush1.msra.mxu0 0.0
    %1374 = vmatprep.subr.mxu0 0.0
    %1375 = vmatpush1.msra.mxu0 0.0
    %1376 = vmatprep.subr.mxu0 0.0
    %1377 = vmatpush1.msra.mxu0 0.0
    %1378 = vmatprep.subr.mxu0 0.0
    %1379 = vmatpush1.msra.mxu0 0.0
    %1380 = vmatprep.subr.mxu0 0.0
    %1381 = vmatpush1.msra.mxu0 0.0
    %1382 = vmatprep.subr.mxu0 0.0
    %1383 = vmatpush1.msra.mxu0 0.0
    %1384 = vmatprep.subr.mxu0 0.0
    %1385 = vmatpush1.msra.mxu0 0.0
    %1386 = vmatprep.subr.mxu0 0.0
    %1387 = vmatpush1.msra.mxu0 0.0
    %1388 = vmatprep.subr.mxu0 0.0
    %1389 = vmatpush1.msra.mxu0 0.0
    %1390 = vmatprep.subr.mxu0 0.0
    %1391 = vmatpush1.msra.mxu0 0.0
    %1392 = vmatprep.subr.mxu0 0.0
    %1393 = vmatpush1.msra.mxu0 0.0
    %1394 = vmatprep.subr.mxu0 0.0
    %1395 = vmatpush1.msra.mxu0 0.0
    %1396 = vmatprep.subr.mxu0 0.0
    %1397 = vmatpush1.msra.mxu0 0.0
    %1398 = vmatprep.subr.mxu0 0.0
    %1399 = vmatpush1.msra.mxu0 0.0
    %1400 = vmatprep.subr.mxu0 0.0
    %1401 = vmatpush1.msra.mxu0 0.0
    %1402 = vmatprep.subr.mxu0 0.0
    %1403 = vmatpush1.msra.mxu0 0.0
    %1404 = vmatprep.subr.mxu0 0.0
    %1405 = vmatpush1.msra.mxu0 0.0
    %1406 = vmatprep.subr.mxu0 0.0
    %1407 = vmatpush1.msra.mxu0 0.0
    %1408 = vmatprep.subr.mxu0 0.0
    %1409 = vmatpush1.msra.mxu0 0.0
    %1410 = vmatprep.subr.mxu0 0.0
    %1411 = vmatpush1.msra.mxu0 0.0
    %1412 = vmatprep.subr.mxu0 0.0
    %1413 = vmatpush1.msra.mxu0 0.0
    %1414 = vmatprep.subr.mxu0 0.0
    %1415 = vmatpush1.msra.mxu0 0.0
    %1416 = vmatprep.subr.mxu0 0.0
    %1417 = vmatpush1.msra.mxu0 0.0
    %1418 = vmatprep.subr.mxu0 0.0
    %1419 = vmatpush1.msra.mxu0 0.0
    %1420 = vmatprep.subr.mxu0 0.0
    %1421 = vmatpush1.msra.mxu0 0.0
    %1422 = vmatprep.mubr.f32.mxu0 0.0
    %1423 = vmatmul.mubr.f32.gmra.mrb[0].mxu0 %v1356
    %v1424 = vpop.f32.mrb[0].mxu0
    %v1425 = vadd.f32 0.0, %v1424
    %v1426 = vpop.f32.mrb[0].mxu0
    %1427 = vdwg.mxu0
    %1428 = vrot.lane.b32.xlu0 %v452, 64
    %v1429 = vpop.permute.xlu0 %1428
    %v1432 = vsel %vm482, %v1195, 0
    %1434 = vmatprep.subr.mxu0 0.0
    %1435 = vmatpush1.msra.mxu0 %v1429
    %1436 = vmatprep.subr.mxu0 0.0
    %1437 = vmatpush1.msra.mxu0 0.0
    %1438 = vmatprep.subr.mxu0 0.0
    %1439 = vmatpush1.msra.mxu0 0.0
    %1440 = vmatprep.subr.mxu0 0.0
    %1441 = vmatpush1.msra.mxu0 0.0
    %1442 = vmatprep.subr.mxu0 0.0
    %1443 = vmatpush1.msra.mxu0 0.0
    %1444 = vmatprep.subr.mxu0 0.0
    %1445 = vmatpush1.msra.mxu0 0.0
    %1446 = vmatprep.subr.mxu0 0.0
    %1447 = vmatpush1.msra.mxu0 0.0
    %1448 = vmatprep.subr.mxu0 0.0
    %1449 = vmatpush1.msra.mxu0 0.0
    %1450 = vmatprep.subr.mxu0 0.0
    %1451 = vmatpush1.msra.mxu0 0.0
    %1452 = vmatprep.subr.mxu0 0.0
    %1453 = vmatpush1.msra.mxu0 0.0
    %1454 = vmatprep.subr.mxu0 0.0
    %1455 = vmatpush1.msra.mxu0 0.0
    %1456 = vmatprep.subr.mxu0 0.0
    %1457 = vmatpush1.msra.mxu0 0.0
    %1458 = vmatprep.subr.mxu0 0.0
    %1459 = vmatpush1.msra.mxu0 0.0
    %1460 = vmatprep.subr.mxu0 0.0
    %1461 = vmatpush1.msra.mxu0 0.0
    %1462 = vmatprep.subr.mxu0 0.0
    %1463 = vmatpush1.msra.mxu0 0.0
    %1464 = vmatprep.subr.mxu0 0.0
    %1465 = vmatpush1.msra.mxu0 0.0
    %1466 = vmatprep.subr.mxu0 0.0
    %1467 = vmatpush1.msra.mxu0 0.0
    %1468 = vmatprep.subr.mxu0 0.0
    %1469 = vmatpush1.msra.mxu0 0.0
    %1470 = vmatprep.subr.mxu0 0.0
    %1471 = vmatpush1.msra.mxu0 0.0
    %1472 = vmatprep.subr.mxu0 0.0
    %1473 = vmatpush1.msra.mxu0 0.0
    %1474 = vmatprep.subr.mxu0 0.0
    %1475 = vmatpush1.msra.mxu0 0.0
    %1476 = vmatprep.subr.mxu0 0.0
    %1477 = vmatpush1.msra.mxu0 0.0
    %1478 = vmatprep.subr.mxu0 0.0
    %1479 = vmatpush1.msra.mxu0 0.0
    %1480 = vmatprep.subr.mxu0 0.0
    %1481 = vmatpush1.msra.mxu0 0.0
    %1482 = vmatprep.subr.mxu0 0.0
    %1483 = vmatpush1.msra.mxu0 0.0
    %1484 = vmatprep.subr.mxu0 0.0
    %1485 = vmatpush1.msra.mxu0 0.0
    %1486 = vmatprep.subr.mxu0 0.0
    %1487 = vmatpush1.msra.mxu0 0.0
    %1488 = vmatprep.subr.mxu0 0.0
    %1489 = vmatpush1.msra.mxu0 0.0
    %1490 = vmatprep.subr.mxu0 0.0
    %1491 = vmatpush1.msra.mxu0 0.0
    %1492 = vmatprep.subr.mxu0 0.0
    %1493 = vmatpush1.msra.mxu0 0.0
    %1494 = vmatprep.subr.mxu0 0.0
    %1495 = vmatpush1.msra.mxu0 0.0
    %1496 = vmatprep.subr.mxu0 0.0
    %1497 = vmatpush1.msra.mxu0 0.0
    %1498 = vmatprep.mubr.f32.mxu0 0.0
    %1499 = vmatmul.mubr.f32.gmra.mrb[0].mxu0 %v1432
    %v1500 = vpop.f32.mrb[0].mxu0
    %v1501 = vadd.f32 0.0, %v1500
    %v1502 = vpop.f32.mrb[0].mxu0
    %1503 = vdwg.mxu0
    %1504 = vrot.lane.b32.xlu0 %v457, 64
    %v1505 = vpop.permute.xlu0 %1504
    %v1508 = vsel %vm482, %v1196, 0
    %1510 = vmatprep.subr.mxu0 0.0
    %1511 = vmatpush1.msra.mxu0 %v1505
    %1512 = vmatprep.subr.mxu0 0.0
    %1513 = vmatpush1.msra.mxu0 0.0
    %1514 = vmatprep.subr.mxu0 0.0
    %1515 = vmatpush1.msra.mxu0 0.0
    %1516 = vmatprep.subr.mxu0 0.0
    %1517 = vmatpush1.msra.mxu0 0.0
    %1518 = vmatprep.subr.mxu0 0.0
    %1519 = vmatpush1.msra.mxu0 0.0
    %1520 = vmatprep.subr.mxu0 0.0
    %1521 = vmatpush1.msra.mxu0 0.0
    %1522 = vmatprep.subr.mxu0 0.0
    %1523 = vmatpush1.msra.mxu0 0.0
    %1524 = vmatprep.subr.mxu0 0.0
    %1525 = vmatpush1.msra.mxu0 0.0
    %1526 = vmatprep.subr.mxu0 0.0
    %1527 = vmatpush1.msra.mxu0 0.0
    %1528 = vmatprep.subr.mxu0 0.0
    %1529 = vmatpush1.msra.mxu0 0.0
    %1530 = vmatprep.subr.mxu0 0.0
    %1531 = vmatpush1.msra.mxu0 0.0
    %1532 = vmatprep.subr.mxu0 0.0
    %1533 = vmatpush1.msra.mxu0 0.0
    %1534 = vmatprep.subr.mxu0 0.0
    %1535 = vmatpush1.msra.mxu0 0.0
    %1536 = vmatprep.subr.mxu0 0.0
    %1537 = vmatpush1.msra.mxu0 0.0
    %1538 = vmatprep.subr.mxu0 0.0
    %1539 = vmatpush1.msra.mxu0 0.0
    %1540 = vmatprep.subr.mxu0 0.0
    %1541 = vmatpush1.msra.mxu0 0.0
    %1542 = vmatprep.subr.mxu0 0.0
    %1543 = vmatpush1.msra.mxu0 0.0
    %1544 = vmatprep.subr.mxu0 0.0
    %1545 = vmatpush1.msra.mxu0 0.0
    %1546 = vmatprep.subr.mxu0 0.0
    %1547 = vmatpush1.msra.mxu0 0.0
    %1548 = vmatprep.subr.mxu0 0.0
    %1549 = vmatpush1.msra.mxu0 0.0
    %1550 = vmatprep.subr.mxu0 0.0
    %1551 = vmatpush1.msra.mxu0 0.0
    %1552 = vmatprep.subr.mxu0 0.0
    %1553 = vmatpush1.msra.mxu0 0.0
    %1554 = vmatprep.subr.mxu0 0.0
    %1555 = vmatpush1.msra.mxu0 0.0
    %1556 = vmatprep.subr.mxu0 0.0
    %1557 = vmatpush1.msra.mxu0 0.0
    %1558 = vmatprep.subr.mxu0 0.0
    %1559 = vmatpush1.msra.mxu0 0.0
    %1560 = vmatprep.subr.mxu0 0.0
    %1561 = vmatpush1.msra.mxu0 0.0
    %1562 = vmatprep.subr.mxu0 0.0
    %1563 = vmatpush1.msra.mxu0 0.0
    %1564 = vmatprep.subr.mxu0 0.0
    %1565 = vmatpush1.msra.mxu0 0.0
    %1566 = vmatprep.subr.mxu0 0.0
    %1567 = vmatpush1.msra.mxu0 0.0
    %1568 = vmatprep.subr.mxu0 0.0
    %1569 = vmatpush1.msra.mxu0 0.0
    %1570 = vmatprep.subr.mxu0 0.0
    %1571 = vmatpush1.msra.mxu0 0.0
    %1572 = vmatprep.subr.mxu0 0.0
    %1573 = vmatpush1.msra.mxu0 0.0
    %1574 = vmatprep.mubr.f32.mxu0 0.0
    %1575 = vmatmul.mubr.f32.gmra.mrb[0].mxu0 %v1508
    %v1576 = vpop.f32.mrb[0].mxu0
    %v1577 = vadd.f32 0.0, %v1576
    %v1578 = vpop.f32.mrb[0].mxu0
    %1579 = vdwg.mxu0
    %1580 = vrot.lane.b32.xlu0 %v460, 64
    %v1581 = vpop.permute.xlu0 %1580
    %v1584 = vsel %vm482, %v1197, 0
    %1586 = vmatprep.subr.mxu0 0.0
    %1587 = vmatpush1.msra.mxu0 %v1581
    %1588 = vmatprep.subr.mxu0 0.0
    %1589 = vmatpush1.msra.mxu0 0.0
    %1590 = vmatprep.subr.mxu0 0.0
    %1591 = vmatpush1.msra.mxu0 0.0
    %1592 = vmatprep.subr.mxu0 0.0
    %1593 = vmatpush1.msra.mxu0 0.0
    %1594 = vmatprep.subr.mxu0 0.0
    %1595 = vmatpush1.msra.mxu0 0.0
    %1596 = vmatprep.subr.mxu0 0.0
    %1597 = vmatpush1.msra.mxu0 0.0
    %1598 = vmatprep.subr.mxu0 0.0
    %1599 = vmatpush1.msra.mxu0 0.0
    %1600 = vmatprep.subr.mxu0 0.0
    %1601 = vmatpush1.msra.mxu0 0.0
    %1602 = vmatprep.subr.mxu0 0.0
    %1603 = vmatpush1.msra.mxu0 0.0
    %1604 = vmatprep.subr.mxu0 0.0
    %1605 = vmatpush1.msra.mxu0 0.0
    %1606 = vmatprep.subr.mxu0 0.0
    %1607 = vmatpush1.msra.mxu0 0.0
    %1608 = vmatprep.subr.mxu0 0.0
    %1609 = vmatpush1.msra.mxu0 0.0
    %1610 = vmatprep.subr.mxu0 0.0
    %1611 = vmatpush1.msra.mxu0 0.0
    %1612 = vmatprep.subr.mxu0 0.0
    %1613 = vmatpush1.msra.mxu0 0.0
    %1614 = vmatprep.subr.mxu0 0.0
    %1615 = vmatpush1.msra.mxu0 0.0
    %1616 = vmatprep.subr.mxu0 0.0
    %1617 = vmatpush1.msra.mxu0 0.0
    %1618 = vmatprep.subr.mxu0 0.0
    %1619 = vmatpush1.msra.mxu0 0.0
    %1620 = vmatprep.subr.mxu0 0.0
    %1621 = vmatpush1.msra.mxu0 0.0
    %1622 = vmatprep.subr.mxu0 0.0
    %1623 = vmatpush1.msra.mxu0 0.0
    %1624 = vmatprep.subr.mxu0 0.0
    %1625 = vmatpush1.msra.mxu0 0.0
    %1626 = vmatprep.subr.mxu0 0.0
    %1627 = vmatpush1.msra.mxu0 0.0
    %1628 = vmatprep.subr.mxu0 0.0
    %1629 = vmatpush1.msra.mxu0 0.0
    %1630 = vmatprep.subr.mxu0 0.0
    %1631 = vmatpush1.msra.mxu0 0.0
    %1632 = vmatprep.subr.mxu0 0.0
    %1633 = vmatpush1.msra.mxu0 0.0
    %1634 = vmatprep.subr.mxu0 0.0
    %1635 = vmatpush1.msra.mxu0 0.0
    %1636 = vmatprep.subr.mxu0 0.0
    %1637 = vmatpush1.msra.mxu0 0.0
    %1638 = vmatprep.subr.mxu0 0.0
    %1639 = vmatpush1.msra.mxu0 0.0
    %1640 = vmatprep.subr.mxu0 0.0
    %1641 = vmatpush1.msra.mxu0 0.0
    %1642 = vmatprep.subr.mxu0 0.0
    %1643 = vmatpush1.msra.mxu0 0.0
    %1644 = vmatprep.subr.mxu0 0.0
    %1645 = vmatpush1.msra.mxu0 0.0
    %1646 = vmatprep.subr.mxu0 0.0
    %1647 = vmatpush1.msra.mxu0 0.0
    %1648 = vmatprep.subr.mxu0 0.0
    %1649 = vmatpush1.msra.mxu0 0.0
    %1650 = vmatprep.mubr.f32.mxu0 0.0
    %1651 = vmatmul.mubr.f32.gmra.mrb[0].mxu0 %v1584
    %v1652 = vpop.f32.mrb[0].mxu0
    %v1653 = vadd.f32 0.0, %v1652
    %v1654 = vpop.f32.mrb[0].mxu0
    %1655 = vdwg.mxu0
    %1656 = vrot.lane.b32.xlu0 %v465, 64
    %v1657 = vpop.permute.xlu0 %1656
    %v1660 = vsel %vm482, %v1198, 0
    %1662 = vmatprep.subr.mxu0 0.0
    %1663 = vmatpush1.msra.mxu0 %v1657
    %1664 = vmatprep.subr.mxu0 0.0
    %1665 = vmatpush1.msra.mxu0 0.0
    %1666 = vmatprep.subr.mxu0 0.0
    %1667 = vmatpush1.msra.mxu0 0.0
    %1668 = vmatprep.subr.mxu0 0.0
    %1669 = vmatpush1.msra.mxu0 0.0
    %1670 = vmatprep.subr.mxu0 0.0
    %1671 = vmatpush1.msra.mxu0 0.0
    %1672 = vmatprep.subr.mxu0 0.0
    %1673 = vmatpush1.msra.mxu0 0.0
    %1674 = vmatprep.subr.mxu0 0.0
    %1675 = vmatpush1.msra.mxu0 0.0
    %1676 = vmatprep.subr.mxu0 0.0
    %1677 = vmatpush1.msra.mxu0 0.0
    %1678 = vmatprep.subr.mxu0 0.0
    %1679 = vmatpush1.msra.mxu0 0.0
    %1680 = vmatprep.subr.mxu0 0.0
    %1681 = vmatpush1.msra.mxu0 0.0
    %1682 = vmatprep.subr.mxu0 0.0
    %1683 = vmatpush1.msra.mxu0 0.0
    %1684 = vmatprep.subr.mxu0 0.0
    %1685 = vmatpush1.msra.mxu0 0.0
    %1686 = vmatprep.subr.mxu0 0.0
    %1687 = vmatpush1.msra.mxu0 0.0
    %1688 = vmatprep.subr.mxu0 0.0
    %1689 = vmatpush1.msra.mxu0 0.0
    %1690 = vmatprep.subr.mxu0 0.0
    %1691 = vmatpush1.msra.mxu0 0.0
    %1692 = vmatprep.subr.mxu0 0.0
    %1693 = vmatpush1.msra.mxu0 0.0
    %1694 = vmatprep.subr.mxu0 0.0
    %1695 = vmatpush1.msra.mxu0 0.0
    %1696 = vmatprep.subr.mxu0 0.0
    %1697 = vmatpush1.msra.mxu0 0.0
    %1698 = vmatprep.subr.mxu0 0.0
    %1699 = vmatpush1.msra.mxu0 0.0
    %1700 = vmatprep.subr.mxu0 0.0
    %1701 = vmatpush1.msra.mxu0 0.0
    %1702 = vmatprep.subr.mxu0 0.0
    %1703 = vmatpush1.msra.mxu0 0.0
    %1704 = vmatprep.subr.mxu0 0.0
    %1705 = vmatpush1.msra.mxu0 0.0
    %1706 = vmatprep.subr.mxu0 0.0
    %1707 = vmatpush1.msra.mxu0 0.0
    %1708 = vmatprep.subr.mxu0 0.0
    %1709 = vmatpush1.msra.mxu0 0.0
    %1710 = vmatprep.subr.mxu0 0.0
    %1711 = vmatpush1.msra.mxu0 0.0
    %1712 = vmatprep.subr.mxu0 0.0
    %1713 = vmatpush1.msra.mxu0 0.0
    %1714 = vmatprep.subr.mxu0 0.0
    %1715 = vmatpush1.msra.mxu0 0.0
    %1716 = vmatprep.subr.mxu0 0.0
    %1717 = vmatpush1.msra.mxu0 0.0
    %1718 = vmatprep.subr.mxu0 0.0
    %1719 = vmatpush1.msra.mxu0 0.0
    %1720 = vmatprep.subr.mxu0 0.0
    %1721 = vmatpush1.msra.mxu0 0.0
    %1722 = vmatprep.subr.mxu0 0.0
    %1723 = vmatpush1.msra.mxu0 0.0
    %1724 = vmatprep.subr.mxu0 0.0
    %1725 = vmatpush1.msra.mxu0 0.0
    %1726 = vmatprep.mubr.f32.mxu0 0.0
    %1727 = vmatmul.mubr.f32.gmra.mrb[0].mxu0 %v1660
    %v1728 = vpop.f32.mrb[0].mxu0
    %v1729 = vadd.f32 0.0, %v1728
    %v1730 = vpop.f32.mrb[0].mxu0
    %1731 = vdwg.mxu0
    %1732 = vrot.lane.b32.xlu0 %v468, 64
    %v1733 = vpop.permute.xlu0 %1732
    %v1736 = vsel %vm482, %v1199, 0
    %1738 = vmatprep.subr.mxu0 0.0
    %1739 = vmatpush1.msra.mxu0 %v1733
    %1740 = vmatprep.subr.mxu0 0.0
    %1741 = vmatpush1.msra.mxu0 0.0
    %1742 = vmatprep.subr.mxu0 0.0
    %1743 = vmatpush1.msra.mxu0 0.0
    %1744 = vmatprep.subr.mxu0 0.0
    %1745 = vmatpush1.msra.mxu0 0.0
    %1746 = vmatprep.subr.mxu0 0.0
    %1747 = vmatpush1.msra.mxu0 0.0
    %1748 = vmatprep.subr.mxu0 0.0
    %1749 = vmatpush1.msra.mxu0 0.0
    %1750 = vmatprep.subr.mxu0 0.0
    %1751 = vmatpush1.msra.mxu0 0.0
    %1752 = vmatprep.subr.mxu0 0.0
    %1753 = vmatpush1.msra.mxu0 0.0
    %1754 = vmatprep.subr.mxu0 0.0
    %1755 = vmatpush1.msra.mxu0 0.0
    %1756 = vmatprep.subr.mxu0 0.0
    %1757 = vmatpush1.msra.mxu0 0.0
    %1758 = vmatprep.subr.mxu0 0.0
    %1759 = vmatpush1.msra.mxu0 0.0
    %1760 = vmatprep.subr.mxu0 0.0
    %1761 = vmatpush1.msra.mxu0 0.0
    %1762 = vmatprep.subr.mxu0 0.0
    %1763 = vmatpush1.msra.mxu0 0.0
    %1764 = vmatprep.subr.mxu0 0.0
    %1765 = vmatpush1.msra.mxu0 0.0
    %1766 = vmatprep.subr.mxu0 0.0
    %1767 = vmatpush1.msra.mxu0 0.0
    %1768 = vmatprep.subr.mxu0 0.0
    %1769 = vmatpush1.msra.mxu0 0.0
    %1770 = vmatprep.subr.mxu0 0.0
    %1771 = vmatpush1.msra.mxu0 0.0
    %1772 = vmatprep.subr.mxu0 0.0
    %1773 = vmatpush1.msra.mxu0 0.0
    %1774 = vmatprep.subr.mxu0 0.0
    %1775 = vmatpush1.msra.mxu0 0.0
    %1776 = vmatprep.subr.mxu0 0.0
    %1777 = vmatpush1.msra.mxu0 0.0
    %1778 = vmatprep.subr.mxu0 0.0
    %1779 = vmatpush1.msra.mxu0 0.0
    %1780 = vmatprep.subr.mxu0 0.0
    %1781 = vmatpush1.msra.mxu0 0.0
    %1782 = vmatprep.subr.mxu0 0.0
    %1783 = vmatpush1.msra.mxu0 0.0
    %1784 = vmatprep.subr.mxu0 0.0
    %1785 = vmatpush1.msra.mxu0 0.0
    %1786 = vmatprep.subr.mxu0 0.0
    %1787 = vmatpush1.msra.mxu0 0.0
    %1788 = vmatprep.subr.mxu0 0.0
    %1789 = vmatpush1.msra.mxu0 0.0
    %1790 = vmatprep.subr.mxu0 0.0
    %1791 = vmatpush1.msra.mxu0 0.0
    %1792 = vmatprep.subr.mxu0 0.0
    %1793 = vmatpush1.msra.mxu0 0.0
    %1794 = vmatprep.subr.mxu0 0.0
    %1795 = vmatpush1.msra.mxu0 0.0
    %1796 = vmatprep.subr.mxu0 0.0
    %1797 = vmatpush1.msra.mxu0 0.0
    %1798 = vmatprep.subr.mxu0 0.0
    %1799 = vmatpush1.msra.mxu0 0.0
    %1800 = vmatprep.subr.mxu0 0.0
    %1801 = vmatpush1.msra.mxu0 0.0
    %1802 = vmatprep.mubr.f32.mxu0 0.0
    %1803 = vmatmul.mubr.f32.gmra.mrb[0].mxu0 %v1736
    %v1804 = vpop.f32.mrb[0].mxu0
    %v1805 = vadd.f32 0.0, %v1804
    %v1806 = vpop.f32.mrb[0].mxu0
    %1807 = vdwg.mxu0
    %1808 = vst.msk [vmem:[#allocation2] sm:$0xff] %vm482, %v1273
    %1809 = vst.msk [vmem:[#allocation2 + $0x8] sm:$0xff] %vm482, %v1349
    %1810 = vst.msk [vmem:[#allocation2 + $0x10] sm:$0xff] %vm482, %v1425
    %1811 = vst.msk [vmem:[#allocation2 + $0x18] sm:$0xff] %vm482, %v1501
    %1812 = vst.msk [vmem:[#allocation2 + $0x20] sm:$0xff] %vm482, %v1577
    %1813 = vst.msk [vmem:[#allocation2 + $0x28] sm:$0xff] %vm482, %v1653
    %1814 = vst.msk [vmem:[#allocation2 + $0x30] sm:$0xff] %vm482, %v1729
    %1815 = vst.msk [vmem:[#allocation2 + $0x38] sm:$0xff] %vm482, %v1805
    %1816 = vrot.lane.b32.xlu0 %v441, 120
    %v1817 = vpop.permute.xlu0 %1816
    %1818 = vrot.lane.b32.xlu0 %v441, 88
    %v1819 = vpop.permute.xlu0 %1818
    %v1820 = vsel %vm482, %v1817, 0
    %v1822 = vsel %vm482, %v1819, 0
    %1824 = vmatprep.subr.mxu0 0.0
    %1825 = vmatpush1.xpose.msra.mxu0 %v1822
    %1826 = vmatprep.subr.mxu0 0.0
    %1827 = vmatpush1.xpose.msra.mxu0 0.0
    %1828 = vmatprep.subr.mxu0 0.0
    %1829 = vmatpush1.xpose.msra.mxu0 0.0
    %1830 = vmatprep.subr.mxu0 0.0
    %1831 = vmatpush1.xpose.msra.mxu0 0.0
    %1832 = vmatprep.subr.mxu0 0.0
    %1833 = vmatpush1.xpose.msra.mxu0 0.0
    %1834 = vmatprep.subr.mxu0 0.0
    %1835 = vmatpush1.xpose.msra.mxu0 0.0
    %1836 = vmatprep.subr.mxu0 0.0
    %1837 = vmatpush1.xpose.msra.mxu0 0.0
    %1838 = vmatprep.subr.mxu0 0.0
    %1839 = vmatpush1.xpose.msra.mxu0 0.0
    %1840 = vmatprep.subr.mxu0 0.0
    %1841 = vmatpush1.xpose.msra.mxu0 0.0
    %1842 = vmatprep.subr.mxu0 0.0
    %1843 = vmatpush1.xpose.msra.mxu0 0.0
    %1844 = vmatprep.subr.mxu0 0.0
    %1845 = vmatpush1.xpose.msra.mxu0 0.0
    %1846 = vmatprep.subr.mxu0 0.0
    %1847 = vmatpush1.xpose.msra.mxu0 0.0
    %1848 = vmatprep.subr.mxu0 0.0
    %1849 = vmatpush1.xpose.msra.mxu0 0.0
    %1850 = vmatprep.subr.mxu0 0.0
    %1851 = vmatpush1.xpose.msra.mxu0 0.0
    %1852 = vmatprep.subr.mxu0 0.0
    %1853 = vmatpush1.xpose.msra.mxu0 0.0
    %1854 = vmatprep.subr.mxu0 0.0
    %1855 = vmatpush1.xpose.msra.mxu0 0.0
    %1856 = vmatprep.subr.mxu0 0.0
    %1857 = vmatpush1.xpose.msra.mxu0 0.0
    %1858 = vmatprep.subr.mxu0 0.0
    %1859 = vmatpush1.xpose.msra.mxu0 0.0
    %1860 = vmatprep.subr.mxu0 0.0
    %1861 = vmatpush1.xpose.msra.mxu0 0.0
    %1862 = vmatprep.subr.mxu0 0.0
    %1863 = vmatpush1.xpose.msra.mxu0 0.0
    %1864 = vmatprep.subr.mxu0 0.0
    %1865 = vmatpush1.xpose.msra.mxu0 0.0
    %1866 = vmatprep.subr.mxu0 0.0
    %1867 = vmatpush1.xpose.msra.mxu0 0.0
    %1868 = vmatprep.subr.mxu0 0.0
    %1869 = vmatpush1.xpose.msra.mxu0 0.0
    %1870 = vmatprep.subr.mxu0 0.0
    %1871 = vmatpush1.xpose.msra.mxu0 0.0
    %1872 = vmatprep.subr.mxu0 0.0
    %1873 = vmatpush1.xpose.msra.mxu0 0.0
    %1874 = vmatprep.subr.mxu0 0.0
    %1875 = vmatpush1.xpose.msra.mxu0 0.0
    %1876 = vmatprep.subr.mxu0 0.0
    %1877 = vmatpush1.xpose.msra.mxu0 0.0
    %1878 = vmatprep.subr.mxu0 0.0
    %1879 = vmatpush1.xpose.msra.mxu0 0.0
    %1880 = vmatprep.subr.mxu0 0.0
    %1881 = vmatpush1.xpose.msra.mxu0 0.0
    %1882 = vmatprep.subr.mxu0 0.0
    %1883 = vmatpush1.xpose.msra.mxu0 0.0
    %1884 = vmatprep.subr.mxu0 0.0
    %1885 = vmatpush1.xpose.msra.mxu0 0.0
    %1886 = vmatprep.subr.mxu0 0.0
    %1887 = vmatpush1.xpose.msra.mxu0 0.0
    %1888 = vmatprep.mubr.f32.mxu0 0.0
    %1889 = vmatmul.mubr.f32.gmra.mrb[0].mxu0 %v1820
    %v1890 = vpop.f32.mrb[0].mxu0
    %v1891 = vadd.f32 0.0, %v1890
    %v1892 = vpop.f32.mrb[0].mxu0
    %1893 = vdwg.mxu0
    %1894 = vrot.lane.b32.xlu0 %v444, 120
    %v1895 = vpop.permute.xlu0 %1894
    %1896 = vrot.lane.b32.xlu0 %v444, 88
    %v1897 = vpop.permute.xlu0 %1896
    %v1898 = vsel %vm482, %v1895, 0
    %v1900 = vsel %vm482, %v1897, 0
    %1902 = vmatprep.subr.mxu0 0.0
    %1903 = vmatpush1.xpose.msra.mxu0 %v1900
    %1904 = vmatprep.subr.mxu0 0.0
    %1905 = vmatpush1.xpose.msra.mxu0 0.0
    %1906 = vmatprep.subr.mxu0 0.0
    %1907 = vmatpush1.xpose.msra.mxu0 0.0
    %1908 = vmatprep.subr.mxu0 0.0
    %1909 = vmatpush1.xpose.msra.mxu0 0.0
    %1910 = vmatprep.subr.mxu0 0.0
    %1911 = vmatpush1.xpose.msra.mxu0 0.0
    %1912 = vmatprep.subr.mxu0 0.0
    %1913 = vmatpush1.xpose.msra.mxu0 0.0
    %1914 = vmatprep.subr.mxu0 0.0
    %1915 = vmatpush1.xpose.msra.mxu0 0.0
    %1916 = vmatprep.subr.mxu0 0.0
    %1917 = vmatpush1.xpose.msra.mxu0 0.0
    %1918 = vmatprep.subr.mxu0 0.0
    %1919 = vmatpush1.xpose.msra.mxu0 0.0
    %1920 = vmatprep.subr.mxu0 0.0
    %1921 = vmatpush1.xpose.msra.mxu0 0.0
    %1922 = vmatprep.subr.mxu0 0.0
    %1923 = vmatpush1.xpose.msra.mxu0 0.0
    %1924 = vmatprep.subr.mxu0 0.0
    %1925 = vmatpush1.xpose.msra.mxu0 0.0
    %1926 = vmatprep.subr.mxu0 0.0
    %1927 = vmatpush1.xpose.msra.mxu0 0.0
    %1928 = vmatprep.subr.mxu0 0.0
    %1929 = vmatpush1.xpose.msra.mxu0 0.0
    %1930 = vmatprep.subr.mxu0 0.0
    %1931 = vmatpush1.xpose.msra.mxu0 0.0
    %1932 = vmatprep.subr.mxu0 0.0
    %1933 = vmatpush1.xpose.msra.mxu0 0.0
    %1934 = vmatprep.subr.mxu0 0.0
    %1935 = vmatpush1.xpose.msra.mxu0 0.0
    %1936 = vmatprep.subr.mxu0 0.0
    %1937 = vmatpush1.xpose.msra.mxu0 0.0
    %1938 = vmatprep.subr.mxu0 0.0
    %1939 = vmatpush1.xpose.msra.mxu0 0.0
    %1940 = vmatprep.subr.mxu0 0.0
    %1941 = vmatpush1.xpose.msra.mxu0 0.0
    %1942 = vmatprep.subr.mxu0 0.0
    %1943 = vmatpush1.xpose.msra.mxu0 0.0
    %1944 = vmatprep.subr.mxu0 0.0
    %1945 = vmatpush1.xpose.msra.mxu0 0.0
    %1946 = vmatprep.subr.mxu0 0.0
    %1947 = vmatpush1.xpose.msra.mxu0 0.0
    %1948 = vmatprep.subr.mxu0 0.0
    %1949 = vmatpush1.xpose.msra.mxu0 0.0
    %1950 = vmatprep.subr.mxu0 0.0
    %1951 = vmatpush1.xpose.msra.mxu0 0.0
    %1952 = vmatprep.subr.mxu0 0.0
    %1953 = vmatpush1.xpose.msra.mxu0 0.0
    %1954 = vmatprep.subr.mxu0 0.0
    %1955 = vmatpush1.xpose.msra.mxu0 0.0
    %1956 = vmatprep.subr.mxu0 0.0
    %1957 = vmatpush1.xpose.msra.mxu0 0.0
    %1958 = vmatprep.subr.mxu0 0.0
    %1959 = vmatpush1.xpose.msra.mxu0 0.0
    %1960 = vmatprep.subr.mxu0 0.0
    %1961 = vmatpush1.xpose.msra.mxu0 0.0
    %1962 = vmatprep.subr.mxu0 0.0
    %1963 = vmatpush1.xpose.msra.mxu0 0.0
    %1964 = vmatprep.subr.mxu0 0.0
    %1965 = vmatpush1.xpose.msra.mxu0 0.0
    %1966 = vmatprep.mubr.f32.mxu0 0.0
    %1967 = vmatmul.mubr.f32.gmra.mrb[0].mxu0 %v1898
    %v1968 = vpop.f32.mrb[0].mxu0
    %v1969 = vadd.f32 0.0, %v1968
    %v1970 = vpop.f32.mrb[0].mxu0
    %1971 = vdwg.mxu0
    %1972 = vrot.lane.b32.xlu0 %v449, 120
    %v1973 = vpop.permute.xlu0 %1972
    %1974 = vrot.lane.b32.xlu0 %v449, 88
    %v1975 = vpop.permute.xlu0 %1974
    %v1976 = vsel %vm482, %v1973, 0
    %v1978 = vsel %vm482, %v1975, 0
    %1980 = vmatprep.subr.mxu0 0.0
    %1981 = vmatpush1.xpose.msra.mxu0 %v1978
    %1982 = vmatprep.subr.mxu0 0.0
    %1983 = vmatpush1.xpose.msra.mxu0 0.0
    %1984 = vmatprep.subr.mxu0 0.0
    %1985 = vmatpush1.xpose.msra.mxu0 0.0
    %1986 = vmatprep.subr.mxu0 0.0
    %1987 = vmatpush1.xpose.msra.mxu0 0.0
    %1988 = vmatprep.subr.mxu0 0.0
    %1989 = vmatpush1.xpose.msra.mxu0 0.0
    %1990 = vmatprep.subr.mxu0 0.0
    %1991 = vmatpush1.xpose.msra.mxu0 0.0
    %1992 = vmatprep.subr.mxu0 0.0
    %1993 = vmatpush1.xpose.msra.mxu0 0.0
    %1994 = vmatprep.subr.mxu0 0.0
    %1995 = vmatpush1.xpose.msra.mxu0 0.0
    %1996 = vmatprep.subr.mxu0 0.0
    %1997 = vmatpush1.xpose.msra.mxu0 0.0
    %1998 = vmatprep.subr.mxu0 0.0
    %1999 = vmatpush1.xpose.msra.mxu0 0.0
    %2000 = vmatprep.subr.mxu0 0.0
    %2001 = vmatpush1.xpose.msra.mxu0 0.0
    %2002 = vmatprep.subr.mxu0 0.0
    %2003 = vmatpush1.xpose.msra.mxu0 0.0
    %2004 = vmatprep.subr.mxu0 0.0
    %2005 = vmatpush1.xpose.msra.mxu0 0.0
    %2006 = vmatprep.subr.mxu0 0.0
    %2007 = vmatpush1.xpose.msra.mxu0 0.0
    %2008 = vmatprep.subr.mxu0 0.0
    %2009 = vmatpush1.xpose.msra.mxu0 0.0
    %2010 = vmatprep.subr.mxu0 0.0
    %2011 = vmatpush1.xpose.msra.mxu0 0.0
    %2012 = vmatprep.subr.mxu0 0.0
    %2013 = vmatpush1.xpose.msra.mxu0 0.0
    %2014 = vmatprep.subr.mxu0 0.0
    %2015 = vmatpush1.xpose.msra.mxu0 0.0
    %2016 = vmatprep.subr.mxu0 0.0
    %2017 = vmatpush1.xpose.msra.mxu0 0.0
    %2018 = vmatprep.subr.mxu0 0.0
    %2019 = vmatpush1.xpose.msra.mxu0 0.0
    %2020 = vmatprep.subr.mxu0 0.0
    %2021 = vmatpush1.xpose.msra.mxu0 0.0
    %2022 = vmatprep.subr.mxu0 0.0
    %2023 = vmatpush1.xpose.msra.mxu0 0.0
    %2024 = vmatprep.subr.mxu0 0.0
    %2025 = vmatpush1.xpose.msra.mxu0 0.0
    %2026 = vmatprep.subr.mxu0 0.0
    %2027 = vmatpush1.xpose.msra.mxu0 0.0
    %2028 = vmatprep.subr.mxu0 0.0
    %2029 = vmatpush1.xpose.msra.mxu0 0.0
    %2030 = vmatprep.subr.mxu0 0.0
    %2031 = vmatpush1.xpose.msra.mxu0 0.0
    %2032 = vmatprep.subr.mxu0 0.0
    %2033 = vmatpush1.xpose.msra.mxu0 0.0
    %2034 = vmatprep.subr.mxu0 0.0
    %2035 = vmatpush1.xpose.msra.mxu0 0.0
    %2036 = vmatprep.subr.mxu0 0.0
    %2037 = vmatpush1.xpose.msra.mxu0 0.0
    %2038 = vmatprep.subr.mxu0 0.0
    %2039 = vmatpush1.xpose.msra.mxu0 0.0
    %2040 = vmatprep.subr.mxu0 0.0
    %2041 = vmatpush1.xpose.msra.mxu0 0.0
    %2042 = vmatprep.subr.mxu0 0.0
    %2043 = vmatpush1.xpose.msra.mxu0 0.0
    %2044 = vmatprep.mubr.f32.mxu0 0.0
    %2045 = vmatmul.mubr.f32.gmra.mrb[0].mxu0 %v1976
    %v2046 = vpop.f32.mrb[0].mxu0
    %v2047 = vadd.f32 0.0, %v2046
    %v2048 = vpop.f32.mrb[0].mxu0
    %2049 = vdwg.mxu0
    %2050 = vrot.lane.b32.xlu0 %v452, 120
    %v2051 = vpop.permute.xlu0 %2050
    %2052 = vrot.lane.b32.xlu0 %v452, 88
    %v2053 = vpop.permute.xlu0 %2052
    %v2054 = vsel %vm482, %v2051, 0
    %v2056 = vsel %vm482, %v2053, 0
    %2058 = vmatprep.subr.mxu0 0.0
    %2059 = vmatpush1.xpose.msra.mxu0 %v2056
    %2060 = vmatprep.subr.mxu0 0.0
    %2061 = vmatpush1.xpose.msra.mxu0 0.0
    %2062 = vmatprep.subr.mxu0 0.0
    %2063 = vmatpush1.xpose.msra.mxu0 0.0
    %2064 = vmatprep.subr.mxu0 0.0
    %2065 = vmatpush1.xpose.msra.mxu0 0.0
    %2066 = vmatprep.subr.mxu0 0.0
    %2067 = vmatpush1.xpose.msra.mxu0 0.0
    %2068 = vmatprep.subr.mxu0 0.0
    %2069 = vmatpush1.xpose.msra.mxu0 0.0
    %2070 = vmatprep.subr.mxu0 0.0
    %2071 = vmatpush1.xpose.msra.mxu0 0.0
    %2072 = vmatprep.subr.mxu0 0.0
    %2073 = vmatpush1.xpose.msra.mxu0 0.0
    %2074 = vmatprep.subr.mxu0 0.0
    %2075 = vmatpush1.xpose.msra.mxu0 0.0
    %2076 = vmatprep.subr.mxu0 0.0
    %2077 = vmatpush1.xpose.msra.mxu0 0.0
    %2078 = vmatprep.subr.mxu0 0.0
    %2079 = vmatpush1.xpose.msra.mxu0 0.0
    %2080 = vmatprep.subr.mxu0 0.0
    %2081 = vmatpush1.xpose.msra.mxu0 0.0
    %2082 = vmatprep.subr.mxu0 0.0
    %2083 = vmatpush1.xpose.msra.mxu0 0.0
    %2084 = vmatprep.subr.mxu0 0.0
    %2085 = vmatpush1.xpose.msra.mxu0 0.0
    %2086 = vmatprep.subr.mxu0 0.0
    %2087 = vmatpush1.xpose.msra.mxu0 0.0
    %2088 = vmatprep.subr.mxu0 0.0
    %2089 = vmatpush1.xpose.msra.mxu0 0.0
    %2090 = vmatprep.subr.mxu0 0.0
    %2091 = vmatpush1.xpose.msra.mxu0 0.0
    %2092 = vmatprep.subr.mxu0 0.0
    %2093 = vmatpush1.xpose.msra.mxu0 0.0
    %2094 = vmatprep.subr.mxu0 0.0
    %2095 = vmatpush1.xpose.msra.mxu0 0.0
    %2096 = vmatprep.subr.mxu0 0.0
    %2097 = vmatpush1.xpose.msra.mxu0 0.0
    %2098 = vmatprep.subr.mxu0 0.0
    %2099 = vmatpush1.xpose.msra.mxu0 0.0
    %2100 = vmatprep.subr.mxu0 0.0
    %2101 = vmatpush1.xpose.msra.mxu0 0.0
    %2102 = vmatprep.subr.mxu0 0.0
    %2103 = vmatpush1.xpose.msra.mxu0 0.0
    %2104 = vmatprep.subr.mxu0 0.0
    %2105 = vmatpush1.xpose.msra.mxu0 0.0
    %2106 = vmatprep.subr.mxu0 0.0
    %2107 = vmatpush1.xpose.msra.mxu0 0.0
    %2108 = vmatprep.subr.mxu0 0.0
    %2109 = vmatpush1.xpose.msra.mxu0 0.0
    %2110 = vmatprep.subr.mxu0 0.0
    %2111 = vmatpush1.xpose.msra.mxu0 0.0
    %2112 = vmatprep.subr.mxu0 0.0
    %2113 = vmatpush1.xpose.msra.mxu0 0.0
    %2114 = vmatprep.subr.mxu0 0.0
    %2115 = vmatpush1.xpose.msra.mxu0 0.0
    %2116 = vmatprep.subr.mxu0 0.0
    %2117 = vmatpush1.xpose.msra.mxu0 0.0
    %2118 = vmatprep.subr.mxu0 0.0
    %2119 = vmatpush1.xpose.msra.mxu0 0.0
    %2120 = vmatprep.subr.mxu0 0.0
    %2121 = vmatpush1.xpose.msra.mxu0 0.0
    %2122 = vmatprep.mubr.f32.mxu0 0.0
    %2123 = vmatmul.mubr.f32.gmra.mrb[0].mxu0 %v2054
    %v2124 = vpop.f32.mrb[0].mxu0
    %v2125 = vadd.f32 0.0, %v2124
    %v2126 = vpop.f32.mrb[0].mxu0
    %2127 = vdwg.mxu0
    %2128 = vrot.lane.b32.xlu0 %v457, 120
    %v2129 = vpop.permute.xlu0 %2128
    %2130 = vrot.lane.b32.xlu0 %v457, 88
    %v2131 = vpop.permute.xlu0 %2130
    %v2132 = vsel %vm482, %v2129, 0
    %v2134 = vsel %vm482, %v2131, 0
    %2136 = vmatprep.subr.mxu0 0.0
    %2137 = vmatpush1.xpose.msra.mxu0 %v2134
    %2138 = vmatprep.subr.mxu0 0.0
    %2139 = vmatpush1.xpose.msra.mxu0 0.0
    %2140 = vmatprep.subr.mxu0 0.0
    %2141 = vmatpush1.xpose.msra.mxu0 0.0
    %2142 = vmatprep.subr.mxu0 0.0
    %2143 = vmatpush1.xpose.msra.mxu0 0.0
    %2144 = vmatprep.subr.mxu0 0.0
    %2145 = vmatpush1.xpose.msra.mxu0 0.0
    %2146 = vmatprep.subr.mxu0 0.0
    %2147 = vmatpush1.xpose.msra.mxu0 0.0
    %2148 = vmatprep.subr.mxu0 0.0
    %2149 = vmatpush1.xpose.msra.mxu0 0.0
    %2150 = vmatprep.subr.mxu0 0.0
    %2151 = vmatpush1.xpose.msra.mxu0 0.0
    %2152 = vmatprep.subr.mxu0 0.0
    %2153 = vmatpush1.xpose.msra.mxu0 0.0
    %2154 = vmatprep.subr.mxu0 0.0
    %2155 = vmatpush1.xpose.msra.mxu0 0.0
    %2156 = vmatprep.subr.mxu0 0.0
    %2157 = vmatpush1.xpose.msra.mxu0 0.0
    %2158 = vmatprep.subr.mxu0 0.0
    %2159 = vmatpush1.xpose.msra.mxu0 0.0
    %2160 = vmatprep.subr.mxu0 0.0
    %2161 = vmatpush1.xpose.msra.mxu0 0.0
    %2162 = vmatprep.subr.mxu0 0.0
    %2163 = vmatpush1.xpose.msra.mxu0 0.0
    %2164 = vmatprep.subr.mxu0 0.0
    %2165 = vmatpush1.xpose.msra.mxu0 0.0
    %2166 = vmatprep.subr.mxu0 0.0
    %2167 = vmatpush1.xpose.msra.mxu0 0.0
    %2168 = vmatprep.subr.mxu0 0.0
    %2169 = vmatpush1.xpose.msra.mxu0 0.0
    %2170 = vmatprep.subr.mxu0 0.0
    %2171 = vmatpush1.xpose.msra.mxu0 0.0
    %2172 = vmatprep.subr.mxu0 0.0
    %2173 = vmatpush1.xpose.msra.mxu0 0.0
    %2174 = vmatprep.subr.mxu0 0.0
    %2175 = vmatpush1.xpose.msra.mxu0 0.0
    %2176 = vmatprep.subr.mxu0 0.0
    %2177 = vmatpush1.xpose.msra.mxu0 0.0
    %2178 = vmatprep.subr.mxu0 0.0
    %2179 = vmatpush1.xpose.msra.mxu0 0.0
    %2180 = vmatprep.subr.mxu0 0.0
    %2181 = vmatpush1.xpose.msra.mxu0 0.0
    %2182 = vmatprep.subr.mxu0 0.0
    %2183 = vmatpush1.xpose.msra.mxu0 0.0
    %2184 = vmatprep.subr.mxu0 0.0
    %2185 = vmatpush1.xpose.msra.mxu0 0.0
    %2186 = vmatprep.subr.mxu0 0.0
    %2187 = vmatpush1.xpose.msra.mxu0 0.0
    %2188 = vmatprep.subr.mxu0 0.0
    %2189 = vmatpush1.xpose.msra.mxu0 0.0
    %2190 = vmatprep.subr.mxu0 0.0
    %2191 = vmatpush1.xpose.msra.mxu0 0.0
    %2192 = vmatprep.subr.mxu0 0.0
    %2193 = vmatpush1.xpose.msra.mxu0 0.0
    %2194 = vmatprep.subr.mxu0 0.0
    %2195 = vmatpush1.xpose.msra.mxu0 0.0
    %2196 = vmatprep.subr.mxu0 0.0
    %2197 = vmatpush1.xpose.msra.mxu0 0.0
    %2198 = vmatprep.subr.mxu0 0.0
    %2199 = vmatpush1.xpose.msra.mxu0 0.0
    %2200 = vmatprep.mubr.f32.mxu0 0.0
    %2201 = vmatmul.mubr.f32.gmra.mrb[0].mxu0 %v2132
    %v2202 = vpop.f32.mrb[0].mxu0
    %v2203 = vadd.f32 0.0, %v2202
    %v2204 = vpop.f32.mrb[0].mxu0
    %2205 = vdwg.mxu0
    %2206 = vrot.lane.b32.xlu0 %v460, 120
    %v2207 = vpop.permute.xlu0 %2206
    %2208 = vrot.lane.b32.xlu0 %v460, 88
    %v2209 = vpop.permute.xlu0 %2208
    %v2210 = vsel %vm482, %v2207, 0
    %v2212 = vsel %vm482, %v2209, 0
    %2214 = vmatprep.subr.mxu0 0.0
    %2215 = vmatpush1.xpose.msra.mxu0 %v2212
    %2216 = vmatprep.subr.mxu0 0.0
    %2217 = vmatpush1.xpose.msra.mxu0 0.0
    %2218 = vmatprep.subr.mxu0 0.0
    %2219 = vmatpush1.xpose.msra.mxu0 0.0
    %2220 = vmatprep.subr.mxu0 0.0
    %2221 = vmatpush1.xpose.msra.mxu0 0.0
    %2222 = vmatprep.subr.mxu0 0.0
    %2223 = vmatpush1.xpose.msra.mxu0 0.0
    %2224 = vmatprep.subr.mxu0 0.0
    %2225 = vmatpush1.xpose.msra.mxu0 0.0
    %2226 = vmatprep.subr.mxu0 0.0
    %2227 = vmatpush1.xpose.msra.mxu0 0.0
    %2228 = vmatprep.subr.mxu0 0.0
    %2229 = vmatpush1.xpose.msra.mxu0 0.0
    %2230 = vmatprep.subr.mxu0 0.0
    %2231 = vmatpush1.xpose.msra.mxu0 0.0
    %2232 = vmatprep.subr.mxu0 0.0
    %2233 = vmatpush1.xpose.msra.mxu0 0.0
    %2234 = vmatprep.subr.mxu0 0.0
    %2235 = vmatpush1.xpose.msra.mxu0 0.0
    %2236 = vmatprep.subr.mxu0 0.0
    %2237 = vmatpush1.xpose.msra.mxu0 0.0
    %2238 = vmatprep.subr.mxu0 0.0
    %2239 = vmatpush1.xpose.msra.mxu0 0.0
    %2240 = vmatprep.subr.mxu0 0.0
    %2241 = vmatpush1.xpose.msra.mxu0 0.0
    %2242 = vmatprep.subr.mxu0 0.0
    %2243 = vmatpush1.xpose.msra.mxu0 0.0
    %2244 = vmatprep.subr.mxu0 0.0
    %2245 = vmatpush1.xpose.msra.mxu0 0.0
    %2246 = vmatprep.subr.mxu0 0.0
    %2247 = vmatpush1.xpose.msra.mxu0 0.0
    %2248 = vmatprep.subr.mxu0 0.0
    %2249 = vmatpush1.xpose.msra.mxu0 0.0
    %2250 = vmatprep.subr.mxu0 0.0
    %2251 = vmatpush1.xpose.msra.mxu0 0.0
    %2252 = vmatprep.subr.mxu0 0.0
    %2253 = vmatpush1.xpose.msra.mxu0 0.0
    %2254 = vmatprep.subr.mxu0 0.0
    %2255 = vmatpush1.xpose.msra.mxu0 0.0
    %2256 = vmatprep.subr.mxu0 0.0
    %2257 = vmatpush1.xpose.msra.mxu0 0.0
    %2258 = vmatprep.subr.mxu0 0.0
    %2259 = vmatpush1.xpose.msra.mxu0 0.0
    %2260 = vmatprep.subr.mxu0 0.0
    %2261 = vmatpush1.xpose.msra.mxu0 0.0
    %2262 = vmatprep.subr.mxu0 0.0
    %2263 = vmatpush1.xpose.msra.mxu0 0.0
    %2264 = vmatprep.subr.mxu0 0.0
    %2265 = vmatpush1.xpose.msra.mxu0 0.0
    %2266 = vmatprep.subr.mxu0 0.0
    %2267 = vmatpush1.xpose.msra.mxu0 0.0
    %2268 = vmatprep.subr.mxu0 0.0
    %2269 = vmatpush1.xpose.msra.mxu0 0.0
    %2270 = vmatprep.subr.mxu0 0.0
    %2271 = vmatpush1.xpose.msra.mxu0 0.0
    %2272 = vmatprep.subr.mxu0 0.0
    %2273 = vmatpush1.xpose.msra.mxu0 0.0
    %2274 = vmatprep.subr.mxu0 0.0
    %2275 = vmatpush1.xpose.msra.mxu0 0.0
    %2276 = vmatprep.subr.mxu0 0.0
    %2277 = vmatpush1.xpose.msra.mxu0 0.0
    %2278 = vmatprep.mubr.f32.mxu0 0.0
    %2279 = vmatmul.mubr.f32.gmra.mrb[0].mxu0 %v2210
    %v2280 = vpop.f32.mrb[0].mxu0
    %v2281 = vadd.f32 0.0, %v2280
    %v2282 = vpop.f32.mrb[0].mxu0
    %2283 = vdwg.mxu0
    %2284 = vrot.lane.b32.xlu0 %v465, 120
    %v2285 = vpop.permute.xlu0 %2284
    %2286 = vrot.lane.b32.xlu0 %v465, 88
    %v2287 = vpop.permute.xlu0 %2286
    %v2288 = vsel %vm482, %v2285, 0
    %v2290 = vsel %vm482, %v2287, 0
    %2292 = vmatprep.subr.mxu0 0.0
    %2293 = vmatpush1.xpose.msra.mxu0 %v2290
    %2294 = vmatprep.subr.mxu0 0.0
    %2295 = vmatpush1.xpose.msra.mxu0 0.0
    %2296 = vmatprep.subr.mxu0 0.0
    %2297 = vmatpush1.xpose.msra.mxu0 0.0
    %2298 = vmatprep.subr.mxu0 0.0
    %2299 = vmatpush1.xpose.msra.mxu0 0.0
    %2300 = vmatprep.subr.mxu0 0.0
    %2301 = vmatpush1.xpose.msra.mxu0 0.0
    %2302 = vmatprep.subr.mxu0 0.0
    %2303 = vmatpush1.xpose.msra.mxu0 0.0
    %2304 = vmatprep.subr.mxu0 0.0
    %2305 = vmatpush1.xpose.msra.mxu0 0.0
    %2306 = vmatprep.subr.mxu0 0.0
    %2307 = vmatpush1.xpose.msra.mxu0 0.0
    %2308 = vmatprep.subr.mxu0 0.0
    %2309 = vmatpush1.xpose.msra.mxu0 0.0
    %2310 = vmatprep.subr.mxu0 0.0
    %2311 = vmatpush1.xpose.msra.mxu0 0.0
    %2312 = vmatprep.subr.mxu0 0.0
    %2313 = vmatpush1.xpose.msra.mxu0 0.0
    %2314 = vmatprep.subr.mxu0 0.0
    %2315 = vmatpush1.xpose.msra.mxu0 0.0
    %2316 = vmatprep.subr.mxu0 0.0
    %2317 = vmatpush1.xpose.msra.mxu0 0.0
    %2318 = vmatprep.subr.mxu0 0.0
    %2319 = vmatpush1.xpose.msra.mxu0 0.0
    %2320 = vmatprep.subr.mxu0 0.0
    %2321 = vmatpush1.xpose.msra.mxu0 0.0
    %2322 = vmatprep.subr.mxu0 0.0
    %2323 = vmatpush1.xpose.msra.mxu0 0.0
    %2324 = vmatprep.subr.mxu0 0.0
    %2325 = vmatpush1.xpose.msra.mxu0 0.0
    %2326 = vmatprep.subr.mxu0 0.0
    %2327 = vmatpush1.xpose.msra.mxu0 0.0
    %2328 = vmatprep.subr.mxu0 0.0
    %2329 = vmatpush1.xpose.msra.mxu0 0.0
    %2330 = vmatprep.subr.mxu0 0.0
    %2331 = vmatpush1.xpose.msra.mxu0 0.0
    %2332 = vmatprep.subr.mxu0 0.0
    %2333 = vmatpush1.xpose.msra.mxu0 0.0
    %2334 = vmatprep.subr.mxu0 0.0
    %2335 = vmatpush1.xpose.msra.mxu0 0.0
    %2336 = vmatprep.subr.mxu0 0.0
    %2337 = vmatpush1.xpose.msra.mxu0 0.0
    %2338 = vmatprep.subr.mxu0 0.0
    %2339 = vmatpush1.xpose.msra.mxu0 0.0
    %2340 = vmatprep.subr.mxu0 0.0
    %2341 = vmatpush1.xpose.msra.mxu0 0.0
    %2342 = vmatprep.subr.mxu0 0.0
    %2343 = vmatpush1.xpose.msra.mxu0 0.0
    %2344 = vmatprep.subr.mxu0 0.0
    %2345 = vmatpush1.xpose.msra.mxu0 0.0
    %2346 = vmatprep.subr.mxu0 0.0
    %2347 = vmatpush1.xpose.msra.mxu0 0.0
    %2348 = vmatprep.subr.mxu0 0.0
    %2349 = vmatpush1.xpose.msra.mxu0 0.0
    %2350 = vmatprep.subr.mxu0 0.0
    %2351 = vmatpush1.xpose.msra.mxu0 0.0
    %2352 = vmatprep.subr.mxu0 0.0
    %2353 = vmatpush1.xpose.msra.mxu0 0.0
    %2354 = vmatprep.subr.mxu0 0.0
    %2355 = vmatpush1.xpose.msra.mxu0 0.0
    %2356 = vmatprep.mubr.f32.mxu0 0.0
    %2357 = vmatmul.mubr.f32.gmra.mrb[0].mxu0 %v2288
    %v2358 = vpop.f32.mrb[0].mxu0
    %v2359 = vadd.f32 0.0, %v2358
    %v2360 = vpop.f32.mrb[0].mxu0
    %2361 = vdwg.mxu0
    %2362 = vrot.lane.b32.xlu0 %v468, 120
    %v2363 = vpop.permute.xlu0 %2362
    %2364 = vrot.lane.b32.xlu0 %v468, 88
    %v2365 = vpop.permute.xlu0 %2364
    %v2366 = vsel %vm482, %v2363, 0
    %v2368 = vsel %vm482, %v2365, 0
    %2370 = vmatprep.subr.mxu0 0.0
    %2371 = vmatpush1.xpose.msra.mxu0 %v2368
    %2372 = vmatprep.subr.mxu0 0.0
    %2373 = vmatpush1.xpose.msra.mxu0 0.0
    %2374 = vmatprep.subr.mxu0 0.0
    %2375 = vmatpush1.xpose.msra.mxu0 0.0
    %2376 = vmatprep.subr.mxu0 0.0
    %2377 = vmatpush1.xpose.msra.mxu0 0.0
    %2378 = vmatprep.subr.mxu0 0.0
    %2379 = vmatpush1.xpose.msra.mxu0 0.0
    %2380 = vmatprep.subr.mxu0 0.0
    %2381 = vmatpush1.xpose.msra.mxu0 0.0
    %2382 = vmatprep.subr.mxu0 0.0
    %2383 = vmatpush1.xpose.msra.mxu0 0.0
    %2384 = vmatprep.subr.mxu0 0.0
    %2385 = vmatpush1.xpose.msra.mxu0 0.0
    %2386 = vmatprep.subr.mxu0 0.0
    %2387 = vmatpush1.xpose.msra.mxu0 0.0
    %2388 = vmatprep.subr.mxu0 0.0
    %2389 = vmatpush1.xpose.msra.mxu0 0.0
    %2390 = vmatprep.subr.mxu0 0.0
    %2391 = vmatpush1.xpose.msra.mxu0 0.0
    %2392 = vmatprep.subr.mxu0 0.0
    %2393 = vmatpush1.xpose.msra.mxu0 0.0
    %2394 = vmatprep.subr.mxu0 0.0
    %2395 = vmatpush1.xpose.msra.mxu0 0.0
    %2396 = vmatprep.subr.mxu0 0.0
    %2397 = vmatpush1.xpose.msra.mxu0 0.0
    %2398 = vmatprep.subr.mxu0 0.0
    %2399 = vmatpush1.xpose.msra.mxu0 0.0
    %2400 = vmatprep.subr.mxu0 0.0
    %2401 = vmatpush1.xpose.msra.mxu0 0.0
    %2402 = vmatprep.subr.mxu0 0.0
    %2403 = vmatpush1.xpose.msra.mxu0 0.0
    %2404 = vmatprep.subr.mxu0 0.0
    %2405 = vmatpush1.xpose.msra.mxu0 0.0
    %2406 = vmatprep.subr.mxu0 0.0
    %2407 = vmatpush1.xpose.msra.mxu0 0.0
    %2408 = vmatprep.subr.mxu0 0.0
    %2409 = vmatpush1.xpose.msra.mxu0 0.0
    %2410 = vmatprep.subr.mxu0 0.0
    %2411 = vmatpush1.xpose.msra.mxu0 0.0
    %2412 = vmatprep.subr.mxu0 0.0
    %2413 = vmatpush1.xpose.msra.mxu0 0.0
    %2414 = vmatprep.subr.mxu0 0.0
    %2415 = vmatpush1.xpose.msra.mxu0 0.0
    %2416 = vmatprep.subr.mxu0 0.0
    %2417 = vmatpush1.xpose.msra.mxu0 0.0
    %2418 = vmatprep.subr.mxu0 0.0
    %2419 = vmatpush1.xpose.msra.mxu0 0.0
    %2420 = vmatprep.subr.mxu0 0.0
    %2421 = vmatpush1.xpose.msra.mxu0 0.0
    %2422 = vmatprep.subr.mxu0 0.0
    %2423 = vmatpush1.xpose.msra.mxu0 0.0
    %2424 = vmatprep.subr.mxu0 0.0
    %2425 = vmatpush1.xpose.msra.mxu0 0.0
    %2426 = vmatprep.subr.mxu0 0.0
    %2427 = vmatpush1.xpose.msra.mxu0 0.0
    %2428 = vmatprep.subr.mxu0 0.0
    %2429 = vmatpush1.xpose.msra.mxu0 0.0
    %2430 = vmatprep.subr.mxu0 0.0
    %2431 = vmatpush1.xpose.msra.mxu0 0.0
    %2432 = vmatprep.subr.mxu0 0.0
    %2433 = vmatpush1.xpose.msra.mxu0 0.0
    %2434 = vmatprep.mubr.f32.mxu0 0.0
    %2435 = vmatmul.mubr.f32.gmra.mrb[0].mxu0 %v2366
    %v2436 = vpop.f32.mrb[0].mxu0
    %v2437 = vadd.f32 0.0, %v2436
    %v2438 = vpop.f32.mrb[0].mxu0
    %2439 = vdwg.mxu0
    %v2440 = vmul.f32 %v1891, 0.35355338
    %v2441 = vmul.f32 %v1969, 0.35355338
    %v2442 = vmul.f32 %v2047, 0.35355338
    %v2443 = vmul.f32 %v2125, 0.35355338
    %v2444 = vmul.f32 %v2203, 0.35355338
    %v2445 = vmul.f32 %v2281, 0.35355338
    %v2446 = vmul.f32 %v2359, 0.35355338
    %v2447 = vmul.f32 %v2437, 0.35355338
    %2456 = vrot.lane.b32.xlu0 %v471, 120
    %v2457 = vpop.permute.xlu0 %2456
    %2458 = vrot.lane.b32.xlu0 %v472, 120
    %v2459 = vpop.permute.xlu0 %2458
    %2460 = vrot.lane.b32.xlu0 %v473, 120
    %v2461 = vpop.permute.xlu0 %2460
    %2462 = vrot.lane.b32.xlu0 %v474, 120
    %v2463 = vpop.permute.xlu0 %2462
    %2464 = vrot.lane.b32.xlu0 %v475, 120
    %v2465 = vpop.permute.xlu0 %2464
    %2466 = vrot.lane.b32.xlu0 %v476, 120
    %v2467 = vpop.permute.xlu0 %2466
    %2468 = vrot.lane.b32.xlu0 %v477, 120
    %v2469 = vpop.permute.xlu0 %2468
    %2470 = vrot.lane.b32.xlu0 %v478, 120
    %v2471 = vpop.permute.xlu0 %2470
    %v2480 = vadd.f32 %v2440, %v2457
    %v2481 = vadd.f32 %v2441, %v2459
    %v2482 = vadd.f32 %v2442, %v2461
    %v2483 = vadd.f32 %v2443, %v2463
    %v2484 = vadd.f32 %v2444, %v2465
    %v2485 = vadd.f32 %v2445, %v2467
    %v2486 = vadd.f32 %v2446, %v2469
    %v2487 = vadd.f32 %v2447, %v2471
    %v2488 = vsel %vm482, %v2480, -inf
    %2489 = vmax.xlane.f32.xlu0 %v2488
    %v2490 = vpop.xlane.xlu0 %2489
    %v2491 = vsel %vm482, %v2481, -inf
    %2492 = vmax.xlane.f32.xlu0 %v2491
    %v2493 = vpop.xlane.xlu0 %2492
    %v2494 = vsel %vm482, %v2482, -inf
    %2495 = vmax.xlane.f32.xlu0 %v2494
    %v2496 = vpop.xlane.xlu0 %2495
    %v2497 = vsel %vm482, %v2483, -inf
    %2498 = vmax.xlane.f32.xlu0 %v2497
    %v2499 = vpop.xlane.xlu0 %2498
    %v2500 = vsel %vm482, %v2484, -inf
    %2501 = vmax.xlane.f32.xlu0 %v2500
    %v2502 = vpop.xlane.xlu0 %2501
    %v2503 = vsel %vm482, %v2485, -inf
    %2504 = vmax.xlane.f32.xlu0 %v2503
    %v2505 = vpop.xlane.xlu0 %2504
    %v2506 = vsel %vm482, %v2486, -inf
    %2507 = vmax.xlane.f32.xlu0 %v2506
    %v2508 = vpop.xlane.xlu0 %2507
    %v2509 = vsel %vm482, %v2487, -inf
    %2510 = vmax.xlane.f32.xlu0 %v2509
    %v2511 = vpop.xlane.xlu0 %2510
    %v2512 = vsub.f32 %v2480, %v2490
    %v2513 = vsub.f32 %v2481, %v2493
    %v2514 = vsub.f32 %v2482, %v2496
    %v2515 = vsub.f32 %v2483, %v2499
    %v2516 = vsub.f32 %v2484, %v2502
    %v2517 = vsub.f32 %v2485, %v2505
    %v2518 = vsub.f32 %v2486, %v2508
    %v2519 = vsub.f32 %v2487, %v2511
    %v2520 = vmul.f32 %v2512, 1.442695
    %v2521 = vpow.pop %v2520
    %v2522 = vmul.f32 %v2513, 1.442695
    %v2523 = vpow.pop %v2522
    %v2524 = vmul.f32 %v2514, 1.442695
    %v2525 = vpow.pop %v2524
    %v2526 = vmul.f32 %v2515, 1.442695
    %v2527 = vpow.pop %v2526
    %v2528 = vmul.f32 %v2516, 1.442695
    %v2529 = vpow.pop %v2528
    %v2530 = vmul.f32 %v2517, 1.442695
    %v2531 = vpow.pop %v2530
    %v2532 = vmul.f32 %v2518, 1.442695
    %v2533 = vpow.pop %v2532
    %v2534 = vmul.f32 %v2519, 1.442695
    %v2535 = vpow.pop %v2534
    %v2536 = vsel %vm482, %v2521, 0.0
    %2537 = vadd.xlane.f32.xlu0 %v2536
    %v2538 = vpop.xlane.xlu0 %2537
    %v2539 = vsel %vm482, %v2523, 0.0
    %2540 = vadd.xlane.f32.xlu0 %v2539
    %v2541 = vpop.xlane.xlu0 %2540
    %v2542 = vsel %vm482, %v2525, 0.0
    %2543 = vadd.xlane.f32.xlu0 %v2542
    %v2544 = vpop.xlane.xlu0 %2543
    %v2545 = vsel %vm482, %v2527, 0.0
    %2546 = vadd.xlane.f32.xlu0 %v2545
    %v2547 = vpop.xlane.xlu0 %2546
    %v2548 = vsel %vm482, %v2529, 0.0
    %2549 = vadd.xlane.f32.xlu0 %v2548
    %v2550 = vpop.xlane.xlu0 %2549
    %v2551 = vsel %vm482, %v2531, 0.0
    %2552 = vadd.xlane.f32.xlu0 %v2551
    %v2553 = vpop.xlane.xlu0 %2552
    %v2554 = vsel %vm482, %v2533, 0.0
    %2555 = vadd.xlane.f32.xlu0 %v2554
    %v2556 = vpop.xlane.xlu0 %2555
    %v2557 = vsel %vm482, %v2535, 0.0
    %2558 = vadd.xlane.f32.xlu0 %v2557
    %v2559 = vpop.xlane.xlu0 %2558
    %v2560 = vrcp.pop %v2538
    %v2561 = vrcp.pop %v2541
    %v2562 = vrcp.pop %v2544
    %v2563 = vrcp.pop %v2547
    %v2564 = vrcp.pop %v2550
    %v2565 = vrcp.pop %v2553
    %v2566 = vrcp.pop %v2556
    %v2567 = vrcp.pop %v2559
    %v2568 = vmul.f32 %v2521, %v2560
    %v2569 = vmul.f32 %v2523, %v2561
    %v2570 = vmul.f32 %v2525, %v2562
    %v2571 = vmul.f32 %v2527, %v2563
    %v2572 = vmul.f32 %v2529, %v2564
    %v2573 = vmul.f32 %v2531, %v2565
    %v2574 = vmul.f32 %v2533, %v2566
    %v2575 = vmul.f32 %v2535, %v2567
    %2576 = vrot.lane.b32.xlu0 %v441, 56
    %v2577 = vpop.permute.xlu0 %2576
    %v2580 = vsel %vm482, %v2568, 0
    %2582 = vmatprep.subr.mxu0 0.0
    %2583 = vmatpush1.msra.mxu0 %v2577
    %2584 = vmatprep.subr.mxu0 0.0
    %2585 = vmatpush1.msra.mxu0 0.0
    %2586 = vmatprep.subr.mxu0 0.0
    %2587 = vmatpush1.msra.mxu0 0.0
    %2588 = vmatprep.subr.mxu0 0.0
    %2589 = vmatpush1.msra.mxu0 0.0
    %2590 = vmatprep.subr.mxu0 0.0
    %2591 = vmatpush1.msra.mxu0 0.0
    %2592 = vmatprep.subr.mxu0 0.0
    %2593 = vmatpush1.msra.mxu0 0.0
    %2594 = vmatprep.subr.mxu0 0.0
    %2595 = vmatpush1.msra.mxu0 0.0
    %2596 = vmatprep.subr.mxu0 0.0
    %2597 = vmatpush1.msra.mxu0 0.0
    %2598 = vmatprep.subr.mxu0 0.0
    %2599 = vmatpush1.msra.mxu0 0.0
    %2600 = vmatprep.subr.mxu0 0.0
    %2601 = vmatpush1.msra.mxu0 0.0
    %2602 = vmatprep.subr.mxu0 0.0
    %2603 = vmatpush1.msra.mxu0 0.0
    %2604 = vmatprep.subr.mxu0 0.0
    %2605 = vmatpush1.msra.mxu0 0.0
    %2606 = vmatprep.subr.mxu0 0.0
    %2607 = vmatpush1.msra.mxu0 0.0
    %2608 = vmatprep.subr.mxu0 0.0
    %2609 = vmatpush1.msra.mxu0 0.0
    %2610 = vmatprep.subr.mxu0 0.0
    %2611 = vmatpush1.msra.mxu0 0.0
    %2612 = vmatprep.subr.mxu0 0.0
    %2613 = vmatpush1.msra.mxu0 0.0
    %2614 = vmatprep.subr.mxu0 0.0
    %2615 = vmatpush1.msra.mxu0 0.0
    %2616 = vmatprep.subr.mxu0 0.0
    %2617 = vmatpush1.msra.mxu0 0.0
    %2618 = vmatprep.subr.mxu0 0.0
    %2619 = vmatpush1.msra.mxu0 0.0
    %2620 = vmatprep.subr.mxu0 0.0
    %2621 = vmatpush1.msra.mxu0 0.0
    %2622 = vmatprep.subr.mxu0 0.0
    %2623 = vmatpush1.msra.mxu0 0.0
    %2624 = vmatprep.subr.mxu0 0.0
    %2625 = vmatpush1.msra.mxu0 0.0
    %2626 = vmatprep.subr.mxu0 0.0
    %2627 = vmatpush1.msra.mxu0 0.0
    %2628 = vmatprep.subr.mxu0 0.0
    %2629 = vmatpush1.msra.mxu0 0.0
    %2630 = vmatprep.subr.mxu0 0.0
    %2631 = vmatpush1.msra.mxu0 0.0
    %2632 = vmatprep.subr.mxu0 0.0
    %2633 = vmatpush1.msra.mxu0 0.0
    %2634 = vmatprep.subr.mxu0 0.0
    %2635 = vmatpush1.msra.mxu0 0.0
    %2636 = vmatprep.subr.mxu0 0.0
    %2637 = vmatpush1.msra.mxu0 0.0
    %2638 = vmatprep.subr.mxu0 0.0
    %2639 = vmatpush1.msra.mxu0 0.0
    %2640 = vmatprep.subr.mxu0 0.0
    %2641 = vmatpush1.msra.mxu0 0.0
    %2642 = vmatprep.subr.mxu0 0.0
    %2643 = vmatpush1.msra.mxu0 0.0
    %2644 = vmatprep.subr.mxu0 0.0
    %2645 = vmatpush1.msra.mxu0 0.0
    %2646 = vmatprep.mubr.f32.mxu0 0.0
    %2647 = vmatmul.mubr.f32.gmra.mrb[0].mxu0 %v2580
    %v2648 = vpop.f32.mrb[0].mxu0
    %v2649 = vadd.f32 0.0, %v2648
    %v2650 = vpop.f32.mrb[0].mxu0
    %2651 = vdwg.mxu0
    %2652 = vrot.lane.b32.xlu0 %v444, 56
    %v2653 = vpop.permute.xlu0 %2652
    %v2656 = vsel %vm482, %v2569, 0
    %2658 = vmatprep.subr.mxu0 0.0
    %2659 = vmatpush1.msra.mxu0 %v2653
    %2660 = vmatprep.subr.mxu0 0.0
    %2661 = vmatpush1.msra.mxu0 0.0
    %2662 = vmatprep.subr.mxu0 0.0
    %2663 = vmatpush1.msra.mxu0 0.0
    %2664 = vmatprep.subr.mxu0 0.0
    %2665 = vmatpush1.msra.mxu0 0.0
    %2666 = vmatprep.subr.mxu0 0.0
    %2667 = vmatpush1.msra.mxu0 0.0
    %2668 = vmatprep.subr.mxu0 0.0
    %2669 = vmatpush1.msra.mxu0 0.0
    %2670 = vmatprep.subr.mxu0 0.0
    %2671 = vmatpush1.msra.mxu0 0.0
    %2672 = vmatprep.subr.mxu0 0.0
    %2673 = vmatpush1.msra.mxu0 0.0
    %2674 = vmatprep.subr.mxu0 0.0
    %2675 = vmatpush1.msra.mxu0 0.0
    %2676 = vmatprep.subr.mxu0 0.0
    %2677 = vmatpush1.msra.mxu0 0.0
    %2678 = vmatprep.subr.mxu0 0.0
    %2679 = vmatpush1.msra.mxu0 0.0
    %2680 = vmatprep.subr.mxu0 0.0
    %2681 = vmatpush1.msra.mxu0 0.0
    %2682 = vmatprep.subr.mxu0 0.0
    %2683 = vmatpush1.msra.mxu0 0.0
    %2684 = vmatprep.subr.mxu0 0.0
    %2685 = vmatpush1.msra.mxu0 0.0
    %2686 = vmatprep.subr.mxu0 0.0
    %2687 = vmatpush1.msra.mxu0 0.0
    %2688 = vmatprep.subr.mxu0 0.0
    %2689 = vmatpush1.msra.mxu0 0.0
    %2690 = vmatprep.subr.mxu0 0.0
    %2691 = vmatpush1.msra.mxu0 0.0
    %2692 = vmatprep.subr.mxu0 0.0
    %2693 = vmatpush1.msra.mxu0 0.0
    %2694 = vmatprep.subr.mxu0 0.0
    %2695 = vmatpush1.msra.mxu0 0.0
    %2696 = vmatprep.subr.mxu0 0.0
    %2697 = vmatpush1.msra.mxu0 0.0
    %2698 = vmatprep.subr.mxu0 0.0
    %2699 = vmatpush1.msra.mxu0 0.0
    %2700 = vmatprep.subr.mxu0 0.0
    %2701 = vmatpush1.msra.mxu0 0.0
    %2702 = vmatprep.subr.mxu0 0.0
    %2703 = vmatpush1.msra.mxu0 0.0
    %2704 = vmatprep.subr.mxu0 0.0
    %2705 = vmatpush1.msra.mxu0 0.0
    %2706 = vmatprep.subr.mxu0 0.0
    %2707 = vmatpush1.msra.mxu0 0.0
    %2708 = vmatprep.subr.mxu0 0.0
    %2709 = vmatpush1.msra.mxu0 0.0
    %2710 = vmatprep.subr.mxu0 0.0
    %2711 = vmatpush1.msra.mxu0 0.0
    %2712 = vmatprep.subr.mxu0 0.0
    %2713 = vmatpush1.msra.mxu0 0.0
    %2714 = vmatprep.subr.mxu0 0.0
    %2715 = vmatpush1.msra.mxu0 0.0
    %2716 = vmatprep.subr.mxu0 0.0
    %2717 = vmatpush1.msra.mxu0 0.0
    %2718 = vmatprep.subr.mxu0 0.0
    %2719 = vmatpush1.msra.mxu0 0.0
    %2720 = vmatprep.subr.mxu0 0.0
    %2721 = vmatpush1.msra.mxu0 0.0
    %2722 = vmatprep.mubr.f32.mxu0 0.0
    %2723 = vmatmul.mubr.f32.gmra.mrb[0].mxu0 %v2656
    %v2724 = vpop.f32.mrb[0].mxu0
    %v2725 = vadd.f32 0.0, %v2724
    %v2726 = vpop.f32.mrb[0].mxu0
    %2727 = vdwg.mxu0
    %2728 = vrot.lane.b32.xlu0 %v449, 56
    %v2729 = vpop.permute.xlu0 %2728
    %v2732 = vsel %vm482, %v2570, 0
    %2734 = vmatprep.subr.mxu0 0.0
    %2735 = vmatpush1.msra.mxu0 %v2729
    %2736 = vmatprep.subr.mxu0 0.0
    %2737 = vmatpush1.msra.mxu0 0.0
    %2738 = vmatprep.subr.mxu0 0.0
    %2739 = vmatpush1.msra.mxu0 0.0
    %2740 = vmatprep.subr.mxu0 0.0
    %2741 = vmatpush1.msra.mxu0 0.0
    %2742 = vmatprep.subr.mxu0 0.0
    %2743 = vmatpush1.msra.mxu0 0.0
    %2744 = vmatprep.subr.mxu0 0.0
    %2745 = vmatpush1.msra.mxu0 0.0
    %2746 = vmatprep.subr.mxu0 0.0
    %2747 = vmatpush1.msra.mxu0 0.0
    %2748 = vmatprep.subr.mxu0 0.0
    %2749 = vmatpush1.msra.mxu0 0.0
    %2750 = vmatprep.subr.mxu0 0.0
    %2751 = vmatpush1.msra.mxu0 0.0
    %2752 = vmatprep.subr.mxu0 0.0
    %2753 = vmatpush1.msra.mxu0 0.0
    %2754 = vmatprep.subr.mxu0 0.0
    %2755 = vmatpush1.msra.mxu0 0.0
    %2756 = vmatprep.subr.mxu0 0.0
    %2757 = vmatpush1.msra.mxu0 0.0
    %2758 = vmatprep.subr.mxu0 0.0
    %2759 = vmatpush1.msra.mxu0 0.0
    %2760 = vmatprep.subr.mxu0 0.0
    %2761 = vmatpush1.msra.mxu0 0.0
    %2762 = vmatprep.subr.mxu0 0.0
    %2763 = vmatpush1.msra.mxu0 0.0
    %2764 = vmatprep.subr.mxu0 0.0
    %2765 = vmatpush1.msra.mxu0 0.0
    %2766 = vmatprep.subr.mxu0 0.0
    %2767 = vmatpush1.msra.mxu0 0.0
    %2768 = vmatprep.subr.mxu0 0.0
    %2769 = vmatpush1.msra.mxu0 0.0
    %2770 = vmatprep.subr.mxu0 0.0
    %2771 = vmatpush1.msra.mxu0 0.0
    %2772 = vmatprep.subr.mxu0 0.0
    %2773 = vmatpush1.msra.mxu0 0.0
    %2774 = vmatprep.subr.mxu0 0.0
    %2775 = vmatpush1.msra.mxu0 0.0
    %2776 = vmatprep.subr.mxu0 0.0
    %2777 = vmatpush1.msra.mxu0 0.0
    %2778 = vmatprep.subr.mxu0 0.0
    %2779 = vmatpush1.msra.mxu0 0.0
    %2780 = vmatprep.subr.mxu0 0.0
    %2781 = vmatpush1.msra.mxu0 0.0
    %2782 = vmatprep.subr.mxu0 0.0
    %2783 = vmatpush1.msra.mxu0 0.0
    %2784 = vmatprep.subr.mxu0 0.0
    %2785 = vmatpush1.msra.mxu0 0.0
    %2786 = vmatprep.subr.mxu0 0.0
    %2787 = vmatpush1.msra.mxu0 0.0
    %2788 = vmatprep.subr.mxu0 0.0
    %2789 = vmatpush1.msra.mxu0 0.0
    %2790 = vmatprep.subr.mxu0 0.0
    %2791 = vmatpush1.msra.mxu0 0.0
    %2792 = vmatprep.subr.mxu0 0.0
    %2793 = vmatpush1.msra.mxu0 0.0
    %2794 = vmatprep.subr.mxu0 0.0
    %2795 = vmatpush1.msra.mxu0 0.0
    %2796 = vmatprep.subr.mxu0 0.0
    %2797 = vmatpush1.msra.mxu0 0.0
    %2798 = vmatprep.mubr.f32.mxu0 0.0
    %2799 = vmatmul.mubr.f32.gmra.mrb[0].mxu0 %v2732
    %v2800 = vpop.f32.mrb[0].mxu0
    %v2801 = vadd.f32 0.0, %v2800
    %v2802 = vpop.f32.mrb[0].mxu0
    %2803 = vdwg.mxu0
    %2804 = vrot.lane.b32.xlu0 %v452, 56
    %v2805 = vpop.permute.xlu0 %2804
    %v2808 = vsel %vm482, %v2571, 0
    %2810 = vmatprep.subr.mxu0 0.0
    %2811 = vmatpush1.msra.mxu0 %v2805
    %2812 = vmatprep.subr.mxu0 0.0
    %2813 = vmatpush1.msra.mxu0 0.0
    %2814 = vmatprep.subr.mxu0 0.0
    %2815 = vmatpush1.msra.mxu0 0.0
    %2816 = vmatprep.subr.mxu0 0.0
    %2817 = vmatpush1.msra.mxu0 0.0
    %2818 = vmatprep.subr.mxu0 0.0
    %2819 = vmatpush1.msra.mxu0 0.0
    %2820 = vmatprep.subr.mxu0 0.0
    %2821 = vmatpush1.msra.mxu0 0.0
    %2822 = vmatprep.subr.mxu0 0.0
    %2823 = vmatpush1.msra.mxu0 0.0
    %2824 = vmatprep.subr.mxu0 0.0
    %2825 = vmatpush1.msra.mxu0 0.0
    %2826 = vmatprep.subr.mxu0 0.0
    %2827 = vmatpush1.msra.mxu0 0.0
    %2828 = vmatprep.subr.mxu0 0.0
    %2829 = vmatpush1.msra.mxu0 0.0
    %2830 = vmatprep.subr.mxu0 0.0
    %2831 = vmatpush1.msra.mxu0 0.0
    %2832 = vmatprep.subr.mxu0 0.0
    %2833 = vmatpush1.msra.mxu0 0.0
    %2834 = vmatprep.subr.mxu0 0.0
    %2835 = vmatpush1.msra.mxu0 0.0
    %2836 = vmatprep.subr.mxu0 0.0
    %2837 = vmatpush1.msra.mxu0 0.0
    %2838 = vmatprep.subr.mxu0 0.0
    %2839 = vmatpush1.msra.mxu0 0.0
    %2840 = vmatprep.subr.mxu0 0.0
    %2841 = vmatpush1.msra.mxu0 0.0
    %2842 = vmatprep.subr.mxu0 0.0
    %2843 = vmatpush1.msra.mxu0 0.0
    %2844 = vmatprep.subr.mxu0 0.0
    %2845 = vmatpush1.msra.mxu0 0.0
    %2846 = vmatprep.subr.mxu0 0.0
    %2847 = vmatpush1.msra.mxu0 0.0
    %2848 = vmatprep.subr.mxu0 0.0
    %2849 = vmatpush1.msra.mxu0 0.0
    %2850 = vmatprep.subr.mxu0 0.0
    %2851 = vmatpush1.msra.mxu0 0.0
    %2852 = vmatprep.subr.mxu0 0.0
    %2853 = vmatpush1.msra.mxu0 0.0
    %2854 = vmatprep.subr.mxu0 0.0
    %2855 = vmatpush1.msra.mxu0 0.0
    %2856 = vmatprep.subr.mxu0 0.0
    %2857 = vmatpush1.msra.mxu0 0.0
    %2858 = vmatprep.subr.mxu0 0.0
    %2859 = vmatpush1.msra.mxu0 0.0
    %2860 = vmatprep.subr.mxu0 0.0
    %2861 = vmatpush1.msra.mxu0 0.0
    %2862 = vmatprep.subr.mxu0 0.0
    %2863 = vmatpush1.msra.mxu0 0.0
    %2864 = vmatprep.subr.mxu0 0.0
    %2865 = vmatpush1.msra.mxu0 0.0
    %2866 = vmatprep.subr.mxu0 0.0
    %2867 = vmatpush1.msra.mxu0 0.0
    %2868 = vmatprep.subr.mxu0 0.0
    %2869 = vmatpush1.msra.mxu0 0.0
    %2870 = vmatprep.subr.mxu0 0.0
    %2871 = vmatpush1.msra.mxu0 0.0
    %2872 = vmatprep.subr.mxu0 0.0
    %2873 = vmatpush1.msra.mxu0 0.0
    %2874 = vmatprep.mubr.f32.mxu0 0.0
    %2875 = vmatmul.mubr.f32.gmra.mrb[0].mxu0 %v2808
    %v2876 = vpop.f32.mrb[0].mxu0
    %v2877 = vadd.f32 0.0, %v2876
    %v2878 = vpop.f32.mrb[0].mxu0
    %2879 = vdwg.mxu0
    %2880 = vrot.lane.b32.xlu0 %v457, 56
    %v2881 = vpop.permute.xlu0 %2880
    %v2884 = vsel %vm482, %v2572, 0
    %2886 = vmatprep.subr.mxu0 0.0
    %2887 = vmatpush1.msra.mxu0 %v2881
    %2888 = vmatprep.subr.mxu0 0.0
    %2889 = vmatpush1.msra.mxu0 0.0
    %2890 = vmatprep.subr.mxu0 0.0
    %2891 = vmatpush1.msra.mxu0 0.0
    %2892 = vmatprep.subr.mxu0 0.0
    %2893 = vmatpush1.msra.mxu0 0.0
    %2894 = vmatprep.subr.mxu0 0.0
    %2895 = vmatpush1.msra.mxu0 0.0
    %2896 = vmatprep.subr.mxu0 0.0
    %2897 = vmatpush1.msra.mxu0 0.0
    %2898 = vmatprep.subr.mxu0 0.0
    %2899 = vmatpush1.msra.mxu0 0.0
    %2900 = vmatprep.subr.mxu0 0.0
    %2901 = vmatpush1.msra.mxu0 0.0
    %2902 = vmatprep.subr.mxu0 0.0
    %2903 = vmatpush1.msra.mxu0 0.0
    %2904 = vmatprep.subr.mxu0 0.0
    %2905 = vmatpush1.msra.mxu0 0.0
    %2906 = vmatprep.subr.mxu0 0.0
    %2907 = vmatpush1.msra.mxu0 0.0
    %2908 = vmatprep.subr.mxu0 0.0
    %2909 = vmatpush1.msra.mxu0 0.0
    %2910 = vmatprep.subr.mxu0 0.0
    %2911 = vmatpush1.msra.mxu0 0.0
    %2912 = vmatprep.subr.mxu0 0.0
    %2913 = vmatpush1.msra.mxu0 0.0
    %2914 = vmatprep.subr.mxu0 0.0
    %2915 = vmatpush1.msra.mxu0 0.0
    %2916 = vmatprep.subr.mxu0 0.0
    %2917 = vmatpush1.msra.mxu0 0.0
    %2918 = vmatprep.subr.mxu0 0.0
    %2919 = vmatpush1.msra.mxu0 0.0
    %2920 = vmatprep.subr.mxu0 0.0
    %2921 = vmatpush1.msra.mxu0 0.0
    %2922 = vmatprep.subr.mxu0 0.0
    %2923 = vmatpush1.msra.mxu0 0.0
    %2924 = vmatprep.subr.mxu0 0.0
    %2925 = vmatpush1.msra.mxu0 0.0
    %2926 = vmatprep.subr.mxu0 0.0
    %2927 = vmatpush1.msra.mxu0 0.0
    %2928 = vmatprep.subr.mxu0 0.0
    %2929 = vmatpush1.msra.mxu0 0.0
    %2930 = vmatprep.subr.mxu0 0.0
    %2931 = vmatpush1.msra.mxu0 0.0
    %2932 = vmatprep.subr.mxu0 0.0
    %2933 = vmatpush1.msra.mxu0 0.0
    %2934 = vmatprep.subr.mxu0 0.0
    %2935 = vmatpush1.msra.mxu0 0.0
    %2936 = vmatprep.subr.mxu0 0.0
    %2937 = vmatpush1.msra.mxu0 0.0
    %2938 = vmatprep.subr.mxu0 0.0
    %2939 = vmatpush1.msra.mxu0 0.0
    %2940 = vmatprep.subr.mxu0 0.0
    %2941 = vmatpush1.msra.mxu0 0.0
    %2942 = vmatprep.subr.mxu0 0.0
    %2943 = vmatpush1.msra.mxu0 0.0
    %2944 = vmatprep.subr.mxu0 0.0
    %2945 = vmatpush1.msra.mxu0 0.0
    %2946 = vmatprep.subr.mxu0 0.0
    %2947 = vmatpush1.msra.mxu0 0.0
    %2948 = vmatprep.subr.mxu0 0.0
    %2949 = vmatpush1.msra.mxu0 0.0
    %2950 = vmatprep.mubr.f32.mxu0 0.0
    %2951 = vmatmul.mubr.f32.gmra.mrb[0].mxu0 %v2884
    %v2952 = vpop.f32.mrb[0].mxu0
    %v2953 = vadd.f32 0.0, %v2952
    %v2954 = vpop.f32.mrb[0].mxu0
    %2955 = vdwg.mxu0
    %2956 = vrot.lane.b32.xlu0 %v460, 56
    %v2957 = vpop.permute.xlu0 %2956
    %v2960 = vsel %vm482, %v2573, 0
    %2962 = vmatprep.subr.mxu0 0.0
    %2963 = vmatpush1.msra.mxu0 %v2957
    %2964 = vmatprep.subr.mxu0 0.0
    %2965 = vmatpush1.msra.mxu0 0.0
    %2966 = vmatprep.subr.mxu0 0.0
    %2967 = vmatpush1.msra.mxu0 0.0
    %2968 = vmatprep.subr.mxu0 0.0
    %2969 = vmatpush1.msra.mxu0 0.0
    %2970 = vmatprep.subr.mxu0 0.0
    %2971 = vmatpush1.msra.mxu0 0.0
    %2972 = vmatprep.subr.mxu0 0.0
    %2973 = vmatpush1.msra.mxu0 0.0
    %2974 = vmatprep.subr.mxu0 0.0
    %2975 = vmatpush1.msra.mxu0 0.0
    %2976 = vmatprep.subr.mxu0 0.0
    %2977 = vmatpush1.msra.mxu0 0.0
    %2978 = vmatprep.subr.mxu0 0.0
    %2979 = vmatpush1.msra.mxu0 0.0
    %2980 = vmatprep.subr.mxu0 0.0
    %2981 = vmatpush1.msra.mxu0 0.0
    %2982 = vmatprep.subr.mxu0 0.0
    %2983 = vmatpush1.msra.mxu0 0.0
    %2984 = vmatprep.subr.mxu0 0.0
    %2985 = vmatpush1.msra.mxu0 0.0
    %2986 = vmatprep.subr.mxu0 0.0
    %2987 = vmatpush1.msra.mxu0 0.0
    %2988 = vmatprep.subr.mxu0 0.0
    %2989 = vmatpush1.msra.mxu0 0.0
    %2990 = vmatprep.subr.mxu0 0.0
    %2991 = vmatpush1.msra.mxu0 0.0
    %2992 = vmatprep.subr.mxu0 0.0
    %2993 = vmatpush1.msra.mxu0 0.0
    %2994 = vmatprep.subr.mxu0 0.0
    %2995 = vmatpush1.msra.mxu0 0.0
    %2996 = vmatprep.subr.mxu0 0.0
    %2997 = vmatpush1.msra.mxu0 0.0
    %2998 = vmatprep.subr.mxu0 0.0
    %2999 = vmatpush1.msra.mxu0 0.0
    %3000 = vmatprep.subr.mxu0 0.0
    %3001 = vmatpush1.msra.mxu0 0.0
    %3002 = vmatprep.subr.mxu0 0.0
    %3003 = vmatpush1.msra.mxu0 0.0
    %3004 = vmatprep.subr.mxu0 0.0
    %3005 = vmatpush1.msra.mxu0 0.0
    %3006 = vmatprep.subr.mxu0 0.0
    %3007 = vmatpush1.msra.mxu0 0.0
    %3008 = vmatprep.subr.mxu0 0.0
    %3009 = vmatpush1.msra.mxu0 0.0
    %3010 = vmatprep.subr.mxu0 0.0
    %3011 = vmatpush1.msra.mxu0 0.0
    %3012 = vmatprep.subr.mxu0 0.0
    %3013 = vmatpush1.msra.mxu0 0.0
    %3014 = vmatprep.subr.mxu0 0.0
    %3015 = vmatpush1.msra.mxu0 0.0
    %3016 = vmatprep.subr.mxu0 0.0
    %3017 = vmatpush1.msra.mxu0 0.0
    %3018 = vmatprep.subr.mxu0 0.0
    %3019 = vmatpush1.msra.mxu0 0.0
    %3020 = vmatprep.subr.mxu0 0.0
    %3021 = vmatpush1.msra.mxu0 0.0
    %3022 = vmatprep.subr.mxu0 0.0
    %3023 = vmatpush1.msra.mxu0 0.0
    %3024 = vmatprep.subr.mxu0 0.0
    %3025 = vmatpush1.msra.mxu0 0.0
    %3026 = vmatprep.mubr.f32.mxu0 0.0
    %3027 = vmatmul.mubr.f32.gmra.mrb[0].mxu0 %v2960
    %v3028 = vpop.f32.mrb[0].mxu0
    %v3029 = vadd.f32 0.0, %v3028
    %v3030 = vpop.f32.mrb[0].mxu0
    %3031 = vdwg.mxu0
    %3032 = vrot.lane.b32.xlu0 %v465, 56
    %v3033 = vpop.permute.xlu0 %3032
    %v3036 = vsel %vm482, %v2574, 0
    %3038 = vmatprep.subr.mxu0 0.0
    %3039 = vmatpush1.msra.mxu0 %v3033
    %3040 = vmatprep.subr.mxu0 0.0
    %3041 = vmatpush1.msra.mxu0 0.0
    %3042 = vmatprep.subr.mxu0 0.0
    %3043 = vmatpush1.msra.mxu0 0.0
    %3044 = vmatprep.subr.mxu0 0.0
    %3045 = vmatpush1.msra.mxu0 0.0
    %3046 = vmatprep.subr.mxu0 0.0
    %3047 = vmatpush1.msra.mxu0 0.0
    %3048 = vmatprep.subr.mxu0 0.0
    %3049 = vmatpush1.msra.mxu0 0.0
    %3050 = vmatprep.subr.mxu0 0.0
    %3051 = vmatpush1.msra.mxu0 0.0
    %3052 = vmatprep.subr.mxu0 0.0
    %3053 = vmatpush1.msra.mxu0 0.0
    %3054 = vmatprep.subr.mxu0 0.0
    %3055 = vmatpush1.msra.mxu0 0.0
    %3056 = vmatprep.subr.mxu0 0.0
    %3057 = vmatpush1.msra.mxu0 0.0
    %3058 = vmatprep.subr.mxu0 0.0
    %3059 = vmatpush1.msra.mxu0 0.0
    %3060 = vmatprep.subr.mxu0 0.0
    %3061 = vmatpush1.msra.mxu0 0.0
    %3062 = vmatprep.subr.mxu0 0.0
    %3063 = vmatpush1.msra.mxu0 0.0
    %3064 = vmatprep.subr.mxu0 0.0
    %3065 = vmatpush1.msra.mxu0 0.0
    %3066 = vmatprep.subr.mxu0 0.0
    %3067 = vmatpush1.msra.mxu0 0.0
    %3068 = vmatprep.subr.mxu0 0.0
    %3069 = vmatpush1.msra.mxu0 0.0
    %3070 = vmatprep.subr.mxu0 0.0
    %3071 = vmatpush1.msra.mxu0 0.0
    %3072 = vmatprep.subr.mxu0 0.0
    %3073 = vmatpush1.msra.mxu0 0.0
    %3074 = vmatprep.subr.mxu0 0.0
    %3075 = vmatpush1.msra.mxu0 0.0
    %3076 = vmatprep.subr.mxu0 0.0
    %3077 = vmatpush1.msra.mxu0 0.0
    %3078 = vmatprep.subr.mxu0 0.0
    %3079 = vmatpush1.msra.mxu0 0.0
    %3080 = vmatprep.subr.mxu0 0.0
    %3081 = vmatpush1.msra.mxu0 0.0
    %3082 = vmatprep.subr.mxu0 0.0
    %3083 = vmatpush1.msra.mxu0 0.0
    %3084 = vmatprep.subr.mxu0 0.0
    %3085 = vmatpush1.msra.mxu0 0.0
    %3086 = vmatprep.subr.mxu0 0.0
    %3087 = vmatpush1.msra.mxu0 0.0
    %3088 = vmatprep.subr.mxu0 0.0
    %3089 = vmatpush1.msra.mxu0 0.0
    %3090 = vmatprep.subr.mxu0 0.0
    %3091 = vmatpush1.msra.mxu0 0.0
    %3092 = vmatprep.subr.mxu0 0.0
    %3093 = vmatpush1.msra.mxu0 0.0
    %3094 = vmatprep.subr.mxu0 0.0
    %3095 = vmatpush1.msra.mxu0 0.0
    %3096 = vmatprep.subr.mxu0 0.0
    %3097 = vmatpush1.msra.mxu0 0.0
    %3098 = vmatprep.subr.mxu0 0.0
    %3099 = vmatpush1.msra.mxu0 0.0
    %3100 = vmatprep.subr.mxu0 0.0
    %3101 = vmatpush1.msra.mxu0 0.0
    %3102 = vmatprep.mubr.f32.mxu0 0.0
    %3103 = vmatmul.mubr.f32.gmra.mrb[0].mxu0 %v3036
    %v3104 = vpop.f32.mrb[0].mxu0
    %v3105 = vadd.f32 0.0, %v3104
    %v3106 = vpop.f32.mrb[0].mxu0
    %3107 = vdwg.mxu0
    %3108 = vrot.lane.b32.xlu0 %v468, 56
    %v3109 = vpop.permute.xlu0 %3108
    %v3112 = vsel %vm482, %v2575, 0
    %3114 = vmatprep.subr.mxu0 0.0
    %3115 = vmatpush1.msra.mxu0 %v3109
    %3116 = vmatprep.subr.mxu0 0.0
    %3117 = vmatpush1.msra.mxu0 0.0
    %3118 = vmatprep.subr.mxu0 0.0
    %3119 = vmatpush1.msra.mxu0 0.0
    %3120 = vmatprep.subr.mxu0 0.0
    %3121 = vmatpush1.msra.mxu0 0.0
    %3122 = vmatprep.subr.mxu0 0.0
    %3123 = vmatpush1.msra.mxu0 0.0
    %3124 = vmatprep.subr.mxu0 0.0
    %3125 = vmatpush1.msra.mxu0 0.0
    %3126 = vmatprep.subr.mxu0 0.0
    %3127 = vmatpush1.msra.mxu0 0.0
    %3128 = vmatprep.subr.mxu0 0.0
    %3129 = vmatpush1.msra.mxu0 0.0
    %3130 = vmatprep.subr.mxu0 0.0
    %3131 = vmatpush1.msra.mxu0 0.0
    %3132 = vmatprep.subr.mxu0 0.0
    %3133 = vmatpush1.msra.mxu0 0.0
    %3134 = vmatprep.subr.mxu0 0.0
    %3135 = vmatpush1.msra.mxu0 0.0
    %3136 = vmatprep.subr.mxu0 0.0
    %3137 = vmatpush1.msra.mxu0 0.0
    %3138 = vmatprep.subr.mxu0 0.0
    %3139 = vmatpush1.msra.mxu0 0.0
    %3140 = vmatprep.subr.mxu0 0.0
    %3141 = vmatpush1.msra.mxu0 0.0
    %3142 = vmatprep.subr.mxu0 0.0
    %3143 = vmatpush1.msra.mxu0 0.0
    %3144 = vmatprep.subr.mxu0 0.0
    %3145 = vmatpush1.msra.mxu0 0.0
    %3146 = vmatprep.subr.mxu0 0.0
    %3147 = vmatpush1.msra.mxu0 0.0
    %3148 = vmatprep.subr.mxu0 0.0
    %3149 = vmatpush1.msra.mxu0 0.0
    %3150 = vmatprep.subr.mxu0 0.0
    %3151 = vmatpush1.msra.mxu0 0.0
    %3152 = vmatprep.subr.mxu0 0.0
    %3153 = vmatpush1.msra.mxu0 0.0
    %3154 = vmatprep.subr.mxu0 0.0
    %3155 = vmatpush1.msra.mxu0 0.0
    %3156 = vmatprep.subr.mxu0 0.0
    %3157 = vmatpush1.msra.mxu0 0.0
    %3158 = vmatprep.subr.mxu0 0.0
    %3159 = vmatpush1.msra.mxu0 0.0
    %3160 = vmatprep.subr.mxu0 0.0
    %3161 = vmatpush1.msra.mxu0 0.0
    %3162 = vmatprep.subr.mxu0 0.0
    %3163 = vmatpush1.msra.mxu0 0.0
    %3164 = vmatprep.subr.mxu0 0.0
    %3165 = vmatpush1.msra.mxu0 0.0
    %3166 = vmatprep.subr.mxu0 0.0
    %3167 = vmatpush1.msra.mxu0 0.0
    %3168 = vmatprep.subr.mxu0 0.0
    %3169 = vmatpush1.msra.mxu0 0.0
    %3170 = vmatprep.subr.mxu0 0.0
    %3171 = vmatpush1.msra.mxu0 0.0
    %3172 = vmatprep.subr.mxu0 0.0
    %3173 = vmatpush1.msra.mxu0 0.0
    %3174 = vmatprep.subr.mxu0 0.0
    %3175 = vmatpush1.msra.mxu0 0.0
    %3176 = vmatprep.subr.mxu0 0.0
    %3177 = vmatpush1.msra.mxu0 0.0
    %3178 = vmatprep.mubr.f32.mxu0 0.0
    %3179 = vmatmul.mubr.f32.gmra.mrb[0].mxu0 %v3112
    %v3180 = vpop.f32.mrb[0].mxu0
    %v3181 = vadd.f32 0.0, %v3180
    %v3182 = vpop.f32.mrb[0].mxu0
    %3183 = vdwg.mxu0
    %3192 = vrot.lane.b32.xlu0 %v2649, 8
    %v3193 = vpop.permute.xlu0 %3192
    %3194 = vrot.lane.b32.xlu0 %v2725, 8
    %v3195 = vpop.permute.xlu0 %3194
    %3196 = vrot.lane.b32.xlu0 %v2801, 8
    %v3197 = vpop.permute.xlu0 %3196
    %3198 = vrot.lane.b32.xlu0 %v2877, 8
    %v3199 = vpop.permute.xlu0 %3198
    %3200 = vrot.lane.b32.xlu0 %v2953, 8
    %v3201 = vpop.permute.xlu0 %3200
    %3202 = vrot.lane.b32.xlu0 %v3029, 8
    %v3203 = vpop.permute.xlu0 %3202
    %3204 = vrot.lane.b32.xlu0 %v3105, 8
    %v3205 = vpop.permute.xlu0 %3204
    %3206 = vrot.lane.b32.xlu0 %v3181, 8
    %v3207 = vpop.permute.xlu0 %3206
    %vm3216 = vcmask 130112
    %3217 = vst.msk [vmem:[#allocation2] sm:$0xff] %vm3216, %v3193
    %3218 = vst.msk [vmem:[#allocation2 + $0x8] sm:$0xff] %vm3216, %v3195
    %3219 = vst.msk [vmem:[#allocation2 + $0x10] sm:$0xff] %vm3216, %v3197
    %3220 = vst.msk [vmem:[#allocation2 + $0x18] sm:$0xff] %vm3216, %v3199
    %3221 = vst.msk [vmem:[#allocation2 + $0x20] sm:$0xff] %vm3216, %v3201
    %3222 = vst.msk [vmem:[#allocation2 + $0x28] sm:$0xff] %vm3216, %v3203
    %3223 = vst.msk [vmem:[#allocation2 + $0x30] sm:$0xff] %vm3216, %v3205
    %3224 = vst.msk [vmem:[#allocation2 + $0x38] sm:$0xff] %vm3216, %v3207
    %3225 = vrot.lane.b32.xlu0 %v441, 112
    %v3226 = vpop.permute.xlu0 %3225
    %3227 = vrot.lane.b32.xlu0 %v441, 80
    %v3228 = vpop.permute.xlu0 %3227
    %v3229 = vsel %vm482, %v3226, 0
    %v3231 = vsel %vm482, %v3228, 0
    %3233 = vmatprep.subr.mxu0 0.0
    %3234 = vmatpush1.xpose.msra.mxu0 %v3231
    %3235 = vmatprep.subr.mxu0 0.0
    %3236 = vmatpush1.xpose.msra.mxu0 0.0
    %3237 = vmatprep.subr.mxu0 0.0
    %3238 = vmatpush1.xpose.msra.mxu0 0.0
    %3239 = vmatprep.subr.mxu0 0.0
    %3240 = vmatpush1.xpose.msra.mxu0 0.0
    %3241 = vmatprep.subr.mxu0 0.0
    %3242 = vmatpush1.xpose.msra.mxu0 0.0
    %3243 = vmatprep.subr.mxu0 0.0
    %3244 = vmatpush1.xpose.msra.mxu0 0.0
    %3245 = vmatprep.subr.mxu0 0.0
    %3246 = vmatpush1.xpose.msra.mxu0 0.0
    %3247 = vmatprep.subr.mxu0 0.0
    %3248 = vmatpush1.xpose.msra.mxu0 0.0
    %3249 = vmatprep.subr.mxu0 0.0
    %3250 = vmatpush1.xpose.msra.mxu0 0.0
    %3251 = vmatprep.subr.mxu0 0.0
    %3252 = vmatpush1.xpose.msra.mxu0 0.0
    %3253 = vmatprep.subr.mxu0 0.0
    %3254 = vmatpush1.xpose.msra.mxu0 0.0
    %3255 = vmatprep.subr.mxu0 0.0
    %3256 = vmatpush1.xpose.msra.mxu0 0.0
    %3257 = vmatprep.subr.mxu0 0.0
    %3258 = vmatpush1.xpose.msra.mxu0 0.0
    %3259 = vmatprep.subr.mxu0 0.0
    %3260 = vmatpush1.xpose.msra.mxu0 0.0
    %3261 = vmatprep.subr.mxu0 0.0
    %3262 = vmatpush1.xpose.msra.mxu0 0.0
    %3263 = vmatprep.subr.mxu0 0.0
    %3264 = vmatpush1.xpose.msra.mxu0 0.0
    %3265 = vmatprep.subr.mxu0 0.0
    %3266 = vmatpush1.xpose.msra.mxu0 0.0
    %3267 = vmatprep.subr.mxu0 0.0
    %3268 = vmatpush1.xpose.msra.mxu0 0.0
    %3269 = vmatprep.subr.mxu0 0.0
    %3270 = vmatpush1.xpose.msra.mxu0 0.0
    %3271 = vmatprep.subr.mxu0 0.0
    %3272 = vmatpush1.xpose.msra.mxu0 0.0
    %3273 = vmatprep.subr.mxu0 0.0
    %3274 = vmatpush1.xpose.msra.mxu0 0.0
    %3275 = vmatprep.subr.mxu0 0.0
    %3276 = vmatpush1.xpose.msra.mxu0 0.0
    %3277 = vmatprep.subr.mxu0 0.0
    %3278 = vmatpush1.xpose.msra.mxu0 0.0
    %3279 = vmatprep.subr.mxu0 0.0
    %3280 = vmatpush1.xpose.msra.mxu0 0.0
    %3281 = vmatprep.subr.mxu0 0.0
    %3282 = vmatpush1.xpose.msra.mxu0 0.0
    %3283 = vmatprep.subr.mxu0 0.0
    %3284 = vmatpush1.xpose.msra.mxu0 0.0
    %3285 = vmatprep.subr.mxu0 0.0
    %3286 = vmatpush1.xpose.msra.mxu0 0.0
    %3287 = vmatprep.subr.mxu0 0.0
    %3288 = vmatpush1.xpose.msra.mxu0 0.0
    %3289 = vmatprep.subr.mxu0 0.0
    %3290 = vmatpush1.xpose.msra.mxu0 0.0
    %3291 = vmatprep.subr.mxu0 0.0
    %3292 = vmatpush1.xpose.msra.mxu0 0.0
    %3293 = vmatprep.subr.mxu0 0.0
    %3294 = vmatpush1.xpose.msra.mxu0 0.0
    %3295 = vmatprep.subr.mxu0 0.0
    %3296 = vmatpush1.xpose.msra.mxu0 0.0
    %3297 = vmatprep.mubr.f32.mxu0 0.0
    %3298 = vmatmul.mubr.f32.gmra.mrb[0].mxu0 %v3229
    %v3299 = vpop.f32.mrb[0].mxu0
    %v3300 = vadd.f32 0.0, %v3299
    %v3301 = vpop.f32.mrb[0].mxu0
    %3302 = vdwg.mxu0
    %3303 = vrot.lane.b32.xlu0 %v444, 112
    %v3304 = vpop.permute.xlu0 %3303
    %3305 = vrot.lane.b32.xlu0 %v444, 80
    %v3306 = vpop.permute.xlu0 %3305
    %v3307 = vsel %vm482, %v3304, 0
    %v3309 = vsel %vm482, %v3306, 0
    %3311 = vmatprep.subr.mxu0 0.0
    %3312 = vmatpush1.xpose.msra.mxu0 %v3309
    %3313 = vmatprep.subr.mxu0 0.0
    %3314 = vmatpush1.xpose.msra.mxu0 0.0
    %3315 = vmatprep.subr.mxu0 0.0
    %3316 = vmatpush1.xpose.msra.mxu0 0.0
    %3317 = vmatprep.subr.mxu0 0.0
    %3318 = vmatpush1.xpose.msra.mxu0 0.0
    %3319 = vmatprep.subr.mxu0 0.0
    %3320 = vmatpush1.xpose.msra.mxu0 0.0
    %3321 = vmatprep.subr.mxu0 0.0
    %3322 = vmatpush1.xpose.msra.mxu0 0.0
    %3323 = vmatprep.subr.mxu0 0.0
    %3324 = vmatpush1.xpose.msra.mxu0 0.0
    %3325 = vmatprep.subr.mxu0 0.0
    %3326 = vmatpush1.xpose.msra.mxu0 0.0
    %3327 = vmatprep.subr.mxu0 0.0
    %3328 = vmatpush1.xpose.msra.mxu0 0.0
    %3329 = vmatprep.subr.mxu0 0.0
    %3330 = vmatpush1.xpose.msra.mxu0 0.0
    %3331 = vmatprep.subr.mxu0 0.0
    %3332 = vmatpush1.xpose.msra.mxu0 0.0
    %3333 = vmatprep.subr.mxu0 0.0
    %3334 = vmatpush1.xpose.msra.mxu0 0.0
    %3335 = vmatprep.subr.mxu0 0.0
    %3336 = vmatpush1.xpose.msra.mxu0 0.0
    %3337 = vmatprep.subr.mxu0 0.0
    %3338 = vmatpush1.xpose.msra.mxu0 0.0
    %3339 = vmatprep.subr.mxu0 0.0
    %3340 = vmatpush1.xpose.msra.mxu0 0.0
    %3341 = vmatprep.subr.mxu0 0.0
    %3342 = vmatpush1.xpose.msra.mxu0 0.0
    %3343 = vmatprep.subr.mxu0 0.0
    %3344 = vmatpush1.xpose.msra.mxu0 0.0
    %3345 = vmatprep.subr.mxu0 0.0
    %3346 = vmatpush1.xpose.msra.mxu0 0.0
    %3347 = vmatprep.subr.mxu0 0.0
    %3348 = vmatpush1.xpose.msra.mxu0 0.0
    %3349 = vmatprep.subr.mxu0 0.0
    %3350 = vmatpush1.xpose.msra.mxu0 0.0
    %3351 = vmatprep.subr.mxu0 0.0
    %3352 = vmatpush1.xpose.msra.mxu0 0.0
    %3353 = vmatprep.subr.mxu0 0.0
    %3354 = vmatpush1.xpose.msra.mxu0 0.0
    %3355 = vmatprep.subr.mxu0 0.0
    %3356 = vmatpush1.xpose.msra.mxu0 0.0
    %3357 = vmatprep.subr.mxu0 0.0
    %3358 = vmatpush1.xpose.msra.mxu0 0.0
    %3359 = vmatprep.subr.mxu0 0.0
    %3360 = vmatpush1.xpose.msra.mxu0 0.0
    %3361 = vmatprep.subr.mxu0 0.0
    %3362 = vmatpush1.xpose.msra.mxu0 0.0
    %3363 = vmatprep.subr.mxu0 0.0
    %3364 = vmatpush1.xpose.msra.mxu0 0.0
    %3365 = vmatprep.subr.mxu0 0.0
    %3366 = vmatpush1.xpose.msra.mxu0 0.0
    %3367 = vmatprep.subr.mxu0 0.0
    %3368 = vmatpush1.xpose.msra.mxu0 0.0
    %3369 = vmatprep.subr.mxu0 0.0
    %3370 = vmatpush1.xpose.msra.mxu0 0.0
    %3371 = vmatprep.subr.mxu0 0.0
    %3372 = vmatpush1.xpose.msra.mxu0 0.0
    %3373 = vmatprep.subr.mxu0 0.0
    %3374 = vmatpush1.xpose.msra.mxu0 0.0
    %3375 = vmatprep.mubr.f32.mxu0 0.0
    %3376 = vmatmul.mubr.f32.gmra.mrb[0].mxu0 %v3307
    %v3377 = vpop.f32.mrb[0].mxu0
    %v3378 = vadd.f32 0.0, %v3377
    %v3379 = vpop.f32.mrb[0].mxu0
    %3380 = vdwg.mxu0
    %3381 = vrot.lane.b32.xlu0 %v449, 112
    %v3382 = vpop.permute.xlu0 %3381
    %3383 = vrot.lane.b32.xlu0 %v449, 80
    %v3384 = vpop.permute.xlu0 %3383
    %v3385 = vsel %vm482, %v3382, 0
    %v3387 = vsel %vm482, %v3384, 0
    %3389 = vmatprep.subr.mxu0 0.0
    %3390 = vmatpush1.xpose.msra.mxu0 %v3387
    %3391 = vmatprep.subr.mxu0 0.0
    %3392 = vmatpush1.xpose.msra.mxu0 0.0
    %3393 = vmatprep.subr.mxu0 0.0
    %3394 = vmatpush1.xpose.msra.mxu0 0.0
    %3395 = vmatprep.subr.mxu0 0.0
    %3396 = vmatpush1.xpose.msra.mxu0 0.0
    %3397 = vmatprep.subr.mxu0 0.0
    %3398 = vmatpush1.xpose.msra.mxu0 0.0
    %3399 = vmatprep.subr.mxu0 0.0
    %3400 = vmatpush1.xpose.msra.mxu0 0.0
    %3401 = vmatprep.subr.mxu0 0.0
    %3402 = vmatpush1.xpose.msra.mxu0 0.0
    %3403 = vmatprep.subr.mxu0 0.0
    %3404 = vmatpush1.xpose.msra.mxu0 0.0
    %3405 = vmatprep.subr.mxu0 0.0
    %3406 = vmatpush1.xpose.msra.mxu0 0.0
    %3407 = vmatprep.subr.mxu0 0.0
    %3408 = vmatpush1.xpose.msra.mxu0 0.0
    %3409 = vmatprep.subr.mxu0 0.0
    %3410 = vmatpush1.xpose.msra.mxu0 0.0
    %3411 = vmatprep.subr.mxu0 0.0
    %3412 = vmatpush1.xpose.msra.mxu0 0.0
    %3413 = vmatprep.subr.mxu0 0.0
    %3414 = vmatpush1.xpose.msra.mxu0 0.0
    %3415 = vmatprep.subr.mxu0 0.0
    %3416 = vmatpush1.xpose.msra.mxu0 0.0
    %3417 = vmatprep.subr.mxu0 0.0
    %3418 = vmatpush1.xpose.msra.mxu0 0.0
    %3419 = vmatprep.subr.mxu0 0.0
    %3420 = vmatpush1.xpose.msra.mxu0 0.0
    %3421 = vmatprep.subr.mxu0 0.0
    %3422 = vmatpush1.xpose.msra.mxu0 0.0
    %3423 = vmatprep.subr.mxu0 0.0
    %3424 = vmatpush1.xpose.msra.mxu0 0.0
    %3425 = vmatprep.subr.mxu0 0.0
    %3426 = vmatpush1.xpose.msra.mxu0 0.0
    %3427 = vmatprep.subr.mxu0 0.0
    %3428 = vmatpush1.xpose.msra.mxu0 0.0
    %3429 = vmatprep.subr.mxu0 0.0
    %3430 = vmatpush1.xpose.msra.mxu0 0.0
    %3431 = vmatprep.subr.mxu0 0.0
    %3432 = vmatpush1.xpose.msra.mxu0 0.0
    %3433 = vmatprep.subr.mxu0 0.0
    %3434 = vmatpush1.xpose.msra.mxu0 0.0
    %3435 = vmatprep.subr.mxu0 0.0
    %3436 = vmatpush1.xpose.msra.mxu0 0.0
    %3437 = vmatprep.subr.mxu0 0.0
    %3438 = vmatpush1.xpose.msra.mxu0 0.0
    %3439 = vmatprep.subr.mxu0 0.0
    %3440 = vmatpush1.xpose.msra.mxu0 0.0
    %3441 = vmatprep.subr.mxu0 0.0
    %3442 = vmatpush1.xpose.msra.mxu0 0.0
    %3443 = vmatprep.subr.mxu0 0.0
    %3444 = vmatpush1.xpose.msra.mxu0 0.0
    %3445 = vmatprep.subr.mxu0 0.0
    %3446 = vmatpush1.xpose.msra.mxu0 0.0
    %3447 = vmatprep.subr.mxu0 0.0
    %3448 = vmatpush1.xpose.msra.mxu0 0.0
    %3449 = vmatprep.subr.mxu0 0.0
    %3450 = vmatpush1.xpose.msra.mxu0 0.0
    %3451 = vmatprep.subr.mxu0 0.0
    %3452 = vmatpush1.xpose.msra.mxu0 0.0
    %3453 = vmatprep.mubr.f32.mxu0 0.0
    %3454 = vmatmul.mubr.f32.gmra.mrb[0].mxu0 %v3385
    %v3455 = vpop.f32.mrb[0].mxu0
    %v3456 = vadd.f32 0.0, %v3455
    %v3457 = vpop.f32.mrb[0].mxu0
    %3458 = vdwg.mxu0
    %3459 = vrot.lane.b32.xlu0 %v452, 112
    %v3460 = vpop.permute.xlu0 %3459
    %3461 = vrot.lane.b32.xlu0 %v452, 80
    %v3462 = vpop.permute.xlu0 %3461
    %v3463 = vsel %vm482, %v3460, 0
    %v3465 = vsel %vm482, %v3462, 0
    %3467 = vmatprep.subr.mxu0 0.0
    %3468 = vmatpush1.xpose.msra.mxu0 %v3465
    %3469 = vmatprep.subr.mxu0 0.0
    %3470 = vmatpush1.xpose.msra.mxu0 0.0
    %3471 = vmatprep.subr.mxu0 0.0
    %3472 = vmatpush1.xpose.msra.mxu0 0.0
    %3473 = vmatprep.subr.mxu0 0.0
    %3474 = vmatpush1.xpose.msra.mxu0 0.0
    %3475 = vmatprep.subr.mxu0 0.0
    %3476 = vmatpush1.xpose.msra.mxu0 0.0
    %3477 = vmatprep.subr.mxu0 0.0
    %3478 = vmatpush1.xpose.msra.mxu0 0.0
    %3479 = vmatprep.subr.mxu0 0.0
    %3480 = vmatpush1.xpose.msra.mxu0 0.0
    %3481 = vmatprep.subr.mxu0 0.0
    %3482 = vmatpush1.xpose.msra.mxu0 0.0
    %3483 = vmatprep.subr.mxu0 0.0
    %3484 = vmatpush1.xpose.msra.mxu0 0.0
    %3485 = vmatprep.subr.mxu0 0.0
    %3486 = vmatpush1.xpose.msra.mxu0 0.0
    %3487 = vmatprep.subr.mxu0 0.0
    %3488 = vmatpush1.xpose.msra.mxu0 0.0
    %3489 = vmatprep.subr.mxu0 0.0
    %3490 = vmatpush1.xpose.msra.mxu0 0.0
    %3491 = vmatprep.subr.mxu0 0.0
    %3492 = vmatpush1.xpose.msra.mxu0 0.0
    %3493 = vmatprep.subr.mxu0 0.0
    %3494 = vmatpush1.xpose.msra.mxu0 0.0
    %3495 = vmatprep.subr.mxu0 0.0
    %3496 = vmatpush1.xpose.msra.mxu0 0.0
    %3497 = vmatprep.subr.mxu0 0.0
    %3498 = vmatpush1.xpose.msra.mxu0 0.0
    %3499 = vmatprep.subr.mxu0 0.0
    %3500 = vmatpush1.xpose.msra.mxu0 0.0
    %3501 = vmatprep.subr.mxu0 0.0
    %3502 = vmatpush1.xpose.msra.mxu0 0.0
    %3503 = vmatprep.subr.mxu0 0.0
    %3504 = vmatpush1.xpose.msra.mxu0 0.0
    %3505 = vmatprep.subr.mxu0 0.0
    %3506 = vmatpush1.xpose.msra.mxu0 0.0
    %3507 = vmatprep.subr.mxu0 0.0
    %3508 = vmatpush1.xpose.msra.mxu0 0.0
    %3509 = vmatprep.subr.mxu0 0.0
    %3510 = vmatpush1.xpose.msra.mxu0 0.0
    %3511 = vmatprep.subr.mxu0 0.0
    %3512 = vmatpush1.xpose.msra.mxu0 0.0
    %3513 = vmatprep.subr.mxu0 0.0
    %3514 = vmatpush1.xpose.msra.mxu0 0.0
    %3515 = vmatprep.subr.mxu0 0.0
    %3516 = vmatpush1.xpose.msra.mxu0 0.0
    %3517 = vmatprep.subr.mxu0 0.0
    %3518 = vmatpush1.xpose.msra.mxu0 0.0
    %3519 = vmatprep.subr.mxu0 0.0
    %3520 = vmatpush1.xpose.msra.mxu0 0.0
    %3521 = vmatprep.subr.mxu0 0.0
    %3522 = vmatpush1.xpose.msra.mxu0 0.0
    %3523 = vmatprep.subr.mxu0 0.0
    %3524 = vmatpush1.xpose.msra.mxu0 0.0
    %3525 = vmatprep.subr.mxu0 0.0
    %3526 = vmatpush1.xpose.msra.mxu0 0.0
    %3527 = vmatprep.subr.mxu0 0.0
    %3528 = vmatpush1.xpose.msra.mxu0 0.0
    %3529 = vmatprep.subr.mxu0 0.0
    %3530 = vmatpush1.xpose.msra.mxu0 0.0
    %3531 = vmatprep.mubr.f32.mxu0 0.0
    %3532 = vmatmul.mubr.f32.gmra.mrb[0].mxu0 %v3463
    %v3533 = vpop.f32.mrb[0].mxu0
    %v3534 = vadd.f32 0.0, %v3533
    %v3535 = vpop.f32.mrb[0].mxu0
    %3536 = vdwg.mxu0
    %3537 = vrot.lane.b32.xlu0 %v457, 112
    %v3538 = vpop.permute.xlu0 %3537
    %3539 = vrot.lane.b32.xlu0 %v457, 80
    %v3540 = vpop.permute.xlu0 %3539
    %v3541 = vsel %vm482, %v3538, 0
    %v3543 = vsel %vm482, %v3540, 0
    %3545 = vmatprep.subr.mxu0 0.0
    %3546 = vmatpush1.xpose.msra.mxu0 %v3543
    %3547 = vmatprep.subr.mxu0 0.0
    %3548 = vmatpush1.xpose.msra.mxu0 0.0
    %3549 = vmatprep.subr.mxu0 0.0
    %3550 = vmatpush1.xpose.msra.mxu0 0.0
    %3551 = vmatprep.subr.mxu0 0.0
    %3552 = vmatpush1.xpose.msra.mxu0 0.0
    %3553 = vmatprep.subr.mxu0 0.0
    %3554 = vmatpush1.xpose.msra.mxu0 0.0
    %3555 = vmatprep.subr.mxu0 0.0
    %3556 = vmatpush1.xpose.msra.mxu0 0.0
    %3557 = vmatprep.subr.mxu0 0.0
    %3558 = vmatpush1.xpose.msra.mxu0 0.0
    %3559 = vmatprep.subr.mxu0 0.0
    %3560 = vmatpush1.xpose.msra.mxu0 0.0
    %3561 = vmatprep.subr.mxu0 0.0
    %3562 = vmatpush1.xpose.msra.mxu0 0.0
    %3563 = vmatprep.subr.mxu0 0.0
    %3564 = vmatpush1.xpose.msra.mxu0 0.0
    %3565 = vmatprep.subr.mxu0 0.0
    %3566 = vmatpush1.xpose.msra.mxu0 0.0
    %3567 = vmatprep.subr.mxu0 0.0
    %3568 = vmatpush1.xpose.msra.mxu0 0.0
    %3569 = vmatprep.subr.mxu0 0.0
    %3570 = vmatpush1.xpose.msra.mxu0 0.0
    %3571 = vmatprep.subr.mxu0 0.0
    %3572 = vmatpush1.xpose.msra.mxu0 0.0
    %3573 = vmatprep.subr.mxu0 0.0
    %3574 = vmatpush1.xpose.msra.mxu0 0.0
    %3575 = vmatprep.subr.mxu0 0.0
    %3576 = vmatpush1.xpose.msra.mxu0 0.0
    %3577 = vmatprep.subr.mxu0 0.0
    %3578 = vmatpush1.xpose.msra.mxu0 0.0
    %3579 = vmatprep.subr.mxu0 0.0
    %3580 = vmatpush1.xpose.msra.mxu0 0.0
    %3581 = vmatprep.subr.mxu0 0.0
    %3582 = vmatpush1.xpose.msra.mxu0 0.0
    %3583 = vmatprep.subr.mxu0 0.0
    %3584 = vmatpush1.xpose.msra.mxu0 0.0
    %3585 = vmatprep.subr.mxu0 0.0
    %3586 = vmatpush1.xpose.msra.mxu0 0.0
    %3587 = vmatprep.subr.mxu0 0.0
    %3588 = vmatpush1.xpose.msra.mxu0 0.0
    %3589 = vmatprep.subr.mxu0 0.0
    %3590 = vmatpush1.xpose.msra.mxu0 0.0
    %3591 = vmatprep.subr.mxu0 0.0
    %3592 = vmatpush1.xpose.msra.mxu0 0.0
    %3593 = vmatprep.subr.mxu0 0.0
    %3594 = vmatpush1.xpose.msra.mxu0 0.0
    %3595 = vmatprep.subr.mxu0 0.0
    %3596 = vmatpush1.xpose.msra.mxu0 0.0
    %3597 = vmatprep.subr.mxu0 0.0
    %3598 = vmatpush1.xpose.msra.mxu0 0.0
    %3599 = vmatprep.subr.mxu0 0.0
    %3600 = vmatpush1.xpose.msra.mxu0 0.0
    %3601 = vmatprep.subr.mxu0 0.0
    %3602 = vmatpush1.xpose.msra.mxu0 0.0
    %3603 = vmatprep.subr.mxu0 0.0
    %3604 = vmatpush1.xpose.msra.mxu0 0.0
    %3605 = vmatprep.subr.mxu0 0.0
    %3606 = vmatpush1.xpose.msra.mxu0 0.0
    %3607 = vmatprep.subr.mxu0 0.0
    %3608 = vmatpush1.xpose.msra.mxu0 0.0
    %3609 = vmatprep.mubr.f32.mxu0 0.0
    %3610 = vmatmul.mubr.f32.gmra.mrb[0].mxu0 %v3541
    %v3611 = vpop.f32.mrb[0].mxu0
    %v3612 = vadd.f32 0.0, %v3611
    %v3613 = vpop.f32.mrb[0].mxu0
    %3614 = vdwg.mxu0
    %3615 = vrot.lane.b32.xlu0 %v460, 112
    %v3616 = vpop.permute.xlu0 %3615
    %3617 = vrot.lane.b32.xlu0 %v460, 80
    %v3618 = vpop.permute.xlu0 %3617
    %v3619 = vsel %vm482, %v3616, 0
    %v3621 = vsel %vm482, %v3618, 0
    %3623 = vmatprep.subr.mxu0 0.0
    %3624 = vmatpush1.xpose.msra.mxu0 %v3621
    %3625 = vmatprep.subr.mxu0 0.0
    %3626 = vmatpush1.xpose.msra.mxu0 0.0
    %3627 = vmatprep.subr.mxu0 0.0
    %3628 = vmatpush1.xpose.msra.mxu0 0.0
    %3629 = vmatprep.subr.mxu0 0.0
    %3630 = vmatpush1.xpose.msra.mxu0 0.0
    %3631 = vmatprep.subr.mxu0 0.0
    %3632 = vmatpush1.xpose.msra.mxu0 0.0
    %3633 = vmatprep.subr.mxu0 0.0
    %3634 = vmatpush1.xpose.msra.mxu0 0.0
    %3635 = vmatprep.subr.mxu0 0.0
    %3636 = vmatpush1.xpose.msra.mxu0 0.0
    %3637 = vmatprep.subr.mxu0 0.0
    %3638 = vmatpush1.xpose.msra.mxu0 0.0
    %3639 = vmatprep.subr.mxu0 0.0
    %3640 = vmatpush1.xpose.msra.mxu0 0.0
    %3641 = vmatprep.subr.mxu0 0.0
    %3642 = vmatpush1.xpose.msra.mxu0 0.0
    %3643 = vmatprep.subr.mxu0 0.0
    %3644 = vmatpush1.xpose.msra.mxu0 0.0
    %3645 = vmatprep.subr.mxu0 0.0
    %3646 = vmatpush1.xpose.msra.mxu0 0.0
    %3647 = vmatprep.subr.mxu0 0.0
    %3648 = vmatpush1.xpose.msra.mxu0 0.0
    %3649 = vmatprep.subr.mxu0 0.0
    %3650 = vmatpush1.xpose.msra.mxu0 0.0
    %3651 = vmatprep.subr.mxu0 0.0
    %3652 = vmatpush1.xpose.msra.mxu0 0.0
    %3653 = vmatprep.subr.mxu0 0.0
    %3654 = vmatpush1.xpose.msra.mxu0 0.0
    %3655 = vmatprep.subr.mxu0 0.0
    %3656 = vmatpush1.xpose.msra.mxu0 0.0
    %3657 = vmatprep.subr.mxu0 0.0
    %3658 = vmatpush1.xpose.msra.mxu0 0.0
    %3659 = vmatprep.subr.mxu0 0.0
    %3660 = vmatpush1.xpose.msra.mxu0 0.0
    %3661 = vmatprep.subr.mxu0 0.0
    %3662 = vmatpush1.xpose.msra.mxu0 0.0
    %3663 = vmatprep.subr.mxu0 0.0
    %3664 = vmatpush1.xpose.msra.mxu0 0.0
    %3665 = vmatprep.subr.mxu0 0.0
    %3666 = vmatpush1.xpose.msra.mxu0 0.0
    %3667 = vmatprep.subr.mxu0 0.0
    %3668 = vmatpush1.xpose.msra.mxu0 0.0
    %3669 = vmatprep.subr.mxu0 0.0
    %3670 = vmatpush1.xpose.msra.mxu0 0.0
    %3671 = vmatprep.subr.mxu0 0.0
    %3672 = vmatpush1.xpose.msra.mxu0 0.0
    %3673 = vmatprep.subr.mxu0 0.0
    %3674 = vmatpush1.xpose.msra.mxu0 0.0
    %3675 = vmatprep.subr.mxu0 0.0
    %3676 = vmatpush1.xpose.msra.mxu0 0.0
    %3677 = vmatprep.subr.mxu0 0.0
    %3678 = vmatpush1.xpose.msra.mxu0 0.0
    %3679 = vmatprep.subr.mxu0 0.0
    %3680 = vmatpush1.xpose.msra.mxu0 0.0
    %3681 = vmatprep.subr.mxu0 0.0
    %3682 = vmatpush1.xpose.msra.mxu0 0.0
    %3683 = vmatprep.subr.mxu0 0.0
    %3684 = vmatpush1.xpose.msra.mxu0 0.0
    %3685 = vmatprep.subr.mxu0 0.0
    %3686 = vmatpush1.xpose.msra.mxu0 0.0
    %3687 = vmatprep.mubr.f32.mxu0 0.0
    %3688 = vmatmul.mubr.f32.gmra.mrb[0].mxu0 %v3619
    %v3689 = vpop.f32.mrb[0].mxu0
    %v3690 = vadd.f32 0.0, %v3689
    %v3691 = vpop.f32.mrb[0].mxu0
    %3692 = vdwg.mxu0
    %3693 = vrot.lane.b32.xlu0 %v465, 112
    %v3694 = vpop.permute.xlu0 %3693
    %3695 = vrot.lane.b32.xlu0 %v465, 80
    %v3696 = vpop.permute.xlu0 %3695
    %v3697 = vsel %vm482, %v3694, 0
    %v3699 = vsel %vm482, %v3696, 0
    %3701 = vmatprep.subr.mxu0 0.0
    %3702 = vmatpush1.xpose.msra.mxu0 %v3699
    %3703 = vmatprep.subr.mxu0 0.0
    %3704 = vmatpush1.xpose.msra.mxu0 0.0
    %3705 = vmatprep.subr.mxu0 0.0
    %3706 = vmatpush1.xpose.msra.mxu0 0.0
    %3707 = vmatprep.subr.mxu0 0.0
    %3708 = vmatpush1.xpose.msra.mxu0 0.0
    %3709 = vmatprep.subr.mxu0 0.0
    %3710 = vmatpush1.xpose.msra.mxu0 0.0
    %3711 = vmatprep.subr.mxu0 0.0
    %3712 = vmatpush1.xpose.msra.mxu0 0.0
    %3713 = vmatprep.subr.mxu0 0.0
    %3714 = vmatpush1.xpose.msra.mxu0 0.0
    %3715 = vmatprep.subr.mxu0 0.0
    %3716 = vmatpush1.xpose.msra.mxu0 0.0
    %3717 = vmatprep.subr.mxu0 0.0
    %3718 = vmatpush1.xpose.msra.mxu0 0.0
    %3719 = vmatprep.subr.mxu0 0.0
    %3720 = vmatpush1.xpose.msra.mxu0 0.0
    %3721 = vmatprep.subr.mxu0 0.0
    %3722 = vmatpush1.xpose.msra.mxu0 0.0
    %3723 = vmatprep.subr.mxu0 0.0
    %3724 = vmatpush1.xpose.msra.mxu0 0.0
    %3725 = vmatprep.subr.mxu0 0.0
    %3726 = vmatpush1.xpose.msra.mxu0 0.0
    %3727 = vmatprep.subr.mxu0 0.0
    %3728 = vmatpush1.xpose.msra.mxu0 0.0
    %3729 = vmatprep.subr.mxu0 0.0
    %3730 = vmatpush1.xpose.msra.mxu0 0.0
    %3731 = vmatprep.subr.mxu0 0.0
    %3732 = vmatpush1.xpose.msra.mxu0 0.0
    %3733 = vmatprep.subr.mxu0 0.0
    %3734 = vmatpush1.xpose.msra.mxu0 0.0
    %3735 = vmatprep.subr.mxu0 0.0
    %3736 = vmatpush1.xpose.msra.mxu0 0.0
    %3737 = vmatprep.subr.mxu0 0.0
    %3738 = vmatpush1.xpose.msra.mxu0 0.0
    %3739 = vmatprep.subr.mxu0 0.0
    %3740 = vmatpush1.xpose.msra.mxu0 0.0
    %3741 = vmatprep.subr.mxu0 0.0
    %3742 = vmatpush1.xpose.msra.mxu0 0.0
    %3743 = vmatprep.subr.mxu0 0.0
    %3744 = vmatpush1.xpose.msra.mxu0 0.0
    %3745 = vmatprep.subr.mxu0 0.0
    %3746 = vmatpush1.xpose.msra.mxu0 0.0
    %3747 = vmatprep.subr.mxu0 0.0
    %3748 = vmatpush1.xpose.msra.mxu0 0.0
    %3749 = vmatprep.subr.mxu0 0.0
    %3750 = vmatpush1.xpose.msra.mxu0 0.0
    %3751 = vmatprep.subr.mxu0 0.0
    %3752 = vmatpush1.xpose.msra.mxu0 0.0
    %3753 = vmatprep.subr.mxu0 0.0
    %3754 = vmatpush1.xpose.msra.mxu0 0.0
    %3755 = vmatprep.subr.mxu0 0.0
    %3756 = vmatpush1.xpose.msra.mxu0 0.0
    %3757 = vmatprep.subr.mxu0 0.0
    %3758 = vmatpush1.xpose.msra.mxu0 0.0
    %3759 = vmatprep.subr.mxu0 0.0
    %3760 = vmatpush1.xpose.msra.mxu0 0.0
    %3761 = vmatprep.subr.mxu0 0.0
    %3762 = vmatpush1.xpose.msra.mxu0 0.0
    %3763 = vmatprep.subr.mxu0 0.0
    %3764 = vmatpush1.xpose.msra.mxu0 0.0
    %3765 = vmatprep.mubr.f32.mxu0 0.0
    %3766 = vmatmul.mubr.f32.gmra.mrb[0].mxu0 %v3697
    %v3767 = vpop.f32.mrb[0].mxu0
    %v3768 = vadd.f32 0.0, %v3767
    %v3769 = vpop.f32.mrb[0].mxu0
    %3770 = vdwg.mxu0
    %3771 = vrot.lane.b32.xlu0 %v468, 112
    %v3772 = vpop.permute.xlu0 %3771
    %3773 = vrot.lane.b32.xlu0 %v468, 80
    %v3774 = vpop.permute.xlu0 %3773
    %v3775 = vsel %vm482, %v3772, 0
    %v3777 = vsel %vm482, %v3774, 0
    %3779 = vmatprep.subr.mxu0 0.0
    %3780 = vmatpush1.xpose.msra.mxu0 %v3777
    %3781 = vmatprep.subr.mxu0 0.0
    %3782 = vmatpush1.xpose.msra.mxu0 0.0
    %3783 = vmatprep.subr.mxu0 0.0
    %3784 = vmatpush1.xpose.msra.mxu0 0.0
    %3785 = vmatprep.subr.mxu0 0.0
    %3786 = vmatpush1.xpose.msra.mxu0 0.0
    %3787 = vmatprep.subr.mxu0 0.0
    %3788 = vmatpush1.xpose.msra.mxu0 0.0
    %3789 = vmatprep.subr.mxu0 0.0
    %3790 = vmatpush1.xpose.msra.mxu0 0.0
    %3791 = vmatprep.subr.mxu0 0.0
    %3792 = vmatpush1.xpose.msra.mxu0 0.0
    %3793 = vmatprep.subr.mxu0 0.0
    %3794 = vmatpush1.xpose.msra.mxu0 0.0
    %3795 = vmatprep.subr.mxu0 0.0
    %3796 = vmatpush1.xpose.msra.mxu0 0.0
    %3797 = vmatprep.subr.mxu0 0.0
    %3798 = vmatpush1.xpose.msra.mxu0 0.0
    %3799 = vmatprep.subr.mxu0 0.0
    %3800 = vmatpush1.xpose.msra.mxu0 0.0
    %3801 = vmatprep.subr.mxu0 0.0
    %3802 = vmatpush1.xpose.msra.mxu0 0.0
    %3803 = vmatprep.subr.mxu0 0.0
    %3804 = vmatpush1.xpose.msra.mxu0 0.0
    %3805 = vmatprep.subr.mxu0 0.0
    %3806 = vmatpush1.xpose.msra.mxu0 0.0
    %3807 = vmatprep.subr.mxu0 0.0
    %3808 = vmatpush1.xpose.msra.mxu0 0.0
    %3809 = vmatprep.subr.mxu0 0.0
    %3810 = vmatpush1.xpose.msra.mxu0 0.0
    %3811 = vmatprep.subr.mxu0 0.0
    %3812 = vmatpush1.xpose.msra.mxu0 0.0
    %3813 = vmatprep.subr.mxu0 0.0
    %3814 = vmatpush1.xpose.msra.mxu0 0.0
    %3815 = vmatprep.subr.mxu0 0.0
    %3816 = vmatpush1.xpose.msra.mxu0 0.0
    %3817 = vmatprep.subr.mxu0 0.0
    %3818 = vmatpush1.xpose.msra.mxu0 0.0
    %3819 = vmatprep.subr.mxu0 0.0
    %3820 = vmatpush1.xpose.msra.mxu0 0.0
    %3821 = vmatprep.subr.mxu0 0.0
    %3822 = vmatpush1.xpose.msra.mxu0 0.0
    %3823 = vmatprep.subr.mxu0 0.0
    %3824 = vmatpush1.xpose.msra.mxu0 0.0
    %3825 = vmatprep.subr.mxu0 0.0
    %3826 = vmatpush1.xpose.msra.mxu0 0.0
    %3827 = vmatprep.subr.mxu0 0.0
    %3828 = vmatpush1.xpose.msra.mxu0 0.0
    %3829 = vmatprep.subr.mxu0 0.0
    %3830 = vmatpush1.xpose.msra.mxu0 0.0
    %3831 = vmatprep.subr.mxu0 0.0
    %3832 = vmatpush1.xpose.msra.mxu0 0.0
    %3833 = vmatprep.subr.mxu0 0.0
    %3834 = vmatpush1.xpose.msra.mxu0 0.0
    %3835 = vmatprep.subr.mxu0 0.0
    %3836 = vmatpush1.xpose.msra.mxu0 0.0
    %3837 = vmatprep.subr.mxu0 0.0
    %3838 = vmatpush1.xpose.msra.mxu0 0.0
    %3839 = vmatprep.subr.mxu0 0.0
    %3840 = vmatpush1.xpose.msra.mxu0 0.0
    %3841 = vmatprep.subr.mxu0 0.0
    %3842 = vmatpush1.xpose.msra.mxu0 0.0
    %3843 = vmatprep.mubr.f32.mxu0 0.0
    %3844 = vmatmul.mubr.f32.gmra.mrb[0].mxu0 %v3775
    %v3845 = vpop.f32.mrb[0].mxu0
    %v3846 = vadd.f32 0.0, %v3845
    %v3847 = vpop.f32.mrb[0].mxu0
    %3848 = vdwg.mxu0
    %v3849 = vmul.f32 %v3300, 0.35355338
    %v3850 = vmul.f32 %v3378, 0.35355338
    %v3851 = vmul.f32 %v3456, 0.35355338
    %v3852 = vmul.f32 %v3534, 0.35355338
    %v3853 = vmul.f32 %v3612, 0.35355338
    %v3854 = vmul.f32 %v3690, 0.35355338
    %v3855 = vmul.f32 %v3768, 0.35355338
    %v3856 = vmul.f32 %v3846, 0.35355338
    %3857 = vrot.lane.b32.xlu0 %v471, 112
    %v3858 = vpop.permute.xlu0 %3857
    %3859 = vrot.lane.b32.xlu0 %v472, 112
    %v3860 = vpop.permute.xlu0 %3859
    %3861 = vrot.lane.b32.xlu0 %v473, 112
    %v3862 = vpop.permute.xlu0 %3861
    %3863 = vrot.lane.b32.xlu0 %v474, 112
    %v3864 = vpop.permute.xlu0 %3863
    %3865 = vrot.lane.b32.xlu0 %v475, 112
    %v3866 = vpop.permute.xlu0 %3865
    %3867 = vrot.lane.b32.xlu0 %v476, 112
    %v3868 = vpop.permute.xlu0 %3867
    %3869 = vrot.lane.b32.xlu0 %v477, 112
    %v3870 = vpop.permute.xlu0 %3869
    %3871 = vrot.lane.b32.xlu0 %v478, 112
    %v3872 = vpop.permute.xlu0 %3871
    %v3881 = vadd.f32 %v3849, %v3858
    %v3882 = vadd.f32 %v3850, %v3860
    %v3883 = vadd.f32 %v3851, %v3862
    %v3884 = vadd.f32 %v3852, %v3864
    %v3885 = vadd.f32 %v3853, %v3866
    %v3886 = vadd.f32 %v3854, %v3868
    %v3887 = vadd.f32 %v3855, %v3870
    %v3888 = vadd.f32 %v3856, %v3872
    %v3889 = vsel %vm482, %v3881, -inf
    %3890 = vmax.xlane.f32.xlu0 %v3889
    %v3891 = vpop.xlane.xlu0 %3890
    %v3892 = vsel %vm482, %v3882, -inf
    %3893 = vmax.xlane.f32.xlu0 %v3892
    %v3894 = vpop.xlane.xlu0 %3893
    %v3895 = vsel %vm482, %v3883, -inf
    %3896 = vmax.xlane.f32.xlu0 %v3895
    %v3897 = vpop.xlane.xlu0 %3896
    %v3898 = vsel %vm482, %v3884, -inf
    %3899 = vmax.xlane.f32.xlu0 %v3898
    %v3900 = vpop.xlane.xlu0 %3899
    %v3901 = vsel %vm482, %v3885, -inf
    %3902 = vmax.xlane.f32.xlu0 %v3901
    %v3903 = vpop.xlane.xlu0 %3902
    %v3904 = vsel %vm482, %v3886, -inf
    %3905 = vmax.xlane.f32.xlu0 %v3904
    %v3906 = vpop.xlane.xlu0 %3905
    %v3907 = vsel %vm482, %v3887, -inf
    %3908 = vmax.xlane.f32.xlu0 %v3907
    %v3909 = vpop.xlane.xlu0 %3908
    %v3910 = vsel %vm482, %v3888, -inf
    %3911 = vmax.xlane.f32.xlu0 %v3910
    %v3912 = vpop.xlane.xlu0 %3911
    %v3913 = vsub.f32 %v3881, %v3891
    %v3914 = vsub.f32 %v3882, %v3894
    %v3915 = vsub.f32 %v3883, %v3897
    %v3916 = vsub.f32 %v3884, %v3900
    %v3917 = vsub.f32 %v3885, %v3903
    %v3918 = vsub.f32 %v3886, %v3906
    %v3919 = vsub.f32 %v3887, %v3909
    %v3920 = vsub.f32 %v3888, %v3912
    %v3921 = vmul.f32 %v3913, 1.442695
    %v3922 = vpow.pop %v3921
    %v3923 = vmul.f32 %v3914, 1.442695
    %v3924 = vpow.pop %v3923
    %v3925 = vmul.f32 %v3915, 1.442695
    %v3926 = vpow.pop %v3925
    %v3927 = vmul.f32 %v3916, 1.442695
    %v3928 = vpow.pop %v3927
    %v3929 = vmul.f32 %v3917, 1.442695
    %v3930 = vpow.pop %v3929
    %v3931 = vmul.f32 %v3918, 1.442695
    %v3932 = vpow.pop %v3931
    %v3933 = vmul.f32 %v3919, 1.442695
    %v3934 = vpow.pop %v3933
    %v3935 = vmul.f32 %v3920, 1.442695
    %v3936 = vpow.pop %v3935
    %v3937 = vsel %vm482, %v3922, 0.0
    %3938 = vadd.xlane.f32.xlu0 %v3937
    %v3939 = vpop.xlane.xlu0 %3938
    %v3940 = vsel %vm482, %v3924, 0.0
    %3941 = vadd.xlane.f32.xlu0 %v3940
    %v3942 = vpop.xlane.xlu0 %3941
    %v3943 = vsel %vm482, %v3926, 0.0
    %3944 = vadd.xlane.f32.xlu0 %v3943
    %v3945 = vpop.xlane.xlu0 %3944
    %v3946 = vsel %vm482, %v3928, 0.0
    %3947 = vadd.xlane.f32.xlu0 %v3946
    %v3948 = vpop.xlane.xlu0 %3947
    %v3949 = vsel %vm482, %v3930, 0.0
    %3950 = vadd.xlane.f32.xlu0 %v3949
    %v3951 = vpop.xlane.xlu0 %3950
    %v3952 = vsel %vm482, %v3932, 0.0
    %3953 = vadd.xlane.f32.xlu0 %v3952
    %v3954 = vpop.xlane.xlu0 %3953
    %v3955 = vsel %vm482, %v3934, 0.0
    %3956 = vadd.xlane.f32.xlu0 %v3955
    %v3957 = vpop.xlane.xlu0 %3956
    %v3958 = vsel %vm482, %v3936, 0.0
    %3959 = vadd.xlane.f32.xlu0 %v3958
    %v3960 = vpop.xlane.xlu0 %3959
    %v3961 = vrcp.pop %v3939
    %v3962 = vrcp.pop %v3942
    %v3963 = vrcp.pop %v3945
    %v3964 = vrcp.pop %v3948
    %v3965 = vrcp.pop %v3951
    %v3966 = vrcp.pop %v3954
    %v3967 = vrcp.pop %v3957
    %v3968 = vrcp.pop %v3960
    %v3969 = vmul.f32 %v3922, %v3961
    %v3970 = vmul.f32 %v3924, %v3962
    %v3971 = vmul.f32 %v3926, %v3963
    %v3972 = vmul.f32 %v3928, %v3964
    %v3973 = vmul.f32 %v3930, %v3965
    %v3974 = vmul.f32 %v3932, %v3966
    %v3975 = vmul.f32 %v3934, %v3967
    %v3976 = vmul.f32 %v3936, %v3968
    %3977 = vrot.lane.b32.xlu0 %v441, 48
    %v3978 = vpop.permute.xlu0 %3977
    %v3981 = vsel %vm482, %v3969, 0
    %3983 = vmatprep.subr.mxu0 0.0
    %3984 = vmatpush1.msra.mxu0 %v3978
    %3985 = vmatprep.subr.mxu0 0.0
    %3986 = vmatpush1.msra.mxu0 0.0
    %3987 = vmatprep.subr.mxu0 0.0
    %3988 = vmatpush1.msra.mxu0 0.0
    %3989 = vmatprep.subr.mxu0 0.0
    %3990 = vmatpush1.msra.mxu0 0.0
    %3991 = vmatprep.subr.mxu0 0.0
    %3992 = vmatpush1.msra.mxu0 0.0
    %3993 = vmatprep.subr.mxu0 0.0
    %3994 = vmatpush1.msra.mxu0 0.0
    %3995 = vmatprep.subr.mxu0 0.0
    %3996 = vmatpush1.msra.mxu0 0.0
    %3997 = vmatprep.subr.mxu0 0.0
    %3998 = vmatpush1.msra.mxu0 0.0
    %3999 = vmatprep.subr.mxu0 0.0
    %4000 = vmatpush1.msra.mxu0 0.0
    %4001 = vmatprep.subr.mxu0 0.0
    %4002 = vmatpush1.msra.mxu0 0.0
    %4003 = vmatprep.subr.mxu0 0.0
    %4004 = vmatpush1.msra.mxu0 0.0
    %4005 = vmatprep.subr.mxu0 0.0
    %4006 = vmatpush1.msra.mxu0 0.0
    %4007 = vmatprep.subr.mxu0 0.0
    %4008 = vmatpush1.msra.mxu0 0.0
    %4009 = vmatprep.subr.mxu0 0.0
    %4010 = vmatpush1.msra.mxu0 0.0
    %4011 = vmatprep.subr.mxu0 0.0
    %4012 = vmatpush1.msra.mxu0 0.0
    %4013 = vmatprep.subr.mxu0 0.0
    %4014 = vmatpush1.msra.mxu0 0.0
    %4015 = vmatprep.subr.mxu0 0.0
    %4016 = vmatpush1.msra.mxu0 0.0
    %4017 = vmatprep.subr.mxu0 0.0
    %4018 = vmatpush1.msra.mxu0 0.0
    %4019 = vmatprep.subr.mxu0 0.0
    %4020 = vmatpush1.msra.mxu0 0.0
    %4021 = vmatprep.subr.mxu0 0.0
    %4022 = vmatpush1.msra.mxu0 0.0
    %4023 = vmatprep.subr.mxu0 0.0
    %4024 = vmatpush1.msra.mxu0 0.0
    %4025 = vmatprep.subr.mxu0 0.0
    %4026 = vmatpush1.msra.mxu0 0.0
    %4027 = vmatprep.subr.mxu0 0.0
    %4028 = vmatpush1.msra.mxu0 0.0
    %4029 = vmatprep.subr.mxu0 0.0
    %4030 = vmatpush1.msra.mxu0 0.0
    %4031 = vmatprep.subr.mxu0 0.0
    %4032 = vmatpush1.msra.mxu0 0.0
    %4033 = vmatprep.subr.mxu0 0.0
    %4034 = vmatpush1.msra.mxu0 0.0
    %4035 = vmatprep.subr.mxu0 0.0
    %4036 = vmatpush1.msra.mxu0 0.0
    %4037 = vmatprep.subr.mxu0 0.0
    %4038 = vmatpush1.msra.mxu0 0.0
    %4039 = vmatprep.subr.mxu0 0.0
    %4040 = vmatpush1.msra.mxu0 0.0
    %4041 = vmatprep.subr.mxu0 0.0
    %4042 = vmatpush1.msra.mxu0 0.0
    %4043 = vmatprep.subr.mxu0 0.0
    %4044 = vmatpush1.msra.mxu0 0.0
    %4045 = vmatprep.subr.mxu0 0.0
    %4046 = vmatpush1.msra.mxu0 0.0
    %4047 = vmatprep.mubr.f32.mxu0 0.0
    %4048 = vmatmul.mubr.f32.gmra.mrb[0].mxu0 %v3981
    %v4049 = vpop.f32.mrb[0].mxu0
    %v4050 = vadd.f32 0.0, %v4049
    %v4051 = vpop.f32.mrb[0].mxu0
    %4052 = vdwg.mxu0
    %4053 = vrot.lane.b32.xlu0 %v444, 48
    %v4054 = vpop.permute.xlu0 %4053
    %v4057 = vsel %vm482, %v3970, 0
    %4059 = vmatprep.subr.mxu0 0.0
    %4060 = vmatpush1.msra.mxu0 %v4054
    %4061 = vmatprep.subr.mxu0 0.0
    %4062 = vmatpush1.msra.mxu0 0.0
    %4063 = vmatprep.subr.mxu0 0.0
    %4064 = vmatpush1.msra.mxu0 0.0
    %4065 = vmatprep.subr.mxu0 0.0
    %4066 = vmatpush1.msra.mxu0 0.0
    %4067 = vmatprep.subr.mxu0 0.0
    %4068 = vmatpush1.msra.mxu0 0.0
    %4069 = vmatprep.subr.mxu0 0.0
    %4070 = vmatpush1.msra.mxu0 0.0
    %4071 = vmatprep.subr.mxu0 0.0
    %4072 = vmatpush1.msra.mxu0 0.0
    %4073 = vmatprep.subr.mxu0 0.0
    %4074 = vmatpush1.msra.mxu0 0.0
    %4075 = vmatprep.subr.mxu0 0.0
    %4076 = vmatpush1.msra.mxu0 0.0
    %4077 = vmatprep.subr.mxu0 0.0
    %4078 = vmatpush1.msra.mxu0 0.0
    %4079 = vmatprep.subr.mxu0 0.0
    %4080 = vmatpush1.msra.mxu0 0.0
    %4081 = vmatprep.subr.mxu0 0.0
    %4082 = vmatpush1.msra.mxu0 0.0
    %4083 = vmatprep.subr.mxu0 0.0
    %4084 = vmatpush1.msra.mxu0 0.0
    %4085 = vmatprep.subr.mxu0 0.0
    %4086 = vmatpush1.msra.mxu0 0.0
    %4087 = vmatprep.subr.mxu0 0.0
    %4088 = vmatpush1.msra.mxu0 0.0
    %4089 = vmatprep.subr.mxu0 0.0
    %4090 = vmatpush1.msra.mxu0 0.0
    %4091 = vmatprep.subr.mxu0 0.0
    %4092 = vmatpush1.msra.mxu0 0.0
    %4093 = vmatprep.subr.mxu0 0.0
    %4094 = vmatpush1.msra.mxu0 0.0
    %4095 = vmatprep.subr.mxu0 0.0
    %4096 = vmatpush1.msra.mxu0 0.0
    %4097 = vmatprep.subr.mxu0 0.0
    %4098 = vmatpush1.msra.mxu0 0.0
    %4099 = vmatprep.subr.mxu0 0.0
    %4100 = vmatpush1.msra.mxu0 0.0
    %4101 = vmatprep.subr.mxu0 0.0
    %4102 = vmatpush1.msra.mxu0 0.0
    %4103 = vmatprep.subr.mxu0 0.0
    %4104 = vmatpush1.msra.mxu0 0.0
    %4105 = vmatprep.subr.mxu0 0.0
    %4106 = vmatpush1.msra.mxu0 0.0
    %4107 = vmatprep.subr.mxu0 0.0
    %4108 = vmatpush1.msra.mxu0 0.0
    %4109 = vmatprep.subr.mxu0 0.0
    %4110 = vmatpush1.msra.mxu0 0.0
    %4111 = vmatprep.subr.mxu0 0.0
    %4112 = vmatpush1.msra.mxu0 0.0
    %4113 = vmatprep.subr.mxu0 0.0
    %4114 = vmatpush1.msra.mxu0 0.0
    %4115 = vmatprep.subr.mxu0 0.0
    %4116 = vmatpush1.msra.mxu0 0.0
    %4117 = vmatprep.subr.mxu0 0.0
    %4118 = vmatpush1.msra.mxu0 0.0
    %4119 = vmatprep.subr.mxu0 0.0
    %4120 = vmatpush1.msra.mxu0 0.0
    %4121 = vmatprep.subr.mxu0 0.0
    %4122 = vmatpush1.msra.mxu0 0.0
    %4123 = vmatprep.mubr.f32.mxu0 0.0
    %4124 = vmatmul.mubr.f32.gmra.mrb[0].mxu0 %v4057
    %v4125 = vpop.f32.mrb[0].mxu0
    %v4126 = vadd.f32 0.0, %v4125
    %v4127 = vpop.f32.mrb[0].mxu0
    %4128 = vdwg.mxu0
    %4129 = vrot.lane.b32.xlu0 %v449, 48
    %v4130 = vpop.permute.xlu0 %4129
    %v4133 = vsel %vm482, %v3971, 0
    %4135 = vmatprep.subr.mxu0 0.0
    %4136 = vmatpush1.msra.mxu0 %v4130
    %4137 = vmatprep.subr.mxu0 0.0
    %4138 = vmatpush1.msra.mxu0 0.0
    %4139 = vmatprep.subr.mxu0 0.0
    %4140 = vmatpush1.msra.mxu0 0.0
    %4141 = vmatprep.subr.mxu0 0.0
    %4142 = vmatpush1.msra.mxu0 0.0
    %4143 = vmatprep.subr.mxu0 0.0
    %4144 = vmatpush1.msra.mxu0 0.0
    %4145 = vmatprep.subr.mxu0 0.0
    %4146 = vmatpush1.msra.mxu0 0.0
    %4147 = vmatprep.subr.mxu0 0.0
    %4148 = vmatpush1.msra.mxu0 0.0
    %4149 = vmatprep.subr.mxu0 0.0
    %4150 = vmatpush1.msra.mxu0 0.0
    %4151 = vmatprep.subr.mxu0 0.0
    %4152 = vmatpush1.msra.mxu0 0.0
    %4153 = vmatprep.subr.mxu0 0.0
    %4154 = vmatpush1.msra.mxu0 0.0
    %4155 = vmatprep.subr.mxu0 0.0
    %4156 = vmatpush1.msra.mxu0 0.0
    %4157 = vmatprep.subr.mxu0 0.0
    %4158 = vmatpush1.msra.mxu0 0.0
    %4159 = vmatprep.subr.mxu0 0.0
    %4160 = vmatpush1.msra.mxu0 0.0
    %4161 = vmatprep.subr.mxu0 0.0
    %4162 = vmatpush1.msra.mxu0 0.0
    %4163 = vmatprep.subr.mxu0 0.0
    %4164 = vmatpush1.msra.mxu0 0.0
    %4165 = vmatprep.subr.mxu0 0.0
    %4166 = vmatpush1.msra.mxu0 0.0
    %4167 = vmatprep.subr.mxu0 0.0
    %4168 = vmatpush1.msra.mxu0 0.0
    %4169 = vmatprep.subr.mxu0 0.0
    %4170 = vmatpush1.msra.mxu0 0.0
    %4171 = vmatprep.subr.mxu0 0.0
    %4172 = vmatpush1.msra.mxu0 0.0
    %4173 = vmatprep.subr.mxu0 0.0
    %4174 = vmatpush1.msra.mxu0 0.0
    %4175 = vmatprep.subr.mxu0 0.0
    %4176 = vmatpush1.msra.mxu0 0.0
    %4177 = vmatprep.subr.mxu0 0.0
    %4178 = vmatpush1.msra.mxu0 0.0
    %4179 = vmatprep.subr.mxu0 0.0
    %4180 = vmatpush1.msra.mxu0 0.0
    %4181 = vmatprep.subr.mxu0 0.0
    %4182 = vmatpush1.msra.mxu0 0.0
    %4183 = vmatprep.subr.mxu0 0.0
    %4184 = vmatpush1.msra.mxu0 0.0
    %4185 = vmatprep.subr.mxu0 0.0
    %4186 = vmatpush1.msra.mxu0 0.0
    %4187 = vmatprep.subr.mxu0 0.0
    %4188 = vmatpush1.msra.mxu0 0.0
    %4189 = vmatprep.subr.mxu0 0.0
    %4190 = vmatpush1.msra.mxu0 0.0
    %4191 = vmatprep.subr.mxu0 0.0
    %4192 = vmatpush1.msra.mxu0 0.0
    %4193 = vmatprep.subr.mxu0 0.0
    %4194 = vmatpush1.msra.mxu0 0.0
    %4195 = vmatprep.subr.mxu0 0.0
    %4196 = vmatpush1.msra.mxu0 0.0
    %4197 = vmatprep.subr.mxu0 0.0
    %4198 = vmatpush1.msra.mxu0 0.0
    %4199 = vmatprep.mubr.f32.mxu0 0.0
    %4200 = vmatmul.mubr.f32.gmra.mrb[0].mxu0 %v4133
    %v4201 = vpop.f32.mrb[0].mxu0
    %v4202 = vadd.f32 0.0, %v4201
    %v4203 = vpop.f32.mrb[0].mxu0
    %4204 = vdwg.mxu0
    %4205 = vrot.lane.b32.xlu0 %v452, 48
    %v4206 = vpop.permute.xlu0 %4205
    %v4209 = vsel %vm482, %v3972, 0
    %4211 = vmatprep.subr.mxu0 0.0
    %4212 = vmatpush1.msra.mxu0 %v4206
    %4213 = vmatprep.subr.mxu0 0.0
    %4214 = vmatpush1.msra.mxu0 0.0
    %4215 = vmatprep.subr.mxu0 0.0
    %4216 = vmatpush1.msra.mxu0 0.0
    %4217 = vmatprep.subr.mxu0 0.0
    %4218 = vmatpush1.msra.mxu0 0.0
    %4219 = vmatprep.subr.mxu0 0.0
    %4220 = vmatpush1.msra.mxu0 0.0
    %4221 = vmatprep.subr.mxu0 0.0
    %4222 = vmatpush1.msra.mxu0 0.0
    %4223 = vmatprep.subr.mxu0 0.0
    %4224 = vmatpush1.msra.mxu0 0.0
    %4225 = vmatprep.subr.mxu0 0.0
    %4226 = vmatpush1.msra.mxu0 0.0
    %4227 = vmatprep.subr.mxu0 0.0
    %4228 = vmatpush1.msra.mxu0 0.0
    %4229 = vmatprep.subr.mxu0 0.0
    %4230 = vmatpush1.msra.mxu0 0.0
    %4231 = vmatprep.subr.mxu0 0.0
    %4232 = vmatpush1.msra.mxu0 0.0
    %4233 = vmatprep.subr.mxu0 0.0
    %4234 = vmatpush1.msra.mxu0 0.0
    %4235 = vmatprep.subr.mxu0 0.0
    %4236 = vmatpush1.msra.mxu0 0.0
    %4237 = vmatprep.subr.mxu0 0.0
    %4238 = vmatpush1.msra.mxu0 0.0
    %4239 = vmatprep.subr.mxu0 0.0
    %4240 = vmatpush1.msra.mxu0 0.0
    %4241 = vmatprep.subr.mxu0 0.0
    %4242 = vmatpush1.msra.mxu0 0.0
    %4243 = vmatprep.subr.mxu0 0.0
    %4244 = vmatpush1.msra.mxu0 0.0
    %4245 = vmatprep.subr.mxu0 0.0
    %4246 = vmatpush1.msra.mxu0 0.0
    %4247 = vmatprep.subr.mxu0 0.0
    %4248 = vmatpush1.msra.mxu0 0.0
    %4249 = vmatprep.subr.mxu0 0.0
    %4250 = vmatpush1.msra.mxu0 0.0
    %4251 = vmatprep.subr.mxu0 0.0
    %4252 = vmatpush1.msra.mxu0 0.0
    %4253 = vmatprep.subr.mxu0 0.0
    %4254 = vmatpush1.msra.mxu0 0.0
    %4255 = vmatprep.subr.mxu0 0.0
    %4256 = vmatpush1.msra.mxu0 0.0
    %4257 = vmatprep.subr.mxu0 0.0
    %4258 = vmatpush1.msra.mxu0 0.0
    %4259 = vmatprep.subr.mxu0 0.0
    %4260 = vmatpush1.msra.mxu0 0.0
    %4261 = vmatprep.subr.mxu0 0.0
    %4262 = vmatpush1.msra.mxu0 0.0
    %4263 = vmatprep.subr.mxu0 0.0
    %4264 = vmatpush1.msra.mxu0 0.0
    %4265 = vmatprep.subr.mxu0 0.0
    %4266 = vmatpush1.msra.mxu0 0.0
    %4267 = vmatprep.subr.mxu0 0.0
    %4268 = vmatpush1.msra.mxu0 0.0
    %4269 = vmatprep.subr.mxu0 0.0
    %4270 = vmatpush1.msra.mxu0 0.0
    %4271 = vmatprep.subr.mxu0 0.0
    %4272 = vmatpush1.msra.mxu0 0.0
    %4273 = vmatprep.subr.mxu0 0.0
    %4274 = vmatpush1.msra.mxu0 0.0
    %4275 = vmatprep.mubr.f32.mxu0 0.0
    %4276 = vmatmul.mubr.f32.gmra.mrb[0].mxu0 %v4209
    %v4277 = vpop.f32.mrb[0].mxu0
    %v4278 = vadd.f32 0.0, %v4277
    %v4279 = vpop.f32.mrb[0].mxu0
    %4280 = vdwg.mxu0
    %4281 = vrot.lane.b32.xlu0 %v457, 48
    %v4282 = vpop.permute.xlu0 %4281
    %v4285 = vsel %vm482, %v3973, 0
    %4287 = vmatprep.subr.mxu0 0.0
    %4288 = vmatpush1.msra.mxu0 %v4282
    %4289 = vmatprep.subr.mxu0 0.0
    %4290 = vmatpush1.msra.mxu0 0.0
    %4291 = vmatprep.subr.mxu0 0.0
    %4292 = vmatpush1.msra.mxu0 0.0
    %4293 = vmatprep.subr.mxu0 0.0
    %4294 = vmatpush1.msra.mxu0 0.0
    %4295 = vmatprep.subr.mxu0 0.0
    %4296 = vmatpush1.msra.mxu0 0.0
    %4297 = vmatprep.subr.mxu0 0.0
    %4298 = vmatpush1.msra.mxu0 0.0
    %4299 = vmatprep.subr.mxu0 0.0
    %4300 = vmatpush1.msra.mxu0 0.0
    %4301 = vmatprep.subr.mxu0 0.0
    %4302 = vmatpush1.msra.mxu0 0.0
    %4303 = vmatprep.subr.mxu0 0.0
    %4304 = vmatpush1.msra.mxu0 0.0
    %4305 = vmatprep.subr.mxu0 0.0
    %4306 = vmatpush1.msra.mxu0 0.0
    %4307 = vmatprep.subr.mxu0 0.0
    %4308 = vmatpush1.msra.mxu0 0.0
    %4309 = vmatprep.subr.mxu0 0.0
    %4310 = vmatpush1.msra.mxu0 0.0
    %4311 = vmatprep.subr.mxu0 0.0
    %4312 = vmatpush1.msra.mxu0 0.0
    %4313 = vmatprep.subr.mxu0 0.0
    %4314 = vmatpush1.msra.mxu0 0.0
    %4315 = vmatprep.subr.mxu0 0.0
    %4316 = vmatpush1.msra.mxu0 0.0
    %4317 = vmatprep.subr.mxu0 0.0
    %4318 = vmatpush1.msra.mxu0 0.0
    %4319 = vmatprep.subr.mxu0 0.0
    %4320 = vmatpush1.msra.mxu0 0.0
    %4321 = vmatprep.subr.mxu0 0.0
    %4322 = vmatpush1.msra.mxu0 0.0
    %4323 = vmatprep.subr.mxu0 0.0
    %4324 = vmatpush1.msra.mxu0 0.0
    %4325 = vmatprep.subr.mxu0 0.0
    %4326 = vmatpush1.msra.mxu0 0.0
    %4327 = vmatprep.subr.mxu0 0.0
    %4328 = vmatpush1.msra.mxu0 0.0
    %4329 = vmatprep.subr.mxu0 0.0
    %4330 = vmatpush1.msra.mxu0 0.0
    %4331 = vmatprep.subr.mxu0 0.0
    %4332 = vmatpush1.msra.mxu0 0.0
    %4333 = vmatprep.subr.mxu0 0.0
    %4334 = vmatpush1.msra.mxu0 0.0
    %4335 = vmatprep.subr.mxu0 0.0
    %4336 = vmatpush1.msra.mxu0 0.0
    %4337 = vmatprep.subr.mxu0 0.0
    %4338 = vmatpush1.msra.mxu0 0.0
    %4339 = vmatprep.subr.mxu0 0.0
    %4340 = vmatpush1.msra.mxu0 0.0
    %4341 = vmatprep.subr.mxu0 0.0
    %4342 = vmatpush1.msra.mxu0 0.0
    %4343 = vmatprep.subr.mxu0 0.0
    %4344 = vmatpush1.msra.mxu0 0.0
    %4345 = vmatprep.subr.mxu0 0.0
    %4346 = vmatpush1.msra.mxu0 0.0
    %4347 = vmatprep.subr.mxu0 0.0
    %4348 = vmatpush1.msra.mxu0 0.0
    %4349 = vmatprep.subr.mxu0 0.0
    %4350 = vmatpush1.msra.mxu0 0.0
    %4351 = vmatprep.mubr.f32.mxu0 0.0
    %4352 = vmatmul.mubr.f32.gmra.mrb[0].mxu0 %v4285
    %v4353 = vpop.f32.mrb[0].mxu0
    %v4354 = vadd.f32 0.0, %v4353
    %v4355 = vpop.f32.mrb[0].mxu0
    %4356 = vdwg.mxu0
    %4357 = vrot.lane.b32.xlu0 %v460, 48
    %v4358 = vpop.permute.xlu0 %4357
    %v4361 = vsel %vm482, %v3974, 0
    %4363 = vmatprep.subr.mxu0 0.0
    %4364 = vmatpush1.msra.mxu0 %v4358
    %4365 = vmatprep.subr.mxu0 0.0
    %4366 = vmatpush1.msra.mxu0 0.0
    %4367 = vmatprep.subr.mxu0 0.0
    %4368 = vmatpush1.msra.mxu0 0.0
    %4369 = vmatprep.subr.mxu0 0.0
    %4370 = vmatpush1.msra.mxu0 0.0
    %4371 = vmatprep.subr.mxu0 0.0
    %4372 = vmatpush1.msra.mxu0 0.0
    %4373 = vmatprep.subr.mxu0 0.0
    %4374 = vmatpush1.msra.mxu0 0.0
    %4375 = vmatprep.subr.mxu0 0.0
    %4376 = vmatpush1.msra.mxu0 0.0
    %4377 = vmatprep.subr.mxu0 0.0
    %4378 = vmatpush1.msra.mxu0 0.0
    %4379 = vmatprep.subr.mxu0 0.0
    %4380 = vmatpush1.msra.mxu0 0.0
    %4381 = vmatprep.subr.mxu0 0.0
    %4382 = vmatpush1.msra.mxu0 0.0
    %4383 = vmatprep.subr.mxu0 0.0
    %4384 = vmatpush1.msra.mxu0 0.0
    %4385 = vmatprep.subr.mxu0 0.0
    %4386 = vmatpush1.msra.mxu0 0.0
    %4387 = vmatprep.subr.mxu0 0.0
    %4388 = vmatpush1.msra.mxu0 0.0
    %4389 = vmatprep.subr.mxu0 0.0
    %4390 = vmatpush1.msra.mxu0 0.0
    %4391 = vmatprep.subr.mxu0 0.0
    %4392 = vmatpush1.msra.mxu0 0.0
    %4393 = vmatprep.subr.mxu0 0.0
    %4394 = vmatpush1.msra.mxu0 0.0
    %4395 = vmatprep.subr.mxu0 0.0
    %4396 = vmatpush1.msra.mxu0 0.0
    %4397 = vmatprep.subr.mxu0 0.0
    %4398 = vmatpush1.msra.mxu0 0.0
    %4399 = vmatprep.subr.mxu0 0.0
    %4400 = vmatpush1.msra.mxu0 0.0
    %4401 = vmatprep.subr.mxu0 0.0
    %4402 = vmatpush1.msra.mxu0 0.0
    %4403 = vmatprep.subr.mxu0 0.0
    %4404 = vmatpush1.msra.mxu0 0.0
    %4405 = vmatprep.subr.mxu0 0.0
    %4406 = vmatpush1.msra.mxu0 0.0
    %4407 = vmatprep.subr.mxu0 0.0
    %4408 = vmatpush1.msra.mxu0 0.0
    %4409 = vmatprep.subr.mxu0 0.0
    %4410 = vmatpush1.msra.mxu0 0.0
    %4411 = vmatprep.subr.mxu0 0.0
    %4412 = vmatpush1.msra.mxu0 0.0
    %4413 = vmatprep.subr.mxu0 0.0
    %4414 = vmatpush1.msra.mxu0 0.0
    %4415 = vmatprep.subr.mxu0 0.0
    %4416 = vmatpush1.msra.mxu0 0.0
    %4417 = vmatprep.subr.mxu0 0.0
    %4418 = vmatpush1.msra.mxu0 0.0
    %4419 = vmatprep.subr.mxu0 0.0
    %4420 = vmatpush1.msra.mxu0 0.0
    %4421 = vmatprep.subr.mxu0 0.0
    %4422 = vmatpush1.msra.mxu0 0.0
    %4423 = vmatprep.subr.mxu0 0.0
    %4424 = vmatpush1.msra.mxu0 0.0
    %4425 = vmatprep.subr.mxu0 0.0
    %4426 = vmatpush1.msra.mxu0 0.0
    %4427 = vmatprep.mubr.f32.mxu0 0.0
    %4428 = vmatmul.mubr.f32.gmra.mrb[0].mxu0 %v4361
    %v4429 = vpop.f32.mrb[0].mxu0
    %v4430 = vadd.f32 0.0, %v4429
    %v4431 = vpop.f32.mrb[0].mxu0
    %4432 = vdwg.mxu0
    %4433 = vrot.lane.b32.xlu0 %v465, 48
    %v4434 = vpop.permute.xlu0 %4433
    %v4437 = vsel %vm482, %v3975, 0
    %4439 = vmatprep.subr.mxu0 0.0
    %4440 = vmatpush1.msra.mxu0 %v4434
    %4441 = vmatprep.subr.mxu0 0.0
    %4442 = vmatpush1.msra.mxu0 0.0
    %4443 = vmatprep.subr.mxu0 0.0
    %4444 = vmatpush1.msra.mxu0 0.0
    %4445 = vmatprep.subr.mxu0 0.0
    %4446 = vmatpush1.msra.mxu0 0.0
    %4447 = vmatprep.subr.mxu0 0.0
    %4448 = vmatpush1.msra.mxu0 0.0
    %4449 = vmatprep.subr.mxu0 0.0
    %4450 = vmatpush1.msra.mxu0 0.0
    %4451 = vmatprep.subr.mxu0 0.0
    %4452 = vmatpush1.msra.mxu0 0.0
    %4453 = vmatprep.subr.mxu0 0.0
    %4454 = vmatpush1.msra.mxu0 0.0
    %4455 = vmatprep.subr.mxu0 0.0
    %4456 = vmatpush1.msra.mxu0 0.0
    %4457 = vmatprep.subr.mxu0 0.0
    %4458 = vmatpush1.msra.mxu0 0.0
    %4459 = vmatprep.subr.mxu0 0.0
    %4460 = vmatpush1.msra.mxu0 0.0
    %4461 = vmatprep.subr.mxu0 0.0
    %4462 = vmatpush1.msra.mxu0 0.0
    %4463 = vmatprep.subr.mxu0 0.0
    %4464 = vmatpush1.msra.mxu0 0.0
    %4465 = vmatprep.subr.mxu0 0.0
    %4466 = vmatpush1.msra.mxu0 0.0
    %4467 = vmatprep.subr.mxu0 0.0
    %4468 = vmatpush1.msra.mxu0 0.0
    %4469 = vmatprep.subr.mxu0 0.0
    %4470 = vmatpush1.msra.mxu0 0.0
    %4471 = vmatprep.subr.mxu0 0.0
    %4472 = vmatpush1.msra.mxu0 0.0
    %4473 = vmatprep.subr.mxu0 0.0
    %4474 = vmatpush1.msra.mxu0 0.0
    %4475 = vmatprep.subr.mxu0 0.0
    %4476 = vmatpush1.msra.mxu0 0.0
    %4477 = vmatprep.subr.mxu0 0.0
    %4478 = vmatpush1.msra.mxu0 0.0
    %4479 = vmatprep.subr.mxu0 0.0
    %4480 = vmatpush1.msra.mxu0 0.0
    %4481 = vmatprep.subr.mxu0 0.0
    %4482 = vmatpush1.msra.mxu0 0.0
    %4483 = vmatprep.subr.mxu0 0.0
    %4484 = vmatpush1.msra.mxu0 0.0
    %4485 = vmatprep.subr.mxu0 0.0
    %4486 = vmatpush1.msra.mxu0 0.0
    %4487 = vmatprep.subr.mxu0 0.0
    %4488 = vmatpush1.msra.mxu0 0.0
    %4489 = vmatprep.subr.mxu0 0.0
    %4490 = vmatpush1.msra.mxu0 0.0
    %4491 = vmatprep.subr.mxu0 0.0
    %4492 = vmatpush1.msra.mxu0 0.0
    %4493 = vmatprep.subr.mxu0 0.0
    %4494 = vmatpush1.msra.mxu0 0.0
    %4495 = vmatprep.subr.mxu0 0.0
    %4496 = vmatpush1.msra.mxu0 0.0
    %4497 = vmatprep.subr.mxu0 0.0
    %4498 = vmatpush1.msra.mxu0 0.0
    %4499 = vmatprep.subr.mxu0 0.0
    %4500 = vmatpush1.msra.mxu0 0.0
    %4501 = vmatprep.subr.mxu0 0.0
    %4502 = vmatpush1.msra.mxu0 0.0
    %4503 = vmatprep.mubr.f32.mxu0 0.0
    %4504 = vmatmul.mubr.f32.gmra.mrb[0].mxu0 %v4437
    %v4505 = vpop.f32.mrb[0].mxu0
    %v4506 = vadd.f32 0.0, %v4505
    %v4507 = vpop.f32.mrb[0].mxu0
    %4508 = vdwg.mxu0
    %4509 = vrot.lane.b32.xlu0 %v468, 48
    %v4510 = vpop.permute.xlu0 %4509
    %v4513 = vsel %vm482, %v3976, 0
    %4515 = vmatprep.subr.mxu0 0.0
    %4516 = vmatpush1.msra.mxu0 %v4510
    %4517 = vmatprep.subr.mxu0 0.0
    %4518 = vmatpush1.msra.mxu0 0.0
    %4519 = vmatprep.subr.mxu0 0.0
    %4520 = vmatpush1.msra.mxu0 0.0
    %4521 = vmatprep.subr.mxu0 0.0
    %4522 = vmatpush1.msra.mxu0 0.0
    %4523 = vmatprep.subr.mxu0 0.0
    %4524 = vmatpush1.msra.mxu0 0.0
    %4525 = vmatprep.subr.mxu0 0.0
    %4526 = vmatpush1.msra.mxu0 0.0
    %4527 = vmatprep.subr.mxu0 0.0
    %4528 = vmatpush1.msra.mxu0 0.0
    %4529 = vmatprep.subr.mxu0 0.0
    %4530 = vmatpush1.msra.mxu0 0.0
    %4531 = vmatprep.subr.mxu0 0.0
    %4532 = vmatpush1.msra.mxu0 0.0
    %4533 = vmatprep.subr.mxu0 0.0
    %4534 = vmatpush1.msra.mxu0 0.0
    %4535 = vmatprep.subr.mxu0 0.0
    %4536 = vmatpush1.msra.mxu0 0.0
    %4537 = vmatprep.subr.mxu0 0.0
    %4538 = vmatpush1.msra.mxu0 0.0
    %4539 = vmatprep.subr.mxu0 0.0
    %4540 = vmatpush1.msra.mxu0 0.0
    %4541 = vmatprep.subr.mxu0 0.0
    %4542 = vmatpush1.msra.mxu0 0.0
    %4543 = vmatprep.subr.mxu0 0.0
    %4544 = vmatpush1.msra.mxu0 0.0
    %4545 = vmatprep.subr.mxu0 0.0
    %4546 = vmatpush1.msra.mxu0 0.0
    %4547 = vmatprep.subr.mxu0 0.0
    %4548 = vmatpush1.msra.mxu0 0.0
    %4549 = vmatprep.subr.mxu0 0.0
    %4550 = vmatpush1.msra.mxu0 0.0
    %4551 = vmatprep.subr.mxu0 0.0
    %4552 = vmatpush1.msra.mxu0 0.0
    %4553 = vmatprep.subr.mxu0 0.0
    %4554 = vmatpush1.msra.mxu0 0.0
    %4555 = vmatprep.subr.mxu0 0.0
    %4556 = vmatpush1.msra.mxu0 0.0
    %4557 = vmatprep.subr.mxu0 0.0
    %4558 = vmatpush1.msra.mxu0 0.0
    %4559 = vmatprep.subr.mxu0 0.0
    %4560 = vmatpush1.msra.mxu0 0.0
    %4561 = vmatprep.subr.mxu0 0.0
    %4562 = vmatpush1.msra.mxu0 0.0
    %4563 = vmatprep.subr.mxu0 0.0
    %4564 = vmatpush1.msra.mxu0 0.0
    %4565 = vmatprep.subr.mxu0 0.0
    %4566 = vmatpush1.msra.mxu0 0.0
    %4567 = vmatprep.subr.mxu0 0.0
    %4568 = vmatpush1.msra.mxu0 0.0
    %4569 = vmatprep.subr.mxu0 0.0
    %4570 = vmatpush1.msra.mxu0 0.0
    %4571 = vmatprep.subr.mxu0 0.0
    %4572 = vmatpush1.msra.mxu0 0.0
    %4573 = vmatprep.subr.mxu0 0.0
    %4574 = vmatpush1.msra.mxu0 0.0
    %4575 = vmatprep.subr.mxu0 0.0
    %4576 = vmatpush1.msra.mxu0 0.0
    %4577 = vmatprep.subr.mxu0 0.0
    %4578 = vmatpush1.msra.mxu0 0.0
    %4579 = vmatprep.mubr.f32.mxu0 0.0
    %4580 = vmatmul.mubr.f32.gmra.mrb[0].mxu0 %v4513
    %v4581 = vpop.f32.mrb[0].mxu0
    %v4582 = vadd.f32 0.0, %v4581
    %v4583 = vpop.f32.mrb[0].mxu0
    %4584 = vdwg.mxu0
    %4593 = vrot.lane.b32.xlu0 %v4050, 16
    %v4594 = vpop.permute.xlu0 %4593
    %4595 = vrot.lane.b32.xlu0 %v4126, 16
    %v4596 = vpop.permute.xlu0 %4595
    %4597 = vrot.lane.b32.xlu0 %v4202, 16
    %v4598 = vpop.permute.xlu0 %4597
    %4599 = vrot.lane.b32.xlu0 %v4278, 16
    %v4600 = vpop.permute.xlu0 %4599
    %4601 = vrot.lane.b32.xlu0 %v4354, 16
    %v4602 = vpop.permute.xlu0 %4601
    %4603 = vrot.lane.b32.xlu0 %v4430, 16
    %v4604 = vpop.permute.xlu0 %4603
    %4605 = vrot.lane.b32.xlu0 %v4506, 16
    %v4606 = vpop.permute.xlu0 %4605
    %4607 = vrot.lane.b32.xlu0 %v4582, 16
    %v4608 = vpop.permute.xlu0 %4607
    %vm4617 = vcmask 195712
    %4618 = vst.msk [vmem:[#allocation2] sm:$0xff] %vm4617, %v4594
    %4619 = vst.msk [vmem:[#allocation2 + $0x8] sm:$0xff] %vm4617, %v4596
    %4620 = vst.msk [vmem:[#allocation2 + $0x10] sm:$0xff] %vm4617, %v4598
    %4621 = vst.msk [vmem:[#allocation2 + $0x18] sm:$0xff] %vm4617, %v4600
    %4622 = vst.msk [vmem:[#allocation2 + $0x20] sm:$0xff] %vm4617, %v4602
    %4623 = vst.msk [vmem:[#allocation2 + $0x28] sm:$0xff] %vm4617, %v4604
    %4624 = vst.msk [vmem:[#allocation2 + $0x30] sm:$0xff] %vm4617, %v4606
    %4625 = vst.msk [vmem:[#allocation2 + $0x38] sm:$0xff] %vm4617, %v4608
    %4626 = vrot.lane.b32.xlu0 %v441, 104
    %v4627 = vpop.permute.xlu0 %4626
    %4628 = vrot.lane.b32.xlu0 %v441, 72
    %v4629 = vpop.permute.xlu0 %4628
    %v4630 = vsel %vm482, %v4627, 0
    %v4632 = vsel %vm482, %v4629, 0
    %4634 = vmatprep.subr.mxu0 0.0
    %4635 = vmatpush1.xpose.msra.mxu0 %v4632
    %4636 = vmatprep.subr.mxu0 0.0
    %4637 = vmatpush1.xpose.msra.mxu0 0.0
    %4638 = vmatprep.subr.mxu0 0.0
    %4639 = vmatpush1.xpose.msra.mxu0 0.0
    %4640 = vmatprep.subr.mxu0 0.0
    %4641 = vmatpush1.xpose.msra.mxu0 0.0
    %4642 = vmatprep.subr.mxu0 0.0
    %4643 = vmatpush1.xpose.msra.mxu0 0.0
    %4644 = vmatprep.subr.mxu0 0.0
    %4645 = vmatpush1.xpose.msra.mxu0 0.0
    %4646 = vmatprep.subr.mxu0 0.0
    %4647 = vmatpush1.xpose.msra.mxu0 0.0
    %4648 = vmatprep.subr.mxu0 0.0
    %4649 = vmatpush1.xpose.msra.mxu0 0.0
    %4650 = vmatprep.subr.mxu0 0.0
    %4651 = vmatpush1.xpose.msra.mxu0 0.0
    %4652 = vmatprep.subr.mxu0 0.0
    %4653 = vmatpush1.xpose.msra.mxu0 0.0
    %4654 = vmatprep.subr.mxu0 0.0
    %4655 = vmatpush1.xpose.msra.mxu0 0.0
    %4656 = vmatprep.subr.mxu0 0.0
    %4657 = vmatpush1.xpose.msra.mxu0 0.0
    %4658 = vmatprep.subr.mxu0 0.0
    %4659 = vmatpush1.xpose.msra.mxu0 0.0
    %4660 = vmatprep.subr.mxu0 0.0
    %4661 = vmatpush1.xpose.msra.mxu0 0.0
    %4662 = vmatprep.subr.mxu0 0.0
    %4663 = vmatpush1.xpose.msra.mxu0 0.0
    %4664 = vmatprep.subr.mxu0 0.0
    %4665 = vmatpush1.xpose.msra.mxu0 0.0
    %4666 = vmatprep.subr.mxu0 0.0
    %4667 = vmatpush1.xpose.msra.mxu0 0.0
    %4668 = vmatprep.subr.mxu0 0.0
    %4669 = vmatpush1.xpose.msra.mxu0 0.0
    %4670 = vmatprep.subr.mxu0 0.0
    %4671 = vmatpush1.xpose.msra.mxu0 0.0
    %4672 = vmatprep.subr.mxu0 0.0
    %4673 = vmatpush1.xpose.msra.mxu0 0.0
    %4674 = vmatprep.subr.mxu0 0.0
    %4675 = vmatpush1.xpose.msra.mxu0 0.0
    %4676 = vmatprep.subr.mxu0 0.0
    %4677 = vmatpush1.xpose.msra.mxu0 0.0
    %4678 = vmatprep.subr.mxu0 0.0
    %4679 = vmatpush1.xpose.msra.mxu0 0.0
    %4680 = vmatprep.subr.mxu0 0.0
    %4681 = vmatpush1.xpose.msra.mxu0 0.0
    %4682 = vmatprep.subr.mxu0 0.0
    %4683 = vmatpush1.xpose.msra.mxu0 0.0
    %4684 = vmatprep.subr.mxu0 0.0
    %4685 = vmatpush1.xpose.msra.mxu0 0.0
    %4686 = vmatprep.subr.mxu0 0.0
    %4687 = vmatpush1.xpose.msra.mxu0 0.0
    %4688 = vmatprep.subr.mxu0 0.0
    %4689 = vmatpush1.xpose.msra.mxu0 0.0
    %4690 = vmatprep.subr.mxu0 0.0
    %4691 = vmatpush1.xpose.msra.mxu0 0.0
    %4692 = vmatprep.subr.mxu0 0.0
    %4693 = vmatpush1.xpose.msra.mxu0 0.0
    %4694 = vmatprep.subr.mxu0 0.0
    %4695 = vmatpush1.xpose.msra.mxu0 0.0
    %4696 = vmatprep.subr.mxu0 0.0
    %4697 = vmatpush1.xpose.msra.mxu0 0.0
    %4698 = vmatprep.mubr.f32.mxu0 0.0
    %4699 = vmatmul.mubr.f32.gmra.mrb[0].mxu0 %v4630
    %v4700 = vpop.f32.mrb[0].mxu0
    %v4701 = vadd.f32 0.0, %v4700
    %v4702 = vpop.f32.mrb[0].mxu0
    %4703 = vdwg.mxu0
    %4704 = vrot.lane.b32.xlu0 %v444, 104
    %v4705 = vpop.permute.xlu0 %4704
    %4706 = vrot.lane.b32.xlu0 %v444, 72
    %v4707 = vpop.permute.xlu0 %4706
    %v4708 = vsel %vm482, %v4705, 0
    %v4710 = vsel %vm482, %v4707, 0
    %4712 = vmatprep.subr.mxu0 0.0
    %4713 = vmatpush1.xpose.msra.mxu0 %v4710
    %4714 = vmatprep.subr.mxu0 0.0
    %4715 = vmatpush1.xpose.msra.mxu0 0.0
    %4716 = vmatprep.subr.mxu0 0.0
    %4717 = vmatpush1.xpose.msra.mxu0 0.0
    %4718 = vmatprep.subr.mxu0 0.0
    %4719 = vmatpush1.xpose.msra.mxu0 0.0
    %4720 = vmatprep.subr.mxu0 0.0
    %4721 = vmatpush1.xpose.msra.mxu0 0.0
    %4722 = vmatprep.subr.mxu0 0.0
    %4723 = vmatpush1.xpose.msra.mxu0 0.0
    %4724 = vmatprep.subr.mxu0 0.0
    %4725 = vmatpush1.xpose.msra.mxu0 0.0
    %4726 = vmatprep.subr.mxu0 0.0
    %4727 = vmatpush1.xpose.msra.mxu0 0.0
    %4728 = vmatprep.subr.mxu0 0.0
    %4729 = vmatpush1.xpose.msra.mxu0 0.0
    %4730 = vmatprep.subr.mxu0 0.0
    %4731 = vmatpush1.xpose.msra.mxu0 0.0
    %4732 = vmatprep.subr.mxu0 0.0
    %4733 = vmatpush1.xpose.msra.mxu0 0.0
    %4734 = vmatprep.subr.mxu0 0.0
    %4735 = vmatpush1.xpose.msra.mxu0 0.0
    %4736 = vmatprep.subr.mxu0 0.0
    %4737 = vmatpush1.xpose.msra.mxu0 0.0
    %4738 = vmatprep.subr.mxu0 0.0
    %4739 = vmatpush1.xpose.msra.mxu0 0.0
    %4740 = vmatprep.subr.mxu0 0.0
    %4741 = vmatpush1.xpose.msra.mxu0 0.0
    %4742 = vmatprep.subr.mxu0 0.0
    %4743 = vmatpush1.xpose.msra.mxu0 0.0
    %4744 = vmatprep.subr.mxu0 0.0
    %4745 = vmatpush1.xpose.msra.mxu0 0.0
    %4746 = vmatprep.subr.mxu0 0.0
    %4747 = vmatpush1.xpose.msra.mxu0 0.0
    %4748 = vmatprep.subr.mxu0 0.0
    %4749 = vmatpush1.xpose.msra.mxu0 0.0
    %4750 = vmatprep.subr.mxu0 0.0
    %4751 = vmatpush1.xpose.msra.mxu0 0.0
    %4752 = vmatprep.subr.mxu0 0.0
    %4753 = vmatpush1.xpose.msra.mxu0 0.0
    %4754 = vmatprep.subr.mxu0 0.0
    %4755 = vmatpush1.xpose.msra.mxu0 0.0
    %4756 = vmatprep.subr.mxu0 0.0
    %4757 = vmatpush1.xpose.msra.mxu0 0.0
    %4758 = vmatprep.subr.mxu0 0.0
    %4759 = vmatpush1.xpose.msra.mxu0 0.0
    %4760 = vmatprep.subr.mxu0 0.0
    %4761 = vmatpush1.xpose.msra.mxu0 0.0
    %4762 = vmatprep.subr.mxu0 0.0
    %4763 = vmatpush1.xpose.msra.mxu0 0.0
    %4764 = vmatprep.subr.mxu0 0.0
    %4765 = vmatpush1.xpose.msra.mxu0 0.0
    %4766 = vmatprep.subr.mxu0 0.0
    %4767 = vmatpush1.xpose.msra.mxu0 0.0
    %4768 = vmatprep.subr.mxu0 0.0
    %4769 = vmatpush1.xpose.msra.mxu0 0.0
    %4770 = vmatprep.subr.mxu0 0.0
    %4771 = vmatpush1.xpose.msra.mxu0 0.0
    %4772 = vmatprep.subr.mxu0 0.0
    %4773 = vmatpush1.xpose.msra.mxu0 0.0
    %4774 = vmatprep.subr.mxu0 0.0
    %4775 = vmatpush1.xpose.msra.mxu0 0.0
    %4776 = vmatprep.mubr.f32.mxu0 0.0
    %4777 = vmatmul.mubr.f32.gmra.mrb[0].mxu0 %v4708
    %v4778 = vpop.f32.mrb[0].mxu0
    %v4779 = vadd.f32 0.0, %v4778
    %v4780 = vpop.f32.mrb[0].mxu0
    %4781 = vdwg.mxu0
    %4782 = vrot.lane.b32.xlu0 %v449, 104
    %v4783 = vpop.permute.xlu0 %4782
    %4784 = vrot.lane.b32.xlu0 %v449, 72
    %v4785 = vpop.permute.xlu0 %4784
    %v4786 = vsel %vm482, %v4783, 0
    %v4788 = vsel %vm482, %v4785, 0
    %4790 = vmatprep.subr.mxu0 0.0
    %4791 = vmatpush1.xpose.msra.mxu0 %v4788
    %4792 = vmatprep.subr.mxu0 0.0
    %4793 = vmatpush1.xpose.msra.mxu0 0.0
    %4794 = vmatprep.subr.mxu0 0.0
    %4795 = vmatpush1.xpose.msra.mxu0 0.0
    %4796 = vmatprep.subr.mxu0 0.0
    %4797 = vmatpush1.xpose.msra.mxu0 0.0
    %4798 = vmatprep.subr.mxu0 0.0
    %4799 = vmatpush1.xpose.msra.mxu0 0.0
    %4800 = vmatprep.subr.mxu0 0.0
    %4801 = vmatpush1.xpose.msra.mxu0 0.0
    %4802 = vmatprep.subr.mxu0 0.0
    %4803 = vmatpush1.xpose.msra.mxu0 0.0
    %4804 = vmatprep.subr.mxu0 0.0
    %4805 = vmatpush1.xpose.msra.mxu0 0.0
    %4806 = vmatprep.subr.mxu0 0.0
    %4807 = vmatpush1.xpose.msra.mxu0 0.0
    %4808 = vmatprep.subr.mxu0 0.0
    %4809 = vmatpush1.xpose.msra.mxu0 0.0
    %4810 = vmatprep.subr.mxu0 0.0
    %4811 = vmatpush1.xpose.msra.mxu0 0.0
    %4812 = vmatprep.subr.mxu0 0.0
    %4813 = vmatpush1.xpose.msra.mxu0 0.0
    %4814 = vmatprep.subr.mxu0 0.0
    %4815 = vmatpush1.xpose.msra.mxu0 0.0
    %4816 = vmatprep.subr.mxu0 0.0
    %4817 = vmatpush1.xpose.msra.mxu0 0.0
    %4818 = vmatprep.subr.mxu0 0.0
    %4819 = vmatpush1.xpose.msra.mxu0 0.0
    %4820 = vmatprep.subr.mxu0 0.0
    %4821 = vmatpush1.xpose.msra.mxu0 0.0
    %4822 = vmatprep.subr.mxu0 0.0
    %4823 = vmatpush1.xpose.msra.mxu0 0.0
    %4824 = vmatprep.subr.mxu0 0.0
    %4825 = vmatpush1.xpose.msra.mxu0 0.0
    %4826 = vmatprep.subr.mxu0 0.0
    %4827 = vmatpush1.xpose.msra.mxu0 0.0
    %4828 = vmatprep.subr.mxu0 0.0
    %4829 = vmatpush1.xpose.msra.mxu0 0.0
    %4830 = vmatprep.subr.mxu0 0.0
    %4831 = vmatpush1.xpose.msra.mxu0 0.0
    %4832 = vmatprep.subr.mxu0 0.0
    %4833 = vmatpush1.xpose.msra.mxu0 0.0
    %4834 = vmatprep.subr.mxu0 0.0
    %4835 = vmatpush1.xpose.msra.mxu0 0.0
    %4836 = vmatprep.subr.mxu0 0.0
    %4837 = vmatpush1.xpose.msra.mxu0 0.0
    %4838 = vmatprep.subr.mxu0 0.0
    %4839 = vmatpush1.xpose.msra.mxu0 0.0
    %4840 = vmatprep.subr.mxu0 0.0
    %4841 = vmatpush1.xpose.msra.mxu0 0.0
    %4842 = vmatprep.subr.mxu0 0.0
    %4843 = vmatpush1.xpose.msra.mxu0 0.0
    %4844 = vmatprep.subr.mxu0 0.0
    %4845 = vmatpush1.xpose.msra.mxu0 0.0
    %4846 = vmatprep.subr.mxu0 0.0
    %4847 = vmatpush1.xpose.msra.mxu0 0.0
    %4848 = vmatprep.subr.mxu0 0.0
    %4849 = vmatpush1.xpose.msra.mxu0 0.0
    %4850 = vmatprep.subr.mxu0 0.0
    %4851 = vmatpush1.xpose.msra.mxu0 0.0
    %4852 = vmatprep.subr.mxu0 0.0
    %4853 = vmatpush1.xpose.msra.mxu0 0.0
    %4854 = vmatprep.mubr.f32.mxu0 0.0
    %4855 = vmatmul.mubr.f32.gmra.mrb[0].mxu0 %v4786
    %v4856 = vpop.f32.mrb[0].mxu0
    %v4857 = vadd.f32 0.0, %v4856
    %v4858 = vpop.f32.mrb[0].mxu0
    %4859 = vdwg.mxu0
    %4860 = vrot.lane.b32.xlu0 %v452, 104
    %v4861 = vpop.permute.xlu0 %4860
    %4862 = vrot.lane.b32.xlu0 %v452, 72
    %v4863 = vpop.permute.xlu0 %4862
    %v4864 = vsel %vm482, %v4861, 0
    %v4866 = vsel %vm482, %v4863, 0
    %4868 = vmatprep.subr.mxu0 0.0
    %4869 = vmatpush1.xpose.msra.mxu0 %v4866
    %4870 = vmatprep.subr.mxu0 0.0
    %4871 = vmatpush1.xpose.msra.mxu0 0.0
    %4872 = vmatprep.subr.mxu0 0.0
    %4873 = vmatpush1.xpose.msra.mxu0 0.0
    %4874 = vmatprep.subr.mxu0 0.0
    %4875 = vmatpush1.xpose.msra.mxu0 0.0
    %4876 = vmatprep.subr.mxu0 0.0
    %4877 = vmatpush1.xpose.msra.mxu0 0.0
    %4878 = vmatprep.subr.mxu0 0.0
    %4879 = vmatpush1.xpose.msra.mxu0 0.0
    %4880 = vmatprep.subr.mxu0 0.0
    %4881 = vmatpush1.xpose.msra.mxu0 0.0
    %4882 = vmatprep.subr.mxu0 0.0
    %4883 = vmatpush1.xpose.msra.mxu0 0.0
    %4884 = vmatprep.subr.mxu0 0.0
    %4885 = vmatpush1.xpose.msra.mxu0 0.0
    %4886 = vmatprep.subr.mxu0 0.0
    %4887 = vmatpush1.xpose.msra.mxu0 0.0
    %4888 = vmatprep.subr.mxu0 0.0
    %4889 = vmatpush1.xpose.msra.mxu0 0.0
    %4890 = vmatprep.subr.mxu0 0.0
    %4891 = vmatpush1.xpose.msra.mxu0 0.0
    %4892 = vmatprep.subr.mxu0 0.0
    %4893 = vmatpush1.xpose.msra.mxu0 0.0
    %4894 = vmatprep.subr.mxu0 0.0
    %4895 = vmatpush1.xpose.msra.mxu0 0.0
    %4896 = vmatprep.subr.mxu0 0.0
    %4897 = vmatpush1.xpose.msra.mxu0 0.0
    %4898 = vmatprep.subr.mxu0 0.0
    %4899 = vmatpush1.xpose.msra.mxu0 0.0
    %4900 = vmatprep.subr.mxu0 0.0
    %4901 = vmatpush1.xpose.msra.mxu0 0.0
    %4902 = vmatprep.subr.mxu0 0.0
    %4903 = vmatpush1.xpose.msra.mxu0 0.0
    %4904 = vmatprep.subr.mxu0 0.0
    %4905 = vmatpush1.xpose.msra.mxu0 0.0
    %4906 = vmatprep.subr.mxu0 0.0
    %4907 = vmatpush1.xpose.msra.mxu0 0.0
    %4908 = vmatprep.subr.mxu0 0.0
    %4909 = vmatpush1.xpose.msra.mxu0 0.0
    %4910 = vmatprep.subr.mxu0 0.0
    %4911 = vmatpush1.xpose.msra.mxu0 0.0
    %4912 = vmatprep.subr.mxu0 0.0
    %4913 = vmatpush1.xpose.msra.mxu0 0.0
    %4914 = vmatprep.subr.mxu0 0.0
    %4915 = vmatpush1.xpose.msra.mxu0 0.0
    %4916 = vmatprep.subr.mxu0 0.0
    %4917 = vmatpush1.xpose.msra.mxu0 0.0
    %4918 = vmatprep.subr.mxu0 0.0
    %4919 = vmatpush1.xpose.msra.mxu0 0.0
    %4920 = vmatprep.subr.mxu0 0.0
    %4921 = vmatpush1.xpose.msra.mxu0 0.0
    %4922 = vmatprep.subr.mxu0 0.0
    %4923 = vmatpush1.xpose.msra.mxu0 0.0
    %4924 = vmatprep.subr.mxu0 0.0
    %4925 = vmatpush1.xpose.msra.mxu0 0.0
    %4926 = vmatprep.subr.mxu0 0.0
    %4927 = vmatpush1.xpose.msra.mxu0 0.0
    %4928 = vmatprep.subr.mxu0 0.0
    %4929 = vmatpush1.xpose.msra.mxu0 0.0
    %4930 = vmatprep.subr.mxu0 0.0
    %4931 = vmatpush1.xpose.msra.mxu0 0.0
    %4932 = vmatprep.mubr.f32.mxu0 0.0
    %4933 = vmatmul.mubr.f32.gmra.mrb[0].mxu0 %v4864
    %v4934 = vpop.f32.mrb[0].mxu0
    %v4935 = vadd.f32 0.0, %v4934
    %v4936 = vpop.f32.mrb[0].mxu0
    %4937 = vdwg.mxu0
    %4938 = vrot.lane.b32.xlu0 %v457, 104
    %v4939 = vpop.permute.xlu0 %4938
    %4940 = vrot.lane.b32.xlu0 %v457, 72
    %v4941 = vpop.permute.xlu0 %4940
    %v4942 = vsel %vm482, %v4939, 0
    %v4944 = vsel %vm482, %v4941, 0
    %4946 = vmatprep.subr.mxu0 0.0
    %4947 = vmatpush1.xpose.msra.mxu0 %v4944
    %4948 = vmatprep.subr.mxu0 0.0
    %4949 = vmatpush1.xpose.msra.mxu0 0.0
    %4950 = vmatprep.subr.mxu0 0.0
    %4951 = vmatpush1.xpose.msra.mxu0 0.0
    %4952 = vmatprep.subr.mxu0 0.0
    %4953 = vmatpush1.xpose.msra.mxu0 0.0
    %4954 = vmatprep.subr.mxu0 0.0
    %4955 = vmatpush1.xpose.msra.mxu0 0.0
    %4956 = vmatprep.subr.mxu0 0.0
    %4957 = vmatpush1.xpose.msra.mxu0 0.0
    %4958 = vmatprep.subr.mxu0 0.0
    %4959 = vmatpush1.xpose.msra.mxu0 0.0
    %4960 = vmatprep.subr.mxu0 0.0
    %4961 = vmatpush1.xpose.msra.mxu0 0.0
    %4962 = vmatprep.subr.mxu0 0.0
    %4963 = vmatpush1.xpose.msra.mxu0 0.0
    %4964 = vmatprep.subr.mxu0 0.0
    %4965 = vmatpush1.xpose.msra.mxu0 0.0
    %4966 = vmatprep.subr.mxu0 0.0
    %4967 = vmatpush1.xpose.msra.mxu0 0.0
    %4968 = vmatprep.subr.mxu0 0.0
    %4969 = vmatpush1.xpose.msra.mxu0 0.0
    %4970 = vmatprep.subr.mxu0 0.0
    %4971 = vmatpush1.xpose.msra.mxu0 0.0
    %4972 = vmatprep.subr.mxu0 0.0
    %4973 = vmatpush1.xpose.msra.mxu0 0.0
    %4974 = vmatprep.subr.mxu0 0.0
    %4975 = vmatpush1.xpose.msra.mxu0 0.0
    %4976 = vmatprep.subr.mxu0 0.0
    %4977 = vmatpush1.xpose.msra.mxu0 0.0
    %4978 = vmatprep.subr.mxu0 0.0
    %4979 = vmatpush1.xpose.msra.mxu0 0.0
    %4980 = vmatprep.subr.mxu0 0.0
    %4981 = vmatpush1.xpose.msra.mxu0 0.0
    %4982 = vmatprep.subr.mxu0 0.0
    %4983 = vmatpush1.xpose.msra.mxu0 0.0
    %4984 = vmatprep.subr.mxu0 0.0
    %4985 = vmatpush1.xpose.msra.mxu0 0.0
    %4986 = vmatprep.subr.mxu0 0.0
    %4987 = vmatpush1.xpose.msra.mxu0 0.0
    %4988 = vmatprep.subr.mxu0 0.0
    %4989 = vmatpush1.xpose.msra.mxu0 0.0
    %4990 = vmatprep.subr.mxu0 0.0
    %4991 = vmatpush1.xpose.msra.mxu0 0.0
    %4992 = vmatprep.subr.mxu0 0.0
    %4993 = vmatpush1.xpose.msra.mxu0 0.0
    %4994 = vmatprep.subr.mxu0 0.0
    %4995 = vmatpush1.xpose.msra.mxu0 0.0
    %4996 = vmatprep.subr.mxu0 0.0
    %4997 = vmatpush1.xpose.msra.mxu0 0.0
    %4998 = vmatprep.subr.mxu0 0.0
    %4999 = vmatpush1.xpose.msra.mxu0 0.0
    %5000 = vmatprep.subr.mxu0 0.0
    %5001 = vmatpush1.xpose.msra.mxu0 0.0
    %5002 = vmatprep.subr.mxu0 0.0
    %5003 = vmatpush1.xpose.msra.mxu0 0.0
    %5004 = vmatprep.subr.mxu0 0.0
    %5005 = vmatpush1.xpose.msra.mxu0 0.0
    %5006 = vmatprep.subr.mxu0 0.0
    %5007 = vmatpush1.xpose.msra.mxu0 0.0
    %5008 = vmatprep.subr.mxu0 0.0
    %5009 = vmatpush1.xpose.msra.mxu0 0.0
    %5010 = vmatprep.mubr.f32.mxu0 0.0
    %5011 = vmatmul.mubr.f32.gmra.mrb[0].mxu0 %v4942
    %v5012 = vpop.f32.mrb[0].mxu0
    %v5013 = vadd.f32 0.0, %v5012
    %v5014 = vpop.f32.mrb[0].mxu0
    %5015 = vdwg.mxu0
    %5016 = vrot.lane.b32.xlu0 %v460, 104
    %v5017 = vpop.permute.xlu0 %5016
    %5018 = vrot.lane.b32.xlu0 %v460, 72
    %v5019 = vpop.permute.xlu0 %5018
    %v5020 = vsel %vm482, %v5017, 0
    %v5022 = vsel %vm482, %v5019, 0
    %5024 = vmatprep.subr.mxu0 0.0
    %5025 = vmatpush1.xpose.msra.mxu0 %v5022
    %5026 = vmatprep.subr.mxu0 0.0
    %5027 = vmatpush1.xpose.msra.mxu0 0.0
    %5028 = vmatprep.subr.mxu0 0.0
    %5029 = vmatpush1.xpose.msra.mxu0 0.0
    %5030 = vmatprep.subr.mxu0 0.0
    %5031 = vmatpush1.xpose.msra.mxu0 0.0
    %5032 = vmatprep.subr.mxu0 0.0
    %5033 = vmatpush1.xpose.msra.mxu0 0.0
    %5034 = vmatprep.subr.mxu0 0.0
    %5035 = vmatpush1.xpose.msra.mxu0 0.0
    %5036 = vmatprep.subr.mxu0 0.0
    %5037 = vmatpush1.xpose.msra.mxu0 0.0
    %5038 = vmatprep.subr.mxu0 0.0
    %5039 = vmatpush1.xpose.msra.mxu0 0.0
    %5040 = vmatprep.subr.mxu0 0.0
    %5041 = vmatpush1.xpose.msra.mxu0 0.0
    %5042 = vmatprep.subr.mxu0 0.0
    %5043 = vmatpush1.xpose.msra.mxu0 0.0
    %5044 = vmatprep.subr.mxu0 0.0
    %5045 = vmatpush1.xpose.msra.mxu0 0.0
    %5046 = vmatprep.subr.mxu0 0.0
    %5047 = vmatpush1.xpose.msra.mxu0 0.0
    %5048 = vmatprep.subr.mxu0 0.0
    %5049 = vmatpush1.xpose.msra.mxu0 0.0
    %5050 = vmatprep.subr.mxu0 0.0
    %5051 = vmatpush1.xpose.msra.mxu0 0.0
    %5052 = vmatprep.subr.mxu0 0.0
    %5053 = vmatpush1.xpose.msra.mxu0 0.0
    %5054 = vmatprep.subr.mxu0 0.0
    %5055 = vmatpush1.xpose.msra.mxu0 0.0
    %5056 = vmatprep.subr.mxu0 0.0
    %5057 = vmatpush1.xpose.msra.mxu0 0.0
    %5058 = vmatprep.subr.mxu0 0.0
    %5059 = vmatpush1.xpose.msra.mxu0 0.0
    %5060 = vmatprep.subr.mxu0 0.0
    %5061 = vmatpush1.xpose.msra.mxu0 0.0
    %5062 = vmatprep.subr.mxu0 0.0
    %5063 = vmatpush1.xpose.msra.mxu0 0.0
    %5064 = vmatprep.subr.mxu0 0.0
    %5065 = vmatpush1.xpose.msra.mxu0 0.0
    %5066 = vmatprep.subr.mxu0 0.0
    %5067 = vmatpush1.xpose.msra.mxu0 0.0
    %5068 = vmatprep.subr.mxu0 0.0
    %5069 = vmatpush1.xpose.msra.mxu0 0.0
    %5070 = vmatprep.subr.mxu0 0.0
    %5071 = vmatpush1.xpose.msra.mxu0 0.0
    %5072 = vmatprep.subr.mxu0 0.0
    %5073 = vmatpush1.xpose.msra.mxu0 0.0
    %5074 = vmatprep.subr.mxu0 0.0
    %5075 = vmatpush1.xpose.msra.mxu0 0.0
    %5076 = vmatprep.subr.mxu0 0.0
    %5077 = vmatpush1.xpose.msra.mxu0 0.0
    %5078 = vmatprep.subr.mxu0 0.0
    %5079 = vmatpush1.xpose.msra.mxu0 0.0
    %5080 = vmatprep.subr.mxu0 0.0
    %5081 = vmatpush1.xpose.msra.mxu0 0.0
    %5082 = vmatprep.subr.mxu0 0.0
    %5083 = vmatpush1.xpose.msra.mxu0 0.0
    %5084 = vmatprep.subr.mxu0 0.0
    %5085 = vmatpush1.xpose.msra.mxu0 0.0
    %5086 = vmatprep.subr.mxu0 0.0
    %5087 = vmatpush1.xpose.msra.mxu0 0.0
    %5088 = vmatprep.mubr.f32.mxu0 0.0
    %5089 = vmatmul.mubr.f32.gmra.mrb[0].mxu0 %v5020
    %v5090 = vpop.f32.mrb[0].mxu0
    %v5091 = vadd.f32 0.0, %v5090
    %v5092 = vpop.f32.mrb[0].mxu0
    %5093 = vdwg.mxu0
    %5094 = vrot.lane.b32.xlu0 %v465, 104
    %v5095 = vpop.permute.xlu0 %5094
    %5096 = vrot.lane.b32.xlu0 %v465, 72
    %v5097 = vpop.permute.xlu0 %5096
    %v5098 = vsel %vm482, %v5095, 0
    %v5100 = vsel %vm482, %v5097, 0
    %5102 = vmatprep.subr.mxu0 0.0
    %5103 = vmatpush1.xpose.msra.mxu0 %v5100
    %5104 = vmatprep.subr.mxu0 0.0
    %5105 = vmatpush1.xpose.msra.mxu0 0.0
    %5106 = vmatprep.subr.mxu0 0.0
    %5107 = vmatpush1.xpose.msra.mxu0 0.0
    %5108 = vmatprep.subr.mxu0 0.0
    %5109 = vmatpush1.xpose.msra.mxu0 0.0
    %5110 = vmatprep.subr.mxu0 0.0
    %5111 = vmatpush1.xpose.msra.mxu0 0.0
    %5112 = vmatprep.subr.mxu0 0.0
    %5113 = vmatpush1.xpose.msra.mxu0 0.0
    %5114 = vmatprep.subr.mxu0 0.0
    %5115 = vmatpush1.xpose.msra.mxu0 0.0
    %5116 = vmatprep.subr.mxu0 0.0
    %5117 = vmatpush1.xpose.msra.mxu0 0.0
    %5118 = vmatprep.subr.mxu0 0.0
    %5119 = vmatpush1.xpose.msra.mxu0 0.0
    %5120 = vmatprep.subr.mxu0 0.0
    %5121 = vmatpush1.xpose.msra.mxu0 0.0
    %5122 = vmatprep.subr.mxu0 0.0
    %5123 = vmatpush1.xpose.msra.mxu0 0.0
    %5124 = vmatprep.subr.mxu0 0.0
    %5125 = vmatpush1.xpose.msra.mxu0 0.0
    %5126 = vmatprep.subr.mxu0 0.0
    %5127 = vmatpush1.xpose.msra.mxu0 0.0
    %5128 = vmatprep.subr.mxu0 0.0
    %5129 = vmatpush1.xpose.msra.mxu0 0.0
    %5130 = vmatprep.subr.mxu0 0.0
    %5131 = vmatpush1.xpose.msra.mxu0 0.0
    %5132 = vmatprep.subr.mxu0 0.0
    %5133 = vmatpush1.xpose.msra.mxu0 0.0
    %5134 = vmatprep.subr.mxu0 0.0
    %5135 = vmatpush1.xpose.msra.mxu0 0.0
    %5136 = vmatprep.subr.mxu0 0.0
    %5137 = vmatpush1.xpose.msra.mxu0 0.0
    %5138 = vmatprep.subr.mxu0 0.0
    %5139 = vmatpush1.xpose.msra.mxu0 0.0
    %5140 = vmatprep.subr.mxu0 0.0
    %5141 = vmatpush1.xpose.msra.mxu0 0.0
    %5142 = vmatprep.subr.mxu0 0.0
    %5143 = vmatpush1.xpose.msra.mxu0 0.0
    %5144 = vmatprep.subr.mxu0 0.0
    %5145 = vmatpush1.xpose.msra.mxu0 0.0
    %5146 = vmatprep.subr.mxu0 0.0
    %5147 = vmatpush1.xpose.msra.mxu0 0.0
    %5148 = vmatprep.subr.mxu0 0.0
    %5149 = vmatpush1.xpose.msra.mxu0 0.0
    %5150 = vmatprep.subr.mxu0 0.0
    %5151 = vmatpush1.xpose.msra.mxu0 0.0
    %5152 = vmatprep.subr.mxu0 0.0
    %5153 = vmatpush1.xpose.msra.mxu0 0.0
    %5154 = vmatprep.subr.mxu0 0.0
    %5155 = vmatpush1.xpose.msra.mxu0 0.0
    %5156 = vmatprep.subr.mxu0 0.0
    %5157 = vmatpush1.xpose.msra.mxu0 0.0
    %5158 = vmatprep.subr.mxu0 0.0
    %5159 = vmatpush1.xpose.msra.mxu0 0.0
    %5160 = vmatprep.subr.mxu0 0.0
    %5161 = vmatpush1.xpose.msra.mxu0 0.0
    %5162 = vmatprep.subr.mxu0 0.0
    %5163 = vmatpush1.xpose.msra.mxu0 0.0
    %5164 = vmatprep.subr.mxu0 0.0
    %5165 = vmatpush1.xpose.msra.mxu0 0.0
    %5166 = vmatprep.mubr.f32.mxu0 0.0
    %5167 = vmatmul.mubr.f32.gmra.mrb[0].mxu0 %v5098
    %v5168 = vpop.f32.mrb[0].mxu0
    %v5169 = vadd.f32 0.0, %v5168
    %v5170 = vpop.f32.mrb[0].mxu0
    %5171 = vdwg.mxu0
    %5172 = vrot.lane.b32.xlu0 %v468, 104
    %v5173 = vpop.permute.xlu0 %5172
    %5174 = vrot.lane.b32.xlu0 %v468, 72
    %v5175 = vpop.permute.xlu0 %5174
    %v5176 = vsel %vm482, %v5173, 0
    %v5178 = vsel %vm482, %v5175, 0
    %5180 = vmatprep.subr.mxu0 0.0
    %5181 = vmatpush1.xpose.msra.mxu0 %v5178
    %5182 = vmatprep.subr.mxu0 0.0
    %5183 = vmatpush1.xpose.msra.mxu0 0.0
    %5184 = vmatprep.subr.mxu0 0.0
    %5185 = vmatpush1.xpose.msra.mxu0 0.0
    %5186 = vmatprep.subr.mxu0 0.0
    %5187 = vmatpush1.xpose.msra.mxu0 0.0
    %5188 = vmatprep.subr.mxu0 0.0
    %5189 = vmatpush1.xpose.msra.mxu0 0.0
    %5190 = vmatprep.subr.mxu0 0.0
    %5191 = vmatpush1.xpose.msra.mxu0 0.0
    %5192 = vmatprep.subr.mxu0 0.0
    %5193 = vmatpush1.xpose.msra.mxu0 0.0
    %5194 = vmatprep.subr.mxu0 0.0
    %5195 = vmatpush1.xpose.msra.mxu0 0.0
    %5196 = vmatprep.subr.mxu0 0.0
    %5197 = vmatpush1.xpose.msra.mxu0 0.0
    %5198 = vmatprep.subr.mxu0 0.0
    %5199 = vmatpush1.xpose.msra.mxu0 0.0
    %5200 = vmatprep.subr.mxu0 0.0
    %5201 = vmatpush1.xpose.msra.mxu0 0.0
    %5202 = vmatprep.subr.mxu0 0.0
    %5203 = vmatpush1.xpose.msra.mxu0 0.0
    %5204 = vmatprep.subr.mxu0 0.0
    %5205 = vmatpush1.xpose.msra.mxu0 0.0
    %5206 = vmatprep.subr.mxu0 0.0
    %5207 = vmatpush1.xpose.msra.mxu0 0.0
    %5208 = vmatprep.subr.mxu0 0.0
    %5209 = vmatpush1.xpose.msra.mxu0 0.0
    %5210 = vmatprep.subr.mxu0 0.0
    %5211 = vmatpush1.xpose.msra.mxu0 0.0
    %5212 = vmatprep.subr.mxu0 0.0
    %5213 = vmatpush1.xpose.msra.mxu0 0.0
    %5214 = vmatprep.subr.mxu0 0.0
    %5215 = vmatpush1.xpose.msra.mxu0 0.0
    %5216 = vmatprep.subr.mxu0 0.0
    %5217 = vmatpush1.xpose.msra.mxu0 0.0
    %5218 = vmatprep.subr.mxu0 0.0
    %5219 = vmatpush1.xpose.msra.mxu0 0.0
    %5220 = vmatprep.subr.mxu0 0.0
    %5221 = vmatpush1.xpose.msra.mxu0 0.0
    %5222 = vmatprep.subr.mxu0 0.0
    %5223 = vmatpush1.xpose.msra.mxu0 0.0
    %5224 = vmatprep.subr.mxu0 0.0
    %5225 = vmatpush1.xpose.msra.mxu0 0.0
    %5226 = vmatprep.subr.mxu0 0.0
    %5227 = vmatpush1.xpose.msra.mxu0 0.0
    %5228 = vmatprep.subr.mxu0 0.0
    %5229 = vmatpush1.xpose.msra.mxu0 0.0
    %5230 = vmatprep.subr.mxu0 0.0
    %5231 = vmatpush1.xpose.msra.mxu0 0.0
    %5232 = vmatprep.subr.mxu0 0.0
    %5233 = vmatpush1.xpose.msra.mxu0 0.0
    %5234 = vmatprep.subr.mxu0 0.0
    %5235 = vmatpush1.xpose.msra.mxu0 0.0
    %5236 = vmatprep.subr.mxu0 0.0
    %5237 = vmatpush1.xpose.msra.mxu0 0.0
    %5238 = vmatprep.subr.mxu0 0.0
    %5239 = vmatpush1.xpose.msra.mxu0 0.0
    %5240 = vmatprep.subr.mxu0 0.0
    %5241 = vmatpush1.xpose.msra.mxu0 0.0
    %5242 = vmatprep.subr.mxu0 0.0
    %5243 = vmatpush1.xpose.msra.mxu0 0.0
    %5244 = vmatprep.mubr.f32.mxu0 0.0
    %5245 = vmatmul.mubr.f32.gmra.mrb[0].mxu0 %v5176
    %v5246 = vpop.f32.mrb[0].mxu0
    %v5247 = vadd.f32 0.0, %v5246
    %v5248 = vpop.f32.mrb[0].mxu0
    %5249 = vdwg.mxu0
    %v5250 = vmul.f32 %v4701, 0.35355338
    %v5251 = vmul.f32 %v4779, 0.35355338
    %v5252 = vmul.f32 %v4857, 0.35355338
    %v5253 = vmul.f32 %v4935, 0.35355338
    %v5254 = vmul.f32 %v5013, 0.35355338
    %v5255 = vmul.f32 %v5091, 0.35355338
    %v5256 = vmul.f32 %v5169, 0.35355338
    %v5257 = vmul.f32 %v5247, 0.35355338
    %5258 = vrot.lane.b32.xlu0 %v471, 104
    %v5259 = vpop.permute.xlu0 %5258
    %5260 = vrot.lane.b32.xlu0 %v472, 104
    %v5261 = vpop.permute.xlu0 %5260
    %5262 = vrot.lane.b32.xlu0 %v473, 104
    %v5263 = vpop.permute.xlu0 %5262
    %5264 = vrot.lane.b32.xlu0 %v474, 104
    %v5265 = vpop.permute.xlu0 %5264
    %5266 = vrot.lane.b32.xlu0 %v475, 104
    %v5267 = vpop.permute.xlu0 %5266
    %5268 = vrot.lane.b32.xlu0 %v476, 104
    %v5269 = vpop.permute.xlu0 %5268
    %5270 = vrot.lane.b32.xlu0 %v477, 104
    %v5271 = vpop.permute.xlu0 %5270
    %5272 = vrot.lane.b32.xlu0 %v478, 104
    %v5273 = vpop.permute.xlu0 %5272
    %v5282 = vadd.f32 %v5250, %v5259
    %v5283 = vadd.f32 %v5251, %v5261
    %v5284 = vadd.f32 %v5252, %v5263
    %v5285 = vadd.f32 %v5253, %v5265
    %v5286 = vadd.f32 %v5254, %v5267
    %v5287 = vadd.f32 %v5255, %v5269
    %v5288 = vadd.f32 %v5256, %v5271
    %v5289 = vadd.f32 %v5257, %v5273
    %v5290 = vsel %vm482, %v5282, -inf
    %5291 = vmax.xlane.f32.xlu0 %v5290
    %v5292 = vpop.xlane.xlu0 %5291
    %v5293 = vsel %vm482, %v5283, -inf
    %5294 = vmax.xlane.f32.xlu0 %v5293
    %v5295 = vpop.xlane.xlu0 %5294
    %v5296 = vsel %vm482, %v5284, -inf
    %5297 = vmax.xlane.f32.xlu0 %v5296
    %v5298 = vpop.xlane.xlu0 %5297
    %v5299 = vsel %vm482, %v5285, -inf
    %5300 = vmax.xlane.f32.xlu0 %v5299
    %v5301 = vpop.xlane.xlu0 %5300
    %v5302 = vsel %vm482, %v5286, -inf
    %5303 = vmax.xlane.f32.xlu0 %v5302
    %v5304 = vpop.xlane.xlu0 %5303
    %v5305 = vsel %vm482, %v5287, -inf
    %5306 = vmax.xlane.f32.xlu0 %v5305
    %v5307 = vpop.xlane.xlu0 %5306
    %v5308 = vsel %vm482, %v5288, -inf
    %5309 = vmax.xlane.f32.xlu0 %v5308
    %v5310 = vpop.xlane.xlu0 %5309
    %v5311 = vsel %vm482, %v5289, -inf
    %5312 = vmax.xlane.f32.xlu0 %v5311
    %v5313 = vpop.xlane.xlu0 %5312
    %v5314 = vsub.f32 %v5282, %v5292
    %v5315 = vsub.f32 %v5283, %v5295
    %v5316 = vsub.f32 %v5284, %v5298
    %v5317 = vsub.f32 %v5285, %v5301
    %v5318 = vsub.f32 %v5286, %v5304
    %v5319 = vsub.f32 %v5287, %v5307
    %v5320 = vsub.f32 %v5288, %v5310
    %v5321 = vsub.f32 %v5289, %v5313
    %v5322 = vmul.f32 %v5314, 1.442695
    %v5323 = vpow.pop %v5322
    %v5324 = vmul.f32 %v5315, 1.442695
    %v5325 = vpow.pop %v5324
    %v5326 = vmul.f32 %v5316, 1.442695
    %v5327 = vpow.pop %v5326
    %v5328 = vmul.f32 %v5317, 1.442695
    %v5329 = vpow.pop %v5328
    %v5330 = vmul.f32 %v5318, 1.442695
    %v5331 = vpow.pop %v5330
    %v5332 = vmul.f32 %v5319, 1.442695
    %v5333 = vpow.pop %v5332
    %v5334 = vmul.f32 %v5320, 1.442695
    %v5335 = vpow.pop %v5334
    %v5336 = vmul.f32 %v5321, 1.442695
    %v5337 = vpow.pop %v5336
    %v5338 = vsel %vm482, %v5323, 0.0
    %5339 = vadd.xlane.f32.xlu0 %v5338
    %v5340 = vpop.xlane.xlu0 %5339
    %v5341 = vsel %vm482, %v5325, 0.0
    %5342 = vadd.xlane.f32.xlu0 %v5341
    %v5343 = vpop.xlane.xlu0 %5342
    %v5344 = vsel %vm482, %v5327, 0.0
    %5345 = vadd.xlane.f32.xlu0 %v5344
    %v5346 = vpop.xlane.xlu0 %5345
    %v5347 = vsel %vm482, %v5329, 0.0
    %5348 = vadd.xlane.f32.xlu0 %v5347
    %v5349 = vpop.xlane.xlu0 %5348
    %v5350 = vsel %vm482, %v5331, 0.0
    %5351 = vadd.xlane.f32.xlu0 %v5350
    %v5352 = vpop.xlane.xlu0 %5351
    %v5353 = vsel %vm482, %v5333, 0.0
    %5354 = vadd.xlane.f32.xlu0 %v5353
    %v5355 = vpop.xlane.xlu0 %5354
    %v5356 = vsel %vm482, %v5335, 0.0
    %5357 = vadd.xlane.f32.xlu0 %v5356
    %v5358 = vpop.xlane.xlu0 %5357
    %v5359 = vsel %vm482, %v5337, 0.0
    %5360 = vadd.xlane.f32.xlu0 %v5359
    %v5361 = vpop.xlane.xlu0 %5360
    %v5362 = vrcp.pop %v5340
    %v5363 = vrcp.pop %v5343
    %v5364 = vrcp.pop %v5346
    %v5365 = vrcp.pop %v5349
    %v5366 = vrcp.pop %v5352
    %v5367 = vrcp.pop %v5355
    %v5368 = vrcp.pop %v5358
    %v5369 = vrcp.pop %v5361
    %v5370 = vmul.f32 %v5323, %v5362
    %v5371 = vmul.f32 %v5325, %v5363
    %v5372 = vmul.f32 %v5327, %v5364
    %v5373 = vmul.f32 %v5329, %v5365
    %v5374 = vmul.f32 %v5331, %v5366
    %v5375 = vmul.f32 %v5333, %v5367
    %v5376 = vmul.f32 %v5335, %v5368
    %v5377 = vmul.f32 %v5337, %v5369
    %5378 = vrot.lane.b32.xlu0 %v441, 40
    %v5379 = vpop.permute.xlu0 %5378
    %v5382 = vsel %vm482, %v5370, 0
    %5384 = vmatprep.subr.mxu0 0.0
    %5385 = vmatpush1.msra.mxu0 %v5379
    %5386 = vmatprep.subr.mxu0 0.0
    %5387 = vmatpush1.msra.mxu0 0.0
    %5388 = vmatprep.subr.mxu0 0.0
    %5389 = vmatpush1.msra.mxu0 0.0
    %5390 = vmatprep.subr.mxu0 0.0
    %5391 = vmatpush1.msra.mxu0 0.0
    %5392 = vmatprep.subr.mxu0 0.0
    %5393 = vmatpush1.msra.mxu0 0.0
    %5394 = vmatprep.subr.mxu0 0.0
    %5395 = vmatpush1.msra.mxu0 0.0
    %5396 = vmatprep.subr.mxu0 0.0
    %5397 = vmatpush1.msra.mxu0 0.0
    %5398 = vmatprep.subr.mxu0 0.0
    %5399 = vmatpush1.msra.mxu0 0.0
    %5400 = vmatprep.subr.mxu0 0.0
    %5401 = vmatpush1.msra.mxu0 0.0
    %5402 = vmatprep.subr.mxu0 0.0
    %5403 = vmatpush1.msra.mxu0 0.0
    %5404 = vmatprep.subr.mxu0 0.0
    %5405 = vmatpush1.msra.mxu0 0.0
    %5406 = vmatprep.subr.mxu0 0.0
    %5407 = vmatpush1.msra.mxu0 0.0
    %5408 = vmatprep.subr.mxu0 0.0
    %5409 = vmatpush1.msra.mxu0 0.0
    %5410 = vmatprep.subr.mxu0 0.0
    %5411 = vmatpush1.msra.mxu0 0.0
    %5412 = vmatprep.subr.mxu0 0.0
    %5413 = vmatpush1.msra.mxu0 0.0
    %5414 = vmatprep.subr.mxu0 0.0
    %5415 = vmatpush1.msra.mxu0 0.0
    %5416 = vmatprep.subr.mxu0 0.0
    %5417 = vmatpush1.msra.mxu0 0.0
    %5418 = vmatprep.subr.mxu0 0.0
    %5419 = vmatpush1.msra.mxu0 0.0
    %5420 = vmatprep.subr.mxu0 0.0
    %5421 = vmatpush1.msra.mxu0 0.0
    %5422 = vmatprep.subr.mxu0 0.0
    %5423 = vmatpush1.msra.mxu0 0.0
    %5424 = vmatprep.subr.mxu0 0.0
    %5425 = vmatpush1.msra.mxu0 0.0
    %5426 = vmatprep.subr.mxu0 0.0
    %5427 = vmatpush1.msra.mxu0 0.0
    %5428 = vmatprep.subr.mxu0 0.0
    %5429 = vmatpush1.msra.mxu0 0.0
    %5430 = vmatprep.subr.mxu0 0.0
    %5431 = vmatpush1.msra.mxu0 0.0
    %5432 = vmatprep.subr.mxu0 0.0
    %5433 = vmatpush1.msra.mxu0 0.0
    %5434 = vmatprep.subr.mxu0 0.0
    %5435 = vmatpush1.msra.mxu0 0.0
    %5436 = vmatprep.subr.mxu0 0.0
    %5437 = vmatpush1.msra.mxu0 0.0
    %5438 = vmatprep.subr.mxu0 0.0
    %5439 = vmatpush1.msra.mxu0 0.0
    %5440 = vmatprep.subr.mxu0 0.0
    %5441 = vmatpush1.msra.mxu0 0.0
    %5442 = vmatprep.subr.mxu0 0.0
    %5443 = vmatpush1.msra.mxu0 0.0
    %5444 = vmatprep.subr.mxu0 0.0
    %5445 = vmatpush1.msra.mxu0 0.0
    %5446 = vmatprep.subr.mxu0 0.0
    %5447 = vmatpush1.msra.mxu0 0.0
    %5448 = vmatprep.mubr.f32.mxu0 0.0
    %5449 = vmatmul.mubr.f32.gmra.mrb[0].mxu0 %v5382
    %v5450 = vpop.f32.mrb[0].mxu0
    %v5451 = vadd.f32 0.0, %v5450
    %v5452 = vpop.f32.mrb[0].mxu0
    %5453 = vdwg.mxu0
    %5454 = vrot.lane.b32.xlu0 %v444, 40
    %v5455 = vpop.permute.xlu0 %5454
    %v5458 = vsel %vm482, %v5371, 0
    %5460 = vmatprep.subr.mxu0 0.0
    %5461 = vmatpush1.msra.mxu0 %v5455
    %5462 = vmatprep.subr.mxu0 0.0
    %5463 = vmatpush1.msra.mxu0 0.0
    %5464 = vmatprep.subr.mxu0 0.0
    %5465 = vmatpush1.msra.mxu0 0.0
    %5466 = vmatprep.subr.mxu0 0.0
    %5467 = vmatpush1.msra.mxu0 0.0
    %5468 = vmatprep.subr.mxu0 0.0
    %5469 = vmatpush1.msra.mxu0 0.0
    %5470 = vmatprep.subr.mxu0 0.0
    %5471 = vmatpush1.msra.mxu0 0.0
    %5472 = vmatprep.subr.mxu0 0.0
    %5473 = vmatpush1.msra.mxu0 0.0
    %5474 = vmatprep.subr.mxu0 0.0
    %5475 = vmatpush1.msra.mxu0 0.0
    %5476 = vmatprep.subr.mxu0 0.0
    %5477 = vmatpush1.msra.mxu0 0.0
    %5478 = vmatprep.subr.mxu0 0.0
    %5479 = vmatpush1.msra.mxu0 0.0
    %5480 = vmatprep.subr.mxu0 0.0
    %5481 = vmatpush1.msra.mxu0 0.0
    %5482 = vmatprep.subr.mxu0 0.0
    %5483 = vmatpush1.msra.mxu0 0.0
    %5484 = vmatprep.subr.mxu0 0.0
    %5485 = vmatpush1.msra.mxu0 0.0
    %5486 = vmatprep.subr.mxu0 0.0
    %5487 = vmatpush1.msra.mxu0 0.0
    %5488 = vmatprep.subr.mxu0 0.0
    %5489 = vmatpush1.msra.mxu0 0.0
    %5490 = vmatprep.subr.mxu0 0.0
    %5491 = vmatpush1.msra.mxu0 0.0
    %5492 = vmatprep.subr.mxu0 0.0
    %5493 = vmatpush1.msra.mxu0 0.0
    %5494 = vmatprep.subr.mxu0 0.0
    %5495 = vmatpush1.msra.mxu0 0.0
    %5496 = vmatprep.subr.mxu0 0.0
    %5497 = vmatpush1.msra.mxu0 0.0
    %5498 = vmatprep.subr.mxu0 0.0
    %5499 = vmatpush1.msra.mxu0 0.0
    %5500 = vmatprep.subr.mxu0 0.0
    %5501 = vmatpush1.msra.mxu0 0.0
    %5502 = vmatprep.subr.mxu0 0.0
    %5503 = vmatpush1.msra.mxu0 0.0
    %5504 = vmatprep.subr.mxu0 0.0
    %5505 = vmatpush1.msra.mxu0 0.0
    %5506 = vmatprep.subr.mxu0 0.0
    %5507 = vmatpush1.msra.mxu0 0.0
    %5508 = vmatprep.subr.mxu0 0.0
    %5509 = vmatpush1.msra.mxu0 0.0
    %5510 = vmatprep.subr.mxu0 0.0
    %5511 = vmatpush1.msra.mxu0 0.0
    %5512 = vmatprep.subr.mxu0 0.0
    %5513 = vmatpush1.msra.mxu0 0.0
    %5514 = vmatprep.subr.mxu0 0.0
    %5515 = vmatpush1.msra.mxu0 0.0
    %5516 = vmatprep.subr.mxu0 0.0
    %5517 = vmatpush1.msra.mxu0 0.0
    %5518 = vmatprep.subr.mxu0 0.0
    %5519 = vmatpush1.msra.mxu0 0.0
    %5520 = vmatprep.subr.mxu0 0.0
    %5521 = vmatpush1.msra.mxu0 0.0
    %5522 = vmatprep.subr.mxu0 0.0
    %5523 = vmatpush1.msra.mxu0 0.0
    %5524 = vmatprep.mubr.f32.mxu0 0.0
    %5525 = vmatmul.mubr.f32.gmra.mrb[0].mxu0 %v5458
    %v5526 = vpop.f32.mrb[0].mxu0
    %v5527 = vadd.f32 0.0, %v5526
    %v5528 = vpop.f32.mrb[0].mxu0
    %5529 = vdwg.mxu0
    %5530 = vrot.lane.b32.xlu0 %v449, 40
    %v5531 = vpop.permute.xlu0 %5530
    %v5534 = vsel %vm482, %v5372, 0
    %5536 = vmatprep.subr.mxu0 0.0
    %5537 = vmatpush1.msra.mxu0 %v5531
    %5538 = vmatprep.subr.mxu0 0.0
    %5539 = vmatpush1.msra.mxu0 0.0
    %5540 = vmatprep.subr.mxu0 0.0
    %5541 = vmatpush1.msra.mxu0 0.0
    %5542 = vmatprep.subr.mxu0 0.0
    %5543 = vmatpush1.msra.mxu0 0.0
    %5544 = vmatprep.subr.mxu0 0.0
    %5545 = vmatpush1.msra.mxu0 0.0
    %5546 = vmatprep.subr.mxu0 0.0
    %5547 = vmatpush1.msra.mxu0 0.0
    %5548 = vmatprep.subr.mxu0 0.0
    %5549 = vmatpush1.msra.mxu0 0.0
    %5550 = vmatprep.subr.mxu0 0.0
    %5551 = vmatpush1.msra.mxu0 0.0
    %5552 = vmatprep.subr.mxu0 0.0
    %5553 = vmatpush1.msra.mxu0 0.0
    %5554 = vmatprep.subr.mxu0 0.0
    %5555 = vmatpush1.msra.mxu0 0.0
    %5556 = vmatprep.subr.mxu0 0.0
    %5557 = vmatpush1.msra.mxu0 0.0
    %5558 = vmatprep.subr.mxu0 0.0
    %5559 = vmatpush1.msra.mxu0 0.0
    %5560 = vmatprep.subr.mxu0 0.0
    %5561 = vmatpush1.msra.mxu0 0.0
    %5562 = vmatprep.subr.mxu0 0.0
    %5563 = vmatpush1.msra.mxu0 0.0
    %5564 = vmatprep.subr.mxu0 0.0
    %5565 = vmatpush1.msra.mxu0 0.0
    %5566 = vmatprep.subr.mxu0 0.0
    %5567 = vmatpush1.msra.mxu0 0.0
    %5568 = vmatprep.subr.mxu0 0.0
    %5569 = vmatpush1.msra.mxu0 0.0
    %5570 = vmatprep.subr.mxu0 0.0
    %5571 = vmatpush1.msra.mxu0 0.0
    %5572 = vmatprep.subr.mxu0 0.0
    %5573 = vmatpush1.msra.mxu0 0.0
    %5574 = vmatprep.subr.mxu0 0.0
    %5575 = vmatpush1.msra.mxu0 0.0
    %5576 = vmatprep.subr.mxu0 0.0
    %5577 = vmatpush1.msra.mxu0 0.0
    %5578 = vmatprep.subr.mxu0 0.0
    %5579 = vmatpush1.msra.mxu0 0.0
    %5580 = vmatprep.subr.mxu0 0.0
    %5581 = vmatpush1.msra.mxu0 0.0
    %5582 = vmatprep.subr.mxu0 0.0
    %5583 = vmatpush1.msra.mxu0 0.0
    %5584 = vmatprep.subr.mxu0 0.0
    %5585 = vmatpush1.msra.mxu0 0.0
    %5586 = vmatprep.subr.mxu0 0.0
    %5587 = vmatpush1.msra.mxu0 0.0
    %5588 = vmatprep.subr.mxu0 0.0
    %5589 = vmatpush1.msra.mxu0 0.0
    %5590 = vmatprep.subr.mxu0 0.0
    %5591 = vmatpush1.msra.mxu0 0.0
    %5592 = vmatprep.subr.mxu0 0.0
    %5593 = vmatpush1.msra.mxu0 0.0
    %5594 = vmatprep.subr.mxu0 0.0
    %5595 = vmatpush1.msra.mxu0 0.0
    %5596 = vmatprep.subr.mxu0 0.0
    %5597 = vmatpush1.msra.mxu0 0.0
    %5598 = vmatprep.subr.mxu0 0.0
    %5599 = vmatpush1.msra.mxu0 0.0
    %5600 = vmatprep.mubr.f32.mxu0 0.0
    %5601 = vmatmul.mubr.f32.gmra.mrb[0].mxu0 %v5534
    %v5602 = vpop.f32.mrb[0].mxu0
    %v5603 = vadd.f32 0.0, %v5602
    %v5604 = vpop.f32.mrb[0].mxu0
    %5605 = vdwg.mxu0
    %5606 = vrot.lane.b32.xlu0 %v452, 40
    %v5607 = vpop.permute.xlu0 %5606
    %v5610 = vsel %vm482, %v5373, 0
    %5612 = vmatprep.subr.mxu0 0.0
    %5613 = vmatpush1.msra.mxu0 %v5607
    %5614 = vmatprep.subr.mxu0 0.0
    %5615 = vmatpush1.msra.mxu0 0.0
    %5616 = vmatprep.subr.mxu0 0.0
    %5617 = vmatpush1.msra.mxu0 0.0
    %5618 = vmatprep.subr.mxu0 0.0
    %5619 = vmatpush1.msra.mxu0 0.0
    %5620 = vmatprep.subr.mxu0 0.0
    %5621 = vmatpush1.msra.mxu0 0.0
    %5622 = vmatprep.subr.mxu0 0.0
    %5623 = vmatpush1.msra.mxu0 0.0
    %5624 = vmatprep.subr.mxu0 0.0
    %5625 = vmatpush1.msra.mxu0 0.0
    %5626 = vmatprep.subr.mxu0 0.0
    %5627 = vmatpush1.msra.mxu0 0.0
    %5628 = vmatprep.subr.mxu0 0.0
    %5629 = vmatpush1.msra.mxu0 0.0
    %5630 = vmatprep.subr.mxu0 0.0
    %5631 = vmatpush1.msra.mxu0 0.0
    %5632 = vmatprep.subr.mxu0 0.0
    %5633 = vmatpush1.msra.mxu0 0.0
    %5634 = vmatprep.subr.mxu0 0.0
    %5635 = vmatpush1.msra.mxu0 0.0
    %5636 = vmatprep.subr.mxu0 0.0
    %5637 = vmatpush1.msra.mxu0 0.0
    %5638 = vmatprep.subr.mxu0 0.0
    %5639 = vmatpush1.msra.mxu0 0.0
    %5640 = vmatprep.subr.mxu0 0.0
    %5641 = vmatpush1.msra.mxu0 0.0
    %5642 = vmatprep.subr.mxu0 0.0
    %5643 = vmatpush1.msra.mxu0 0.0
    %5644 = vmatprep.subr.mxu0 0.0
    %5645 = vmatpush1.msra.mxu0 0.0
    %5646 = vmatprep.subr.mxu0 0.0
    %5647 = vmatpush1.msra.mxu0 0.0
    %5648 = vmatprep.subr.mxu0 0.0
    %5649 = vmatpush1.msra.mxu0 0.0
    %5650 = vmatprep.subr.mxu0 0.0
    %5651 = vmatpush1.msra.mxu0 0.0
    %5652 = vmatprep.subr.mxu0 0.0
    %5653 = vmatpush1.msra.mxu0 0.0
    %5654 = vmatprep.subr.mxu0 0.0
    %5655 = vmatpush1.msra.mxu0 0.0
    %5656 = vmatprep.subr.mxu0 0.0
    %5657 = vmatpush1.msra.mxu0 0.0
    %5658 = vmatprep.subr.mxu0 0.0
    %5659 = vmatpush1.msra.mxu0 0.0
    %5660 = vmatprep.subr.mxu0 0.0
    %5661 = vmatpush1.msra.mxu0 0.0
    %5662 = vmatprep.subr.mxu0 0.0
    %5663 = vmatpush1.msra.mxu0 0.0
    %5664 = vmatprep.subr.mxu0 0.0
    %5665 = vmatpush1.msra.mxu0 0.0
    %5666 = vmatprep.subr.mxu0 0.0
    %5667 = vmatpush1.msra.mxu0 0.0
    %5668 = vmatprep.subr.mxu0 0.0
    %5669 = vmatpush1.msra.mxu0 0.0
    %5670 = vmatprep.subr.mxu0 0.0
    %5671 = vmatpush1.msra.mxu0 0.0
    %5672 = vmatprep.subr.mxu0 0.0
    %5673 = vmatpush1.msra.mxu0 0.0
    %5674 = vmatprep.subr.mxu0 0.0
    %5675 = vmatpush1.msra.mxu0 0.0
    %5676 = vmatprep.mubr.f32.mxu0 0.0
    %5677 = vmatmul.mubr.f32.gmra.mrb[0].mxu0 %v5610
    %v5678 = vpop.f32.mrb[0].mxu0
    %v5679 = vadd.f32 0.0, %v5678
    %v5680 = vpop.f32.mrb[0].mxu0
    %5681 = vdwg.mxu0
    %5682 = vrot.lane.b32.xlu0 %v457, 40
    %v5683 = vpop.permute.xlu0 %5682
    %v5686 = vsel %vm482, %v5374, 0
    %5688 = vmatprep.subr.mxu0 0.0
    %5689 = vmatpush1.msra.mxu0 %v5683
    %5690 = vmatprep.subr.mxu0 0.0
    %5691 = vmatpush1.msra.mxu0 0.0
    %5692 = vmatprep.subr.mxu0 0.0
    %5693 = vmatpush1.msra.mxu0 0.0
    %5694 = vmatprep.subr.mxu0 0.0
    %5695 = vmatpush1.msra.mxu0 0.0
    %5696 = vmatprep.subr.mxu0 0.0
    %5697 = vmatpush1.msra.mxu0 0.0
    %5698 = vmatprep.subr.mxu0 0.0
    %5699 = vmatpush1.msra.mxu0 0.0
    %5700 = vmatprep.subr.mxu0 0.0
    %5701 = vmatpush1.msra.mxu0 0.0
    %5702 = vmatprep.subr.mxu0 0.0
    %5703 = vmatpush1.msra.mxu0 0.0
    %5704 = vmatprep.subr.mxu0 0.0
    %5705 = vmatpush1.msra.mxu0 0.0
    %5706 = vmatprep.subr.mxu0 0.0
    %5707 = vmatpush1.msra.mxu0 0.0
    %5708 = vmatprep.subr.mxu0 0.0
    %5709 = vmatpush1.msra.mxu0 0.0
    %5710 = vmatprep.subr.mxu0 0.0
    %5711 = vmatpush1.msra.mxu0 0.0
    %5712 = vmatprep.subr.mxu0 0.0
    %5713 = vmatpush1.msra.mxu0 0.0
    %5714 = vmatprep.subr.mxu0 0.0
    %5715 = vmatpush1.msra.mxu0 0.0
    %5716 = vmatprep.subr.mxu0 0.0
    %5717 = vmatpush1.msra.mxu0 0.0
    %5718 = vmatprep.subr.mxu0 0.0
    %5719 = vmatpush1.msra.mxu0 0.0
    %5720 = vmatprep.subr.mxu0 0.0
    %5721 = vmatpush1.msra.mxu0 0.0
    %5722 = vmatprep.subr.mxu0 0.0
    %5723 = vmatpush1.msra.mxu0 0.0
    %5724 = vmatprep.subr.mxu0 0.0
    %5725 = vmatpush1.msra.mxu0 0.0
    %5726 = vmatprep.subr.mxu0 0.0
    %5727 = vmatpush1.msra.mxu0 0.0
    %5728 = vmatprep.subr.mxu0 0.0
    %5729 = vmatpush1.msra.mxu0 0.0
    %5730 = vmatprep.subr.mxu0 0.0
    %5731 = vmatpush1.msra.mxu0 0.0
    %5732 = vmatprep.subr.mxu0 0.0
    %5733 = vmatpush1.msra.mxu0 0.0
    %5734 = vmatprep.subr.mxu0 0.0
    %5735 = vmatpush1.msra.mxu0 0.0
    %5736 = vmatprep.subr.mxu0 0.0
    %5737 = vmatpush1.msra.mxu0 0.0
    %5738 = vmatprep.subr.mxu0 0.0
    %5739 = vmatpush1.msra.mxu0 0.0
    %5740 = vmatprep.subr.mxu0 0.0
    %5741 = vmatpush1.msra.mxu0 0.0
    %5742 = vmatprep.subr.mxu0 0.0
    %5743 = vmatpush1.msra.mxu0 0.0
    %5744 = vmatprep.subr.mxu0 0.0
    %5745 = vmatpush1.msra.mxu0 0.0
    %5746 = vmatprep.subr.mxu0 0.0
    %5747 = vmatpush1.msra.mxu0 0.0
    %5748 = vmatprep.subr.mxu0 0.0
    %5749 = vmatpush1.msra.mxu0 0.0
    %5750 = vmatprep.subr.mxu0 0.0
    %5751 = vmatpush1.msra.mxu0 0.0
    %5752 = vmatprep.mubr.f32.mxu0 0.0
    %5753 = vmatmul.mubr.f32.gmra.mrb[0].mxu0 %v5686
    %v5754 = vpop.f32.mrb[0].mxu0
    %v5755 = vadd.f32 0.0, %v5754
    %v5756 = vpop.f32.mrb[0].mxu0
    %5757 = vdwg.mxu0
    %5758 = vrot.lane.b32.xlu0 %v460, 40
    %v5759 = vpop.permute.xlu0 %5758
    %v5762 = vsel %vm482, %v5375, 0
    %5764 = vmatprep.subr.mxu0 0.0
    %5765 = vmatpush1.msra.mxu0 %v5759
    %5766 = vmatprep.subr.mxu0 0.0
    %5767 = vmatpush1.msra.mxu0 0.0
    %5768 = vmatprep.subr.mxu0 0.0
    %5769 = vmatpush1.msra.mxu0 0.0
    %5770 = vmatprep.subr.mxu0 0.0
    %5771 = vmatpush1.msra.mxu0 0.0
    %5772 = vmatprep.subr.mxu0 0.0
    %5773 = vmatpush1.msra.mxu0 0.0
    %5774 = vmatprep.subr.mxu0 0.0
    %5775 = vmatpush1.msra.mxu0 0.0
    %5776 = vmatprep.subr.mxu0 0.0
    %5777 = vmatpush1.msra.mxu0 0.0
    %5778 = vmatprep.subr.mxu0 0.0
    %5779 = vmatpush1.msra.mxu0 0.0
    %5780 = vmatprep.subr.mxu0 0.0
    %5781 = vmatpush1.msra.mxu0 0.0
    %5782 = vmatprep.subr.mxu0 0.0
    %5783 = vmatpush1.msra.mxu0 0.0
    %5784 = vmatprep.subr.mxu0 0.0
    %5785 = vmatpush1.msra.mxu0 0.0
    %5786 = vmatprep.subr.mxu0 0.0
    %5787 = vmatpush1.msra.mxu0 0.0
    %5788 = vmatprep.subr.mxu0 0.0
    %5789 = vmatpush1.msra.mxu0 0.0
    %5790 = vmatprep.subr.mxu0 0.0
    %5791 = vmatpush1.msra.mxu0 0.0
    %5792 = vmatprep.subr.mxu0 0.0
    %5793 = vmatpush1.msra.mxu0 0.0
    %5794 = vmatprep.subr.mxu0 0.0
    %5795 = vmatpush1.msra.mxu0 0.0
    %5796 = vmatprep.subr.mxu0 0.0
    %5797 = vmatpush1.msra.mxu0 0.0
    %5798 = vmatprep.subr.mxu0 0.0
    %5799 = vmatpush1.msra.mxu0 0.0
    %5800 = vmatprep.subr.mxu0 0.0
    %5801 = vmatpush1.msra.mxu0 0.0
    %5802 = vmatprep.subr.mxu0 0.0
    %5803 = vmatpush1.msra.mxu0 0.0
    %5804 = vmatprep.subr.mxu0 0.0
    %5805 = vmatpush1.msra.mxu0 0.0
    %5806 = vmatprep.subr.mxu0 0.0
    %5807 = vmatpush1.msra.mxu0 0.0
    %5808 = vmatprep.subr.mxu0 0.0
    %5809 = vmatpush1.msra.mxu0 0.0
    %5810 = vmatprep.subr.mxu0 0.0
    %5811 = vmatpush1.msra.mxu0 0.0
    %5812 = vmatprep.subr.mxu0 0.0
    %5813 = vmatpush1.msra.mxu0 0.0
    %5814 = vmatprep.subr.mxu0 0.0
    %5815 = vmatpush1.msra.mxu0 0.0
    %5816 = vmatprep.subr.mxu0 0.0
    %5817 = vmatpush1.msra.mxu0 0.0
    %5818 = vmatprep.subr.mxu0 0.0
    %5819 = vmatpush1.msra.mxu0 0.0
    %5820 = vmatprep.subr.mxu0 0.0
    %5821 = vmatpush1.msra.mxu0 0.0
    %5822 = vmatprep.subr.mxu0 0.0
    %5823 = vmatpush1.msra.mxu0 0.0
    %5824 = vmatprep.subr.mxu0 0.0
    %5825 = vmatpush1.msra.mxu0 0.0
    %5826 = vmatprep.subr.mxu0 0.0
    %5827 = vmatpush1.msra.mxu0 0.0
    %5828 = vmatprep.mubr.f32.mxu0 0.0
    %5829 = vmatmul.mubr.f32.gmra.mrb[0].mxu0 %v5762
    %v5830 = vpop.f32.mrb[0].mxu0
    %v5831 = vadd.f32 0.0, %v5830
    %v5832 = vpop.f32.mrb[0].mxu0
    %5833 = vdwg.mxu0
    %5834 = vrot.lane.b32.xlu0 %v465, 40
    %v5835 = vpop.permute.xlu0 %5834
    %v5838 = vsel %vm482, %v5376, 0
    %5840 = vmatprep.subr.mxu0 0.0
    %5841 = vmatpush1.msra.mxu0 %v5835
    %5842 = vmatprep.subr.mxu0 0.0
    %5843 = vmatpush1.msra.mxu0 0.0
    %5844 = vmatprep.subr.mxu0 0.0
    %5845 = vmatpush1.msra.mxu0 0.0
    %5846 = vmatprep.subr.mxu0 0.0
    %5847 = vmatpush1.msra.mxu0 0.0
    %5848 = vmatprep.subr.mxu0 0.0
    %5849 = vmatpush1.msra.mxu0 0.0
    %5850 = vmatprep.subr.mxu0 0.0
    %5851 = vmatpush1.msra.mxu0 0.0
    %5852 = vmatprep.subr.mxu0 0.0
    %5853 = vmatpush1.msra.mxu0 0.0
    %5854 = vmatprep.subr.mxu0 0.0
    %5855 = vmatpush1.msra.mxu0 0.0
    %5856 = vmatprep.subr.mxu0 0.0
    %5857 = vmatpush1.msra.mxu0 0.0
    %5858 = vmatprep.subr.mxu0 0.0
    %5859 = vmatpush1.msra.mxu0 0.0
    %5860 = vmatprep.subr.mxu0 0.0
    %5861 = vmatpush1.msra.mxu0 0.0
    %5862 = vmatprep.subr.mxu0 0.0
    %5863 = vmatpush1.msra.mxu0 0.0
    %5864 = vmatprep.subr.mxu0 0.0
    %5865 = vmatpush1.msra.mxu0 0.0
    %5866 = vmatprep.subr.mxu0 0.0
    %5867 = vmatpush1.msra.mxu0 0.0
    %5868 = vmatprep.subr.mxu0 0.0
    %5869 = vmatpush1.msra.mxu0 0.0
    %5870 = vmatprep.subr.mxu0 0.0
    %5871 = vmatpush1.msra.mxu0 0.0
    %5872 = vmatprep.subr.mxu0 0.0
    %5873 = vmatpush1.msra.mxu0 0.0
    %5874 = vmatprep.subr.mxu0 0.0
    %5875 = vmatpush1.msra.mxu0 0.0
    %5876 = vmatprep.subr.mxu0 0.0
    %5877 = vmatpush1.msra.mxu0 0.0
    %5878 = vmatprep.subr.mxu0 0.0
    %5879 = vmatpush1.msra.mxu0 0.0
    %5880 = vmatprep.subr.mxu0 0.0
    %5881 = vmatpush1.msra.mxu0 0.0
    %5882 = vmatprep.subr.mxu0 0.0
    %5883 = vmatpush1.msra.mxu0 0.0
    %5884 = vmatprep.subr.mxu0 0.0
    %5885 = vmatpush1.msra.mxu0 0.0
    %5886 = vmatprep.subr.mxu0 0.0
    %5887 = vmatpush1.msra.mxu0 0.0
    %5888 = vmatprep.subr.mxu0 0.0
    %5889 = vmatpush1.msra.mxu0 0.0
    %5890 = vmatprep.subr.mxu0 0.0
    %5891 = vmatpush1.msra.mxu0 0.0
    %5892 = vmatprep.subr.mxu0 0.0
    %5893 = vmatpush1.msra.mxu0 0.0
    %5894 = vmatprep.subr.mxu0 0.0
    %5895 = vmatpush1.msra.mxu0 0.0
    %5896 = vmatprep.subr.mxu0 0.0
    %5897 = vmatpush1.msra.mxu0 0.0
    %5898 = vmatprep.subr.mxu0 0.0
    %5899 = vmatpush1.msra.mxu0 0.0
    %5900 = vmatprep.subr.mxu0 0.0
    %5901 = vmatpush1.msra.mxu0 0.0
    %5902 = vmatprep.subr.mxu0 0.0
    %5903 = vmatpush1.msra.mxu0 0.0
    %5904 = vmatprep.mubr.f32.mxu0 0.0
    %5905 = vmatmul.mubr.f32.gmra.mrb[0].mxu0 %v5838
    %v5906 = vpop.f32.mrb[0].mxu0
    %v5907 = vadd.f32 0.0, %v5906
    %v5908 = vpop.f32.mrb[0].mxu0
    %5909 = vdwg.mxu0
    %5910 = vrot.lane.b32.xlu0 %v468, 40
    %v5911 = vpop.permute.xlu0 %5910
    %v5914 = vsel %vm482, %v5377, 0
    %5916 = vmatprep.subr.mxu0 0.0
    %5917 = vmatpush1.msra.mxu0 %v5911
    %5918 = vmatprep.subr.mxu0 0.0
    %5919 = vmatpush1.msra.mxu0 0.0
    %5920 = vmatprep.subr.mxu0 0.0
    %5921 = vmatpush1.msra.mxu0 0.0
    %5922 = vmatprep.subr.mxu0 0.0
    %5923 = vmatpush1.msra.mxu0 0.0
    %5924 = vmatprep.subr.mxu0 0.0
    %5925 = vmatpush1.msra.mxu0 0.0
    %5926 = vmatprep.subr.mxu0 0.0
    %5927 = vmatpush1.msra.mxu0 0.0
    %5928 = vmatprep.subr.mxu0 0.0
    %5929 = vmatpush1.msra.mxu0 0.0
    %5930 = vmatprep.subr.mxu0 0.0
    %5931 = vmatpush1.msra.mxu0 0.0
    %5932 = vmatprep.subr.mxu0 0.0
    %5933 = vmatpush1.msra.mxu0 0.0
    %5934 = vmatprep.subr.mxu0 0.0
    %5935 = vmatpush1.msra.mxu0 0.0
    %5936 = vmatprep.subr.mxu0 0.0
    %5937 = vmatpush1.msra.mxu0 0.0
    %5938 = vmatprep.subr.mxu0 0.0
    %5939 = vmatpush1.msra.mxu0 0.0
    %5940 = vmatprep.subr.mxu0 0.0
    %5941 = vmatpush1.msra.mxu0 0.0
    %5942 = vmatprep.subr.mxu0 0.0
    %5943 = vmatpush1.msra.mxu0 0.0
    %5944 = vmatprep.subr.mxu0 0.0
    %5945 = vmatpush1.msra.mxu0 0.0
    %5946 = vmatprep.subr.mxu0 0.0
    %5947 = vmatpush1.msra.mxu0 0.0
    %5948 = vmatprep.subr.mxu0 0.0
    %5949 = vmatpush1.msra.mxu0 0.0
    %5950 = vmatprep.subr.mxu0 0.0
    %5951 = vmatpush1.msra.mxu0 0.0
    %5952 = vmatprep.subr.mxu0 0.0
    %5953 = vmatpush1.msra.mxu0 0.0
    %5954 = vmatprep.subr.mxu0 0.0
    %5955 = vmatpush1.msra.mxu0 0.0
    %5956 = vmatprep.subr.mxu0 0.0
    %5957 = vmatpush1.msra.mxu0 0.0
    %5958 = vmatprep.subr.mxu0 0.0
    %5959 = vmatpush1.msra.mxu0 0.0
    %5960 = vmatprep.subr.mxu0 0.0
    %5961 = vmatpush1.msra.mxu0 0.0
    %5962 = vmatprep.subr.mxu0 0.0
    %5963 = vmatpush1.msra.mxu0 0.0
    %5964 = vmatprep.subr.mxu0 0.0
    %5965 = vmatpush1.msra.mxu0 0.0
    %5966 = vmatprep.subr.mxu0 0.0
    %5967 = vmatpush1.msra.mxu0 0.0
    %5968 = vmatprep.subr.mxu0 0.0
    %5969 = vmatpush1.msra.mxu0 0.0
    %5970 = vmatprep.subr.mxu0 0.0
    %5971 = vmatpush1.msra.mxu0 0.0
    %5972 = vmatprep.subr.mxu0 0.0
    %5973 = vmatpush1.msra.mxu0 0.0
    %5974 = vmatprep.subr.mxu0 0.0
    %5975 = vmatpush1.msra.mxu0 0.0
    %5976 = vmatprep.subr.mxu0 0.0
    %5977 = vmatpush1.msra.mxu0 0.0
    %5978 = vmatprep.subr.mxu0 0.0
    %5979 = vmatpush1.msra.mxu0 0.0
    %5980 = vmatprep.mubr.f32.mxu0 0.0
    %5981 = vmatmul.mubr.f32.gmra.mrb[0].mxu0 %v5914
    %v5982 = vpop.f32.mrb[0].mxu0
    %v5983 = vadd.f32 0.0, %v5982
    %v5984 = vpop.f32.mrb[0].mxu0
    %5985 = vdwg.mxu0
    %5994 = vrot.lane.b32.xlu0 %v5451, 24
    %v5995 = vpop.permute.xlu0 %5994
    %5996 = vrot.lane.b32.xlu0 %v5527, 24
    %v5997 = vpop.permute.xlu0 %5996
    %5998 = vrot.lane.b32.xlu0 %v5603, 24
    %v5999 = vpop.permute.xlu0 %5998
    %6000 = vrot.lane.b32.xlu0 %v5679, 24
    %v6001 = vpop.permute.xlu0 %6000
    %6002 = vrot.lane.b32.xlu0 %v5755, 24
    %v6003 = vpop.permute.xlu0 %6002
    %6004 = vrot.lane.b32.xlu0 %v5831, 24
    %v6005 = vpop.permute.xlu0 %6004
    %6006 = vrot.lane.b32.xlu0 %v5907, 24
    %v6007 = vpop.permute.xlu0 %6006
    %6008 = vrot.lane.b32.xlu0 %v5983, 24
    %v6009 = vpop.permute.xlu0 %6008
    %vm6018 = vcmask 261312
    %6019 = vst.msk [vmem:[#allocation2] sm:$0xff] %vm6018, %v5995
    %6020 = vst.msk [vmem:[#allocation2 + $0x8] sm:$0xff] %vm6018, %v5997
    %6021 = vst.msk [vmem:[#allocation2 + $0x10] sm:$0xff] %vm6018, %v5999
    %6022 = vst.msk [vmem:[#allocation2 + $0x18] sm:$0xff] %vm6018, %v6001
    %6023 = vst.msk [vmem:[#allocation2 + $0x20] sm:$0xff] %vm6018, %v6003
    %6024 = vst.msk [vmem:[#allocation2 + $0x28] sm:$0xff] %vm6018, %v6005
    %6025 = vst.msk [vmem:[#allocation2 + $0x30] sm:$0xff] %vm6018, %v6007
    %6026 = vst.msk [vmem:[#allocation2 + $0x38] sm:$0xff] %vm6018, %v6009
    %v6027 = vld [vmem:[#allocation2] sm:$0xff]
    %v6028 = vld [vmem:[#allocation2 + $0x8] sm:$0xff]
    %v6029 = vld [vmem:[#allocation2 + $0x10] sm:$0xff]
    %v6030 = vld [vmem:[#allocation2 + $0x18] sm:$0xff]
    %v6031 = vld [vmem:[#allocation2 + $0x20] sm:$0xff]
    %v6032 = vld [vmem:[#allocation2 + $0x28] sm:$0xff]
    %v6033 = vld [vmem:[#allocation2 + $0x30] sm:$0xff]
    %v6034 = vld [vmem:[#allocation2 + $0x38] sm:$0xff]
    %v6035 = vpack.c.bf16 %v6028, %v6027
    %v6036 = vpack.c.bf16 %v6030, %v6029
    %v6037 = vpack.c.bf16 %v6032, %v6031
    %v6038 = vpack.c.bf16 %v6034, %v6033
    %v6039 = vld [vmem:[#allocation14] sm:$0xf]
    %v6040 = vld [vmem:[#allocation14 + $0x4] sm:$0xf]
    %v6041 = vld [vmem:[#allocation14 + $0x8] sm:$0xf]
    %v6042 = vld [vmem:[#allocation14 + $0xc] sm:$0xf]
    %v6043 = vld [vmem:[#allocation15] sm:$0x1]
    %v6045 = vlaneseq
    %v6046 = vshrl.u32 %v6045, 7
    %v6047 = vsub.s32 0, %v6046
    %v6048 = vrot.slane %v6043, %v6047
    %v6054 = vunpack.c.l.b16 %v6039
    %v6055 = vunpack.c.l.b16 %v6040
    %v6056 = vunpack.c.l.b16 %v6041
    %v6057 = vunpack.c.l.b16 %v6042
    %v6058 = vpack.c.b16 %v6055, %v6054
    %v6059 = vpack.c.b16 %v6057, %v6056
    %v6063 = vsel %vm233, %v6035, 0
    %v6066 = vsel %vm233, %v6036, 0
    %v6069 = vsel %vm233, %v6037, 0
    %v6072 = vsel %vm233, %v6038, 0
    %6074 = vmatprep.subr.bf16.mxu0 0
    %6075 = vmatpush1.bf16.msra.mxu0 %v6058
    %6076 = vmatprep.subr.bf16.mxu0 0
    %6077 = vmatpush1.bf16.msra.mxu0 %v6059
    %6078 = vmatprep.subr.bf16.mxu0 0
    %6079 = vmatpush1.bf16.msra.mxu0 0
    %6080 = vmatprep.subr.bf16.mxu0 0
    %6081 = vmatpush1.bf16.msra.mxu0 0
    %6082 = vmatprep.subr.bf16.mxu0 0
    %6083 = vmatpush1.bf16.msra.mxu0 0
    %6084 = vmatprep.subr.bf16.mxu0 0
    %6085 = vmatpush1.bf16.msra.mxu0 0
    %6086 = vmatprep.subr.bf16.mxu0 0
    %6087 = vmatpush1.bf16.msra.mxu0 0
    %6088 = vmatprep.subr.bf16.mxu0 0
    %6089 = vmatpush1.bf16.msra.mxu0 0
    %6090 = vmatprep.subr.bf16.mxu0 0
    %6091 = vmatpush1.bf16.msra.mxu0 0
    %6092 = vmatprep.subr.bf16.mxu0 0
    %6093 = vmatpush1.bf16.msra.mxu0 0
    %6094 = vmatprep.subr.bf16.mxu0 0
    %6095 = vmatpush1.bf16.msra.mxu0 0
    %6096 = vmatprep.subr.bf16.mxu0 0
    %6097 = vmatpush1.bf16.msra.mxu0 0
    %6098 = vmatprep.subr.bf16.mxu0 0
    %6099 = vmatpush1.bf16.msra.mxu0 0
    %6100 = vmatprep.subr.bf16.mxu0 0
    %6101 = vmatpush1.bf16.msra.mxu0 0
    %6102 = vmatprep.subr.bf16.mxu0 0
    %6103 = vmatpush1.bf16.msra.mxu0 0
    %6104 = vmatprep.subr.bf16.mxu0 0
    %6105 = vmatpush1.bf16.msra.mxu0 0
    %6106 = vmatprep.mubr.bf16.mxu0 0
    %6107 = vmatmul.mubr.bf16.gmra.mrb[0].mxu0 %v6063
    %v6108 = vpop.f32.mrb[0].mxu0
    %v6109 = vadd.f32 %v6048, %v6108
    %v6110 = vpop.f32.mrb[0].mxu0
    %v6111 = vpop.f32.mrb[0].mxu0
    %v6112 = vadd.f32 %v6048, %v6111
    %v6113 = vpop.f32.mrb[0].mxu0
    %6114 = vmatprep.mubr.bf16.mxu0 0
    %6115 = vmatmul.mubr.bf16.gmra.mrb[0].mxu0 %v6066
    %v6116 = vpop.f32.mrb[0].mxu0
    %v6117 = vadd.f32 %v6048, %v6116
    %v6118 = vpop.f32.mrb[0].mxu0
    %v6119 = vpop.f32.mrb[0].mxu0
    %v6120 = vadd.f32 %v6048, %v6119
    %v6121 = vpop.f32.mrb[0].mxu0
    %6122 = vmatprep.mubr.bf16.mxu0 0
    %6123 = vmatmul.mubr.bf16.gmra.mrb[0].mxu0 %v6069
    %v6124 = vpop.f32.mrb[0].mxu0
    %v6125 = vadd.f32 %v6048, %v6124
    %v6126 = vpop.f32.mrb[0].mxu0
    %v6127 = vpop.f32.mrb[0].mxu0
    %v6128 = vadd.f32 %v6048, %v6127
    %v6129 = vpop.f32.mrb[0].mxu0
    %6130 = vmatprep.mubr.bf16.mxu0 0
    %6131 = vmatmul.mubr.bf16.gmra.mrb[0].mxu0 %v6072
    %v6132 = vpop.f32.mrb[0].mxu0
    %v6133 = vadd.f32 %v6048, %v6132
    %v6134 = vpop.f32.mrb[0].mxu0
    %v6135 = vpop.f32.mrb[0].mxu0
    %v6136 = vadd.f32 %v6048, %v6135
    %v6137 = vpop.f32.mrb[0].mxu0
    %6138 = vdwg.mxu0
    %v6139 = vadd.f32 %v223, %v6109
    %v6140 = vadd.f32 %v224, %v6112
    %v6141 = vadd.f32 %v225, %v6117
    %v6142 = vadd.f32 %v226, %v6120
    %v6143 = vadd.f32 %v227, %v6125
    %v6144 = vadd.f32 %v228, %v6128
    %v6145 = vadd.f32 %v229, %v6133
    %v6146 = vadd.f32 %v230, %v6136
    %v6147 = vld [vmem:[#allocation17] sm:$0x1]
    %v6148 = vld [vmem:[#allocation18] sm:$0x1]
    %v6149 = vsel %vm233, %v6139, 0.0
    %6150 = vadd.xlane.f32.xlu0 %v6149
    %v6151 = vpop.xlane.xlu0 %6150
    %v6152 = vsel %vm233, %v6140, 0.0
    %6153 = vadd.xlane.f32.xlu0 %v6152
    %v6154 = vpop.xlane.xlu0 %6153
    %v6155 = vsel %vm233, %v6141, 0.0
    %6156 = vadd.xlane.f32.xlu0 %v6155
    %v6157 = vpop.xlane.xlu0 %6156
    %v6158 = vsel %vm233, %v6142, 0.0
    %6159 = vadd.xlane.f32.xlu0 %v6158
    %v6160 = vpop.xlane.xlu0 %6159
    %v6161 = vsel %vm233, %v6143, 0.0
    %6162 = vadd.xlane.f32.xlu0 %v6161
    %v6163 = vpop.xlane.xlu0 %6162
    %v6164 = vsel %vm233, %v6144, 0.0
    %6165 = vadd.xlane.f32.xlu0 %v6164
    %v6166 = vpop.xlane.xlu0 %6165
    %v6167 = vsel %vm233, %v6145, 0.0
    %6168 = vadd.xlane.f32.xlu0 %v6167
    %v6169 = vpop.xlane.xlu0 %6168
    %v6170 = vsel %vm233, %v6146, 0.0
    %6171 = vadd.xlane.f32.xlu0 %v6170
    %v6172 = vpop.xlane.xlu0 %6171
    %v6173 = vmul.f32 %v6151, %v258
    %v6174 = vmul.f32 %v6154, %v258
    %v6175 = vmul.f32 %v6157, %v258
    %v6176 = vmul.f32 %v6160, %v258
    %v6177 = vmul.f32 %v6163, %v258
    %v6178 = vmul.f32 %v6166, %v258
    %v6179 = vmul.f32 %v6169, %v258
    %v6180 = vmul.f32 %v6172, %v258
    %v6181 = vsub.f32 %v6139, %v6173
    %v6182 = vsub.f32 %v6140, %v6174
    %v6183 = vsub.f32 %v6141, %v6175
    %v6184 = vsub.f32 %v6142, %v6176
    %v6185 = vsub.f32 %v6143, %v6177
    %v6186 = vsub.f32 %v6144, %v6178
    %v6187 = vsub.f32 %v6145, %v6179
    %v6188 = vsub.f32 %v6146, %v6180
    %v6189 = vmul.f32 %v6181, %v6181
    %v6190 = vmul.f32 %v6182, %v6182
    %v6191 = vmul.f32 %v6183, %v6183
    %v6192 = vmul.f32 %v6184, %v6184
    %v6193 = vmul.f32 %v6185, %v6185
    %v6194 = vmul.f32 %v6186, %v6186
    %v6195 = vmul.f32 %v6187, %v6187
    %v6196 = vmul.f32 %v6188, %v6188
    %v6197 = vsel %vm233, %v6189, 0.0
    %6198 = vadd.xlane.f32.xlu0 %v6197
    %v6199 = vpop.xlane.xlu0 %6198
    %v6200 = vsel %vm233, %v6190, 0.0
    %6201 = vadd.xlane.f32.xlu0 %v6200
    %v6202 = vpop.xlane.xlu0 %6201
    %v6203 = vsel %vm233, %v6191, 0.0
    %6204 = vadd.xlane.f32.xlu0 %v6203
    %v6205 = vpop.xlane.xlu0 %6204
    %v6206 = vsel %vm233, %v6192, 0.0
    %6207 = vadd.xlane.f32.xlu0 %v6206
    %v6208 = vpop.xlane.xlu0 %6207
    %v6209 = vsel %vm233, %v6193, 0.0
    %6210 = vadd.xlane.f32.xlu0 %v6209
    %v6211 = vpop.xlane.xlu0 %6210
    %v6212 = vsel %vm233, %v6194, 0.0
    %6213 = vadd.xlane.f32.xlu0 %v6212
    %v6214 = vpop.xlane.xlu0 %6213
    %v6215 = vsel %vm233, %v6195, 0.0
    %6216 = vadd.xlane.f32.xlu0 %v6215
    %v6217 = vpop.xlane.xlu0 %6216
    %v6218 = vsel %vm233, %v6196, 0.0
    %6219 = vadd.xlane.f32.xlu0 %v6218
    %v6220 = vpop.xlane.xlu0 %6219
    %v6221 = vmul.f32 %v6199, %v258
    %v6222 = vmul.f32 %v6202, %v258
    %v6223 = vmul.f32 %v6205, %v258
    %v6224 = vmul.f32 %v6208, %v258
    %v6225 = vmul.f32 %v6211, %v258
    %v6226 = vmul.f32 %v6214, %v258
    %v6227 = vmul.f32 %v6217, %v258
    %v6228 = vmul.f32 %v6220, %v258
    %v6229 = vadd.f32 %v6221, 1e-05
    %v6230 = vadd.f32 %v6222, 1e-05
    %v6231 = vadd.f32 %v6223, 1e-05
    %v6232 = vadd.f32 %v6224, 1e-05
    %v6233 = vadd.f32 %v6225, 1e-05
    %v6234 = vadd.f32 %v6226, 1e-05
    %v6235 = vadd.f32 %v6227, 1e-05
    %v6236 = vadd.f32 %v6228, 1e-05
    %v6237 = vrsqrt.pop %v6229
    %v6238 = vrsqrt.pop %v6230
    %v6239 = vrsqrt.pop %v6231
    %v6240 = vrsqrt.pop %v6232
    %v6241 = vrsqrt.pop %v6233
    %v6242 = vrsqrt.pop %v6234
    %v6243 = vrsqrt.pop %v6235
    %v6244 = vrsqrt.pop %v6236
    %v6245 = vmul.f32 %v6181, %v6237
    %v6246 = vmul.f32 %v6182, %v6238
    %v6247 = vmul.f32 %v6183, %v6239
    %v6248 = vmul.f32 %v6184, %v6240
    %v6249 = vmul.f32 %v6185, %v6241
    %v6250 = vmul.f32 %v6186, %v6242
    %v6251 = vmul.f32 %v6187, %v6243
    %v6252 = vmul.f32 %v6188, %v6244
    %v6254 = vlaneseq
    %v6255 = vshrl.u32 %v6254, 7
    %v6256 = vsub.s32 0, %v6255
    %v6257 = vrot.slane %v6147, %v6256
    %v6259 = vmul.f32 %v6245, %v6257
    %v6260 = vmul.f32 %v6246, %v6257
    %v6261 = vmul.f32 %v6247, %v6257
    %v6262 = vmul.f32 %v6248, %v6257
    %v6263 = vmul.f32 %v6249, %v6257
    %v6264 = vmul.f32 %v6250, %v6257
    %v6265 = vmul.f32 %v6251, %v6257
    %v6266 = vmul.f32 %v6252, %v6257
    %v6268 = vlaneseq
    %v6269 = vshrl.u32 %v6268, 7
    %v6270 = vsub.s32 0, %v6269
    %v6271 = vrot.slane %v6148, %v6270
    %v6273 = vadd.f32 %v6259, %v6271
    %v6274 = vadd.f32 %v6260, %v6271
    %v6275 = vadd.f32 %v6261, %v6271
    %v6276 = vadd.f32 %v6262, %v6271
    %v6277 = vadd.f32 %v6263, %v6271
    %v6278 = vadd.f32 %v6264, %v6271
    %v6279 = vadd.f32 %v6265, %v6271
    %v6280 = vadd.f32 %v6266, %v6271
    %v6281 = vpack.c.bf16 %v6274, %v6273
    %v6282 = vpack.c.bf16 %v6276, %v6275
    %v6283 = vpack.c.bf16 %v6278, %v6277
    %v6284 = vpack.c.bf16 %v6280, %v6279
    %v6285 = vld [vmem:[#allocation20] sm:$0xf]
    %v6286 = vld [vmem:[#allocation20 + $0x4] sm:$0xf]
    %v6287 = vld [vmem:[#allocation20 + $0x8] sm:$0xf]
    %v6288 = vld [vmem:[#allocation20 + $0xc] sm:$0xf]
    %v6289 = vld [vmem:[#allocation21] sm:$0x1]
    %v6291 = vlaneseq
    %v6292 = vshrl.u32 %v6291, 7
    %v6293 = vsub.s32 0, %v6292
    %v6294 = vrot.slane %v6289, %v6293
    %v6300 = vunpack.c.l.b16 %v6285
    %v6301 = vunpack.c.l.b16 %v6286
    %v6302 = vunpack.c.l.b16 %v6287
    %v6303 = vunpack.c.l.b16 %v6288
    %v6304 = vpack.c.b16 %v6301, %v6300
    %v6305 = vpack.c.b16 %v6303, %v6302
    %v6309 = vsel %vm233, %v6281, 0
    %v6312 = vsel %vm233, %v6282, 0
    %v6315 = vsel %vm233, %v6283, 0
    %v6318 = vsel %vm233, %v6284, 0
    %6320 = vmatprep.subr.bf16.mxu0 0
    %6321 = vmatpush1.bf16.msra.mxu0 %v6304
    %6322 = vmatprep.subr.bf16.mxu0 0
    %6323 = vmatpush1.bf16.msra.mxu0 %v6305
    %6324 = vmatprep.subr.bf16.mxu0 0
    %6325 = vmatpush1.bf16.msra.mxu0 0
    %6326 = vmatprep.subr.bf16.mxu0 0
    %6327 = vmatpush1.bf16.msra.mxu0 0
    %6328 = vmatprep.subr.bf16.mxu0 0
    %6329 = vmatpush1.bf16.msra.mxu0 0
    %6330 = vmatprep.subr.bf16.mxu0 0
    %6331 = vmatpush1.bf16.msra.mxu0 0
    %6332 = vmatprep.subr.bf16.mxu0 0
    %6333 = vmatpush1.bf16.msra.mxu0 0
    %6334 = vmatprep.subr.bf16.mxu0 0
    %6335 = vmatpush1.bf16.msra.mxu0 0
    %6336 = vmatprep.subr.bf16.mxu0 0
    %6337 = vmatpush1.bf16.msra.mxu0 0
    %6338 = vmatprep.subr.bf16.mxu0 0
    %6339 = vmatpush1.bf16.msra.mxu0 0
    %6340 = vmatprep.subr.bf16.mxu0 0
    %6341 = vmatpush1.bf16.msra.mxu0 0
    %6342 = vmatprep.subr.bf16.mxu0 0
    %6343 = vmatpush1.bf16.msra.mxu0 0
    %6344 = vmatprep.subr.bf16.mxu0 0
    %6345 = vmatpush1.bf16.msra.mxu0 0
    %6346 = vmatprep.subr.bf16.mxu0 0
    %6347 = vmatpush1.bf16.msra.mxu0 0
    %6348 = vmatprep.subr.bf16.mxu0 0
    %6349 = vmatpush1.bf16.msra.mxu0 0
    %6350 = vmatprep.subr.bf16.mxu0 0
    %6351 = vmatpush1.bf16.msra.mxu0 0
    %6352 = vmatprep.mubr.bf16.mxu0 0
    %6353 = vmatmul.mubr.bf16.gmra.mrb[0].mxu0 %v6309
    %v6354 = vpop.f32.mrb[0].mxu0
    %v6355 = vadd.f32 %v6294, %v6354
    %v6356 = vpop.f32.mrb[0].mxu0
    %v6357 = vpop.f32.mrb[0].mxu0
    %v6358 = vadd.f32 %v6294, %v6357
    %v6359 = vpop.f32.mrb[0].mxu0
    %6360 = vmatprep.mubr.bf16.mxu0 0
    %6361 = vmatmul.mubr.bf16.gmra.mrb[0].mxu0 %v6312
    %v6362 = vpop.f32.mrb[0].mxu0
    %v6363 = vadd.f32 %v6294, %v6362
    %v6364 = vpop.f32.mrb[0].mxu0
    %v6365 = vpop.f32.mrb[0].mxu0
    %v6366 = vadd.f32 %v6294, %v6365
    %v6367 = vpop.f32.mrb[0].mxu0
    %6368 = vmatprep.mubr.bf16.mxu0 0
    %6369 = vmatmul.mubr.bf16.gmra.mrb[0].mxu0 %v6315
    %v6370 = vpop.f32.mrb[0].mxu0
    %v6371 = vadd.f32 %v6294, %v6370
    %v6372 = vpop.f32.mrb[0].mxu0
    %v6373 = vpop.f32.mrb[0].mxu0
    %v6374 = vadd.f32 %v6294, %v6373
    %v6375 = vpop.f32.mrb[0].mxu0
    %6376 = vmatprep.mubr.bf16.mxu0 0
    %6377 = vmatmul.mubr.bf16.gmra.mrb[0].mxu0 %v6318
    %v6378 = vpop.f32.mrb[0].mxu0
    %v6379 = vadd.f32 %v6294, %v6378
    %v6380 = vpop.f32.mrb[0].mxu0
    %v6381 = vpop.f32.mrb[0].mxu0
    %v6382 = vadd.f32 %v6294, %v6381
    %v6383 = vpop.f32.mrb[0].mxu0
    %6384 = vdwg.mxu0
    %v6385 = vmul.f32 %v6355, 0.5
    %v6386 = vmul.f32 %v6358, 0.5
    %v6387 = vmul.f32 %v6363, 0.5
    %v6388 = vmul.f32 %v6366, 0.5
    %v6389 = vmul.f32 %v6371, 0.5
    %v6390 = vmul.f32 %v6374, 0.5
    %v6391 = vmul.f32 %v6379, 0.5
    %v6392 = vmul.f32 %v6382, 0.5
    %v6393 = vmul.f32 %v6355, 0.70710677
    %v6394 = vmul.f32 %v6358, 0.70710677
    %v6395 = vmul.f32 %v6363, 0.70710677
    %v6396 = vmul.f32 %v6366, 0.70710677
    %v6397 = vmul.f32 %v6371, 0.70710677
    %v6398 = vmul.f32 %v6374, 0.70710677
    %v6399 = vmul.f32 %v6379, 0.70710677
    %v6400 = vmul.f32 %v6382, 0.70710677
    %vm6401 = vcmp.ge.f32.partialorder %v6393, 0.0
    %vm6402 = vcmp.ge.f32.partialorder %v6394, 0.0
    %vm6403 = vcmp.ge.f32.partialorder %v6395, 0.0
    %vm6404 = vcmp.ge.f32.partialorder %v6396, 0.0
    %vm6405 = vcmp.ge.f32.partialorder %v6397, 0.0
    %vm6406 = vcmp.ge.f32.partialorder %v6398, 0.0
    %vm6407 = vcmp.ge.f32.partialorder %v6399, 0.0
    %vm6408 = vcmp.ge.f32.partialorder %v6400, 0.0
    %v6409 = vsel %vm6401, 1.0, -1.0
    %v6410 = vsel %vm6402, 1.0, -1.0
    %v6411 = vsel %vm6403, 1.0, -1.0
    %v6412 = vsel %vm6404, 1.0, -1.0
    %v6413 = vsel %vm6405, 1.0, -1.0
    %v6414 = vsel %vm6406, 1.0, -1.0
    %v6415 = vsel %vm6407, 1.0, -1.0
    %v6416 = vsel %vm6408, 1.0, -1.0
    %v6417 = vand.u32 2147483647, %v6393
    %v6418 = vand.u32 2147483647, %v6394
    %v6419 = vand.u32 2147483647, %v6395
    %v6420 = vand.u32 2147483647, %v6396
    %v6421 = vand.u32 2147483647, %v6397
    %v6422 = vand.u32 2147483647, %v6398
    %v6423 = vand.u32 2147483647, %v6399
    %v6424 = vand.u32 2147483647, %v6400
    %v6425 = vmul.f32 %v6417, 0.3275911
    %v6426 = vmul.f32 %v6418, 0.3275911
    %v6427 = vmul.f32 %v6419, 0.3275911
    %v6428 = vmul.f32 %v6420, 0.3275911
    %v6429 = vmul.f32 %v6421, 0.3275911
    %v6430 = vmul.f32 %v6422, 0.3275911
    %v6431 = vmul.f32 %v6423, 0.3275911
    %v6432 = vmul.f32 %v6424, 0.3275911
    %v6433 = vadd.f32 %v6425, 1.0
    %v6434 = vadd.f32 %v6426, 1.0
    %v6435 = vadd.f32 %v6427, 1.0
    %v6436 = vadd.f32 %v6428, 1.0
    %v6437 = vadd.f32 %v6429, 1.0
    %v6438 = vadd.f32 %v6430, 1.0
    %v6439 = vadd.f32 %v6431, 1.0
    %v6440 = vadd.f32 %v6432, 1.0
    %v6441 = vrcp.pop %v6433
    %v6442 = vmul.f32 1.0, %v6441
    %v6443 = vrcp.pop %v6434
    %v6444 = vmul.f32 1.0, %v6443
    %v6445 = vrcp.pop %v6435
    %v6446 = vmul.f32 1.0, %v6445
    %v6447 = vrcp.pop %v6436
    %v6448 = vmul.f32 1.0, %v6447
    %v6449 = vrcp.pop %v6437
    %v6450 = vmul.f32 1.0, %v6449
    %v6451 = vrcp.pop %v6438
    %v6452 = vmul.f32 1.0, %v6451
    %v6453 = vrcp.pop %v6439
    %v6454 = vmul.f32 1.0, %v6453
    %v6455 = vrcp.pop %v6440
    %v6456 = vmul.f32 1.0, %v6455
    %v6457 = vmul.f32 %v6442, 1.0614054
    %v6458 = vmul.f32 %v6444, 1.0614054
    %v6459 = vmul.f32 %v6446, 1.0614054
    %v6460 = vmul.f32 %v6448, 1.0614054
    %v6461 = vmul.f32 %v6450, 1.0614054
    %v6462 = vmul.f32 %v6452, 1.0614054
    %v6463 = vmul.f32 %v6454, 1.0614054
    %v6464 = vmul.f32 %v6456, 1.0614054
    %v6465 = vadd.f32 %v6457, -1.4531521
    %v6466 = vadd.f32 %v6458, -1.4531521
    %v6467 = vadd.f32 %v6459, -1.4531521
    %v6468 = vadd.f32 %v6460, -1.4531521
    %v6469 = vadd.f32 %v6461, -1.4531521
    %v6470 = vadd.f32 %v6462, -1.4531521
    %v6471 = vadd.f32 %v6463, -1.4531521
    %v6472 = vadd.f32 %v6464, -1.4531521
    %v6473 = vmul.f32 %v6465, %v6442
    %v6474 = vmul.f32 %v6466, %v6444
    %v6475 = vmul.f32 %v6467, %v6446
    %v6476 = vmul.f32 %v6468, %v6448
    %v6477 = vmul.f32 %v6469, %v6450
    %v6478 = vmul.f32 %v6470, %v6452
    %v6479 = vmul.f32 %v6471, %v6454
    %v6480 = vmul.f32 %v6472, %v6456
    %v6481 = vadd.f32 %v6473, 1.4214138
    %v6482 = vadd.f32 %v6474, 1.4214138
    %v6483 = vadd.f32 %v6475, 1.4214138
    %v6484 = vadd.f32 %v6476, 1.4214138
    %v6485 = vadd.f32 %v6477, 1.4214138
    %v6486 = vadd.f32 %v6478, 1.4214138
    %v6487 = vadd.f32 %v6479, 1.4214138
    %v6488 = vadd.f32 %v6480, 1.4214138
    %v6489 = vmul.f32 %v6481, %v6442
    %v6490 = vmul.f32 %v6482, %v6444
    %v6491 = vmul.f32 %v6483, %v6446
    %v6492 = vmul.f32 %v6484, %v6448
    %v6493 = vmul.f32 %v6485, %v6450
    %v6494 = vmul.f32 %v6486, %v6452
    %v6495 = vmul.f32 %v6487, %v6454
    %v6496 = vmul.f32 %v6488, %v6456
    %v6497 = vadd.f32 %v6489, -0.28449672
    %v6498 = vadd.f32 %v6490, -0.28449672
    %v6499 = vadd.f32 %v6491, -0.28449672
    %v6500 = vadd.f32 %v6492, -0.28449672
    %v6501 = vadd.f32 %v6493, -0.28449672
    %v6502 = vadd.f32 %v6494, -0.28449672
    %v6503 = vadd.f32 %v6495, -0.28449672
    %v6504 = vadd.f32 %v6496, -0.28449672
    %v6505 = vmul.f32 %v6497, %v6442
    %v6506 = vmul.f32 %v6498, %v6444
    %v6507 = vmul.f32 %v6499, %v6446
    %v6508 = vmul.f32 %v6500, %v6448
    %v6509 = vmul.f32 %v6501, %v6450
    %v6510 = vmul.f32 %v6502, %v6452
    %v6511 = vmul.f32 %v6503, %v6454
    %v6512 = vmul.f32 %v6504, %v6456
    %v6513 = vadd.f32 %v6505, 0.2548296
    %v6514 = vadd.f32 %v6506, 0.2548296
    %v6515 = vadd.f32 %v6507, 0.2548296
    %v6516 = vadd.f32 %v6508, 0.2548296
    %v6517 = vadd.f32 %v6509, 0.2548296
    %v6518 = vadd.f32 %v6510, 0.2548296
    %v6519 = vadd.f32 %v6511, 0.2548296
    %v6520 = vadd.f32 %v6512, 0.2548296
    %v6521 = vmul.f32 %v6513, %v6442
    %v6522 = vmul.f32 %v6514, %v6444
    %v6523 = vmul.f32 %v6515, %v6446
    %v6524 = vmul.f32 %v6516, %v6448
    %v6525 = vmul.f32 %v6517, %v6450
    %v6526 = vmul.f32 %v6518, %v6452
    %v6527 = vmul.f32 %v6519, %v6454
    %v6528 = vmul.f32 %v6520, %v6456
    %v6529 = vsub.f32 0.0, %v6417
    %v6530 = vsub.f32 0.0, %v6418
    %v6531 = vsub.f32 0.0, %v6419
    %v6532 = vsub.f32 0.0, %v6420
    %v6533 = vsub.f32 0.0, %v6421
    %v6534 = vsub.f32 0.0, %v6422
    %v6535 = vsub.f32 0.0, %v6423
    %v6536 = vsub.f32 0.0, %v6424
    %v6537 = vmul.f32 %v6529, %v6417
    %v6538 = vmul.f32 %v6530, %v6418
    %v6539 = vmul.f32 %v6531, %v6419
    %v6540 = vmul.f32 %v6532, %v6420
    %v6541 = vmul.f32 %v6533, %v6421
    %v6542 = vmul.f32 %v6534, %v6422
    %v6543 = vmul.f32 %v6535, %v6423
    %v6544 = vmul.f32 %v6536, %v6424
    %v6545 = vmul.f32 %v6537, 1.442695
    %v6546 = vpow.pop %v6545
    %v6547 = vmul.f32 %v6538, 1.442695
    %v6548 = vpow.pop %v6547
    %v6549 = vmul.f32 %v6539, 1.442695
    %v6550 = vpow.pop %v6549
    %v6551 = vmul.f32 %v6540, 1.442695
    %v6552 = vpow.pop %v6551
    %v6553 = vmul.f32 %v6541, 1.442695
    %v6554 = vpow.pop %v6553
    %v6555 = vmul.f32 %v6542, 1.442695
    %v6556 = vpow.pop %v6555
    %v6557 = vmul.f32 %v6543, 1.442695
    %v6558 = vpow.pop %v6557
    %v6559 = vmul.f32 %v6544, 1.442695
    %v6560 = vpow.pop %v6559
    %v6561 = vmul.f32 %v6521, %v6546
    %v6562 = vmul.f32 %v6522, %v6548
    %v6563 = vmul.f32 %v6523, %v6550
    %v6564 = vmul.f32 %v6524, %v6552
    %v6565 = vmul.f32 %v6525, %v6554
    %v6566 = vmul.f32 %v6526, %v6556
    %v6567 = vmul.f32 %v6527, %v6558
    %v6568 = vmul.f32 %v6528, %v6560
    %v6569 = vsub.f32 1.0, %v6561
    %v6570 = vsub.f32 1.0, %v6562
    %v6571 = vsub.f32 1.0, %v6563
    %v6572 = vsub.f32 1.0, %v6564
    %v6573 = vsub.f32 1.0, %v6565
    %v6574 = vsub.f32 1.0, %v6566
    %v6575 = vsub.f32 1.0, %v6567
    %v6576 = vsub.f32 1.0, %v6568
    %v6577 = vmul.f32 %v6409, %v6569
    %v6578 = vmul.f32 %v6410, %v6570
    %v6579 = vmul.f32 %v6411, %v6571
    %v6580 = vmul.f32 %v6412, %v6572
    %v6581 = vmul.f32 %v6413, %v6573
    %v6582 = vmul.f32 %v6414, %v6574
    %v6583 = vmul.f32 %v6415, %v6575
    %v6584 = vmul.f32 %v6416, %v6576
    %v6585 = vadd.f32 %v6577, 1.0
    %v6586 = vadd.f32 %v6578, 1.0
    %v6587 = vadd.f32 %v6579, 1.0
    %v6588 = vadd.f32 %v6580, 1.0
    %v6589 = vadd.f32 %v6581, 1.0
    %v6590 = vadd.f32 %v6582, 1.0
    %v6591 = vadd.f32 %v6583, 1.0
    %v6592 = vadd.f32 %v6584, 1.0
    %v6593 = vmul.f32 %v6385, %v6585
    %v6594 = vmul.f32 %v6386, %v6586
    %v6595 = vmul.f32 %v6387, %v6587
    %v6596 = vmul.f32 %v6388, %v6588
    %v6597 = vmul.f32 %v6389, %v6589
    %v6598 = vmul.f32 %v6390, %v6590
    %v6599 = vmul.f32 %v6391, %v6591
    %v6600 = vmul.f32 %v6392, %v6592
    %v6601 = vpack.c.bf16 %v6594, %v6593
    %v6602 = vpack.c.bf16 %v6596, %v6595
    %v6603 = vpack.c.bf16 %v6598, %v6597
    %v6604 = vpack.c.bf16 %v6600, %v6599
    %v6605 = vld [vmem:[#allocation23] sm:$0xf]
    %v6606 = vld [vmem:[#allocation23 + $0x4] sm:$0xf]
    %v6607 = vld [vmem:[#allocation23 + $0x8] sm:$0xf]
    %v6608 = vld [vmem:[#allocation23 + $0xc] sm:$0xf]
    %v6609 = vld [vmem:[#allocation23 + $0x10] sm:$0xf]
    %v6610 = vld [vmem:[#allocation23 + $0x14] sm:$0xf]
    %v6611 = vld [vmem:[#allocation23 + $0x18] sm:$0xf]
    %v6612 = vld [vmem:[#allocation23 + $0x1c] sm:$0xf]
    %v6613 = vld [vmem:[#allocation23 + $0x20] sm:$0xf]
    %v6614 = vld [vmem:[#allocation23 + $0x24] sm:$0xf]
    %v6615 = vld [vmem:[#allocation23 + $0x28] sm:$0xf]
    %v6616 = vld [vmem:[#allocation23 + $0x2c] sm:$0xf]
    %v6617 = vld [vmem:[#allocation23 + $0x30] sm:$0xf]
    %v6618 = vld [vmem:[#allocation23 + $0x34] sm:$0xf]
    %v6619 = vld [vmem:[#allocation23 + $0x38] sm:$0xf]
    %v6620 = vld [vmem:[#allocation23 + $0x3c] sm:$0xf]
    %v6621 = vld [vmem:[#allocation24] sm:$0x1]
    %v6623 = vlaneseq
    %v6624 = vshrl.u32 %v6623, 7
    %v6625 = vsub.s32 0, %v6624
    %v6626 = vrot.slane %v6621, %v6625
    %v6644 = vunpack.c.l.b16 %v6605
    %v6645 = vunpack.c.l.b16 %v6606
    %v6646 = vunpack.c.l.b16 %v6607
    %v6647 = vunpack.c.l.b16 %v6608
    %v6648 = vunpack.c.l.b16 %v6609
    %v6649 = vunpack.c.l.b16 %v6610
    %v6650 = vunpack.c.l.b16 %v6611
    %v6651 = vunpack.c.l.b16 %v6612
    %v6652 = vunpack.c.l.b16 %v6613
    %v6653 = vunpack.c.l.b16 %v6614
    %v6654 = vunpack.c.l.b16 %v6615
    %v6655 = vunpack.c.l.b16 %v6616
    %v6656 = vunpack.c.l.b16 %v6617
    %v6657 = vunpack.c.l.b16 %v6618
    %v6658 = vunpack.c.l.b16 %v6619
    %v6659 = vunpack.c.l.b16 %v6620
    %v6660 = vpack.c.b16 %v6645, %v6644
    %v6661 = vpack.c.b16 %v6647, %v6646
    %v6662 = vpack.c.b16 %v6649, %v6648
    %v6663 = vpack.c.b16 %v6651, %v6650
    %v6664 = vpack.c.b16 %v6653, %v6652
    %v6665 = vpack.c.b16 %v6655, %v6654
    %v6666 = vpack.c.b16 %v6657, %v6656
    %v6667 = vpack.c.b16 %v6659, %v6658
    %6676 = vmatprep.subr.bf16.mxu0 0
    %6677 = vmatpush1.bf16.msra.mxu0 %v6660
    %6678 = vmatprep.subr.bf16.mxu0 0
    %6679 = vmatpush1.bf16.msra.mxu0 %v6661
    %6680 = vmatprep.subr.bf16.mxu0 0
    %6681 = vmatpush1.bf16.msra.mxu0 %v6662
    %6682 = vmatprep.subr.bf16.mxu0 0
    %6683 = vmatpush1.bf16.msra.mxu0 %v6663
    %6684 = vmatprep.subr.bf16.mxu0 0
    %6685 = vmatpush1.bf16.msra.mxu0 %v6664
    %6686 = vmatprep.subr.bf16.mxu0 0
    %6687 = vmatpush1.bf16.msra.mxu0 %v6665
    %6688 = vmatprep.subr.bf16.mxu0 0
    %6689 = vmatpush1.bf16.msra.mxu0 %v6666
    %6690 = vmatprep.subr.bf16.mxu0 0
    %6691 = vmatpush1.bf16.msra.mxu0 %v6667
    %6692 = vmatprep.subr.bf16.mxu0 0
    %6693 = vmatpush1.bf16.msra.mxu0 0
    %6694 = vmatprep.subr.bf16.mxu0 0
    %6695 = vmatpush1.bf16.msra.mxu0 0
    %6696 = vmatprep.subr.bf16.mxu0 0
    %6697 = vmatpush1.bf16.msra.mxu0 0
    %6698 = vmatprep.subr.bf16.mxu0 0
    %6699 = vmatpush1.bf16.msra.mxu0 0
    %6700 = vmatprep.subr.bf16.mxu0 0
    %6701 = vmatpush1.bf16.msra.mxu0 0
    %6702 = vmatprep.subr.bf16.mxu0 0
    %6703 = vmatpush1.bf16.msra.mxu0 0
    %6704 = vmatprep.subr.bf16.mxu0 0
    %6705 = vmatpush1.bf16.msra.mxu0 0
    %6706 = vmatprep.subr.bf16.mxu0 0
    %6707 = vmatpush1.bf16.msra.mxu0 0
    %6708 = vmatprep.mubr.bf16.mxu0 0
    %6709 = vmatmul.mubr.bf16.gmra.mrb[0].mxu0 %v6601
    %v6710 = vpop.f32.mrb[0].mxu0
    %v6711 = vadd.f32 %v6626, %v6710
    %v6712 = vpop.f32.mrb[0].mxu0
    %v6713 = vpop.f32.mrb[0].mxu0
    %v6714 = vadd.f32 %v6626, %v6713
    %v6715 = vpop.f32.mrb[0].mxu0
    %6716 = vmatprep.mubr.bf16.mxu0 0
    %6717 = vmatmul.mubr.bf16.gmra.mrb[0].mxu0 %v6602
    %v6718 = vpop.f32.mrb[0].mxu0
    %v6719 = vadd.f32 %v6626, %v6718
    %v6720 = vpop.f32.mrb[0].mxu0
    %v6721 = vpop.f32.mrb[0].mxu0
    %v6722 = vadd.f32 %v6626, %v6721
    %v6723 = vpop.f32.mrb[0].mxu0
    %6724 = vmatprep.mubr.bf16.mxu0 0
    %6725 = vmatmul.mubr.bf16.gmra.mrb[0].mxu0 %v6603
    %v6726 = vpop.f32.mrb[0].mxu0
    %v6727 = vadd.f32 %v6626, %v6726
    %v6728 = vpop.f32.mrb[0].mxu0
    %v6729 = vpop.f32.mrb[0].mxu0
    %v6730 = vadd.f32 %v6626, %v6729
    %v6731 = vpop.f32.mrb[0].mxu0
    %6732 = vmatprep.mubr.bf16.mxu0 0
    %6733 = vmatmul.mubr.bf16.gmra.mrb[0].mxu0 %v6604
    %v6734 = vpop.f32.mrb[0].mxu0
    %v6735 = vadd.f32 %v6626, %v6734
    %v6736 = vpop.f32.mrb[0].mxu0
    %v6737 = vpop.f32.mrb[0].mxu0
    %v6738 = vadd.f32 %v6626, %v6737
    %v6739 = vpop.f32.mrb[0].mxu0
    %6740 = vdwg.mxu0
    %v6741 = vadd.f32 %v6139, %v6711
    %v6742 = vadd.f32 %v6140, %v6714
    %v6743 = vadd.f32 %v6141, %v6719
    %v6744 = vadd.f32 %v6142, %v6722
    %v6745 = vadd.f32 %v6143, %v6727
    %v6746 = vadd.f32 %v6144, %v6730
    %v6747 = vadd.f32 %v6145, %v6735
    %v6748 = vadd.f32 %v6146, %v6738
    %6749 = vst.msk [vmem:[#allocation26] sm:$0xff] %vm233, %v6741
    %6750 = vst.msk [vmem:[#allocation26 + $0x8] sm:$0xff] %vm233, %v6742
    %6751 = vst.msk [vmem:[#allocation26 + $0x10] sm:$0xff] %vm233, %v6743
    %6752 = vst.msk [vmem:[#allocation26 + $0x18] sm:$0xff] %vm233, %v6744
    %6753 = vst.msk [vmem:[#allocation26 + $0x20] sm:$0xff] %vm233, %v6745
    %6754 = vst.msk [vmem:[#allocation26 + $0x28] sm:$0xff] %vm233, %v6746
    %6755 = vst.msk [vmem:[#allocation26 + $0x30] sm:$0xff] %vm233, %v6747
    %6756 = vst.msk [vmem:[#allocation26 + $0x38] sm:$0xff] %vm233, %v6748
    // Predicated region
    $region114: #{_device_forward.1} parent=1 // pred_check
      _
    $region115: #{_device_forward.1} parent=1 // pred_check_branch
      %6758 = sbr.rel (0) target = $region117
    $region116: #{_device_forward.1} parent=1 // pred_region
      %s6760 = ssub.s32 1024, 1024
      %6761 = vsyncadd [#allocation5], %s6760
      %s6762 = sshll.u32 [#allocation26], 4
      %s6763 = int_to_ptr.vmem [resolvable:$true] %s6762
      %6768 = dma.vmem_to_hbm [thread:$0]  %s6763, 1024, %s14, [#allocation5], 128, 128, 8
    $region117: #{_device_forward.1} parent=1 // pred_fallthru
      _
    // Predicated region
    $region118: #{_device_forward.1} parent=1 // pred_check
      _
    $region119: #{_device_forward.1} parent=1 // pred_check_branch
      %6770 = sbr.rel (0) target = $region121
    $region120: #{_device_forward.1} parent=1 // pred_region
      %6771 = dma.done [#allocation5], 1024
    $region121: #{_device_forward.1} parent=1 // pred_fallthru
      _
    %6772 = vsyncpa [#allocation4], 1
    %6773 = vsyncpa [#allocation7], 1
    %6774 = vsyncpa [#allocation10], 1
    %6775 = vsyncpa [#allocation13], 1
    %6776 = vsyncpa [#allocation16], 1
    %6777 = vsyncpa [#allocation19], 1
    %6778 = vsyncpa [#allocation22], 1
    %6779 = vsyncpa [#allocation25], 1
    %6780 = vsyncpa [#allocation5], 1

</llo_original>
